<compile_context>
chip_gen: v6e
topology: v6e:2x2x1
jax: 0.10.0
libtpu: 0.0.40
codegen_flags: <defaults>
</compile_context>

<pallas_src>
import functools

import jax
import jax.numpy as jnp
from jax import lax
from jax.experimental import pallas as pl
from jax.experimental.pallas import tpu as pltpu


def _round_up(x, m):
    return (x + m - 1) // m * m


def _padded_bytes(shape, dtype):
    """VMEM footprint of one buffer after (sublane, lane) tile padding."""
    itemsize = jnp.dtype(dtype).itemsize
    sub = 32 // itemsize            # 8 sublanes for f32, 16 for bf16
    shape = (1, 1) + tuple(int(s) for s in shape)
    lead = 1
    for s in shape[:-2]:
        lead *= s
    return lead * _round_up(shape[-2], sub) * _round_up(shape[-1], 128) * itemsize


# ----------------------------------------------------------------------------
# Pallas kernel: one (batch, depth-tile) step of the per-sample 3-D conv.
# ----------------------------------------------------------------------------
def _dynconv3d_tile_kernel(x_ref, w_ref, b_ref, o_ref, patch_ref, *,
                           KS, TD, H_out, W_out):
    # x_ref:     (1, TD+KS-1, Hp, Wp, C_in) bf16  zero-padded + depth-halo'd slab
    # w_ref:     (1, P, C_out)  bf16  per-sample mixed weights, P = KS^3 * C_in
    #                                 (column order p = ((kd*KS+kh)*KS+kw)*C_in + c)
    # b_ref:     (1, 1, C_out)  f32   per-sample mixed bias
    # o_ref:     (1, 1, N_tile, C_out) f32, N_tile = TD*H_out*W_out
    # patch_ref: (N_tile, P)    bf16  im2col slab for this depth tile (scratch)
    C_in = x_ref.shape[4]
    N_tile = TD * H_out * W_out

    # ---- im2col: one (N_tile, C_in) column-block store per tap --------------
    # TODO(synk): for C_in < 128 these column writes are masked (sub-lane);
    #             pad C_in wrapper-side / group taps for large production shapes.
    for kd in range(KS):
        for kh in range(KS):
            for kw in range(KS):
                tap = (kd * KS + kh) * KS + kw
                win = x_ref[0, kd:kd + TD, kh:kh + H_out, kw:kw + W_out, :]
                patch_ref[:, tap * C_in:(tap + 1) * C_in] = win.reshape(N_tile, C_in)

    # ---- one MXU matmul per tile: long N_tile dim streams, small (P, C_out)
    #      mixed weights are the stationary operand; bf16 in, f32 accumulate ---
    acc = lax.dot_general(patch_ref[...], w_ref[0],
                          dimension_numbers=(((1,), (0,)), ((), ())),
                          preferred_element_type=jnp.float32)       # (N_tile, C_out)
    o_ref[0, 0] = (acc + b_ref[0]).astype(o_ref.dtype)


# ----------------------------------------------------------------------------
# Parameter init (shapes mirror Dynamic_conv3d.__init__)
# ----------------------------------------------------------------------------
def init_params(key, in_planes, out_planes, kernel_size, ratio=0.25, K=4):
    hidden = K if in_planes == 3 else int(in_planes * ratio) + 1
    k1, k2, k3, k4 = jax.random.split(key, 4)
    # attention3d.fc1 / fc2: 1x1x1 Conv3d, bias=False (faithful to the module)
    fc1_w = jax.random.normal(k1, (hidden, in_planes), jnp.float32) * jnp.sqrt(2.0 / in_planes)
    fc2_w = jax.random.normal(k2, (K, hidden), jnp.float32) * jnp.sqrt(2.0 / hidden)
    # expert weight bank: torch.randn(K, out, in, k, k, k)
    weight = jax.random.normal(
        k3, (K, out_planes, in_planes, kernel_size, kernel_size, kernel_size), jnp.float32)
    # expert bias bank (torch leaves it uninitialized; small deterministic init here)
    bias = jax.random.normal(k4, (K, out_planes), jnp.float32) * 0.1
    return dict(fc1_w=fc1_w, fc2_w=fc2_w, weight=weight, bias=bias)


def prepare_kernel_params(params, kernel_size):
    """One-time re-layout of the expert weight bank into the kernel's im2col layout."""
    weight = params["weight"]                      # (K, C_out, C_in, KS, KS, KS)
    K, C_out, C_in = weight.shape[0], weight.shape[1], weight.shape[2]
    KS = kernel_size
    # P ordering: p = ((kd*KS + kh)*KS + kw)*C_in + c ; trailing axis = C_out
    w_bank_t = jnp.transpose(weight, (0, 3, 4, 5, 2, 1)).reshape(K, KS * KS * KS * C_in, C_out)
    return dict(fc1_w=params["fc1_w"], fc2_w=params["fc2_w"],
                w_bank_t=w_bank_t, b_bank=params["bias"])


# ----------------------------------------------------------------------------
# Forward wrapper
# ----------------------------------------------------------------------------
def dynamic_conv3d_forward(x_ncdhw, kparams, *, kernel_size, stride=1, padding=0,
                           dilation=1, groups=1, K=4, temperature=34, d_tile=None):
    assert temperature % 3 == 1
    assert stride == 1 and dilation == 1 and groups == 1
    # TODO(synk): general stride / dilation / groups>1 are not implemented in the
    #             Pallas kernel (only the module's defaults).

    B, C_in, D, H, W = x_ncdhw.shape
    KS = kernel_size
    fc1_w = kparams["fc1_w"]          # (hidden, C_in)
    fc2_w = kparams["fc2_w"]          # (K, hidden)
    w_bank_t = kparams["w_bank_t"]    # (K, P, C_out)
    b_bank = kparams["b_bank"]        # (K, C_out)
    P = w_bank_t.shape[1]
    C_out = w_bank_t.shape[2]
    assert P == KS * KS * KS * C_in

    # ---- attention head, hoisted to XLA (O(B*C_in), trivial) ----------------
    pooled = x_ncdhw.astype(jnp.float32).mean(axis=(2, 3, 4))          # (B, C_in)
    h = jnp.maximum(pooled @ fc1_w.T, 0.0)
    logits = h @ fc2_w.T                                               # fc2 has no bias
    attn = jax.nn.softmax(logits / float(temperature), axis=-1)        # (B, K)

    # ---- per-sample expert mixing (tiny einsum, f32), bf16 only for the MXU --
    agg_w = jnp.einsum("bk,kpo->bpo", attn, w_bank_t).astype(jnp.bfloat16)  # (B, P, C_out)
    agg_b = (attn @ b_bank).reshape(B, 1, C_out).astype(jnp.float32)        # (B, 1, C_out)

    Dp, Hp, Wp = D + 2 * padding, H + 2 * padding, W + 2 * padding
    D_out, H_out, W_out = Dp - KS + 1, Hp - KS + 1, Wp - KS + 1

    # ---- depth tiling (keeps the im2col slab VMEM footprint bounded) --------
    if d_tile is None:
        budget = 6 * 1024 * 1024
        per_depth = H_out * W_out * (_round_up(P, 128) * 2 + _round_up(C_out, 128) * 8)
        d_tile = max(1, budget // max(per_depth, 1))
    TD = int(min(d_tile, D_out))
    n_t = -(-D_out // TD)                       # ceil-div; last tile rows are discarded
    TDh = TD + KS - 1
    N_tile = TD * H_out * W_out
    pad_d_end = n_t * TD + KS - 1 - D - padding  # >= padding; covers the last halo

    # ---- one-time padding + per-tile depth-halo duplication (cheap XLA) ------
    x_cl = jnp.transpose(x_ncdhw, (0, 2, 3, 4, 1)).astype(jnp.bfloat16)     # (B,D,H,W,C)
    x_pad = jnp.pad(x_cl, ((0, 0), (padding, pad_d_end), (padding, padding),
                           (padding, padding), (0, 0)))
    x_halo = jnp.stack([x_pad[:, t * TD:t * TD + TDh] for t in range(n_t)], axis=1)
    x_halo = x_halo.reshape(B * n_t, TDh, Hp, Wp, C_in)

    # ---- explicit scoped-VMEM budget (block double-buffering + scratch) ------
    est = (2 * _padded_bytes((TDh, Hp, Wp, C_in), jnp.bfloat16)   # x block
           + 2 * _padded_bytes((P, C_out), jnp.bfloat16)          # mixed weights
           + 2 * _padded_bytes((1, C_out), jnp.float32)           # mixed bias
           + 2 * _padded_bytes((N_tile, C_out), jnp.float32)      # out block
           + _padded_bytes((N_tile, P), jnp.bfloat16))            # patch scratch
    vmem_limit = int(min(64 * 1024 * 1024, max(16 * 1024 * 1024, 2 * est)))

    out_flat = pl.pallas_call(
        functools.partial(_dynconv3d_tile_kernel, KS=KS, TD=TD,
                          H_out=H_out, W_out=W_out),
        out_shape=jax.ShapeDtypeStruct((B, n_t, N_tile, C_out), jnp.float32),
        grid=(B, n_t),
        in_specs=[
            pl.BlockSpec((1, TDh, Hp, Wp, C_in), lambda b, t: (b * n_t + t, 0, 0, 0, 0)),
            pl.BlockSpec((1, P, C_out), lambda b, t: (b, 0, 0)),
            pl.BlockSpec((1, 1, C_out), lambda b, t: (b, 0, 0)),
        ],
        out_specs=pl.BlockSpec((1, 1, N_tile, C_out), lambda b, t: (b, t, 0, 0)),
        scratch_shapes=[pltpu.VMEM((N_tile, P), jnp.bfloat16)],
        compiler_params=pltpu.CompilerParams(
            dimension_semantics=("parallel", "parallel"),
            vmem_limit_bytes=vmem_limit),
    )(x_halo, agg_w, agg_b)

    # (B, n_t, TD*H_out*W_out, C_out) -> NCDHW (one cheap wrapper transpose)
    out = out_flat.reshape(B, n_t * TD, H_out, W_out, C_out)[:, :D_out]
    out = jnp.transpose(out, (0, 4, 1, 2, 3))
    return out, attn


# ----------------------------------------------------------------------------
# Pure-JAX reference (mirrors the PyTorch forward) for correctness checking
# ----------------------------------------------------------------------------
def reference_forward(x, params, *, kernel_size, padding, temperature, K):
    fc1_w, fc2_w = params["fc1_w"], params["fc2_w"]
    weight, bias = params["weight"], params["bias"]
    pooled = x.mean(axis=(2, 3, 4))                                  # (B, C_in)
    h = jnp.maximum(pooled @ fc1_w.T, 0.0)
    logits = h @ fc2_w.T                                             # fc2 has no bias
    attn = jax.nn.softmax(logits / temperature, axis=1)              # (B, K)

    agg_w = jnp.einsum('bk,koidhw->boidhw', attn, weight)            # (B,C_out,C_in,KS,KS,KS)
    agg_b = attn @ bias                                              # (B, C_out)

    outs = []
    for b in range(x.shape[0]):
        o = lax.conv_general_dilated(
            x[b:b + 1], agg_w[b], window_strides=(1, 1, 1),
            padding=[(padding, padding)] * 3,
            dimension_numbers=('NCDHW', 'OIDHW', 'NCDHW'))
        outs.append(o + agg_b[b][None, :, None, None, None])
    return jnp.concatenate(outs, axis=0), attn


if __name__ == "__main__":
    B, C_in, D, H, W = 2, 4, 8, 8, 8
    C_out, KS, K = 8, 3, 4
    padding = 1
    temperature = 34

    key = jax.random.PRNGKey(0)
    kx, kp = jax.random.split(key)
    x = jax.random.normal(kx, (B, C_in, D, H, W), jnp.float32)
    params = init_params(kp, C_in, C_out, KS, ratio=0.25, K=K)
    kparams = prepare_kernel_params(params, KS)     # one-time layout prep

    # d_tile=3 deliberately does not divide D_out=8, exercising the padded
    # last-tile path of the depth tiling (grid = (2, 3)).
    out, attn = dynamic_conv3d_forward(x, kparams, kernel_size=KS, stride=1,
                                       padding=padding, K=K,
                                       temperature=temperature, d_tile=3)
    out = jax.block_until_ready(out)

    ref_out, ref_attn = reference_forward(x, params, kernel_size=KS, padding=padding,
                                          temperature=temperature, K=K)

    assert out.shape == (B, C_out, D, H, W), out.shape
    assert jnp.allclose(attn, ref_attn, rtol=1e-4, atol=1e-5), "attention mismatch"
    max_err = float(jnp.max(jnp.abs(out - ref_out)))
    # bf16 MXU operands with f32 accumulation -> looser tolerance than pure f32
    assert jnp.allclose(out, ref_out, rtol=5e-2, atol=1e-1), (
        f"conv output mismatch (max abs err {max_err})")
    print("KERNEL_OK")
</pallas_src>

<mosaic_0001>
module attributes {stable_mosaic.version = 11 : i64} {
  func.func @_dynconv3d_tile_kernel(%arg0: i32, %arg1: i32, %arg2: memref<1x5x10x10x4xbf16, #tpu.memory_space<vmem>>, %arg3: memref<1x108x8xbf16, #tpu.memory_space<vmem>>, %arg4: memref<1x1x8xf32, #tpu.memory_space<vmem>>, %arg5: memref<1x1x192x8xf32, #tpu.memory_space<vmem>>, %arg6: memref<192x108xbf16, #tpu.memory_space<vmem>>) attributes {dimension_semantics = [#tpu.dimension_semantics<parallel>, #tpu.dimension_semantics<parallel>], iteration_bounds = array<i64: 2, 3>, scalar_prefetch = 0 : i64, scratch_operands = 1 : i64, tpu.core_type = #tpu.core_type<tc>, window_params = [{transform_indices = @transform_0, window_bounds = array<i64: 1, 5, 10, 10, 4>}, {transform_indices = @transform_1, window_bounds = array<i64: 1, 108, 8>}, {transform_indices = @transform_2, window_bounds = array<i64: 1, 1, 8>}, {transform_indices = @transform_3, window_bounds = array<i64: 1, 1, 192, 8>}]} {
    %c0 = arith.constant 0 : index
    %c0_0 = arith.constant 0 : index
    %c0_1 = arith.constant 0 : index
    %c0_2 = arith.constant 0 : index
    %c0_3 = arith.constant 0 : index
    %0 = vector.load %arg2[%c0, %c0_0, %c0_1, %c0_2, %c0_3] : memref<1x5x10x10x4xbf16, #tpu.memory_space<vmem>>, vector<1x3x8x8x4xbf16>
    %1 = vector.shape_cast %0 : vector<1x3x8x8x4xbf16> to vector<3x8x8x4xbf16>
    %2 = vector.shape_cast %1 : vector<3x8x8x4xbf16> to vector<192x4xbf16>
    %c0_4 = arith.constant 0 : index
    %c0_5 = arith.constant 0 : index
    %3 = vector.load %arg6[%c0_4, %c0_5] : memref<192x108xbf16, #tpu.memory_space<vmem>>, vector<192x4xbf16>
    tpu.vector_store %arg6[%c0_4, %c0_5], %2 {strides = array<i32>} : memref<192x108xbf16, #tpu.memory_space<vmem>>, vector<192x4xbf16>,
    %c0_6 = arith.constant 0 : index
    %c0_7 = arith.constant 0 : index
    %c0_8 = arith.constant 0 : index
    %c1 = arith.constant 1 : index
    %c0_9 = arith.constant 0 : index
    %4 = vector.load %arg2[%c0_6, %c0_7, %c0_8, %c1, %c0_9] : memref<1x5x10x10x4xbf16, #tpu.memory_space<vmem>>, vector<1x3x8x8x4xbf16>
    %5 = vector.shape_cast %4 : vector<1x3x8x8x4xbf16> to vector<3x8x8x4xbf16>
    %6 = vector.shape_cast %5 : vector<3x8x8x4xbf16> to vector<192x4xbf16>
    %c0_10 = arith.constant 0 : index
    %c4 = arith.constant 4 : index
    %7 = vector.load %arg6[%c0_10, %c4] : memref<192x108xbf16, #tpu.memory_space<vmem>>, vector<192x4xbf16>
    tpu.vector_store %arg6[%c0_10, %c4], %6 {strides = array<i32>} : memref<192x108xbf16, #tpu.memory_space<vmem>>, vector<192x4xbf16>,
    %c0_11 = arith.constant 0 : index
    %c0_12 = arith.constant 0 : index
    %c0_13 = arith.constant 0 : index
    %c2 = arith.constant 2 : index
    %c0_14 = arith.constant 0 : index
    %8 = vector.load %arg2[%c0_11, %c0_12, %c0_13, %c2, %c0_14] : memref<1x5x10x10x4xbf16, #tpu.memory_space<vmem>>, vector<1x3x8x8x4xbf16>
    %9 = vector.shape_cast %8 : vector<1x3x8x8x4xbf16> to vector<3x8x8x4xbf16>
    %10 = vector.shape_cast %9 : vector<3x8x8x4xbf16> to vector<192x4xbf16>
    %c0_15 = arith.constant 0 : index
    %c8 = arith.constant 8 : index
    %11 = vector.load %arg6[%c0_15, %c8] : memref<192x108xbf16, #tpu.memory_space<vmem>>, vector<192x4xbf16>
    tpu.vector_store %arg6[%c0_15, %c8], %10 {strides = array<i32>} : memref<192x108xbf16, #tpu.memory_space<vmem>>, vector<192x4xbf16>,
    %c0_16 = arith.constant 0 : index
    %c0_17 = arith.constant 0 : index
    %c1_18 = arith.constant 1 : index
    %c0_19 = arith.constant 0 : index
    %c0_20 = arith.constant 0 : index
    %12 = vector.load %arg2[%c0_16, %c0_17, %c1_18, %c0_19, %c0_20] : memref<1x5x10x10x4xbf16, #tpu.memory_space<vmem>>, vector<1x3x8x8x4xbf16>
    %13 = vector.shape_cast %12 : vector<1x3x8x8x4xbf16> to vector<3x8x8x4xbf16>
    %14 = vector.shape_cast %13 : vector<3x8x8x4xbf16> to vector<192x4xbf16>
    %c0_21 = arith.constant 0 : index
    %c12 = arith.constant 12 : index
    %15 = vector.load %arg6[%c0_21, %c12] : memref<192x108xbf16, #tpu.memory_space<vmem>>, vector<192x4xbf16>
    tpu.vector_store %arg6[%c0_21, %c12], %14 {strides = array<i32>} : memref<192x108xbf16, #tpu.memory_space<vmem>>, vector<192x4xbf16>,
    %c0_22 = arith.constant 0 : index
    %c0_23 = arith.constant 0 : index
    %c1_24 = arith.constant 1 : index
    %c1_25 = arith.constant 1 : index
    %c0_26 = arith.constant 0 : index
    %16 = vector.load %arg2[%c0_22, %c0_23, %c1_24, %c1_25, %c0_26] : memref<1x5x10x10x4xbf16, #tpu.memory_space<vmem>>, vector<1x3x8x8x4xbf16>
    %17 = vector.shape_cast %16 : vector<1x3x8x8x4xbf16> to vector<3x8x8x4xbf16>
    %18 = vector.shape_cast %17 : vector<3x8x8x4xbf16> to vector<192x4xbf16>
    %c0_27 = arith.constant 0 : index
    %c16 = arith.constant 16 : index
    %19 = vector.load %arg6[%c0_27, %c16] : memref<192x108xbf16, #tpu.memory_space<vmem>>, vector<192x4xbf16>
    tpu.vector_store %arg6[%c0_27, %c16], %18 {strides = array<i32>} : memref<192x108xbf16, #tpu.memory_space<vmem>>, vector<192x4xbf16>,
    %c0_28 = arith.constant 0 : index
    %c0_29 = arith.constant 0 : index
    %c1_30 = arith.constant 1 : index
    %c2_31 = arith.constant 2 : index
    %c0_32 = arith.constant 0 : index
    %20 = vector.load %arg2[%c0_28, %c0_29, %c1_30, %c2_31, %c0_32] : memref<1x5x10x10x4xbf16, #tpu.memory_space<vmem>>, vector<1x3x8x8x4xbf16>
    %21 = vector.shape_cast %20 : vector<1x3x8x8x4xbf16> to vector<3x8x8x4xbf16>
    %22 = vector.shape_cast %21 : vector<3x8x8x4xbf16> to vector<192x4xbf16>
    %c0_33 = arith.constant 0 : index
    %c20 = arith.constant 20 : index
    %23 = vector.load %arg6[%c0_33, %c20] : memref<192x108xbf16, #tpu.memory_space<vmem>>, vector<192x4xbf16>
    tpu.vector_store %arg6[%c0_33, %c20], %22 {strides = array<i32>} : memref<192x108xbf16, #tpu.memory_space<vmem>>, vector<192x4xbf16>,
    %c0_34 = arith.constant 0 : index
    %c0_35 = arith.constant 0 : index
    %c2_36 = arith.constant 2 : index
    %c0_37 = arith.constant 0 : index
    %c0_38 = arith.constant 0 : index
    %24 = vector.load %arg2[%c0_34, %c0_35, %c2_36, %c0_37, %c0_38] : memref<1x5x10x10x4xbf16, #tpu.memory_space<vmem>>, vector<1x3x8x8x4xbf16>
    %25 = vector.shape_cast %24 : vector<1x3x8x8x4xbf16> to vector<3x8x8x4xbf16>
    %26 = vector.shape_cast %25 : vector<3x8x8x4xbf16> to vector<192x4xbf16>
    %c0_39 = arith.constant 0 : index
    %c24 = arith.constant 24 : index
    %27 = vector.load %arg6[%c0_39, %c24] : memref<192x108xbf16, #tpu.memory_space<vmem>>, vector<192x4xbf16>
    tpu.vector_store %arg6[%c0_39, %c24], %26 {strides = array<i32>} : memref<192x108xbf16, #tpu.memory_space<vmem>>, vector<192x4xbf16>,
    %c0_40 = arith.constant 0 : index
    %c0_41 = arith.constant 0 : index
    %c2_42 = arith.constant 2 : index
    %c1_43 = arith.constant 1 : index
    %c0_44 = arith.constant 0 : index
    %28 = vector.load %arg2[%c0_40, %c0_41, %c2_42, %c1_43, %c0_44] : memref<1x5x10x10x4xbf16, #tpu.memory_space<vmem>>, vector<1x3x8x8x4xbf16>
    %29 = vector.shape_cast %28 : vector<1x3x8x8x4xbf16> to vector<3x8x8x4xbf16>
    %30 = vector.shape_cast %29 : vector<3x8x8x4xbf16> to vector<192x4xbf16>
    %c0_45 = arith.constant 0 : index
    %c28 = arith.constant 28 : index
    %31 = vector.load %arg6[%c0_45, %c28] : memref<192x108xbf16, #tpu.memory_space<vmem>>, vector<192x4xbf16>
    tpu.vector_store %arg6[%c0_45, %c28], %30 {strides = array<i32>} : memref<192x108xbf16, #tpu.memory_space<vmem>>, vector<192x4xbf16>,
    %c0_46 = arith.constant 0 : index
    %c0_47 = arith.constant 0 : index
    %c2_48 = arith.constant 2 : index
    %c2_49 = arith.constant 2 : index
    %c0_50 = arith.constant 0 : index
    %32 = vector.load %arg2[%c0_46, %c0_47, %c2_48, %c2_49, %c0_50] : memref<1x5x10x10x4xbf16, #tpu.memory_space<vmem>>, vector<1x3x8x8x4xbf16>
    %33 = vector.shape_cast %32 : vector<1x3x8x8x4xbf16> to vector<3x8x8x4xbf16>
    %34 = vector.shape_cast %33 : vector<3x8x8x4xbf16> to vector<192x4xbf16>
    %c0_51 = arith.constant 0 : index
    %c32 = arith.constant 32 : index
    %35 = vector.load %arg6[%c0_51, %c32] : memref<192x108xbf16, #tpu.memory_space<vmem>>, vector<192x4xbf16>
    tpu.vector_store %arg6[%c0_51, %c32], %34 {strides = array<i32>} : memref<192x108xbf16, #tpu.memory_space<vmem>>, vector<192x4xbf16>,
    %c0_52 = arith.constant 0 : index
    %c1_53 = arith.constant 1 : index
    %c0_54 = arith.constant 0 : index
    %c0_55 = arith.constant 0 : index
    %c0_56 = arith.constant 0 : index
    %36 = vector.load %arg2[%c0_52, %c1_53, %c0_54, %c0_55, %c0_56] : memref<1x5x10x10x4xbf16, #tpu.memory_space<vmem>>, vector<1x3x8x8x4xbf16>
    %37 = vector.shape_cast %36 : vector<1x3x8x8x4xbf16> to vector<3x8x8x4xbf16>
    %38 = vector.shape_cast %37 : vector<3x8x8x4xbf16> to vector<192x4xbf16>
    %c0_57 = arith.constant 0 : index
    %c36 = arith.constant 36 : index
    %39 = vector.load %arg6[%c0_57, %c36] : memref<192x108xbf16, #tpu.memory_space<vmem>>, vector<192x4xbf16>
    tpu.vector_store %arg6[%c0_57, %c36], %38 {strides = array<i32>} : memref<192x108xbf16, #tpu.memory_space<vmem>>, vector<192x4xbf16>,
    %c0_58 = arith.constant 0 : index
    %c1_59 = arith.constant 1 : index
    %c0_60 = arith.constant 0 : index
    %c1_61 = arith.constant 1 : index
    %c0_62 = arith.constant 0 : index
    %40 = vector.load %arg2[%c0_58, %c1_59, %c0_60, %c1_61, %c0_62] : memref<1x5x10x10x4xbf16, #tpu.memory_space<vmem>>, vector<1x3x8x8x4xbf16>
    %41 = vector.shape_cast %40 : vector<1x3x8x8x4xbf16> to vector<3x8x8x4xbf16>
    %42 = vector.shape_cast %41 : vector<3x8x8x4xbf16> to vector<192x4xbf16>
    %c0_63 = arith.constant 0 : index
    %c40 = arith.constant 40 : index
    %43 = vector.load %arg6[%c0_63, %c40] : memref<192x108xbf16, #tpu.memory_space<vmem>>, vector<192x4xbf16>
    tpu.vector_store %arg6[%c0_63, %c40], %42 {strides = array<i32>} : memref<192x108xbf16, #tpu.memory_space<vmem>>, vector<192x4xbf16>,
    %c0_64 = arith.constant 0 : index
    %c1_65 = arith.constant 1 : index
    %c0_66 = arith.constant 0 : index
    %c2_67 = arith.constant 2 : index
    %c0_68 = arith.constant 0 : index
    %44 = vector.load %arg2[%c0_64, %c1_65, %c0_66, %c2_67, %c0_68] : memref<1x5x10x10x4xbf16, #tpu.memory_space<vmem>>, vector<1x3x8x8x4xbf16>
    %45 = vector.shape_cast %44 : vector<1x3x8x8x4xbf16> to vector<3x8x8x4xbf16>
    %46 = vector.shape_cast %45 : vector<3x8x8x4xbf16> to vector<192x4xbf16>
    %c0_69 = arith.constant 0 : index
    %c44 = arith.constant 44 : index
    %47 = vector.load %arg6[%c0_69, %c44] : memref<192x108xbf16, #tpu.memory_space<vmem>>, vector<192x4xbf16>
    tpu.vector_store %arg6[%c0_69, %c44], %46 {strides = array<i32>} : memref<192x108xbf16, #tpu.memory_space<vmem>>, vector<192x4xbf16>,
    %c0_70 = arith.constant 0 : index
    %c1_71 = arith.constant 1 : index
    %c1_72 = arith.constant 1 : index
    %c0_73 = arith.constant 0 : index
    %c0_74 = arith.constant 0 : index
    %48 = vector.load %arg2[%c0_70, %c1_71, %c1_72, %c0_73, %c0_74] : memref<1x5x10x10x4xbf16, #tpu.memory_space<vmem>>, vector<1x3x8x8x4xbf16>
    %49 = vector.shape_cast %48 : vector<1x3x8x8x4xbf16> to vector<3x8x8x4xbf16>
    %50 = vector.shape_cast %49 : vector<3x8x8x4xbf16> to vector<192x4xbf16>
    %c0_75 = arith.constant 0 : index
    %c48 = arith.constant 48 : index
    %51 = vector.load %arg6[%c0_75, %c48] : memref<192x108xbf16, #tpu.memory_space<vmem>>, vector<192x4xbf16>
    tpu.vector_store %arg6[%c0_75, %c48], %50 {strides = array<i32>} : memref<192x108xbf16, #tpu.memory_space<vmem>>, vector<192x4xbf16>,
    %c0_76 = arith.constant 0 : index
    %c1_77 = arith.constant 1 : index
    %c1_78 = arith.constant 1 : index
    %c1_79 = arith.constant 1 : index
    %c0_80 = arith.constant 0 : index
    %52 = vector.load %arg2[%c0_76, %c1_77, %c1_78, %c1_79, %c0_80] : memref<1x5x10x10x4xbf16, #tpu.memory_space<vmem>>, vector<1x3x8x8x4xbf16>
    %53 = vector.shape_cast %52 : vector<1x3x8x8x4xbf16> to vector<3x8x8x4xbf16>
    %54 = vector.shape_cast %53 : vector<3x8x8x4xbf16> to vector<192x4xbf16>
    %c0_81 = arith.constant 0 : index
    %c52 = arith.constant 52 : index
    %55 = vector.load %arg6[%c0_81, %c52] : memref<192x108xbf16, #tpu.memory_space<vmem>>, vector<192x4xbf16>
    tpu.vector_store %arg6[%c0_81, %c52], %54 {strides = array<i32>} : memref<192x108xbf16, #tpu.memory_space<vmem>>, vector<192x4xbf16>,
    %c0_82 = arith.constant 0 : index
    %c1_83 = arith.constant 1 : index
    %c1_84 = arith.constant 1 : index
    %c2_85 = arith.constant 2 : index
    %c0_86 = arith.constant 0 : index
    %56 = vector.load %arg2[%c0_82, %c1_83, %c1_84, %c2_85, %c0_86] : memref<1x5x10x10x4xbf16, #tpu.memory_space<vmem>>, vector<1x3x8x8x4xbf16>
    %57 = vector.shape_cast %56 : vector<1x3x8x8x4xbf16> to vector<3x8x8x4xbf16>
    %58 = vector.shape_cast %57 : vector<3x8x8x4xbf16> to vector<192x4xbf16>
    %c0_87 = arith.constant 0 : index
    %c56 = arith.constant 56 : index
    %59 = vector.load %arg6[%c0_87, %c56] : memref<192x108xbf16, #tpu.memory_space<vmem>>, vector<192x4xbf16>
    tpu.vector_store %arg6[%c0_87, %c56], %58 {strides = array<i32>} : memref<192x108xbf16, #tpu.memory_space<vmem>>, vector<192x4xbf16>,
    %c0_88 = arith.constant 0 : index
    %c1_89 = arith.constant 1 : index
    %c2_90 = arith.constant 2 : index
    %c0_91 = arith.constant 0 : index
    %c0_92 = arith.constant 0 : index
    %60 = vector.load %arg2[%c0_88, %c1_89, %c2_90, %c0_91, %c0_92] : memref<1x5x10x10x4xbf16, #tpu.memory_space<vmem>>, vector<1x3x8x8x4xbf16>
    %61 = vector.shape_cast %60 : vector<1x3x8x8x4xbf16> to vector<3x8x8x4xbf16>
    %62 = vector.shape_cast %61 : vector<3x8x8x4xbf16> to vector<192x4xbf16>
    %c0_93 = arith.constant 0 : index
    %c60 = arith.constant 60 : index
    %63 = vector.load %arg6[%c0_93, %c60] : memref<192x108xbf16, #tpu.memory_space<vmem>>, vector<192x4xbf16>
    tpu.vector_store %arg6[%c0_93, %c60], %62 {strides = array<i32>} : memref<192x108xbf16, #tpu.memory_space<vmem>>, vector<192x4xbf16>,
    %c0_94 = arith.constant 0 : index
    %c1_95 = arith.constant 1 : index
    %c2_96 = arith.constant 2 : index
    %c1_97 = arith.constant 1 : index
    %c0_98 = arith.constant 0 : index
    %64 = vector.load %arg2[%c0_94, %c1_95, %c2_96, %c1_97, %c0_98] : memref<1x5x10x10x4xbf16, #tpu.memory_space<vmem>>, vector<1x3x8x8x4xbf16>
    %65 = vector.shape_cast %64 : vector<1x3x8x8x4xbf16> to vector<3x8x8x4xbf16>
    %66 = vector.shape_cast %65 : vector<3x8x8x4xbf16> to vector<192x4xbf16>
    %c0_99 = arith.constant 0 : index
    %c64 = arith.constant 64 : index
    %67 = vector.load %arg6[%c0_99, %c64] : memref<192x108xbf16, #tpu.memory_space<vmem>>, vector<192x4xbf16>
    tpu.vector_store %arg6[%c0_99, %c64], %66 {strides = array<i32>} : memref<192x108xbf16, #tpu.memory_space<vmem>>, vector<192x4xbf16>,
    %c0_100 = arith.constant 0 : index
    %c1_101 = arith.constant 1 : index
    %c2_102 = arith.constant 2 : index
    %c2_103 = arith.constant 2 : index
    %c0_104 = arith.constant 0 : index
    %68 = vector.load %arg2[%c0_100, %c1_101, %c2_102, %c2_103, %c0_104] : memref<1x5x10x10x4xbf16, #tpu.memory_space<vmem>>, vector<1x3x8x8x4xbf16>
    %69 = vector.shape_cast %68 : vector<1x3x8x8x4xbf16> to vector<3x8x8x4xbf16>
    %70 = vector.shape_cast %69 : vector<3x8x8x4xbf16> to vector<192x4xbf16>
    %c0_105 = arith.constant 0 : index
    %c68 = arith.constant 68 : index
    %71 = vector.load %arg6[%c0_105, %c68] : memref<192x108xbf16, #tpu.memory_space<vmem>>, vector<192x4xbf16>
    tpu.vector_store %arg6[%c0_105, %c68], %70 {strides = array<i32>} : memref<192x108xbf16, #tpu.memory_space<vmem>>, vector<192x4xbf16>,
    %c0_106 = arith.constant 0 : index
    %c2_107 = arith.constant 2 : index
    %c0_108 = arith.constant 0 : index
    %c0_109 = arith.constant 0 : index
    %c0_110 = arith.constant 0 : index
    %72 = vector.load %arg2[%c0_106, %c2_107, %c0_108, %c0_109, %c0_110] : memref<1x5x10x10x4xbf16, #tpu.memory_space<vmem>>, vector<1x3x8x8x4xbf16>
    %73 = vector.shape_cast %72 : vector<1x3x8x8x4xbf16> to vector<3x8x8x4xbf16>
    %74 = vector.shape_cast %73 : vector<3x8x8x4xbf16> to vector<192x4xbf16>
    %c0_111 = arith.constant 0 : index
    %c72 = arith.constant 72 : index
    %75 = vector.load %arg6[%c0_111, %c72] : memref<192x108xbf16, #tpu.memory_space<vmem>>, vector<192x4xbf16>
    tpu.vector_store %arg6[%c0_111, %c72], %74 {strides = array<i32>} : memref<192x108xbf16, #tpu.memory_space<vmem>>, vector<192x4xbf16>,
    %c0_112 = arith.constant 0 : index
    %c2_113 = arith.constant 2 : index
    %c0_114 = arith.constant 0 : index
    %c1_115 = arith.constant 1 : index
    %c0_116 = arith.constant 0 : index
    %76 = vector.load %arg2[%c0_112, %c2_113, %c0_114, %c1_115, %c0_116] : memref<1x5x10x10x4xbf16, #tpu.memory_space<vmem>>, vector<1x3x8x8x4xbf16>
    %77 = vector.shape_cast %76 : vector<1x3x8x8x4xbf16> to vector<3x8x8x4xbf16>
    %78 = vector.shape_cast %77 : vector<3x8x8x4xbf16> to vector<192x4xbf16>
    %c0_117 = arith.constant 0 : index
    %c76 = arith.constant 76 : index
    %79 = vector.load %arg6[%c0_117, %c76] : memref<192x108xbf16, #tpu.memory_space<vmem>>, vector<192x4xbf16>
    tpu.vector_store %arg6[%c0_117, %c76], %78 {strides = array<i32>} : memref<192x108xbf16, #tpu.memory_space<vmem>>, vector<192x4xbf16>,
    %c0_118 = arith.constant 0 : index
    %c2_119 = arith.constant 2 : index
    %c0_120 = arith.constant 0 : index
    %c2_121 = arith.constant 2 : index
    %c0_122 = arith.constant 0 : index
    %80 = vector.load %arg2[%c0_118, %c2_119, %c0_120, %c2_121, %c0_122] : memref<1x5x10x10x4xbf16, #tpu.memory_space<vmem>>, vector<1x3x8x8x4xbf16>
    %81 = vector.shape_cast %80 : vector<1x3x8x8x4xbf16> to vector<3x8x8x4xbf16>
    %82 = vector.shape_cast %81 : vector<3x8x8x4xbf16> to vector<192x4xbf16>
    %c0_123 = arith.constant 0 : index
    %c80 = arith.constant 80 : index
    %83 = vector.load %arg6[%c0_123, %c80] : memref<192x108xbf16, #tpu.memory_space<vmem>>, vector<192x4xbf16>
    tpu.vector_store %arg6[%c0_123, %c80], %82 {strides = array<i32>} : memref<192x108xbf16, #tpu.memory_space<vmem>>, vector<192x4xbf16>,
    %c0_124 = arith.constant 0 : index
    %c2_125 = arith.constant 2 : index
    %c1_126 = arith.constant 1 : index
    %c0_127 = arith.constant 0 : index
    %c0_128 = arith.constant 0 : index
    %84 = vector.load %arg2[%c0_124, %c2_125, %c1_126, %c0_127, %c0_128] : memref<1x5x10x10x4xbf16, #tpu.memory_space<vmem>>, vector<1x3x8x8x4xbf16>
    %85 = vector.shape_cast %84 : vector<1x3x8x8x4xbf16> to vector<3x8x8x4xbf16>
    %86 = vector.shape_cast %85 : vector<3x8x8x4xbf16> to vector<192x4xbf16>
    %c0_129 = arith.constant 0 : index
    %c84 = arith.constant 84 : index
    %87 = vector.load %arg6[%c0_129, %c84] : memref<192x108xbf16, #tpu.memory_space<vmem>>, vector<192x4xbf16>
    tpu.vector_store %arg6[%c0_129, %c84], %86 {strides = array<i32>} : memref<192x108xbf16, #tpu.memory_space<vmem>>, vector<192x4xbf16>,
    %c0_130 = arith.constant 0 : index
    %c2_131 = arith.constant 2 : index
    %c1_132 = arith.constant 1 : index
    %c1_133 = arith.constant 1 : index
    %c0_134 = arith.constant 0 : index
    %88 = vector.load %arg2[%c0_130, %c2_131, %c1_132, %c1_133, %c0_134] : memref<1x5x10x10x4xbf16, #tpu.memory_space<vmem>>, vector<1x3x8x8x4xbf16>
    %89 = vector.shape_cast %88 : vector<1x3x8x8x4xbf16> to vector<3x8x8x4xbf16>
    %90 = vector.shape_cast %89 : vector<3x8x8x4xbf16> to vector<192x4xbf16>
    %c0_135 = arith.constant 0 : index
    %c88 = arith.constant 88 : index
    %91 = vector.load %arg6[%c0_135, %c88] : memref<192x108xbf16, #tpu.memory_space<vmem>>, vector<192x4xbf16>
    tpu.vector_store %arg6[%c0_135, %c88], %90 {strides = array<i32>} : memref<192x108xbf16, #tpu.memory_space<vmem>>, vector<192x4xbf16>,
    %c0_136 = arith.constant 0 : index
    %c2_137 = arith.constant 2 : index
    %c1_138 = arith.constant 1 : index
    %c2_139 = arith.constant 2 : index
    %c0_140 = arith.constant 0 : index
    %92 = vector.load %arg2[%c0_136, %c2_137, %c1_138, %c2_139, %c0_140] : memref<1x5x10x10x4xbf16, #tpu.memory_space<vmem>>, vector<1x3x8x8x4xbf16>
    %93 = vector.shape_cast %92 : vector<1x3x8x8x4xbf16> to vector<3x8x8x4xbf16>
    %94 = vector.shape_cast %93 : vector<3x8x8x4xbf16> to vector<192x4xbf16>
    %c0_141 = arith.constant 0 : index
    %c92 = arith.constant 92 : index
    %95 = vector.load %arg6[%c0_141, %c92] : memref<192x108xbf16, #tpu.memory_space<vmem>>, vector<192x4xbf16>
    tpu.vector_store %arg6[%c0_141, %c92], %94 {strides = array<i32>} : memref<192x108xbf16, #tpu.memory_space<vmem>>, vector<192x4xbf16>,
    %c0_142 = arith.constant 0 : index
    %c2_143 = arith.constant 2 : index
    %c2_144 = arith.constant 2 : index
    %c0_145 = arith.constant 0 : index
    %c0_146 = arith.constant 0 : index
    %96 = vector.load %arg2[%c0_142, %c2_143, %c2_144, %c0_145, %c0_146] : memref<1x5x10x10x4xbf16, #tpu.memory_space<vmem>>, vector<1x3x8x8x4xbf16>
    %97 = vector.shape_cast %96 : vector<1x3x8x8x4xbf16> to vector<3x8x8x4xbf16>
    %98 = vector.shape_cast %97 : vector<3x8x8x4xbf16> to vector<192x4xbf16>
    %c0_147 = arith.constant 0 : index
    %c96 = arith.constant 96 : index
    %99 = vector.load %arg6[%c0_147, %c96] : memref<192x108xbf16, #tpu.memory_space<vmem>>, vector<192x4xbf16>
    tpu.vector_store %arg6[%c0_147, %c96], %98 {strides = array<i32>} : memref<192x108xbf16, #tpu.memory_space<vmem>>, vector<192x4xbf16>,
    %c0_148 = arith.constant 0 : index
    %c2_149 = arith.constant 2 : index
    %c2_150 = arith.constant 2 : index
    %c1_151 = arith.constant 1 : index
    %c0_152 = arith.constant 0 : index
    %100 = vector.load %arg2[%c0_148, %c2_149, %c2_150, %c1_151, %c0_152] : memref<1x5x10x10x4xbf16, #tpu.memory_space<vmem>>, vector<1x3x8x8x4xbf16>
    %101 = vector.shape_cast %100 : vector<1x3x8x8x4xbf16> to vector<3x8x8x4xbf16>
    %102 = vector.shape_cast %101 : vector<3x8x8x4xbf16> to vector<192x4xbf16>
    %c0_153 = arith.constant 0 : index
    %c100 = arith.constant 100 : index
    %103 = vector.load %arg6[%c0_153, %c100] : memref<192x108xbf16, #tpu.memory_space<vmem>>, vector<192x4xbf16>
    tpu.vector_store %arg6[%c0_153, %c100], %102 {strides = array<i32>} : memref<192x108xbf16, #tpu.memory_space<vmem>>, vector<192x4xbf16>,
    %c0_154 = arith.constant 0 : index
    %c2_155 = arith.constant 2 : index
    %c2_156 = arith.constant 2 : index
    %c2_157 = arith.constant 2 : index
    %c0_158 = arith.constant 0 : index
    %104 = vector.load %arg2[%c0_154, %c2_155, %c2_156, %c2_157, %c0_158] : memref<1x5x10x10x4xbf16, #tpu.memory_space<vmem>>, vector<1x3x8x8x4xbf16>
    %105 = vector.shape_cast %104 : vector<1x3x8x8x4xbf16> to vector<3x8x8x4xbf16>
    %106 = vector.shape_cast %105 : vector<3x8x8x4xbf16> to vector<192x4xbf16>
    %c0_159 = arith.constant 0 : index
    %c104 = arith.constant 104 : index
    %107 = vector.load %arg6[%c0_159, %c104] : memref<192x108xbf16, #tpu.memory_space<vmem>>, vector<192x4xbf16>
    tpu.vector_store %arg6[%c0_159, %c104], %106 {strides = array<i32>} : memref<192x108xbf16, #tpu.memory_space<vmem>>, vector<192x4xbf16>,
    %c0_160 = arith.constant 0 : index
    %c0_161 = arith.constant 0 : index
    %108 = vector.load %arg6[%c0_160, %c0_161] : memref<192x108xbf16, #tpu.memory_space<vmem>>, vector<192x108xbf16>
    %c0_162 = arith.constant 0 : index
    %c0_163 = arith.constant 0 : index
    %c0_164 = arith.constant 0 : index
    %109 = vector.load %arg3[%c0_162, %c0_163, %c0_164] : memref<1x108x8xbf16, #tpu.memory_space<vmem>>, vector<1x108x8xbf16>
    %110 = vector.shape_cast %109 : vector<1x108x8xbf16> to vector<108x8xbf16>
    %cst = arith.constant dense<0.000000e+00> : vector<192x8xf32>
    %111 = tpu.matmul %108, %110, %cst {dimension_numbers = #tpu.dot_dimension_numbers<[1], [0], [0], [1], [0, 0, 1, 1], [], []>} : vector<192x108xbf16>, vector<108x8xbf16>, vector<192x8xf32> -> vector<192x8xf32>
    %c0_165 = arith.constant 0 : index
    %c0_166 = arith.constant 0 : index
    %c0_167 = arith.constant 0 : index
    %112 = vector.load %arg4[%c0_165, %c0_166, %c0_167] : memref<1x1x8xf32, #tpu.memory_space<vmem>>, vector<1x1x8xf32>
    %113 = vector.shape_cast %112 : vector<1x1x8xf32> to vector<1x8xf32>
    %114 = vector.broadcast %113 : vector<1x8xf32> to vector<192x8xf32>
    %115 = arith.addf %111, %114 : vector<192x8xf32>
    %c0_168 = arith.constant 0 : index
    %c0_169 = arith.constant 0 : index
    %c0_170 = arith.constant 0 : index
    %c0_171 = arith.constant 0 : index
    %116 = vector.load %arg5[%c0_168, %c0_169, %c0_170, %c0_171] : memref<1x1x192x8xf32, #tpu.memory_space<vmem>>, vector<1x1x192x8xf32>
    %117 = vector.shape_cast %116 : vector<1x1x192x8xf32> to vector<192x8xf32>
    %118 = vector.shape_cast %115 : vector<192x8xf32> to vector<1x1x192x8xf32>
    tpu.vector_store %arg5[%c0_168, %c0_169, %c0_170, %c0_171], %118 {strides = array<i32>} : memref<1x1x192x8xf32, #tpu.memory_space<vmem>>, vector<1x1x192x8xf32>,
    return
  }
  func.func @transform_0(%arg0: i32, %arg1: i32) -> (i32, i32, i32, i32, i32) {
    %c3_i32 = arith.constant 3 : i32
    %0 = arith.muli %arg0, %c3_i32 : i32
    %1 = arith.addi %0, %arg1 : i32
    %c0_i32 = arith.constant 0 : i32
    %c0_i32_0 = arith.constant 0 : i32
    %c0_i32_1 = arith.constant 0 : i32
    %c0_i32_2 = arith.constant 0 : i32
    %c0_i32_3 = arith.constant 0 : i32
    return %1, %c0_i32, %c0_i32_0, %c0_i32_1, %c0_i32_2 : i32, i32, i32, i32, i32
  }
  func.func @transform_1(%arg0: i32, %arg1: i32) -> (i32, i32, i32) {
    %c0_i32 = arith.constant 0 : i32
    %c0_i32_0 = arith.constant 0 : i32
    %c0_i32_1 = arith.constant 0 : i32
    return %arg0, %c0_i32, %c0_i32_0 : i32, i32, i32
  }
  func.func @transform_2(%arg0: i32, %arg1: i32) -> (i32, i32, i32) {
    %c0_i32 = arith.constant 0 : i32
    %c0_i32_0 = arith.constant 0 : i32
    %c0_i32_1 = arith.constant 0 : i32
    return %arg0, %c0_i32, %c0_i32_0 : i32, i32, i32
  }
  func.func @transform_3(%arg0: i32, %arg1: i32) -> (i32, i32, i32, i32) {
    %c0_i32 = arith.constant 0 : i32
    %c0_i32_0 = arith.constant 0 : i32
    %c0_i32_1 = arith.constant 0 : i32
    return %arg0, %arg1, %c0_i32, %c0_i32_0 : i32, i32, i32, i32
  }
}

</mosaic_0001>

<llo_original>
// kernel: tpu_custom_call.1
$region0: #{tpu_custom_call.1}
  #allocation0 [shape = 'u32[]', space=smem, size = 0x4, offset = 0x4, fixed_abs, tag = 'smem constant byte address 0x4 - core index']
  #allocation1 [shape = 'u32[144,128]{1,0:T(1,128)}', space=vmem, size = 0x12000, scoped, tag = 'internal scratch']
  #allocation2 [shape = 'bf16[192,108]{1,0:T(8,128)(2,1)}', space=vmem, size = 0xc000, scoped, tag = 'scratch operand']
  %s0 = inlined_call_operand.vmem [shape: bf16[6,5,10,10,4], index: 0, kind: input, shape index: {}]
  %s1 = inlined_call_operand.vmem [shape: bf16[2,108,8], index: 1, kind: input, shape index: {}]
  %s2 = inlined_call_operand.vmem [shape: f32[2,1,8], index: 2, kind: input, shape index: {}]
  %s3 = inlined_call_operand.vmem [shape: f32[2,3,192,8], index: 3, kind: output, shape index: {}]
  %s4 = sld [smem:[#allocation0]]
  $region45: #{tpu_custom_call.1} parent=0
    _
  %s6 = ssub.s32 1, %s4
  %s7 = scalar_select 0, %s6, %s4
  loop: start=0, step=1, limit=8
  $region2: #{tpu_custom_call.1} parent=0 // loop_pre_header
    _
  $region3: #{tpu_custom_call.1} parent=0 // loop_header
    %s9 = sphi 0, %s13
    %p10 = scmp.ge.s32.totalorder %s9, 8
    %s16 = sphi 0, %s28
    %s17 = sphi 0, %s24
    %s18 = sphi 0, %s16
    %s19 = sphi 0, %s17
    %s20 = sphi 0, %s18
    %s21 = sphi 0, %s19
    %s35 = sphi 0, %s37
    %s38 = sphi 0, %s35
    %s39 = sphi 0, %s38
    %s55 = sphi 0, %s39
    %s61 = sphi 0, %s63
    %s64 = sphi 0, %s61
    %s65 = sphi 0, %s64
    %s81 = sphi 0, %s65
    %s87 = sphi 0, %s89
    %s90 = sphi 0, %s87
    %s91 = sphi 0, %s90
    %s107 = sphi 0, %s91
    %s115 = sphi 0, %s117
    %s118 = sphi 0, %s115
    %s119 = sphi 0, %s118
    %s135 = sphi 0, %s119
  $region4: #{tpu_custom_call.1} parent=0 // loop_header_branch
    %12 = sbr.rel (%p10) target = $region8
  $region5: #{tpu_custom_call.1} parent=0 // loop_body
    %s14 = ssub.s32 %s9, 1
    %s15 = ssub.s32 %s9, 2
    %s22 = sadd.s32 1, %s17
    %p23 = scmp.ge.s32.totalorder %s22, 3
    %s24 = scalar_select %p23, 0, %s22
    %s25 = sadd.s32 1, %s16
    %s26 = scalar_select %p23, %s25, %s16
    %p27 = scmp.ge.s32.totalorder %s26, 2
    %s28 = scalar_select %p27, 0, %s26
    %s29 = smul.u32 %s16, 3
    %s30 = sadd.s32 %s29, %s17
    %s31 = smul.u32 %s28, 3
    %s32 = sadd.s32 %s31, %s24
    %s33 = ssub.s32 %s30, %s32
    %p34 = scmp.eq.s32.totalorder %s33, 0
    %s36 = sadd.s32 %s35, 1
    %s37 = scalar_select %p34, %s35, %s36
    %p40 = pneg %p34
    %p41 = scmp.eq.s32.totalorder %s9, 5
    %p42 = por %p40, %p41
    %p43 = scmp.ne.s32.totalorder %s35, %s38
    %p44 = scmp.eq.s32.totalorder %s9, 0
    %p45 = por %p43, %p44
    %p46 = scmp.ne.s32.totalorder %s35, %s38
    %p47 = scmp.eq.s32.totalorder %s14, 5
    %p48 = por %p46, %p47
    %p49 = scmp.ne.s32.totalorder %s38, %s39
    %p50 = scmp.eq.s32.totalorder %s14, 0
    %p51 = por %p49, %p50
    %p52 = scmp.ne.s32.totalorder %s38, %s39
    %p53 = scmp.eq.s32.totalorder %s15, 5
    %p54 = por %p52, %p53
    %p56 = scmp.ne.s32.totalorder %s39, %s55
    %p57 = scmp.eq.s32.totalorder %s15, 0
    %p58 = por %p56, %p57
    %s59 = ssub.s32 %s16, %s28
    %p60 = scmp.eq.s32.totalorder %s59, 0
    %s62 = sadd.s32 %s61, 1
    %s63 = scalar_select %p60, %s61, %s62
    %p66 = pneg %p60
    %p67 = scmp.eq.s32.totalorder %s9, 5
    %p68 = por %p66, %p67
    %p69 = scmp.ne.s32.totalorder %s61, %s64
    %p70 = scmp.eq.s32.totalorder %s9, 0
    %p71 = por %p69, %p70
    %p72 = scmp.ne.s32.totalorder %s61, %s64
    %p73 = scmp.eq.s32.totalorder %s14, 5
    %p74 = por %p72, %p73
    %p75 = scmp.ne.s32.totalorder %s64, %s65
    %p76 = scmp.eq.s32.totalorder %s14, 0
    %p77 = por %p75, %p76
    %p78 = scmp.ne.s32.totalorder %s64, %s65
    %p79 = scmp.eq.s32.totalorder %s15, 5
    %p80 = por %p78, %p79
    %p82 = scmp.ne.s32.totalorder %s65, %s81
    %p83 = scmp.eq.s32.totalorder %s15, 0
    %p84 = por %p82, %p83
    %s85 = ssub.s32 %s16, %s28
    %p86 = scmp.eq.s32.totalorder %s85, 0
    %s88 = sadd.s32 %s87, 1
    %s89 = scalar_select %p86, %s87, %s88
    %p92 = pneg %p86
    %p93 = scmp.eq.s32.totalorder %s9, 5
    %p94 = por %p92, %p93
    %p95 = scmp.ne.s32.totalorder %s87, %s90
    %p96 = scmp.eq.s32.totalorder %s9, 0
    %p97 = por %p95, %p96
    %p98 = scmp.ne.s32.totalorder %s87, %s90
    %p99 = scmp.eq.s32.totalorder %s14, 5
    %p100 = por %p98, %p99
    %p101 = scmp.ne.s32.totalorder %s90, %s91
    %p102 = scmp.eq.s32.totalorder %s14, 0
    %p103 = por %p101, %p102
    %p104 = scmp.ne.s32.totalorder %s90, %s91
    %p105 = scmp.eq.s32.totalorder %s15, 5
    %p106 = por %p104, %p105
    %p108 = scmp.ne.s32.totalorder %s91, %s107
    %p109 = scmp.eq.s32.totalorder %s15, 0
    %p110 = por %p108, %p109
    %s111 = ssub.s32 %s16, %s28
    %s112 = ssub.s32 %s17, %s24
    %s113 = sor.u32 %s111, %s112
    %p114 = scmp.eq.s32.totalorder %s113, 0
    %s116 = sadd.s32 %s115, 1
    %s117 = scalar_select %p114, %s115, %s116
    %p120 = pneg %p114
    %p121 = scmp.eq.s32.totalorder %s9, 5
    %p122 = por %p120, %p121
    %p123 = scmp.ne.s32.totalorder %s115, %s118
    %p124 = scmp.eq.s32.totalorder %s9, 0
    %p125 = por %p123, %p124
    %p126 = scmp.ne.s32.totalorder %s115, %s118
    %p127 = scmp.eq.s32.totalorder %s14, 5
    %p128 = por %p126, %p127
    %p129 = scmp.ne.s32.totalorder %s118, %s119
    %p130 = scmp.eq.s32.totalorder %s14, 0
    %p131 = por %p129, %p130
    %p132 = scmp.ne.s32.totalorder %s118, %s119
    %p133 = scmp.eq.s32.totalorder %s15, 5
    %p134 = por %p132, %p133
    %p136 = scmp.ne.s32.totalorder %s119, %s135
    %p137 = scmp.eq.s32.totalorder %s15, 0
    %p138 = por %p136, %p137
    %p139 = scmp.le.s32.totalorder 1, %s9
    %p140 = scmp.lt.s32.totalorder %s9, 7
    %p141 = pnand %p139, %p140
    %p142 = pneg %p141
    // Predicated region
    $region9: #{tpu_custom_call.1} parent=5 // pred_check
      _
    $region10: #{tpu_custom_call.1} parent=5 // pred_check_branch
      %144 = sbr.rel (%p141) target = $region12
    $region11: #{tpu_custom_call.1} parent=5 // pred_region
      %s145 = ssub.s32 %s9, 1
    $region12: #{tpu_custom_call.1} parent=5 // pred_fallthru
      _
    %p146 = scmp.lt.s32.totalorder %s9, 6
    // Predicated region
    $region13: #{tpu_custom_call.1} parent=5 // pred_check
      %p147 = pneg %p146
    $region14: #{tpu_custom_call.1} parent=5 // pred_check_branch
      %149 = sbr.rel (%p147) target = $region16
    $region15: #{tpu_custom_call.1} parent=5 // pred_region
      // Predicated region
      $region17: #{tpu_custom_call.1} parent=15 // pred_check
        %p150 = pneg %p45
      $region18: #{tpu_custom_call.1} parent=15 // pred_check_branch
        %152 = sbr.rel (%p150) target = $region20
      $region19: #{tpu_custom_call.1} parent=15 // pred_region
        %s153 = smul.u32 %s16, 3
        %s154 = sadd.s32 %s153, %s17
        %p155 = scmp.lt.s32.totalorder %s154, 5
        %s156 = scalar_select %p155, %s154, 5
        %s157 = smul.addr %s156, 100
        %s158 = smul.addr %s157, 4
        %s159 = scalar_lea.vmem %s0, %s158
        %s160 = smul.u32 %s16, 3
        %s161 = sadd.s32 %s160, %s17
      $region20: #{tpu_custom_call.1} parent=15 // pred_fallthru
        _
      // Predicated region
      $region21: #{tpu_custom_call.1} parent=15 // pred_check
        %p162 = pneg %p71
      $region22: #{tpu_custom_call.1} parent=15 // pred_check_branch
        %164 = sbr.rel (%p162) target = $region24
      $region23: #{tpu_custom_call.1} parent=15 // pred_region
        %p165 = scmp.lt.s32.totalorder %s16, 1
        %s166 = scalar_select %p165, %s16, 1
        %s167 = smul.addr %s166, 14
        %s168 = smul.addr %s167, 4
        %s169 = scalar_lea.vmem %s1, %s168
      $region24: #{tpu_custom_call.1} parent=15 // pred_fallthru
        _
      // Predicated region
      $region25: #{tpu_custom_call.1} parent=15 // pred_check
        %p170 = pneg %p97
      $region26: #{tpu_custom_call.1} parent=15 // pred_check_branch
        %172 = sbr.rel (%p170) target = $region28
      $region27: #{tpu_custom_call.1} parent=15 // pred_region
        %p173 = scmp.lt.s32.totalorder %s16, 1
        %s174 = scalar_select %p173, %s16, 1
        %s175 = scalar_lea.vmem %s2, %s174
      $region28: #{tpu_custom_call.1} parent=15 // pred_fallthru
        _
    $region16: #{tpu_custom_call.1} parent=5 // pred_fallthru
      _
    %p176 = scmp.le.s32.totalorder 1, %s9
    %p177 = scmp.lt.s32.totalorder %s9, 7
    %p178 = pnand %p176, %p177
    %p179 = pneg %p178
    // Predicated region
    $region29: #{tpu_custom_call.1} parent=5 // pred_check
      _
    $region30: #{tpu_custom_call.1} parent=5 // pred_check_branch
      %181 = sbr.rel (%p178) target = $region32
    $region31: #{tpu_custom_call.1} parent=5 // pred_region
      %s182 = ssub.s32 %s9, 1
      %s183 = smul.u32 %s18, 3
      %s184 = sadd.s32 %s183, %s19
      %p185 = scmp.lt.s32.totalorder %s184, 5
      %s186 = scalar_select %p185, %s184, 5
      %s187 = smul.addr %s186, 100
      %s188 = smul.addr %s187, 4
      %s189 = scalar_lea.vmem %s0, %s188
      %p190 = pneg %p51
      %p191 = pneg %p48
      %p192 = scmp.lt.s32.totalorder %s18, 1
      %s193 = scalar_select %p192, %s18, 1
      %s194 = smul.addr %s193, 14
      %s195 = smul.addr %s194, 4
      %s196 = scalar_lea.vmem %s1, %s195
      %p197 = pneg %p77
      %p198 = pneg %p74
      %p199 = scmp.lt.s32.totalorder %s18, 1
      %s200 = scalar_select %p199, %s18, 1
      %s201 = scalar_lea.vmem %s2, %s200
      %p202 = pneg %p103
      %p203 = pneg %p100
      %p204 = pneg %p131
      %p205 = pneg %p128
      %p206 = scmp.lt.s32.totalorder %s18, 1
      %s207 = scalar_select %p206, %s18, 1
      %p208 = scmp.lt.s32.totalorder %s19, 2
      %s209 = scalar_select %p208, %s19, 2
      %s210 = smul.addr %s209, 24
      %s211 = smul.addr %s207, 72
      %s212 = sadd.s32 %s210, %s211
      %s213 = smul.addr %s212, 8
      %s214 = scalar_lea.vmem %s3, %s213
      %s215 = smul.u32 %s18, 3
      %s216 = sadd.s32 %s215, %s19
      %p217 = scmp.lt.s32.totalorder %s216, 5
      %s218 = scalar_select %p217, %s216, 5
      %s219 = smul.addr %s218, 100
      %s220 = smul.addr %s219, 4
      %s221 = scalar_lea.vmem %s0, %s220
      %s222 = smul.u32 %s18, 3
      %s223 = sadd.s32 %s222, %s19
      %p224 = scmp.lt.s32.totalorder %s18, 1
      %s225 = scalar_select %p224, %s18, 1
      %s226 = smul.addr %s225, 14
      %s227 = smul.addr %s226, 4
      %s228 = scalar_lea.vmem %s1, %s227
      %p229 = scmp.lt.s32.totalorder %s18, 1
      %s230 = scalar_select %p229, %s18, 1
      %s231 = scalar_lea.vmem %s2, %s230
      %p232 = scmp.lt.s32.totalorder %s18, 1
      %s233 = scalar_select %p232, %s18, 1
      %p234 = scmp.lt.s32.totalorder %s19, 2
      %s235 = scalar_select %p234, %s19, 2
      %s236 = smul.addr %s235, 24
      %s237 = smul.addr %s233, 72
      %s238 = sadd.s32 %s236, %s237
      %s239 = smul.addr %s238, 8
      %s240 = scalar_lea.vmem %s3, %s239
      %v242 = vld [vmem:[%s221] sm:$0xf]
      %v243 = vld [vmem:[%s221 + $0x8] sm:$0xf]
      %v244 = vld [vmem:[%s221 + $0x10] sm:$0xf]
      %v245 = vld [vmem:[%s221 + $0x18] sm:$0xf]
      %v246 = vld [vmem:[%s221 + $0x20] sm:$0xf]
      %v247 = vld [vmem:[%s221 + $0x28] sm:$0xf]
      %v248 = vld [vmem:[%s221 + $0x30] sm:$0xf]
      %v249 = vld [vmem:[%s221 + $0x38] sm:$0xf]
      %v250 = vld [vmem:[%s221 + $0x50] sm:$0xf]
      %v251 = vld [vmem:[%s221 + $0x58] sm:$0xf]
      %v252 = vld [vmem:[%s221 + $0x60] sm:$0xf]
      %v253 = vld [vmem:[%s221 + $0x68] sm:$0xf]
      %v254 = vld [vmem:[%s221 + $0x70] sm:$0xf]
      %v255 = vld [vmem:[%s221 + $0x78] sm:$0xf]
      %v256 = vld [vmem:[%s221 + $0x80] sm:$0xf]
      %v257 = vld [vmem:[%s221 + $0x88] sm:$0xf]
      %v258 = vld [vmem:[%s221 + $0xa0] sm:$0xf]
      %v259 = vld [vmem:[%s221 + $0xa8] sm:$0xf]
      %v260 = vld [vmem:[%s221 + $0xb0] sm:$0xf]
      %v261 = vld [vmem:[%s221 + $0xb8] sm:$0xf]
      %v262 = vld [vmem:[%s221 + $0xc0] sm:$0xf]
      %v263 = vld [vmem:[%s221 + $0xc8] sm:$0xf]
      %v264 = vld [vmem:[%s221 + $0xd0] sm:$0xf]
      %v265 = vld [vmem:[%s221 + $0xd8] sm:$0xf]
      %vm266 = vcmask 27648
      %267 = vst.msk [vmem:[#allocation2] sm:$0xf] %vm266, %v242
      %268 = vst.msk [vmem:[#allocation2 + $0x4] sm:$0xf] %vm266, %v243
      %269 = vst.msk [vmem:[#allocation2 + $0x8] sm:$0xf] %vm266, %v244
      %270 = vst.msk [vmem:[#allocation2 + $0xc] sm:$0xf] %vm266, %v245
      %271 = vst.msk [vmem:[#allocation2 + $0x10] sm:$0xf] %vm266, %v246
      %272 = vst.msk [vmem:[#allocation2 + $0x14] sm:$0xf] %vm266, %v247
      %273 = vst.msk [vmem:[#allocation2 + $0x18] sm:$0xf] %vm266, %v248
      %274 = vst.msk [vmem:[#allocation2 + $0x1c] sm:$0xf] %vm266, %v249
      %275 = vst.msk [vmem:[#allocation2 + $0x20] sm:$0xf] %vm266, %v250
      %276 = vst.msk [vmem:[#allocation2 + $0x24] sm:$0xf] %vm266, %v251
      %277 = vst.msk [vmem:[#allocation2 + $0x28] sm:$0xf] %vm266, %v252
      %278 = vst.msk [vmem:[#allocation2 + $0x2c] sm:$0xf] %vm266, %v253
      %279 = vst.msk [vmem:[#allocation2 + $0x30] sm:$0xf] %vm266, %v254
      %280 = vst.msk [vmem:[#allocation2 + $0x34] sm:$0xf] %vm266, %v255
      %281 = vst.msk [vmem:[#allocation2 + $0x38] sm:$0xf] %vm266, %v256
      %282 = vst.msk [vmem:[#allocation2 + $0x3c] sm:$0xf] %vm266, %v257
      %283 = vst.msk [vmem:[#allocation2 + $0x40] sm:$0xf] %vm266, %v258
      %284 = vst.msk [vmem:[#allocation2 + $0x44] sm:$0xf] %vm266, %v259
      %285 = vst.msk [vmem:[#allocation2 + $0x48] sm:$0xf] %vm266, %v260
      %286 = vst.msk [vmem:[#allocation2 + $0x4c] sm:$0xf] %vm266, %v261
      %287 = vst.msk [vmem:[#allocation2 + $0x50] sm:$0xf] %vm266, %v262
      %288 = vst.msk [vmem:[#allocation2 + $0x54] sm:$0xf] %vm266, %v263
      %289 = vst.msk [vmem:[#allocation2 + $0x58] sm:$0xf] %vm266, %v264
      %290 = vst.msk [vmem:[#allocation2 + $0x5c] sm:$0xf] %vm266, %v265
      %v291 = vld [vmem:[%s221] sm:$0xf]
      %v292 = vld [vmem:[%s221 + $0x4] sm:$0x1]
      %v293 = vld [vmem:[%s221 + $0x8] sm:$0xf]
      %v294 = vld [vmem:[%s221 + $0xc] sm:$0x1]
      %v295 = vld [vmem:[%s221 + $0x10] sm:$0xf]
      %v296 = vld [vmem:[%s221 + $0x14] sm:$0x1]
      %v297 = vld [vmem:[%s221 + $0x18] sm:$0xf]
      %v298 = vld [vmem:[%s221 + $0x1c] sm:$0x1]
      %v299 = vld [vmem:[%s221 + $0x20] sm:$0xf]
      %v300 = vld [vmem:[%s221 + $0x24] sm:$0x1]
      %v301 = vld [vmem:[%s221 + $0x28] sm:$0xf]
      %v302 = vld [vmem:[%s221 + $0x2c] sm:$0x1]
      %v303 = vld [vmem:[%s221 + $0x30] sm:$0xf]
      %v304 = vld [vmem:[%s221 + $0x34] sm:$0x1]
      %v305 = vld [vmem:[%s221 + $0x38] sm:$0xf]
      %v306 = vld [vmem:[%s221 + $0x3c] sm:$0x1]
      %v307 = vld [vmem:[%s221 + $0x50] sm:$0xf]
      %v308 = vld [vmem:[%s221 + $0x54] sm:$0x1]
      %v309 = vld [vmem:[%s221 + $0x58] sm:$0xf]
      %v310 = vld [vmem:[%s221 + $0x5c] sm:$0x1]
      %v311 = vld [vmem:[%s221 + $0x60] sm:$0xf]
      %v312 = vld [vmem:[%s221 + $0x64] sm:$0x1]
      %v313 = vld [vmem:[%s221 + $0x68] sm:$0xf]
      %v314 = vld [vmem:[%s221 + $0x6c] sm:$0x1]
      %v315 = vld [vmem:[%s221 + $0x70] sm:$0xf]
      %v316 = vld [vmem:[%s221 + $0x74] sm:$0x1]
      %v317 = vld [vmem:[%s221 + $0x78] sm:$0xf]
      %v318 = vld [vmem:[%s221 + $0x7c] sm:$0x1]
      %v319 = vld [vmem:[%s221 + $0x80] sm:$0xf]
      %v320 = vld [vmem:[%s221 + $0x84] sm:$0x1]
      %v321 = vld [vmem:[%s221 + $0x88] sm:$0xf]
      %v322 = vld [vmem:[%s221 + $0x8c] sm:$0x1]
      %v323 = vld [vmem:[%s221 + $0xa0] sm:$0xf]
      %v324 = vld [vmem:[%s221 + $0xa4] sm:$0x1]
      %v325 = vld [vmem:[%s221 + $0xa8] sm:$0xf]
      %v326 = vld [vmem:[%s221 + $0xac] sm:$0x1]
      %v327 = vld [vmem:[%s221 + $0xb0] sm:$0xf]
      %v328 = vld [vmem:[%s221 + $0xb4] sm:$0x1]
      %v329 = vld [vmem:[%s221 + $0xb8] sm:$0xf]
      %v330 = vld [vmem:[%s221 + $0xbc] sm:$0x1]
      %v331 = vld [vmem:[%s221 + $0xc0] sm:$0xf]
      %v332 = vld [vmem:[%s221 + $0xc4] sm:$0x1]
      %v333 = vld [vmem:[%s221 + $0xc8] sm:$0xf]
      %v334 = vld [vmem:[%s221 + $0xcc] sm:$0x1]
      %v335 = vld [vmem:[%s221 + $0xd0] sm:$0xf]
      %v336 = vld [vmem:[%s221 + $0xd4] sm:$0x1]
      %v337 = vld [vmem:[%s221 + $0xd8] sm:$0xf]
      %v338 = vld [vmem:[%s221 + $0xdc] sm:$0x1]
      %vm339 = vsmask.f32 3328
      %vm340 = vsmask.f32 7440
      %vm341 = vmor %vm339, %vm340
      %v343 = vshrl.u32 %v291, 16
      %v345 = vrot.slane %v343, 4
      %v346 = vshll.u32 %v291, 16
      %v348 = vrot.slane %v346, 5
      %v349 = vor.u32 %v345, %v348
      %v350 = vrot.slane %v349, 4
      %v352 = vshll.u32 %v292, 16
      %v354 = vrot.slane %v352, 5
      %v355 = vsel %vm341, %v350, %v354
      %v357 = vshrl.u32 %v293, 16
      %v359 = vrot.slane %v357, 4
      %v360 = vshll.u32 %v293, 16
      %v362 = vrot.slane %v360, 5
      %v363 = vor.u32 %v359, %v362
      %v364 = vrot.slane %v363, 4
      %v366 = vshll.u32 %v294, 16
      %v368 = vrot.slane %v366, 5
      %v369 = vsel %vm341, %v364, %v368
      %v371 = vshrl.u32 %v295, 16
      %v373 = vrot.slane %v371, 4
      %v374 = vshll.u32 %v295, 16
      %v376 = vrot.slane %v374, 5
      %v377 = vor.u32 %v373, %v376
      %v378 = vrot.slane %v377, 4
      %v380 = vshll.u32 %v296, 16
      %v382 = vrot.slane %v380, 5
      %v383 = vsel %vm341, %v378, %v382
      %v385 = vshrl.u32 %v297, 16
      %v387 = vrot.slane %v385, 4
      %v388 = vshll.u32 %v297, 16
      %v390 = vrot.slane %v388, 5
      %v391 = vor.u32 %v387, %v390
      %v392 = vrot.slane %v391, 4
      %v394 = vshll.u32 %v298, 16
      %v396 = vrot.slane %v394, 5
      %v397 = vsel %vm341, %v392, %v396
      %v399 = vshrl.u32 %v299, 16
      %v401 = vrot.slane %v399, 4
      %v402 = vshll.u32 %v299, 16
      %v404 = vrot.slane %v402, 5
      %v405 = vor.u32 %v401, %v404
      %v406 = vrot.slane %v405, 4
      %v408 = vshll.u32 %v300, 16
      %v410 = vrot.slane %v408, 5
      %v411 = vsel %vm341, %v406, %v410
      %v413 = vshrl.u32 %v301, 16
      %v415 = vrot.slane %v413, 4
      %v416 = vshll.u32 %v301, 16
      %v418 = vrot.slane %v416, 5
      %v419 = vor.u32 %v415, %v418
      %v420 = vrot.slane %v419, 4
      %v422 = vshll.u32 %v302, 16
      %v424 = vrot.slane %v422, 5
      %v425 = vsel %vm341, %v420, %v424
      %v427 = vshrl.u32 %v303, 16
      %v429 = vrot.slane %v427, 4
      %v430 = vshll.u32 %v303, 16
      %v432 = vrot.slane %v430, 5
      %v433 = vor.u32 %v429, %v432
      %v434 = vrot.slane %v433, 4
      %v436 = vshll.u32 %v304, 16
      %v438 = vrot.slane %v436, 5
      %v439 = vsel %vm341, %v434, %v438
      %v441 = vshrl.u32 %v305, 16
      %v443 = vrot.slane %v441, 4
      %v444 = vshll.u32 %v305, 16
      %v446 = vrot.slane %v444, 5
      %v447 = vor.u32 %v443, %v446
      %v448 = vrot.slane %v447, 4
      %v450 = vshll.u32 %v306, 16
      %v452 = vrot.slane %v450, 5
      %v453 = vsel %vm341, %v448, %v452
      %v455 = vshrl.u32 %v307, 16
      %v457 = vrot.slane %v455, 4
      %v458 = vshll.u32 %v307, 16
      %v460 = vrot.slane %v458, 5
      %v461 = vor.u32 %v457, %v460
      %v462 = vrot.slane %v461, 4
      %v464 = vshll.u32 %v308, 16
      %v466 = vrot.slane %v464, 5
      %v467 = vsel %vm341, %v462, %v466
      %v469 = vshrl.u32 %v309, 16
      %v471 = vrot.slane %v469, 4
      %v472 = vshll.u32 %v309, 16
      %v474 = vrot.slane %v472, 5
      %v475 = vor.u32 %v471, %v474
      %v476 = vrot.slane %v475, 4
      %v478 = vshll.u32 %v310, 16
      %v480 = vrot.slane %v478, 5
      %v481 = vsel %vm341, %v476, %v480
      %v483 = vshrl.u32 %v311, 16
      %v485 = vrot.slane %v483, 4
      %v486 = vshll.u32 %v311, 16
      %v488 = vrot.slane %v486, 5
      %v489 = vor.u32 %v485, %v488
      %v490 = vrot.slane %v489, 4
      %v492 = vshll.u32 %v312, 16
      %v494 = vrot.slane %v492, 5
      %v495 = vsel %vm341, %v490, %v494
      %v497 = vshrl.u32 %v313, 16
      %v499 = vrot.slane %v497, 4
      %v500 = vshll.u32 %v313, 16
      %v502 = vrot.slane %v500, 5
      %v503 = vor.u32 %v499, %v502
      %v504 = vrot.slane %v503, 4
      %v506 = vshll.u32 %v314, 16
      %v508 = vrot.slane %v506, 5
      %v509 = vsel %vm341, %v504, %v508
      %v511 = vshrl.u32 %v315, 16
      %v513 = vrot.slane %v511, 4
      %v514 = vshll.u32 %v315, 16
      %v516 = vrot.slane %v514, 5
      %v517 = vor.u32 %v513, %v516
      %v518 = vrot.slane %v517, 4
      %v520 = vshll.u32 %v316, 16
      %v522 = vrot.slane %v520, 5
      %v523 = vsel %vm341, %v518, %v522
      %v525 = vshrl.u32 %v317, 16
      %v527 = vrot.slane %v525, 4
      %v528 = vshll.u32 %v317, 16
      %v530 = vrot.slane %v528, 5
      %v531 = vor.u32 %v527, %v530
      %v532 = vrot.slane %v531, 4
      %v534 = vshll.u32 %v318, 16
      %v536 = vrot.slane %v534, 5
      %v537 = vsel %vm341, %v532, %v536
      %v539 = vshrl.u32 %v319, 16
      %v541 = vrot.slane %v539, 4
      %v542 = vshll.u32 %v319, 16
      %v544 = vrot.slane %v542, 5
      %v545 = vor.u32 %v541, %v544
      %v546 = vrot.slane %v545, 4
      %v548 = vshll.u32 %v320, 16
      %v550 = vrot.slane %v548, 5
      %v551 = vsel %vm341, %v546, %v550
      %v553 = vshrl.u32 %v321, 16
      %v555 = vrot.slane %v553, 4
      %v556 = vshll.u32 %v321, 16
      %v558 = vrot.slane %v556, 5
      %v559 = vor.u32 %v555, %v558
      %v560 = vrot.slane %v559, 4
      %v562 = vshll.u32 %v322, 16
      %v564 = vrot.slane %v562, 5
      %v565 = vsel %vm341, %v560, %v564
      %v567 = vshrl.u32 %v323, 16
      %v569 = vrot.slane %v567, 4
      %v570 = vshll.u32 %v323, 16
      %v572 = vrot.slane %v570, 5
      %v573 = vor.u32 %v569, %v572
      %v574 = vrot.slane %v573, 4
      %v576 = vshll.u32 %v324, 16
      %v578 = vrot.slane %v576, 5
      %v579 = vsel %vm341, %v574, %v578
      %v581 = vshrl.u32 %v325, 16
      %v583 = vrot.slane %v581, 4
      %v584 = vshll.u32 %v325, 16
      %v586 = vrot.slane %v584, 5
      %v587 = vor.u32 %v583, %v586
      %v588 = vrot.slane %v587, 4
      %v590 = vshll.u32 %v326, 16
      %v592 = vrot.slane %v590, 5
      %v593 = vsel %vm341, %v588, %v592
      %v595 = vshrl.u32 %v327, 16
      %v597 = vrot.slane %v595, 4
      %v598 = vshll.u32 %v327, 16
      %v600 = vrot.slane %v598, 5
      %v601 = vor.u32 %v597, %v600
      %v602 = vrot.slane %v601, 4
      %v604 = vshll.u32 %v328, 16
      %v606 = vrot.slane %v604, 5
      %v607 = vsel %vm341, %v602, %v606
      %v609 = vshrl.u32 %v329, 16
      %v611 = vrot.slane %v609, 4
      %v612 = vshll.u32 %v329, 16
      %v614 = vrot.slane %v612, 5
      %v615 = vor.u32 %v611, %v614
      %v616 = vrot.slane %v615, 4
      %v618 = vshll.u32 %v330, 16
      %v620 = vrot.slane %v618, 5
      %v621 = vsel %vm341, %v616, %v620
      %v623 = vshrl.u32 %v331, 16
      %v625 = vrot.slane %v623, 4
      %v626 = vshll.u32 %v331, 16
      %v628 = vrot.slane %v626, 5
      %v629 = vor.u32 %v625, %v628
      %v630 = vrot.slane %v629, 4
      %v632 = vshll.u32 %v332, 16
      %v634 = vrot.slane %v632, 5
      %v635 = vsel %vm341, %v630, %v634
      %v637 = vshrl.u32 %v333, 16
      %v639 = vrot.slane %v637, 4
      %v640 = vshll.u32 %v333, 16
      %v642 = vrot.slane %v640, 5
      %v643 = vor.u32 %v639, %v642
      %v644 = vrot.slane %v643, 4
      %v646 = vshll.u32 %v334, 16
      %v648 = vrot.slane %v646, 5
      %v649 = vsel %vm341, %v644, %v648
      %v651 = vshrl.u32 %v335, 16
      %v653 = vrot.slane %v651, 4
      %v654 = vshll.u32 %v335, 16
      %v656 = vrot.slane %v654, 5
      %v657 = vor.u32 %v653, %v656
      %v658 = vrot.slane %v657, 4
      %v660 = vshll.u32 %v336, 16
      %v662 = vrot.slane %v660, 5
      %v663 = vsel %vm341, %v658, %v662
      %v665 = vshrl.u32 %v337, 16
      %v667 = vrot.slane %v665, 4
      %v668 = vshll.u32 %v337, 16
      %v670 = vrot.slane %v668, 5
      %v671 = vor.u32 %v667, %v670
      %v672 = vrot.slane %v671, 4
      %v674 = vshll.u32 %v338, 16
      %v676 = vrot.slane %v674, 5
      %v677 = vsel %vm341, %v672, %v676
      %678 = vrot.lane.b32.xlu0 %v355, 4
      %v679 = vpop.permute.xlu0 %678
      %680 = vrot.lane.b32.xlu0 %v369, 4
      %v681 = vpop.permute.xlu0 %680
      %682 = vrot.lane.b32.xlu0 %v383, 4
      %v683 = vpop.permute.xlu0 %682
      %684 = vrot.lane.b32.xlu0 %v397, 4
      %v685 = vpop.permute.xlu0 %684
      %686 = vrot.lane.b32.xlu0 %v411, 4
      %v687 = vpop.permute.xlu0 %686
      %688 = vrot.lane.b32.xlu0 %v425, 4
      %v689 = vpop.permute.xlu0 %688
      %690 = vrot.lane.b32.xlu0 %v439, 4
      %v691 = vpop.permute.xlu0 %690
      %692 = vrot.lane.b32.xlu0 %v453, 4
      %v693 = vpop.permute.xlu0 %692
      %694 = vrot.lane.b32.xlu0 %v467, 4
      %v695 = vpop.permute.xlu0 %694
      %696 = vrot.lane.b32.xlu0 %v481, 4
      %v697 = vpop.permute.xlu0 %696
      %698 = vrot.lane.b32.xlu0 %v495, 4
      %v699 = vpop.permute.xlu0 %698
      %700 = vrot.lane.b32.xlu0 %v509, 4
      %v701 = vpop.permute.xlu0 %700
      %702 = vrot.lane.b32.xlu0 %v523, 4
      %v703 = vpop.permute.xlu0 %702
      %704 = vrot.lane.b32.xlu0 %v537, 4
      %v705 = vpop.permute.xlu0 %704
      %706 = vrot.lane.b32.xlu0 %v551, 4
      %v707 = vpop.permute.xlu0 %706
      %708 = vrot.lane.b32.xlu0 %v565, 4
      %v709 = vpop.permute.xlu0 %708
      %710 = vrot.lane.b32.xlu0 %v579, 4
      %v711 = vpop.permute.xlu0 %710
      %712 = vrot.lane.b32.xlu0 %v593, 4
      %v713 = vpop.permute.xlu0 %712
      %714 = vrot.lane.b32.xlu0 %v607, 4
      %v715 = vpop.permute.xlu0 %714
      %716 = vrot.lane.b32.xlu0 %v621, 4
      %v717 = vpop.permute.xlu0 %716
      %718 = vrot.lane.b32.xlu0 %v635, 4
      %v719 = vpop.permute.xlu0 %718
      %720 = vrot.lane.b32.xlu0 %v649, 4
      %v721 = vpop.permute.xlu0 %720
      %722 = vrot.lane.b32.xlu0 %v663, 4
      %v723 = vpop.permute.xlu0 %722
      %724 = vrot.lane.b32.xlu0 %v677, 4
      %v725 = vpop.permute.xlu0 %724
      %vm750 = vcmask 60448
      %751 = vst.msk [vmem:[#allocation2] sm:$0xf] %vm750, %v679
      %752 = vst.msk [vmem:[#allocation2 + $0x4] sm:$0xf] %vm750, %v681
      %753 = vst.msk [vmem:[#allocation2 + $0x8] sm:$0xf] %vm750, %v683
      %754 = vst.msk [vmem:[#allocation2 + $0xc] sm:$0xf] %vm750, %v685
      %755 = vst.msk [vmem:[#allocation2 + $0x10] sm:$0xf] %vm750, %v687
      %756 = vst.msk [vmem:[#allocation2 + $0x14] sm:$0xf] %vm750, %v689
      %757 = vst.msk [vmem:[#allocation2 + $0x18] sm:$0xf] %vm750, %v691
      %758 = vst.msk [vmem:[#allocation2 + $0x1c] sm:$0xf] %vm750, %v693
      %759 = vst.msk [vmem:[#allocation2 + $0x20] sm:$0xf] %vm750, %v695
      %760 = vst.msk [vmem:[#allocation2 + $0x24] sm:$0xf] %vm750, %v697
      %761 = vst.msk [vmem:[#allocation2 + $0x28] sm:$0xf] %vm750, %v699
      %762 = vst.msk [vmem:[#allocation2 + $0x2c] sm:$0xf] %vm750, %v701
      %763 = vst.msk [vmem:[#allocation2 + $0x30] sm:$0xf] %vm750, %v703
      %764 = vst.msk [vmem:[#allocation2 + $0x34] sm:$0xf] %vm750, %v705
      %765 = vst.msk [vmem:[#allocation2 + $0x38] sm:$0xf] %vm750, %v707
      %766 = vst.msk [vmem:[#allocation2 + $0x3c] sm:$0xf] %vm750, %v709
      %767 = vst.msk [vmem:[#allocation2 + $0x40] sm:$0xf] %vm750, %v711
      %768 = vst.msk [vmem:[#allocation2 + $0x44] sm:$0xf] %vm750, %v713
      %769 = vst.msk [vmem:[#allocation2 + $0x48] sm:$0xf] %vm750, %v715
      %770 = vst.msk [vmem:[#allocation2 + $0x4c] sm:$0xf] %vm750, %v717
      %771 = vst.msk [vmem:[#allocation2 + $0x50] sm:$0xf] %vm750, %v719
      %772 = vst.msk [vmem:[#allocation2 + $0x54] sm:$0xf] %vm750, %v721
      %773 = vst.msk [vmem:[#allocation2 + $0x58] sm:$0xf] %vm750, %v723
      %774 = vst.msk [vmem:[#allocation2 + $0x5c] sm:$0xf] %vm750, %v725
      %v775 = vld [vmem:[%s221] sm:$0xe]
      %v776 = vld [vmem:[%s221 + $0x4] sm:$0x1]
      %v777 = vld [vmem:[%s221 + $0x8] sm:$0xe]
      %v778 = vld [vmem:[%s221 + $0xc] sm:$0x1]
      %v779 = vld [vmem:[%s221 + $0x10] sm:$0xe]
      %v780 = vld [vmem:[%s221 + $0x14] sm:$0x1]
      %v781 = vld [vmem:[%s221 + $0x18] sm:$0xe]
      %v782 = vld [vmem:[%s221 + $0x1c] sm:$0x1]
      %v783 = vld [vmem:[%s221 + $0x20] sm:$0xe]
      %v784 = vld [vmem:[%s221 + $0x24] sm:$0x1]
      %v785 = vld [vmem:[%s221 + $0x28] sm:$0xe]
      %v786 = vld [vmem:[%s221 + $0x2c] sm:$0x1]
      %v787 = vld [vmem:[%s221 + $0x30] sm:$0xe]
      %v788 = vld [vmem:[%s221 + $0x34] sm:$0x1]
      %v789 = vld [vmem:[%s221 + $0x38] sm:$0xe]
      %v790 = vld [vmem:[%s221 + $0x3c] sm:$0x1]
      %v791 = vld [vmem:[%s221 + $0x50] sm:$0xe]
      %v792 = vld [vmem:[%s221 + $0x54] sm:$0x1]
      %v793 = vld [vmem:[%s221 + $0x58] sm:$0xe]
      %v794 = vld [vmem:[%s221 + $0x5c] sm:$0x1]
      %v795 = vld [vmem:[%s221 + $0x60] sm:$0xe]
      %v796 = vld [vmem:[%s221 + $0x64] sm:$0x1]
      %v797 = vld [vmem:[%s221 + $0x68] sm:$0xe]
      %v798 = vld [vmem:[%s221 + $0x6c] sm:$0x1]
      %v799 = vld [vmem:[%s221 + $0x70] sm:$0xe]
      %v800 = vld [vmem:[%s221 + $0x74] sm:$0x1]
      %v801 = vld [vmem:[%s221 + $0x78] sm:$0xe]
      %v802 = vld [vmem:[%s221 + $0x7c] sm:$0x1]
      %v803 = vld [vmem:[%s221 + $0x80] sm:$0xe]
      %v804 = vld [vmem:[%s221 + $0x84] sm:$0x1]
      %v805 = vld [vmem:[%s221 + $0x88] sm:$0xe]
      %v806 = vld [vmem:[%s221 + $0x8c] sm:$0x1]
      %v807 = vld [vmem:[%s221 + $0xa0] sm:$0xe]
      %v808 = vld [vmem:[%s221 + $0xa4] sm:$0x1]
      %v809 = vld [vmem:[%s221 + $0xa8] sm:$0xe]
      %v810 = vld [vmem:[%s221 + $0xac] sm:$0x1]
      %v811 = vld [vmem:[%s221 + $0xb0] sm:$0xe]
      %v812 = vld [vmem:[%s221 + $0xb4] sm:$0x1]
      %v813 = vld [vmem:[%s221 + $0xb8] sm:$0xe]
      %v814 = vld [vmem:[%s221 + $0xbc] sm:$0x1]
      %v815 = vld [vmem:[%s221 + $0xc0] sm:$0xe]
      %v816 = vld [vmem:[%s221 + $0xc4] sm:$0x1]
      %v817 = vld [vmem:[%s221 + $0xc8] sm:$0xe]
      %v818 = vld [vmem:[%s221 + $0xcc] sm:$0x1]
      %v819 = vld [vmem:[%s221 + $0xd0] sm:$0xe]
      %v820 = vld [vmem:[%s221 + $0xd4] sm:$0x1]
      %v821 = vld [vmem:[%s221 + $0xd8] sm:$0xe]
      %v822 = vld [vmem:[%s221 + $0xdc] sm:$0x1]
      %vm871 = vcmask 1042432
      %vm872 = vcmask 1046532
      %vm873 = vmor %vm871, %vm872
      %v874 = vrot.slane %v775, 5
      %v875 = vrot.slane %v874, 4
      %v876 = vrot.slane %v776, 5
      %v877 = vsel %vm873, %v875, %v876
      %v878 = vrot.slane %v777, 5
      %v879 = vrot.slane %v878, 4
      %v880 = vrot.slane %v778, 5
      %v881 = vsel %vm873, %v879, %v880
      %v882 = vrot.slane %v779, 5
      %v883 = vrot.slane %v882, 4
      %v884 = vrot.slane %v780, 5
      %v885 = vsel %vm873, %v883, %v884
      %v886 = vrot.slane %v781, 5
      %v887 = vrot.slane %v886, 4
      %v888 = vrot.slane %v782, 5
      %v889 = vsel %vm873, %v887, %v888
      %v890 = vrot.slane %v783, 5
      %v891 = vrot.slane %v890, 4
      %v892 = vrot.slane %v784, 5
      %v893 = vsel %vm873, %v891, %v892
      %v894 = vrot.slane %v785, 5
      %v895 = vrot.slane %v894, 4
      %v896 = vrot.slane %v786, 5
      %v897 = vsel %vm873, %v895, %v896
      %v898 = vrot.slane %v787, 5
      %v899 = vrot.slane %v898, 4
      %v900 = vrot.slane %v788, 5
      %v901 = vsel %vm873, %v899, %v900
      %v902 = vrot.slane %v789, 5
      %v903 = vrot.slane %v902, 4
      %v904 = vrot.slane %v790, 5
      %v905 = vsel %vm873, %v903, %v904
      %v906 = vrot.slane %v791, 5
      %v907 = vrot.slane %v906, 4
      %v908 = vrot.slane %v792, 5
      %v909 = vsel %vm873, %v907, %v908
      %v910 = vrot.slane %v793, 5
      %v911 = vrot.slane %v910, 4
      %v912 = vrot.slane %v794, 5
      %v913 = vsel %vm873, %v911, %v912
      %v914 = vrot.slane %v795, 5
      %v915 = vrot.slane %v914, 4
      %v916 = vrot.slane %v796, 5
      %v917 = vsel %vm873, %v915, %v916
      %v918 = vrot.slane %v797, 5
      %v919 = vrot.slane %v918, 4
      %v920 = vrot.slane %v798, 5
      %v921 = vsel %vm873, %v919, %v920
      %v922 = vrot.slane %v799, 5
      %v923 = vrot.slane %v922, 4
      %v924 = vrot.slane %v800, 5
      %v925 = vsel %vm873, %v923, %v924
      %v926 = vrot.slane %v801, 5
      %v927 = vrot.slane %v926, 4
      %v928 = vrot.slane %v802, 5
      %v929 = vsel %vm873, %v927, %v928
      %v930 = vrot.slane %v803, 5
      %v931 = vrot.slane %v930, 4
      %v932 = vrot.slane %v804, 5
      %v933 = vsel %vm873, %v931, %v932
      %v934 = vrot.slane %v805, 5
      %v935 = vrot.slane %v934, 4
      %v936 = vrot.slane %v806, 5
      %v937 = vsel %vm873, %v935, %v936
      %v938 = vrot.slane %v807, 5
      %v939 = vrot.slane %v938, 4
      %v940 = vrot.slane %v808, 5
      %v941 = vsel %vm873, %v939, %v940
      %v942 = vrot.slane %v809, 5
      %v943 = vrot.slane %v942, 4
      %v944 = vrot.slane %v810, 5
      %v945 = vsel %vm873, %v943, %v944
      %v946 = vrot.slane %v811, 5
      %v947 = vrot.slane %v946, 4
      %v948 = vrot.slane %v812, 5
      %v949 = vsel %vm873, %v947, %v948
      %v950 = vrot.slane %v813, 5
      %v951 = vrot.slane %v950, 4
      %v952 = vrot.slane %v814, 5
      %v953 = vsel %vm873, %v951, %v952
      %v954 = vrot.slane %v815, 5
      %v955 = vrot.slane %v954, 4
      %v956 = vrot.slane %v816, 5
      %v957 = vsel %vm873, %v955, %v956
      %v958 = vrot.slane %v817, 5
      %v959 = vrot.slane %v958, 4
      %v960 = vrot.slane %v818, 5
      %v961 = vsel %vm873, %v959, %v960
      %v962 = vrot.slane %v819, 5
      %v963 = vrot.slane %v962, 4
      %v964 = vrot.slane %v820, 5
      %v965 = vsel %vm873, %v963, %v964
      %v966 = vrot.slane %v821, 5
      %v967 = vrot.slane %v966, 4
      %v968 = vrot.slane %v822, 5
      %v969 = vsel %vm873, %v967, %v968
      %970 = vrot.lane.b32.xlu0 %v877, 8
      %v971 = vpop.permute.xlu0 %970
      %972 = vrot.lane.b32.xlu0 %v881, 8
      %v973 = vpop.permute.xlu0 %972
      %974 = vrot.lane.b32.xlu0 %v885, 8
      %v975 = vpop.permute.xlu0 %974
      %976 = vrot.lane.b32.xlu0 %v889, 8
      %v977 = vpop.permute.xlu0 %976
      %978 = vrot.lane.b32.xlu0 %v893, 8
      %v979 = vpop.permute.xlu0 %978
      %980 = vrot.lane.b32.xlu0 %v897, 8
      %v981 = vpop.permute.xlu0 %980
      %982 = vrot.lane.b32.xlu0 %v901, 8
      %v983 = vpop.permute.xlu0 %982
      %984 = vrot.lane.b32.xlu0 %v905, 8
      %v985 = vpop.permute.xlu0 %984
      %986 = vrot.lane.b32.xlu0 %v909, 8
      %v987 = vpop.permute.xlu0 %986
      %988 = vrot.lane.b32.xlu0 %v913, 8
      %v989 = vpop.permute.xlu0 %988
      %990 = vrot.lane.b32.xlu0 %v917, 8
      %v991 = vpop.permute.xlu0 %990
      %992 = vrot.lane.b32.xlu0 %v921, 8
      %v993 = vpop.permute.xlu0 %992
      %994 = vrot.lane.b32.xlu0 %v925, 8
      %v995 = vpop.permute.xlu0 %994
      %996 = vrot.lane.b32.xlu0 %v929, 8
      %v997 = vpop.permute.xlu0 %996
      %998 = vrot.lane.b32.xlu0 %v933, 8
      %v999 = vpop.permute.xlu0 %998
      %1000 = vrot.lane.b32.xlu0 %v937, 8
      %v1001 = vpop.permute.xlu0 %1000
      %1002 = vrot.lane.b32.xlu0 %v941, 8
      %v1003 = vpop.permute.xlu0 %1002
      %1004 = vrot.lane.b32.xlu0 %v945, 8
      %v1005 = vpop.permute.xlu0 %1004
      %1006 = vrot.lane.b32.xlu0 %v949, 8
      %v1007 = vpop.permute.xlu0 %1006
      %1008 = vrot.lane.b32.xlu0 %v953, 8
      %v1009 = vpop.permute.xlu0 %1008
      %1010 = vrot.lane.b32.xlu0 %v957, 8
      %v1011 = vpop.permute.xlu0 %1010
      %1012 = vrot.lane.b32.xlu0 %v961, 8
      %v1013 = vpop.permute.xlu0 %1012
      %1014 = vrot.lane.b32.xlu0 %v965, 8
      %v1015 = vpop.permute.xlu0 %1014
      %1016 = vrot.lane.b32.xlu0 %v969, 8
      %v1017 = vpop.permute.xlu0 %1016
      %vm1042 = vcmask 93248
      %1043 = vst.msk [vmem:[#allocation2] sm:$0xf] %vm1042, %v971
      %1044 = vst.msk [vmem:[#allocation2 + $0x4] sm:$0xf] %vm1042, %v973
      %1045 = vst.msk [vmem:[#allocation2 + $0x8] sm:$0xf] %vm1042, %v975
      %1046 = vst.msk [vmem:[#allocation2 + $0xc] sm:$0xf] %vm1042, %v977
      %1047 = vst.msk [vmem:[#allocation2 + $0x10] sm:$0xf] %vm1042, %v979
      %1048 = vst.msk [vmem:[#allocation2 + $0x14] sm:$0xf] %vm1042, %v981
      %1049 = vst.msk [vmem:[#allocation2 + $0x18] sm:$0xf] %vm1042, %v983
      %1050 = vst.msk [vmem:[#allocation2 + $0x1c] sm:$0xf] %vm1042, %v985
      %1051 = vst.msk [vmem:[#allocation2 + $0x20] sm:$0xf] %vm1042, %v987
      %1052 = vst.msk [vmem:[#allocation2 + $0x24] sm:$0xf] %vm1042, %v989
      %1053 = vst.msk [vmem:[#allocation2 + $0x28] sm:$0xf] %vm1042, %v991
      %1054 = vst.msk [vmem:[#allocation2 + $0x2c] sm:$0xf] %vm1042, %v993
      %1055 = vst.msk [vmem:[#allocation2 + $0x30] sm:$0xf] %vm1042, %v995
      %1056 = vst.msk [vmem:[#allocation2 + $0x34] sm:$0xf] %vm1042, %v997
      %1057 = vst.msk [vmem:[#allocation2 + $0x38] sm:$0xf] %vm1042, %v999
      %1058 = vst.msk [vmem:[#allocation2 + $0x3c] sm:$0xf] %vm1042, %v1001
      %1059 = vst.msk [vmem:[#allocation2 + $0x40] sm:$0xf] %vm1042, %v1003
      %1060 = vst.msk [vmem:[#allocation2 + $0x44] sm:$0xf] %vm1042, %v1005
      %1061 = vst.msk [vmem:[#allocation2 + $0x48] sm:$0xf] %vm1042, %v1007
      %1062 = vst.msk [vmem:[#allocation2 + $0x4c] sm:$0xf] %vm1042, %v1009
      %1063 = vst.msk [vmem:[#allocation2 + $0x50] sm:$0xf] %vm1042, %v1011
      %1064 = vst.msk [vmem:[#allocation2 + $0x54] sm:$0xf] %vm1042, %v1013
      %1065 = vst.msk [vmem:[#allocation2 + $0x58] sm:$0xf] %vm1042, %v1015
      %1066 = vst.msk [vmem:[#allocation2 + $0x5c] sm:$0xf] %vm1042, %v1017
      %s1067 = scalar_lea.vmem %s221, 8
      %v1068 = vld [vmem:[%s1067] sm:$0xf]
      %v1069 = vld [vmem:[%s1067 + $0x8] sm:$0xf]
      %v1070 = vld [vmem:[%s1067 + $0x10] sm:$0xf]
      %v1071 = vld [vmem:[%s1067 + $0x18] sm:$0xf]
      %v1072 = vld [vmem:[%s1067 + $0x20] sm:$0xf]
      %v1073 = vld [vmem:[%s1067 + $0x28] sm:$0xf]
      %v1074 = vld [vmem:[%s1067 + $0x30] sm:$0xf]
      %v1075 = vld [vmem:[%s1067 + $0x38] sm:$0xf]
      %v1076 = vld [vmem:[%s1067 + $0x50] sm:$0xf]
      %v1077 = vld [vmem:[%s1067 + $0x58] sm:$0xf]
      %v1078 = vld [vmem:[%s1067 + $0x60] sm:$0xf]
      %v1079 = vld [vmem:[%s1067 + $0x68] sm:$0xf]
      %v1080 = vld [vmem:[%s1067 + $0x70] sm:$0xf]
      %v1081 = vld [vmem:[%s1067 + $0x78] sm:$0xf]
      %v1082 = vld [vmem:[%s1067 + $0x80] sm:$0xf]
      %v1083 = vld [vmem:[%s1067 + $0x88] sm:$0xf]
      %v1084 = vld [vmem:[%s1067 + $0xa0] sm:$0xf]
      %v1085 = vld [vmem:[%s1067 + $0xa8] sm:$0xf]
      %v1086 = vld [vmem:[%s1067 + $0xb0] sm:$0xf]
      %v1087 = vld [vmem:[%s1067 + $0xb8] sm:$0xf]
      %v1088 = vld [vmem:[%s1067 + $0xc0] sm:$0xf]
      %v1089 = vld [vmem:[%s1067 + $0xc8] sm:$0xf]
      %v1090 = vld [vmem:[%s1067 + $0xd0] sm:$0xf]
      %v1091 = vld [vmem:[%s1067 + $0xd8] sm:$0xf]
      %1116 = vrot.lane.b32.xlu0 %v1068, 12
      %v1117 = vpop.permute.xlu0 %1116
      %1118 = vrot.lane.b32.xlu0 %v1069, 12
      %v1119 = vpop.permute.xlu0 %1118
      %1120 = vrot.lane.b32.xlu0 %v1070, 12
      %v1121 = vpop.permute.xlu0 %1120
      %1122 = vrot.lane.b32.xlu0 %v1071, 12
      %v1123 = vpop.permute.xlu0 %1122
      %1124 = vrot.lane.b32.xlu0 %v1072, 12
      %v1125 = vpop.permute.xlu0 %1124
      %1126 = vrot.lane.b32.xlu0 %v1073, 12
      %v1127 = vpop.permute.xlu0 %1126
      %1128 = vrot.lane.b32.xlu0 %v1074, 12
      %v1129 = vpop.permute.xlu0 %1128
      %1130 = vrot.lane.b32.xlu0 %v1075, 12
      %v1131 = vpop.permute.xlu0 %1130
      %1132 = vrot.lane.b32.xlu0 %v1076, 12
      %v1133 = vpop.permute.xlu0 %1132
      %1134 = vrot.lane.b32.xlu0 %v1077, 12
      %v1135 = vpop.permute.xlu0 %1134
      %1136 = vrot.lane.b32.xlu0 %v1078, 12
      %v1137 = vpop.permute.xlu0 %1136
      %1138 = vrot.lane.b32.xlu0 %v1079, 12
      %v1139 = vpop.permute.xlu0 %1138
      %1140 = vrot.lane.b32.xlu0 %v1080, 12
      %v1141 = vpop.permute.xlu0 %1140
      %1142 = vrot.lane.b32.xlu0 %v1081, 12
      %v1143 = vpop.permute.xlu0 %1142
      %1144 = vrot.lane.b32.xlu0 %v1082, 12
      %v1145 = vpop.permute.xlu0 %1144
      %1146 = vrot.lane.b32.xlu0 %v1083, 12
      %v1147 = vpop.permute.xlu0 %1146
      %1148 = vrot.lane.b32.xlu0 %v1084, 12
      %v1149 = vpop.permute.xlu0 %1148
      %1150 = vrot.lane.b32.xlu0 %v1085, 12
      %v1151 = vpop.permute.xlu0 %1150
      %1152 = vrot.lane.b32.xlu0 %v1086, 12
      %v1153 = vpop.permute.xlu0 %1152
      %1154 = vrot.lane.b32.xlu0 %v1087, 12
      %v1155 = vpop.permute.xlu0 %1154
      %1156 = vrot.lane.b32.xlu0 %v1088, 12
      %v1157 = vpop.permute.xlu0 %1156
      %1158 = vrot.lane.b32.xlu0 %v1089, 12
      %v1159 = vpop.permute.xlu0 %1158
      %1160 = vrot.lane.b32.xlu0 %v1090, 12
      %v1161 = vpop.permute.xlu0 %1160
      %1162 = vrot.lane.b32.xlu0 %v1091, 12
      %v1163 = vpop.permute.xlu0 %1162
      %vm1188 = vcmask 126048
      %1189 = vst.msk [vmem:[#allocation2] sm:$0xf] %vm1188, %v1117
      %1190 = vst.msk [vmem:[#allocation2 + $0x4] sm:$0xf] %vm1188, %v1119
      %1191 = vst.msk [vmem:[#allocation2 + $0x8] sm:$0xf] %vm1188, %v1121
      %1192 = vst.msk [vmem:[#allocation2 + $0xc] sm:$0xf] %vm1188, %v1123
      %1193 = vst.msk [vmem:[#allocation2 + $0x10] sm:$0xf] %vm1188, %v1125
      %1194 = vst.msk [vmem:[#allocation2 + $0x14] sm:$0xf] %vm1188, %v1127
      %1195 = vst.msk [vmem:[#allocation2 + $0x18] sm:$0xf] %vm1188, %v1129
      %1196 = vst.msk [vmem:[#allocation2 + $0x1c] sm:$0xf] %vm1188, %v1131
      %1197 = vst.msk [vmem:[#allocation2 + $0x20] sm:$0xf] %vm1188, %v1133
      %1198 = vst.msk [vmem:[#allocation2 + $0x24] sm:$0xf] %vm1188, %v1135
      %1199 = vst.msk [vmem:[#allocation2 + $0x28] sm:$0xf] %vm1188, %v1137
      %1200 = vst.msk [vmem:[#allocation2 + $0x2c] sm:$0xf] %vm1188, %v1139
      %1201 = vst.msk [vmem:[#allocation2 + $0x30] sm:$0xf] %vm1188, %v1141
      %1202 = vst.msk [vmem:[#allocation2 + $0x34] sm:$0xf] %vm1188, %v1143
      %1203 = vst.msk [vmem:[#allocation2 + $0x38] sm:$0xf] %vm1188, %v1145
      %1204 = vst.msk [vmem:[#allocation2 + $0x3c] sm:$0xf] %vm1188, %v1147
      %1205 = vst.msk [vmem:[#allocation2 + $0x40] sm:$0xf] %vm1188, %v1149
      %1206 = vst.msk [vmem:[#allocation2 + $0x44] sm:$0xf] %vm1188, %v1151
      %1207 = vst.msk [vmem:[#allocation2 + $0x48] sm:$0xf] %vm1188, %v1153
      %1208 = vst.msk [vmem:[#allocation2 + $0x4c] sm:$0xf] %vm1188, %v1155
      %1209 = vst.msk [vmem:[#allocation2 + $0x50] sm:$0xf] %vm1188, %v1157
      %1210 = vst.msk [vmem:[#allocation2 + $0x54] sm:$0xf] %vm1188, %v1159
      %1211 = vst.msk [vmem:[#allocation2 + $0x58] sm:$0xf] %vm1188, %v1161
      %1212 = vst.msk [vmem:[#allocation2 + $0x5c] sm:$0xf] %vm1188, %v1163
      %v1213 = vld [vmem:[%s1067] sm:$0xf]
      %v1214 = vld [vmem:[%s1067 + $0x4] sm:$0x1]
      %v1215 = vld [vmem:[%s1067 + $0x8] sm:$0xf]
      %v1216 = vld [vmem:[%s1067 + $0xc] sm:$0x1]
      %v1217 = vld [vmem:[%s1067 + $0x10] sm:$0xf]
      %v1218 = vld [vmem:[%s1067 + $0x14] sm:$0x1]
      %v1219 = vld [vmem:[%s1067 + $0x18] sm:$0xf]
      %v1220 = vld [vmem:[%s1067 + $0x1c] sm:$0x1]
      %v1221 = vld [vmem:[%s1067 + $0x20] sm:$0xf]
      %v1222 = vld [vmem:[%s1067 + $0x24] sm:$0x1]
      %v1223 = vld [vmem:[%s1067 + $0x28] sm:$0xf]
      %v1224 = vld [vmem:[%s1067 + $0x2c] sm:$0x1]
      %v1225 = vld [vmem:[%s1067 + $0x30] sm:$0xf]
      %v1226 = vld [vmem:[%s1067 + $0x34] sm:$0x1]
      %v1227 = vld [vmem:[%s1067 + $0x38] sm:$0xf]
      %v1228 = vld [vmem:[%s1067 + $0x3c] sm:$0x1]
      %v1229 = vld [vmem:[%s1067 + $0x50] sm:$0xf]
      %v1230 = vld [vmem:[%s1067 + $0x54] sm:$0x1]
      %v1231 = vld [vmem:[%s1067 + $0x58] sm:$0xf]
      %v1232 = vld [vmem:[%s1067 + $0x5c] sm:$0x1]
      %v1233 = vld [vmem:[%s1067 + $0x60] sm:$0xf]
      %v1234 = vld [vmem:[%s1067 + $0x64] sm:$0x1]
      %v1235 = vld [vmem:[%s1067 + $0x68] sm:$0xf]
      %v1236 = vld [vmem:[%s1067 + $0x6c] sm:$0x1]
      %v1237 = vld [vmem:[%s1067 + $0x70] sm:$0xf]
      %v1238 = vld [vmem:[%s1067 + $0x74] sm:$0x1]
      %v1239 = vld [vmem:[%s1067 + $0x78] sm:$0xf]
      %v1240 = vld [vmem:[%s1067 + $0x7c] sm:$0x1]
      %v1241 = vld [vmem:[%s1067 + $0x80] sm:$0xf]
      %v1242 = vld [vmem:[%s1067 + $0x84] sm:$0x1]
      %v1243 = vld [vmem:[%s1067 + $0x88] sm:$0xf]
      %v1244 = vld [vmem:[%s1067 + $0x8c] sm:$0x1]
      %v1245 = vld [vmem:[%s1067 + $0xa0] sm:$0xf]
      %v1246 = vld [vmem:[%s1067 + $0xa4] sm:$0x1]
      %v1247 = vld [vmem:[%s1067 + $0xa8] sm:$0xf]
      %v1248 = vld [vmem:[%s1067 + $0xac] sm:$0x1]
      %v1249 = vld [vmem:[%s1067 + $0xb0] sm:$0xf]
      %v1250 = vld [vmem:[%s1067 + $0xb4] sm:$0x1]
      %v1251 = vld [vmem:[%s1067 + $0xb8] sm:$0xf]
      %v1252 = vld [vmem:[%s1067 + $0xbc] sm:$0x1]
      %v1253 = vld [vmem:[%s1067 + $0xc0] sm:$0xf]
      %v1254 = vld [vmem:[%s1067 + $0xc4] sm:$0x1]
      %v1255 = vld [vmem:[%s1067 + $0xc8] sm:$0xf]
      %v1256 = vld [vmem:[%s1067 + $0xcc] sm:$0x1]
      %v1257 = vld [vmem:[%s1067 + $0xd0] sm:$0xf]
      %v1258 = vld [vmem:[%s1067 + $0xd4] sm:$0x1]
      %v1259 = vld [vmem:[%s1067 + $0xd8] sm:$0xf]
      %v1260 = vld [vmem:[%s1067 + $0xdc] sm:$0x1]
      %v1262 = vshrl.u32 %v1213, 16
      %v1264 = vrot.slane %v1262, 4
      %v1265 = vshll.u32 %v1213, 16
      %v1267 = vrot.slane %v1265, 5
      %v1268 = vor.u32 %v1264, %v1267
      %v1269 = vrot.slane %v1268, 4
      %v1271 = vshll.u32 %v1214, 16
      %v1273 = vrot.slane %v1271, 5
      %v1274 = vsel %vm341, %v1269, %v1273
      %v1276 = vshrl.u32 %v1215, 16
      %v1278 = vrot.slane %v1276, 4
      %v1279 = vshll.u32 %v1215, 16
      %v1281 = vrot.slane %v1279, 5
      %v1282 = vor.u32 %v1278, %v1281
      %v1283 = vrot.slane %v1282, 4
      %v1285 = vshll.u32 %v1216, 16
      %v1287 = vrot.slane %v1285, 5
      %v1288 = vsel %vm341, %v1283, %v1287
      %v1290 = vshrl.u32 %v1217, 16
      %v1292 = vrot.slane %v1290, 4
      %v1293 = vshll.u32 %v1217, 16
      %v1295 = vrot.slane %v1293, 5
      %v1296 = vor.u32 %v1292, %v1295
      %v1297 = vrot.slane %v1296, 4
      %v1299 = vshll.u32 %v1218, 16
      %v1301 = vrot.slane %v1299, 5
      %v1302 = vsel %vm341, %v1297, %v1301
      %v1304 = vshrl.u32 %v1219, 16
      %v1306 = vrot.slane %v1304, 4
      %v1307 = vshll.u32 %v1219, 16
      %v1309 = vrot.slane %v1307, 5
      %v1310 = vor.u32 %v1306, %v1309
      %v1311 = vrot.slane %v1310, 4
      %v1313 = vshll.u32 %v1220, 16
      %v1315 = vrot.slane %v1313, 5
      %v1316 = vsel %vm341, %v1311, %v1315
      %v1318 = vshrl.u32 %v1221, 16
      %v1320 = vrot.slane %v1318, 4
      %v1321 = vshll.u32 %v1221, 16
      %v1323 = vrot.slane %v1321, 5
      %v1324 = vor.u32 %v1320, %v1323
      %v1325 = vrot.slane %v1324, 4
      %v1327 = vshll.u32 %v1222, 16
      %v1329 = vrot.slane %v1327, 5
      %v1330 = vsel %vm341, %v1325, %v1329
      %v1332 = vshrl.u32 %v1223, 16
      %v1334 = vrot.slane %v1332, 4
      %v1335 = vshll.u32 %v1223, 16
      %v1337 = vrot.slane %v1335, 5
      %v1338 = vor.u32 %v1334, %v1337
      %v1339 = vrot.slane %v1338, 4
      %v1341 = vshll.u32 %v1224, 16
      %v1343 = vrot.slane %v1341, 5
      %v1344 = vsel %vm341, %v1339, %v1343
      %v1346 = vshrl.u32 %v1225, 16
      %v1348 = vrot.slane %v1346, 4
      %v1349 = vshll.u32 %v1225, 16
      %v1351 = vrot.slane %v1349, 5
      %v1352 = vor.u32 %v1348, %v1351
      %v1353 = vrot.slane %v1352, 4
      %v1355 = vshll.u32 %v1226, 16
      %v1357 = vrot.slane %v1355, 5
      %v1358 = vsel %vm341, %v1353, %v1357
      %v1360 = vshrl.u32 %v1227, 16
      %v1362 = vrot.slane %v1360, 4
      %v1363 = vshll.u32 %v1227, 16
      %v1365 = vrot.slane %v1363, 5
      %v1366 = vor.u32 %v1362, %v1365
      %v1367 = vrot.slane %v1366, 4
      %v1369 = vshll.u32 %v1228, 16
      %v1371 = vrot.slane %v1369, 5
      %v1372 = vsel %vm341, %v1367, %v1371
      %v1374 = vshrl.u32 %v1229, 16
      %v1376 = vrot.slane %v1374, 4
      %v1377 = vshll.u32 %v1229, 16
      %v1379 = vrot.slane %v1377, 5
      %v1380 = vor.u32 %v1376, %v1379
      %v1381 = vrot.slane %v1380, 4
      %v1383 = vshll.u32 %v1230, 16
      %v1385 = vrot.slane %v1383, 5
      %v1386 = vsel %vm341, %v1381, %v1385
      %v1388 = vshrl.u32 %v1231, 16
      %v1390 = vrot.slane %v1388, 4
      %v1391 = vshll.u32 %v1231, 16
      %v1393 = vrot.slane %v1391, 5
      %v1394 = vor.u32 %v1390, %v1393
      %v1395 = vrot.slane %v1394, 4
      %v1397 = vshll.u32 %v1232, 16
      %v1399 = vrot.slane %v1397, 5
      %v1400 = vsel %vm341, %v1395, %v1399
      %v1402 = vshrl.u32 %v1233, 16
      %v1404 = vrot.slane %v1402, 4
      %v1405 = vshll.u32 %v1233, 16
      %v1407 = vrot.slane %v1405, 5
      %v1408 = vor.u32 %v1404, %v1407
      %v1409 = vrot.slane %v1408, 4
      %v1411 = vshll.u32 %v1234, 16
      %v1413 = vrot.slane %v1411, 5
      %v1414 = vsel %vm341, %v1409, %v1413
      %v1416 = vshrl.u32 %v1235, 16
      %v1418 = vrot.slane %v1416, 4
      %v1419 = vshll.u32 %v1235, 16
      %v1421 = vrot.slane %v1419, 5
      %v1422 = vor.u32 %v1418, %v1421
      %v1423 = vrot.slane %v1422, 4
      %v1425 = vshll.u32 %v1236, 16
      %v1427 = vrot.slane %v1425, 5
      %v1428 = vsel %vm341, %v1423, %v1427
      %v1430 = vshrl.u32 %v1237, 16
      %v1432 = vrot.slane %v1430, 4
      %v1433 = vshll.u32 %v1237, 16
      %v1435 = vrot.slane %v1433, 5
      %v1436 = vor.u32 %v1432, %v1435
      %v1437 = vrot.slane %v1436, 4
      %v1439 = vshll.u32 %v1238, 16
      %v1441 = vrot.slane %v1439, 5
      %v1442 = vsel %vm341, %v1437, %v1441
      %v1444 = vshrl.u32 %v1239, 16
      %v1446 = vrot.slane %v1444, 4
      %v1447 = vshll.u32 %v1239, 16
      %v1449 = vrot.slane %v1447, 5
      %v1450 = vor.u32 %v1446, %v1449
      %v1451 = vrot.slane %v1450, 4
      %v1453 = vshll.u32 %v1240, 16
      %v1455 = vrot.slane %v1453, 5
      %v1456 = vsel %vm341, %v1451, %v1455
      %v1458 = vshrl.u32 %v1241, 16
      %v1460 = vrot.slane %v1458, 4
      %v1461 = vshll.u32 %v1241, 16
      %v1463 = vrot.slane %v1461, 5
      %v1464 = vor.u32 %v1460, %v1463
      %v1465 = vrot.slane %v1464, 4
      %v1467 = vshll.u32 %v1242, 16
      %v1469 = vrot.slane %v1467, 5
      %v1470 = vsel %vm341, %v1465, %v1469
      %v1472 = vshrl.u32 %v1243, 16
      %v1474 = vrot.slane %v1472, 4
      %v1475 = vshll.u32 %v1243, 16
      %v1477 = vrot.slane %v1475, 5
      %v1478 = vor.u32 %v1474, %v1477
      %v1479 = vrot.slane %v1478, 4
      %v1481 = vshll.u32 %v1244, 16
      %v1483 = vrot.slane %v1481, 5
      %v1484 = vsel %vm341, %v1479, %v1483
      %v1486 = vshrl.u32 %v1245, 16
      %v1488 = vrot.slane %v1486, 4
      %v1489 = vshll.u32 %v1245, 16
      %v1491 = vrot.slane %v1489, 5
      %v1492 = vor.u32 %v1488, %v1491
      %v1493 = vrot.slane %v1492, 4
      %v1495 = vshll.u32 %v1246, 16
      %v1497 = vrot.slane %v1495, 5
      %v1498 = vsel %vm341, %v1493, %v1497
      %v1500 = vshrl.u32 %v1247, 16
      %v1502 = vrot.slane %v1500, 4
      %v1503 = vshll.u32 %v1247, 16
      %v1505 = vrot.slane %v1503, 5
      %v1506 = vor.u32 %v1502, %v1505
      %v1507 = vrot.slane %v1506, 4
      %v1509 = vshll.u32 %v1248, 16
      %v1511 = vrot.slane %v1509, 5
      %v1512 = vsel %vm341, %v1507, %v1511
      %v1514 = vshrl.u32 %v1249, 16
      %v1516 = vrot.slane %v1514, 4
      %v1517 = vshll.u32 %v1249, 16
      %v1519 = vrot.slane %v1517, 5
      %v1520 = vor.u32 %v1516, %v1519
      %v1521 = vrot.slane %v1520, 4
      %v1523 = vshll.u32 %v1250, 16
      %v1525 = vrot.slane %v1523, 5
      %v1526 = vsel %vm341, %v1521, %v1525
      %v1528 = vshrl.u32 %v1251, 16
      %v1530 = vrot.slane %v1528, 4
      %v1531 = vshll.u32 %v1251, 16
      %v1533 = vrot.slane %v1531, 5
      %v1534 = vor.u32 %v1530, %v1533
      %v1535 = vrot.slane %v1534, 4
      %v1537 = vshll.u32 %v1252, 16
      %v1539 = vrot.slane %v1537, 5
      %v1540 = vsel %vm341, %v1535, %v1539
      %v1542 = vshrl.u32 %v1253, 16
      %v1544 = vrot.slane %v1542, 4
      %v1545 = vshll.u32 %v1253, 16
      %v1547 = vrot.slane %v1545, 5
      %v1548 = vor.u32 %v1544, %v1547
      %v1549 = vrot.slane %v1548, 4
      %v1551 = vshll.u32 %v1254, 16
      %v1553 = vrot.slane %v1551, 5
      %v1554 = vsel %vm341, %v1549, %v1553
      %v1556 = vshrl.u32 %v1255, 16
      %v1558 = vrot.slane %v1556, 4
      %v1559 = vshll.u32 %v1255, 16
      %v1561 = vrot.slane %v1559, 5
      %v1562 = vor.u32 %v1558, %v1561
      %v1563 = vrot.slane %v1562, 4
      %v1565 = vshll.u32 %v1256, 16
      %v1567 = vrot.slane %v1565, 5
      %v1568 = vsel %vm341, %v1563, %v1567
      %v1570 = vshrl.u32 %v1257, 16
      %v1572 = vrot.slane %v1570, 4
      %v1573 = vshll.u32 %v1257, 16
      %v1575 = vrot.slane %v1573, 5
      %v1576 = vor.u32 %v1572, %v1575
      %v1577 = vrot.slane %v1576, 4
      %v1579 = vshll.u32 %v1258, 16
      %v1581 = vrot.slane %v1579, 5
      %v1582 = vsel %vm341, %v1577, %v1581
      %v1584 = vshrl.u32 %v1259, 16
      %v1586 = vrot.slane %v1584, 4
      %v1587 = vshll.u32 %v1259, 16
      %v1589 = vrot.slane %v1587, 5
      %v1590 = vor.u32 %v1586, %v1589
      %v1591 = vrot.slane %v1590, 4
      %v1593 = vshll.u32 %v1260, 16
      %v1595 = vrot.slane %v1593, 5
      %v1596 = vsel %vm341, %v1591, %v1595
      %1597 = vrot.lane.b32.xlu0 %v1274, 16
      %v1598 = vpop.permute.xlu0 %1597
      %1599 = vrot.lane.b32.xlu0 %v1288, 16
      %v1600 = vpop.permute.xlu0 %1599
      %1601 = vrot.lane.b32.xlu0 %v1302, 16
      %v1602 = vpop.permute.xlu0 %1601
      %1603 = vrot.lane.b32.xlu0 %v1316, 16
      %v1604 = vpop.permute.xlu0 %1603
      %1605 = vrot.lane.b32.xlu0 %v1330, 16
      %v1606 = vpop.permute.xlu0 %1605
      %1607 = vrot.lane.b32.xlu0 %v1344, 16
      %v1608 = vpop.permute.xlu0 %1607
      %1609 = vrot.lane.b32.xlu0 %v1358, 16
      %v1610 = vpop.permute.xlu0 %1609
      %1611 = vrot.lane.b32.xlu0 %v1372, 16
      %v1612 = vpop.permute.xlu0 %1611
      %1613 = vrot.lane.b32.xlu0 %v1386, 16
      %v1614 = vpop.permute.xlu0 %1613
      %1615 = vrot.lane.b32.xlu0 %v1400, 16
      %v1616 = vpop.permute.xlu0 %1615
      %1617 = vrot.lane.b32.xlu0 %v1414, 16
      %v1618 = vpop.permute.xlu0 %1617
      %1619 = vrot.lane.b32.xlu0 %v1428, 16
      %v1620 = vpop.permute.xlu0 %1619
      %1621 = vrot.lane.b32.xlu0 %v1442, 16
      %v1622 = vpop.permute.xlu0 %1621
      %1623 = vrot.lane.b32.xlu0 %v1456, 16
      %v1624 = vpop.permute.xlu0 %1623
      %1625 = vrot.lane.b32.xlu0 %v1470, 16
      %v1626 = vpop.permute.xlu0 %1625
      %1627 = vrot.lane.b32.xlu0 %v1484, 16
      %v1628 = vpop.permute.xlu0 %1627
      %1629 = vrot.lane.b32.xlu0 %v1498, 16
      %v1630 = vpop.permute.xlu0 %1629
      %1631 = vrot.lane.b32.xlu0 %v1512, 16
      %v1632 = vpop.permute.xlu0 %1631
      %1633 = vrot.lane.b32.xlu0 %v1526, 16
      %v1634 = vpop.permute.xlu0 %1633
      %1635 = vrot.lane.b32.xlu0 %v1540, 16
      %v1636 = vpop.permute.xlu0 %1635
      %1637 = vrot.lane.b32.xlu0 %v1554, 16
      %v1638 = vpop.permute.xlu0 %1637
      %1639 = vrot.lane.b32.xlu0 %v1568, 16
      %v1640 = vpop.permute.xlu0 %1639
      %1641 = vrot.lane.b32.xlu0 %v1582, 16
      %v1642 = vpop.permute.xlu0 %1641
      %1643 = vrot.lane.b32.xlu0 %v1596, 16
      %v1644 = vpop.permute.xlu0 %1643
      %vm1669 = vcmask 158848
      %1670 = vst.msk [vmem:[#allocation2] sm:$0xf] %vm1669, %v1598
      %1671 = vst.msk [vmem:[#allocation2 + $0x4] sm:$0xf] %vm1669, %v1600
      %1672 = vst.msk [vmem:[#allocation2 + $0x8] sm:$0xf] %vm1669, %v1602
      %1673 = vst.msk [vmem:[#allocation2 + $0xc] sm:$0xf] %vm1669, %v1604
      %1674 = vst.msk [vmem:[#allocation2 + $0x10] sm:$0xf] %vm1669, %v1606
      %1675 = vst.msk [vmem:[#allocation2 + $0x14] sm:$0xf] %vm1669, %v1608
      %1676 = vst.msk [vmem:[#allocation2 + $0x18] sm:$0xf] %vm1669, %v1610
      %1677 = vst.msk [vmem:[#allocation2 + $0x1c] sm:$0xf] %vm1669, %v1612
      %1678 = vst.msk [vmem:[#allocation2 + $0x20] sm:$0xf] %vm1669, %v1614
      %1679 = vst.msk [vmem:[#allocation2 + $0x24] sm:$0xf] %vm1669, %v1616
      %1680 = vst.msk [vmem:[#allocation2 + $0x28] sm:$0xf] %vm1669, %v1618
      %1681 = vst.msk [vmem:[#allocation2 + $0x2c] sm:$0xf] %vm1669, %v1620
      %1682 = vst.msk [vmem:[#allocation2 + $0x30] sm:$0xf] %vm1669, %v1622
      %1683 = vst.msk [vmem:[#allocation2 + $0x34] sm:$0xf] %vm1669, %v1624
      %1684 = vst.msk [vmem:[#allocation2 + $0x38] sm:$0xf] %vm1669, %v1626
      %1685 = vst.msk [vmem:[#allocation2 + $0x3c] sm:$0xf] %vm1669, %v1628
      %1686 = vst.msk [vmem:[#allocation2 + $0x40] sm:$0xf] %vm1669, %v1630
      %1687 = vst.msk [vmem:[#allocation2 + $0x44] sm:$0xf] %vm1669, %v1632
      %1688 = vst.msk [vmem:[#allocation2 + $0x48] sm:$0xf] %vm1669, %v1634
      %1689 = vst.msk [vmem:[#allocation2 + $0x4c] sm:$0xf] %vm1669, %v1636
      %1690 = vst.msk [vmem:[#allocation2 + $0x50] sm:$0xf] %vm1669, %v1638
      %1691 = vst.msk [vmem:[#allocation2 + $0x54] sm:$0xf] %vm1669, %v1640
      %1692 = vst.msk [vmem:[#allocation2 + $0x58] sm:$0xf] %vm1669, %v1642
      %1693 = vst.msk [vmem:[#allocation2 + $0x5c] sm:$0xf] %vm1669, %v1644
      %v1694 = vld [vmem:[%s1067] sm:$0xe]
      %v1695 = vld [vmem:[%s1067 + $0x4] sm:$0x1]
      %v1696 = vld [vmem:[%s1067 + $0x8] sm:$0xe]
      %v1697 = vld [vmem:[%s1067 + $0xc] sm:$0x1]
      %v1698 = vld [vmem:[%s1067 + $0x10] sm:$0xe]
      %v1699 = vld [vmem:[%s1067 + $0x14] sm:$0x1]
      %v1700 = vld [vmem:[%s1067 + $0x18] sm:$0xe]
      %v1701 = vld [vmem:[%s1067 + $0x1c] sm:$0x1]
      %v1702 = vld [vmem:[%s1067 + $0x20] sm:$0xe]
      %v1703 = vld [vmem:[%s1067 + $0x24] sm:$0x1]
      %v1704 = vld [vmem:[%s1067 + $0x28] sm:$0xe]
      %v1705 = vld [vmem:[%s1067 + $0x2c] sm:$0x1]
      %v1706 = vld [vmem:[%s1067 + $0x30] sm:$0xe]
      %v1707 = vld [vmem:[%s1067 + $0x34] sm:$0x1]
      %v1708 = vld [vmem:[%s1067 + $0x38] sm:$0xe]
      %v1709 = vld [vmem:[%s1067 + $0x3c] sm:$0x1]
      %v1710 = vld [vmem:[%s1067 + $0x50] sm:$0xe]
      %v1711 = vld [vmem:[%s1067 + $0x54] sm:$0x1]
      %v1712 = vld [vmem:[%s1067 + $0x58] sm:$0xe]
      %v1713 = vld [vmem:[%s1067 + $0x5c] sm:$0x1]
      %v1714 = vld [vmem:[%s1067 + $0x60] sm:$0xe]
      %v1715 = vld [vmem:[%s1067 + $0x64] sm:$0x1]
      %v1716 = vld [vmem:[%s1067 + $0x68] sm:$0xe]
      %v1717 = vld [vmem:[%s1067 + $0x6c] sm:$0x1]
      %v1718 = vld [vmem:[%s1067 + $0x70] sm:$0xe]
      %v1719 = vld [vmem:[%s1067 + $0x74] sm:$0x1]
      %v1720 = vld [vmem:[%s1067 + $0x78] sm:$0xe]
      %v1721 = vld [vmem:[%s1067 + $0x7c] sm:$0x1]
      %v1722 = vld [vmem:[%s1067 + $0x80] sm:$0xe]
      %v1723 = vld [vmem:[%s1067 + $0x84] sm:$0x1]
      %v1724 = vld [vmem:[%s1067 + $0x88] sm:$0xe]
      %v1725 = vld [vmem:[%s1067 + $0x8c] sm:$0x1]
      %v1726 = vld [vmem:[%s1067 + $0xa0] sm:$0xe]
      %v1727 = vld [vmem:[%s1067 + $0xa4] sm:$0x1]
      %v1728 = vld [vmem:[%s1067 + $0xa8] sm:$0xe]
      %v1729 = vld [vmem:[%s1067 + $0xac] sm:$0x1]
      %v1730 = vld [vmem:[%s1067 + $0xb0] sm:$0xe]
      %v1731 = vld [vmem:[%s1067 + $0xb4] sm:$0x1]
      %v1732 = vld [vmem:[%s1067 + $0xb8] sm:$0xe]
      %v1733 = vld [vmem:[%s1067 + $0xbc] sm:$0x1]
      %v1734 = vld [vmem:[%s1067 + $0xc0] sm:$0xe]
      %v1735 = vld [vmem:[%s1067 + $0xc4] sm:$0x1]
      %v1736 = vld [vmem:[%s1067 + $0xc8] sm:$0xe]
      %v1737 = vld [vmem:[%s1067 + $0xcc] sm:$0x1]
      %v1738 = vld [vmem:[%s1067 + $0xd0] sm:$0xe]
      %v1739 = vld [vmem:[%s1067 + $0xd4] sm:$0x1]
      %v1740 = vld [vmem:[%s1067 + $0xd8] sm:$0xe]
      %v1741 = vld [vmem:[%s1067 + $0xdc] sm:$0x1]
      %v1790 = vrot.slane %v1694, 5
      %v1791 = vrot.slane %v1790, 4
      %v1792 = vrot.slane %v1695, 5
      %v1793 = vsel %vm873, %v1791, %v1792
      %v1794 = vrot.slane %v1696, 5
      %v1795 = vrot.slane %v1794, 4
      %v1796 = vrot.slane %v1697, 5
      %v1797 = vsel %vm873, %v1795, %v1796
      %v1798 = vrot.slane %v1698, 5
      %v1799 = vrot.slane %v1798, 4
      %v1800 = vrot.slane %v1699, 5
      %v1801 = vsel %vm873, %v1799, %v1800
      %v1802 = vrot.slane %v1700, 5
      %v1803 = vrot.slane %v1802, 4
      %v1804 = vrot.slane %v1701, 5
      %v1805 = vsel %vm873, %v1803, %v1804
      %v1806 = vrot.slane %v1702, 5
      %v1807 = vrot.slane %v1806, 4
      %v1808 = vrot.slane %v1703, 5
      %v1809 = vsel %vm873, %v1807, %v1808
      %v1810 = vrot.slane %v1704, 5
      %v1811 = vrot.slane %v1810, 4
      %v1812 = vrot.slane %v1705, 5
      %v1813 = vsel %vm873, %v1811, %v1812
      %v1814 = vrot.slane %v1706, 5
      %v1815 = vrot.slane %v1814, 4
      %v1816 = vrot.slane %v1707, 5
      %v1817 = vsel %vm873, %v1815, %v1816
      %v1818 = vrot.slane %v1708, 5
      %v1819 = vrot.slane %v1818, 4
      %v1820 = vrot.slane %v1709, 5
      %v1821 = vsel %vm873, %v1819, %v1820
      %v1822 = vrot.slane %v1710, 5
      %v1823 = vrot.slane %v1822, 4
      %v1824 = vrot.slane %v1711, 5
      %v1825 = vsel %vm873, %v1823, %v1824
      %v1826 = vrot.slane %v1712, 5
      %v1827 = vrot.slane %v1826, 4
      %v1828 = vrot.slane %v1713, 5
      %v1829 = vsel %vm873, %v1827, %v1828
      %v1830 = vrot.slane %v1714, 5
      %v1831 = vrot.slane %v1830, 4
      %v1832 = vrot.slane %v1715, 5
      %v1833 = vsel %vm873, %v1831, %v1832
      %v1834 = vrot.slane %v1716, 5
      %v1835 = vrot.slane %v1834, 4
      %v1836 = vrot.slane %v1717, 5
      %v1837 = vsel %vm873, %v1835, %v1836
      %v1838 = vrot.slane %v1718, 5
      %v1839 = vrot.slane %v1838, 4
      %v1840 = vrot.slane %v1719, 5
      %v1841 = vsel %vm873, %v1839, %v1840
      %v1842 = vrot.slane %v1720, 5
      %v1843 = vrot.slane %v1842, 4
      %v1844 = vrot.slane %v1721, 5
      %v1845 = vsel %vm873, %v1843, %v1844
      %v1846 = vrot.slane %v1722, 5
      %v1847 = vrot.slane %v1846, 4
      %v1848 = vrot.slane %v1723, 5
      %v1849 = vsel %vm873, %v1847, %v1848
      %v1850 = vrot.slane %v1724, 5
      %v1851 = vrot.slane %v1850, 4
      %v1852 = vrot.slane %v1725, 5
      %v1853 = vsel %vm873, %v1851, %v1852
      %v1854 = vrot.slane %v1726, 5
      %v1855 = vrot.slane %v1854, 4
      %v1856 = vrot.slane %v1727, 5
      %v1857 = vsel %vm873, %v1855, %v1856
      %v1858 = vrot.slane %v1728, 5
      %v1859 = vrot.slane %v1858, 4
      %v1860 = vrot.slane %v1729, 5
      %v1861 = vsel %vm873, %v1859, %v1860
      %v1862 = vrot.slane %v1730, 5
      %v1863 = vrot.slane %v1862, 4
      %v1864 = vrot.slane %v1731, 5
      %v1865 = vsel %vm873, %v1863, %v1864
      %v1866 = vrot.slane %v1732, 5
      %v1867 = vrot.slane %v1866, 4
      %v1868 = vrot.slane %v1733, 5
      %v1869 = vsel %vm873, %v1867, %v1868
      %v1870 = vrot.slane %v1734, 5
      %v1871 = vrot.slane %v1870, 4
      %v1872 = vrot.slane %v1735, 5
      %v1873 = vsel %vm873, %v1871, %v1872
      %v1874 = vrot.slane %v1736, 5
      %v1875 = vrot.slane %v1874, 4
      %v1876 = vrot.slane %v1737, 5
      %v1877 = vsel %vm873, %v1875, %v1876
      %v1878 = vrot.slane %v1738, 5
      %v1879 = vrot.slane %v1878, 4
      %v1880 = vrot.slane %v1739, 5
      %v1881 = vsel %vm873, %v1879, %v1880
      %v1882 = vrot.slane %v1740, 5
      %v1883 = vrot.slane %v1882, 4
      %v1884 = vrot.slane %v1741, 5
      %v1885 = vsel %vm873, %v1883, %v1884
      %1886 = vrot.lane.b32.xlu0 %v1793, 20
      %v1887 = vpop.permute.xlu0 %1886
      %1888 = vrot.lane.b32.xlu0 %v1797, 20
      %v1889 = vpop.permute.xlu0 %1888
      %1890 = vrot.lane.b32.xlu0 %v1801, 20
      %v1891 = vpop.permute.xlu0 %1890
      %1892 = vrot.lane.b32.xlu0 %v1805, 20
      %v1893 = vpop.permute.xlu0 %1892
      %1894 = vrot.lane.b32.xlu0 %v1809, 20
      %v1895 = vpop.permute.xlu0 %1894
      %1896 = vrot.lane.b32.xlu0 %v1813, 20
      %v1897 = vpop.permute.xlu0 %1896
      %1898 = vrot.lane.b32.xlu0 %v1817, 20
      %v1899 = vpop.permute.xlu0 %1898
      %1900 = vrot.lane.b32.xlu0 %v1821, 20
      %v1901 = vpop.permute.xlu0 %1900
      %1902 = vrot.lane.b32.xlu0 %v1825, 20
      %v1903 = vpop.permute.xlu0 %1902
      %1904 = vrot.lane.b32.xlu0 %v1829, 20
      %v1905 = vpop.permute.xlu0 %1904
      %1906 = vrot.lane.b32.xlu0 %v1833, 20
      %v1907 = vpop.permute.xlu0 %1906
      %1908 = vrot.lane.b32.xlu0 %v1837, 20
      %v1909 = vpop.permute.xlu0 %1908
      %1910 = vrot.lane.b32.xlu0 %v1841, 20
      %v1911 = vpop.permute.xlu0 %1910
      %1912 = vrot.lane.b32.xlu0 %v1845, 20
      %v1913 = vpop.permute.xlu0 %1912
      %1914 = vrot.lane.b32.xlu0 %v1849, 20
      %v1915 = vpop.permute.xlu0 %1914
      %1916 = vrot.lane.b32.xlu0 %v1853, 20
      %v1917 = vpop.permute.xlu0 %1916
      %1918 = vrot.lane.b32.xlu0 %v1857, 20
      %v1919 = vpop.permute.xlu0 %1918
      %1920 = vrot.lane.b32.xlu0 %v1861, 20
      %v1921 = vpop.permute.xlu0 %1920
      %1922 = vrot.lane.b32.xlu0 %v1865, 20
      %v1923 = vpop.permute.xlu0 %1922
      %1924 = vrot.lane.b32.xlu0 %v1869, 20
      %v1925 = vpop.permute.xlu0 %1924
      %1926 = vrot.lane.b32.xlu0 %v1873, 20
      %v1927 = vpop.permute.xlu0 %1926
      %1928 = vrot.lane.b32.xlu0 %v1877, 20
      %v1929 = vpop.permute.xlu0 %1928
      %1930 = vrot.lane.b32.xlu0 %v1881, 20
      %v1931 = vpop.permute.xlu0 %1930
      %1932 = vrot.lane.b32.xlu0 %v1885, 20
      %v1933 = vpop.permute.xlu0 %1932
      %vm1958 = vcmask 191648
      %1959 = vst.msk [vmem:[#allocation2] sm:$0xf] %vm1958, %v1887
      %1960 = vst.msk [vmem:[#allocation2 + $0x4] sm:$0xf] %vm1958, %v1889
      %1961 = vst.msk [vmem:[#allocation2 + $0x8] sm:$0xf] %vm1958, %v1891
      %1962 = vst.msk [vmem:[#allocation2 + $0xc] sm:$0xf] %vm1958, %v1893
      %1963 = vst.msk [vmem:[#allocation2 + $0x10] sm:$0xf] %vm1958, %v1895
      %1964 = vst.msk [vmem:[#allocation2 + $0x14] sm:$0xf] %vm1958, %v1897
      %1965 = vst.msk [vmem:[#allocation2 + $0x18] sm:$0xf] %vm1958, %v1899
      %1966 = vst.msk [vmem:[#allocation2 + $0x1c] sm:$0xf] %vm1958, %v1901
      %1967 = vst.msk [vmem:[#allocation2 + $0x20] sm:$0xf] %vm1958, %v1903
      %1968 = vst.msk [vmem:[#allocation2 + $0x24] sm:$0xf] %vm1958, %v1905
      %1969 = vst.msk [vmem:[#allocation2 + $0x28] sm:$0xf] %vm1958, %v1907
      %1970 = vst.msk [vmem:[#allocation2 + $0x2c] sm:$0xf] %vm1958, %v1909
      %1971 = vst.msk [vmem:[#allocation2 + $0x30] sm:$0xf] %vm1958, %v1911
      %1972 = vst.msk [vmem:[#allocation2 + $0x34] sm:$0xf] %vm1958, %v1913
      %1973 = vst.msk [vmem:[#allocation2 + $0x38] sm:$0xf] %vm1958, %v1915
      %1974 = vst.msk [vmem:[#allocation2 + $0x3c] sm:$0xf] %vm1958, %v1917
      %1975 = vst.msk [vmem:[#allocation2 + $0x40] sm:$0xf] %vm1958, %v1919
      %1976 = vst.msk [vmem:[#allocation2 + $0x44] sm:$0xf] %vm1958, %v1921
      %1977 = vst.msk [vmem:[#allocation2 + $0x48] sm:$0xf] %vm1958, %v1923
      %1978 = vst.msk [vmem:[#allocation2 + $0x4c] sm:$0xf] %vm1958, %v1925
      %1979 = vst.msk [vmem:[#allocation2 + $0x50] sm:$0xf] %vm1958, %v1927
      %1980 = vst.msk [vmem:[#allocation2 + $0x54] sm:$0xf] %vm1958, %v1929
      %1981 = vst.msk [vmem:[#allocation2 + $0x58] sm:$0xf] %vm1958, %v1931
      %1982 = vst.msk [vmem:[#allocation2 + $0x5c] sm:$0xf] %vm1958, %v1933
      %s1983 = scalar_lea.vmem %s221, 16
      %v1984 = vld [vmem:[%s1983] sm:$0xf]
      %v1985 = vld [vmem:[%s1983 + $0x8] sm:$0xf]
      %v1986 = vld [vmem:[%s1983 + $0x10] sm:$0xf]
      %v1987 = vld [vmem:[%s1983 + $0x18] sm:$0xf]
      %v1988 = vld [vmem:[%s1983 + $0x20] sm:$0xf]
      %v1989 = vld [vmem:[%s1983 + $0x28] sm:$0xf]
      %v1990 = vld [vmem:[%s1983 + $0x30] sm:$0xf]
      %v1991 = vld [vmem:[%s1983 + $0x38] sm:$0xf]
      %v1992 = vld [vmem:[%s1983 + $0x50] sm:$0xf]
      %v1993 = vld [vmem:[%s1983 + $0x58] sm:$0xf]
      %v1994 = vld [vmem:[%s1983 + $0x60] sm:$0xf]
      %v1995 = vld [vmem:[%s1983 + $0x68] sm:$0xf]
      %v1996 = vld [vmem:[%s1983 + $0x70] sm:$0xf]
      %v1997 = vld [vmem:[%s1983 + $0x78] sm:$0xf]
      %v1998 = vld [vmem:[%s1983 + $0x80] sm:$0xf]
      %v1999 = vld [vmem:[%s1983 + $0x88] sm:$0xf]
      %v2000 = vld [vmem:[%s1983 + $0xa0] sm:$0xf]
      %v2001 = vld [vmem:[%s1983 + $0xa8] sm:$0xf]
      %v2002 = vld [vmem:[%s1983 + $0xb0] sm:$0xf]
      %v2003 = vld [vmem:[%s1983 + $0xb8] sm:$0xf]
      %v2004 = vld [vmem:[%s1983 + $0xc0] sm:$0xf]
      %v2005 = vld [vmem:[%s1983 + $0xc8] sm:$0xf]
      %v2006 = vld [vmem:[%s1983 + $0xd0] sm:$0xf]
      %v2007 = vld [vmem:[%s1983 + $0xd8] sm:$0xf]
      %2032 = vrot.lane.b32.xlu0 %v1984, 24
      %v2033 = vpop.permute.xlu0 %2032
      %2034 = vrot.lane.b32.xlu0 %v1985, 24
      %v2035 = vpop.permute.xlu0 %2034
      %2036 = vrot.lane.b32.xlu0 %v1986, 24
      %v2037 = vpop.permute.xlu0 %2036
      %2038 = vrot.lane.b32.xlu0 %v1987, 24
      %v2039 = vpop.permute.xlu0 %2038
      %2040 = vrot.lane.b32.xlu0 %v1988, 24
      %v2041 = vpop.permute.xlu0 %2040
      %2042 = vrot.lane.b32.xlu0 %v1989, 24
      %v2043 = vpop.permute.xlu0 %2042
      %2044 = vrot.lane.b32.xlu0 %v1990, 24
      %v2045 = vpop.permute.xlu0 %2044
      %2046 = vrot.lane.b32.xlu0 %v1991, 24
      %v2047 = vpop.permute.xlu0 %2046
      %2048 = vrot.lane.b32.xlu0 %v1992, 24
      %v2049 = vpop.permute.xlu0 %2048
      %2050 = vrot.lane.b32.xlu0 %v1993, 24
      %v2051 = vpop.permute.xlu0 %2050
      %2052 = vrot.lane.b32.xlu0 %v1994, 24
      %v2053 = vpop.permute.xlu0 %2052
      %2054 = vrot.lane.b32.xlu0 %v1995, 24
      %v2055 = vpop.permute.xlu0 %2054
      %2056 = vrot.lane.b32.xlu0 %v1996, 24
      %v2057 = vpop.permute.xlu0 %2056
      %2058 = vrot.lane.b32.xlu0 %v1997, 24
      %v2059 = vpop.permute.xlu0 %2058
      %2060 = vrot.lane.b32.xlu0 %v1998, 24
      %v2061 = vpop.permute.xlu0 %2060
      %2062 = vrot.lane.b32.xlu0 %v1999, 24
      %v2063 = vpop.permute.xlu0 %2062
      %2064 = vrot.lane.b32.xlu0 %v2000, 24
      %v2065 = vpop.permute.xlu0 %2064
      %2066 = vrot.lane.b32.xlu0 %v2001, 24
      %v2067 = vpop.permute.xlu0 %2066
      %2068 = vrot.lane.b32.xlu0 %v2002, 24
      %v2069 = vpop.permute.xlu0 %2068
      %2070 = vrot.lane.b32.xlu0 %v2003, 24
      %v2071 = vpop.permute.xlu0 %2070
      %2072 = vrot.lane.b32.xlu0 %v2004, 24
      %v2073 = vpop.permute.xlu0 %2072
      %2074 = vrot.lane.b32.xlu0 %v2005, 24
      %v2075 = vpop.permute.xlu0 %2074
      %2076 = vrot.lane.b32.xlu0 %v2006, 24
      %v2077 = vpop.permute.xlu0 %2076
      %2078 = vrot.lane.b32.xlu0 %v2007, 24
      %v2079 = vpop.permute.xlu0 %2078
      %vm2104 = vcmask 224448
      %2105 = vst.msk [vmem:[#allocation2] sm:$0xf] %vm2104, %v2033
      %2106 = vst.msk [vmem:[#allocation2 + $0x4] sm:$0xf] %vm2104, %v2035
      %2107 = vst.msk [vmem:[#allocation2 + $0x8] sm:$0xf] %vm2104, %v2037
      %2108 = vst.msk [vmem:[#allocation2 + $0xc] sm:$0xf] %vm2104, %v2039
      %2109 = vst.msk [vmem:[#allocation2 + $0x10] sm:$0xf] %vm2104, %v2041
      %2110 = vst.msk [vmem:[#allocation2 + $0x14] sm:$0xf] %vm2104, %v2043
      %2111 = vst.msk [vmem:[#allocation2 + $0x18] sm:$0xf] %vm2104, %v2045
      %2112 = vst.msk [vmem:[#allocation2 + $0x1c] sm:$0xf] %vm2104, %v2047
      %2113 = vst.msk [vmem:[#allocation2 + $0x20] sm:$0xf] %vm2104, %v2049
      %2114 = vst.msk [vmem:[#allocation2 + $0x24] sm:$0xf] %vm2104, %v2051
      %2115 = vst.msk [vmem:[#allocation2 + $0x28] sm:$0xf] %vm2104, %v2053
      %2116 = vst.msk [vmem:[#allocation2 + $0x2c] sm:$0xf] %vm2104, %v2055
      %2117 = vst.msk [vmem:[#allocation2 + $0x30] sm:$0xf] %vm2104, %v2057
      %2118 = vst.msk [vmem:[#allocation2 + $0x34] sm:$0xf] %vm2104, %v2059
      %2119 = vst.msk [vmem:[#allocation2 + $0x38] sm:$0xf] %vm2104, %v2061
      %2120 = vst.msk [vmem:[#allocation2 + $0x3c] sm:$0xf] %vm2104, %v2063
      %2121 = vst.msk [vmem:[#allocation2 + $0x40] sm:$0xf] %vm2104, %v2065
      %2122 = vst.msk [vmem:[#allocation2 + $0x44] sm:$0xf] %vm2104, %v2067
      %2123 = vst.msk [vmem:[#allocation2 + $0x48] sm:$0xf] %vm2104, %v2069
      %2124 = vst.msk [vmem:[#allocation2 + $0x4c] sm:$0xf] %vm2104, %v2071
      %2125 = vst.msk [vmem:[#allocation2 + $0x50] sm:$0xf] %vm2104, %v2073
      %2126 = vst.msk [vmem:[#allocation2 + $0x54] sm:$0xf] %vm2104, %v2075
      %2127 = vst.msk [vmem:[#allocation2 + $0x58] sm:$0xf] %vm2104, %v2077
      %2128 = vst.msk [vmem:[#allocation2 + $0x5c] sm:$0xf] %vm2104, %v2079
      %v2129 = vld [vmem:[%s1983] sm:$0xf]
      %v2130 = vld [vmem:[%s1983 + $0x4] sm:$0x1]
      %v2131 = vld [vmem:[%s1983 + $0x8] sm:$0xf]
      %v2132 = vld [vmem:[%s1983 + $0xc] sm:$0x1]
      %v2133 = vld [vmem:[%s1983 + $0x10] sm:$0xf]
      %v2134 = vld [vmem:[%s1983 + $0x14] sm:$0x1]
      %v2135 = vld [vmem:[%s1983 + $0x18] sm:$0xf]
      %v2136 = vld [vmem:[%s1983 + $0x1c] sm:$0x1]
      %v2137 = vld [vmem:[%s1983 + $0x20] sm:$0xf]
      %v2138 = vld [vmem:[%s1983 + $0x24] sm:$0x1]
      %v2139 = vld [vmem:[%s1983 + $0x28] sm:$0xf]
      %v2140 = vld [vmem:[%s1983 + $0x2c] sm:$0x1]
      %v2141 = vld [vmem:[%s1983 + $0x30] sm:$0xf]
      %v2142 = vld [vmem:[%s1983 + $0x34] sm:$0x1]
      %v2143 = vld [vmem:[%s1983 + $0x38] sm:$0xf]
      %v2144 = vld [vmem:[%s1983 + $0x3c] sm:$0x1]
      %v2145 = vld [vmem:[%s1983 + $0x50] sm:$0xf]
      %v2146 = vld [vmem:[%s1983 + $0x54] sm:$0x1]
      %v2147 = vld [vmem:[%s1983 + $0x58] sm:$0xf]
      %v2148 = vld [vmem:[%s1983 + $0x5c] sm:$0x1]
      %v2149 = vld [vmem:[%s1983 + $0x60] sm:$0xf]
      %v2150 = vld [vmem:[%s1983 + $0x64] sm:$0x1]
      %v2151 = vld [vmem:[%s1983 + $0x68] sm:$0xf]
      %v2152 = vld [vmem:[%s1983 + $0x6c] sm:$0x1]
      %v2153 = vld [vmem:[%s1983 + $0x70] sm:$0xf]
      %v2154 = vld [vmem:[%s1983 + $0x74] sm:$0x1]
      %v2155 = vld [vmem:[%s1983 + $0x78] sm:$0xf]
      %v2156 = vld [vmem:[%s1983 + $0x7c] sm:$0x1]
      %v2157 = vld [vmem:[%s1983 + $0x80] sm:$0xf]
      %v2158 = vld [vmem:[%s1983 + $0x84] sm:$0x1]
      %v2159 = vld [vmem:[%s1983 + $0x88] sm:$0xf]
      %v2160 = vld [vmem:[%s1983 + $0x8c] sm:$0x1]
      %v2161 = vld [vmem:[%s1983 + $0xa0] sm:$0xf]
      %v2162 = vld [vmem:[%s1983 + $0xa4] sm:$0x1]
      %v2163 = vld [vmem:[%s1983 + $0xa8] sm:$0xf]
      %v2164 = vld [vmem:[%s1983 + $0xac] sm:$0x1]
      %v2165 = vld [vmem:[%s1983 + $0xb0] sm:$0xf]
      %v2166 = vld [vmem:[%s1983 + $0xb4] sm:$0x1]
      %v2167 = vld [vmem:[%s1983 + $0xb8] sm:$0xf]
      %v2168 = vld [vmem:[%s1983 + $0xbc] sm:$0x1]
      %v2169 = vld [vmem:[%s1983 + $0xc0] sm:$0xf]
      %v2170 = vld [vmem:[%s1983 + $0xc4] sm:$0x1]
      %v2171 = vld [vmem:[%s1983 + $0xc8] sm:$0xf]
      %v2172 = vld [vmem:[%s1983 + $0xcc] sm:$0x1]
      %v2173 = vld [vmem:[%s1983 + $0xd0] sm:$0xf]
      %v2174 = vld [vmem:[%s1983 + $0xd4] sm:$0x1]
      %v2175 = vld [vmem:[%s1983 + $0xd8] sm:$0xf]
      %v2176 = vld [vmem:[%s1983 + $0xdc] sm:$0x1]
      %v2178 = vshrl.u32 %v2129, 16
      %v2180 = vrot.slane %v2178, 4
      %v2181 = vshll.u32 %v2129, 16
      %v2183 = vrot.slane %v2181, 5
      %v2184 = vor.u32 %v2180, %v2183
      %v2185 = vrot.slane %v2184, 4
      %v2187 = vshll.u32 %v2130, 16
      %v2189 = vrot.slane %v2187, 5
      %v2190 = vsel %vm341, %v2185, %v2189
      %v2192 = vshrl.u32 %v2131, 16
      %v2194 = vrot.slane %v2192, 4
      %v2195 = vshll.u32 %v2131, 16
      %v2197 = vrot.slane %v2195, 5
      %v2198 = vor.u32 %v2194, %v2197
      %v2199 = vrot.slane %v2198, 4
      %v2201 = vshll.u32 %v2132, 16
      %v2203 = vrot.slane %v2201, 5
      %v2204 = vsel %vm341, %v2199, %v2203
      %v2206 = vshrl.u32 %v2133, 16
      %v2208 = vrot.slane %v2206, 4
      %v2209 = vshll.u32 %v2133, 16
      %v2211 = vrot.slane %v2209, 5
      %v2212 = vor.u32 %v2208, %v2211
      %v2213 = vrot.slane %v2212, 4
      %v2215 = vshll.u32 %v2134, 16
      %v2217 = vrot.slane %v2215, 5
      %v2218 = vsel %vm341, %v2213, %v2217
      %v2220 = vshrl.u32 %v2135, 16
      %v2222 = vrot.slane %v2220, 4
      %v2223 = vshll.u32 %v2135, 16
      %v2225 = vrot.slane %v2223, 5
      %v2226 = vor.u32 %v2222, %v2225
      %v2227 = vrot.slane %v2226, 4
      %v2229 = vshll.u32 %v2136, 16
      %v2231 = vrot.slane %v2229, 5
      %v2232 = vsel %vm341, %v2227, %v2231
      %v2234 = vshrl.u32 %v2137, 16
      %v2236 = vrot.slane %v2234, 4
      %v2237 = vshll.u32 %v2137, 16
      %v2239 = vrot.slane %v2237, 5
      %v2240 = vor.u32 %v2236, %v2239
      %v2241 = vrot.slane %v2240, 4
      %v2243 = vshll.u32 %v2138, 16
      %v2245 = vrot.slane %v2243, 5
      %v2246 = vsel %vm341, %v2241, %v2245
      %v2248 = vshrl.u32 %v2139, 16
      %v2250 = vrot.slane %v2248, 4
      %v2251 = vshll.u32 %v2139, 16
      %v2253 = vrot.slane %v2251, 5
      %v2254 = vor.u32 %v2250, %v2253
      %v2255 = vrot.slane %v2254, 4
      %v2257 = vshll.u32 %v2140, 16
      %v2259 = vrot.slane %v2257, 5
      %v2260 = vsel %vm341, %v2255, %v2259
      %v2262 = vshrl.u32 %v2141, 16
      %v2264 = vrot.slane %v2262, 4
      %v2265 = vshll.u32 %v2141, 16
      %v2267 = vrot.slane %v2265, 5
      %v2268 = vor.u32 %v2264, %v2267
      %v2269 = vrot.slane %v2268, 4
      %v2271 = vshll.u32 %v2142, 16
      %v2273 = vrot.slane %v2271, 5
      %v2274 = vsel %vm341, %v2269, %v2273
      %v2276 = vshrl.u32 %v2143, 16
      %v2278 = vrot.slane %v2276, 4
      %v2279 = vshll.u32 %v2143, 16
      %v2281 = vrot.slane %v2279, 5
      %v2282 = vor.u32 %v2278, %v2281
      %v2283 = vrot.slane %v2282, 4
      %v2285 = vshll.u32 %v2144, 16
      %v2287 = vrot.slane %v2285, 5
      %v2288 = vsel %vm341, %v2283, %v2287
      %v2290 = vshrl.u32 %v2145, 16
      %v2292 = vrot.slane %v2290, 4
      %v2293 = vshll.u32 %v2145, 16
      %v2295 = vrot.slane %v2293, 5
      %v2296 = vor.u32 %v2292, %v2295
      %v2297 = vrot.slane %v2296, 4
      %v2299 = vshll.u32 %v2146, 16
      %v2301 = vrot.slane %v2299, 5
      %v2302 = vsel %vm341, %v2297, %v2301
      %v2304 = vshrl.u32 %v2147, 16
      %v2306 = vrot.slane %v2304, 4
      %v2307 = vshll.u32 %v2147, 16
      %v2309 = vrot.slane %v2307, 5
      %v2310 = vor.u32 %v2306, %v2309
      %v2311 = vrot.slane %v2310, 4
      %v2313 = vshll.u32 %v2148, 16
      %v2315 = vrot.slane %v2313, 5
      %v2316 = vsel %vm341, %v2311, %v2315
      %v2318 = vshrl.u32 %v2149, 16
      %v2320 = vrot.slane %v2318, 4
      %v2321 = vshll.u32 %v2149, 16
      %v2323 = vrot.slane %v2321, 5
      %v2324 = vor.u32 %v2320, %v2323
      %v2325 = vrot.slane %v2324, 4
      %v2327 = vshll.u32 %v2150, 16
      %v2329 = vrot.slane %v2327, 5
      %v2330 = vsel %vm341, %v2325, %v2329
      %v2332 = vshrl.u32 %v2151, 16
      %v2334 = vrot.slane %v2332, 4
      %v2335 = vshll.u32 %v2151, 16
      %v2337 = vrot.slane %v2335, 5
      %v2338 = vor.u32 %v2334, %v2337
      %v2339 = vrot.slane %v2338, 4
      %v2341 = vshll.u32 %v2152, 16
      %v2343 = vrot.slane %v2341, 5
      %v2344 = vsel %vm341, %v2339, %v2343
      %v2346 = vshrl.u32 %v2153, 16
      %v2348 = vrot.slane %v2346, 4
      %v2349 = vshll.u32 %v2153, 16
      %v2351 = vrot.slane %v2349, 5
      %v2352 = vor.u32 %v2348, %v2351
      %v2353 = vrot.slane %v2352, 4
      %v2355 = vshll.u32 %v2154, 16
      %v2357 = vrot.slane %v2355, 5
      %v2358 = vsel %vm341, %v2353, %v2357
      %v2360 = vshrl.u32 %v2155, 16
      %v2362 = vrot.slane %v2360, 4
      %v2363 = vshll.u32 %v2155, 16
      %v2365 = vrot.slane %v2363, 5
      %v2366 = vor.u32 %v2362, %v2365
      %v2367 = vrot.slane %v2366, 4
      %v2369 = vshll.u32 %v2156, 16
      %v2371 = vrot.slane %v2369, 5
      %v2372 = vsel %vm341, %v2367, %v2371
      %v2374 = vshrl.u32 %v2157, 16
      %v2376 = vrot.slane %v2374, 4
      %v2377 = vshll.u32 %v2157, 16
      %v2379 = vrot.slane %v2377, 5
      %v2380 = vor.u32 %v2376, %v2379
      %v2381 = vrot.slane %v2380, 4
      %v2383 = vshll.u32 %v2158, 16
      %v2385 = vrot.slane %v2383, 5
      %v2386 = vsel %vm341, %v2381, %v2385
      %v2388 = vshrl.u32 %v2159, 16
      %v2390 = vrot.slane %v2388, 4
      %v2391 = vshll.u32 %v2159, 16
      %v2393 = vrot.slane %v2391, 5
      %v2394 = vor.u32 %v2390, %v2393
      %v2395 = vrot.slane %v2394, 4
      %v2397 = vshll.u32 %v2160, 16
      %v2399 = vrot.slane %v2397, 5
      %v2400 = vsel %vm341, %v2395, %v2399
      %v2402 = vshrl.u32 %v2161, 16
      %v2404 = vrot.slane %v2402, 4
      %v2405 = vshll.u32 %v2161, 16
      %v2407 = vrot.slane %v2405, 5
      %v2408 = vor.u32 %v2404, %v2407
      %v2409 = vrot.slane %v2408, 4
      %v2411 = vshll.u32 %v2162, 16
      %v2413 = vrot.slane %v2411, 5
      %v2414 = vsel %vm341, %v2409, %v2413
      %v2416 = vshrl.u32 %v2163, 16
      %v2418 = vrot.slane %v2416, 4
      %v2419 = vshll.u32 %v2163, 16
      %v2421 = vrot.slane %v2419, 5
      %v2422 = vor.u32 %v2418, %v2421
      %v2423 = vrot.slane %v2422, 4
      %v2425 = vshll.u32 %v2164, 16
      %v2427 = vrot.slane %v2425, 5
      %v2428 = vsel %vm341, %v2423, %v2427
      %v2430 = vshrl.u32 %v2165, 16
      %v2432 = vrot.slane %v2430, 4
      %v2433 = vshll.u32 %v2165, 16
      %v2435 = vrot.slane %v2433, 5
      %v2436 = vor.u32 %v2432, %v2435
      %v2437 = vrot.slane %v2436, 4
      %v2439 = vshll.u32 %v2166, 16
      %v2441 = vrot.slane %v2439, 5
      %v2442 = vsel %vm341, %v2437, %v2441
      %v2444 = vshrl.u32 %v2167, 16
      %v2446 = vrot.slane %v2444, 4
      %v2447 = vshll.u32 %v2167, 16
      %v2449 = vrot.slane %v2447, 5
      %v2450 = vor.u32 %v2446, %v2449
      %v2451 = vrot.slane %v2450, 4
      %v2453 = vshll.u32 %v2168, 16
      %v2455 = vrot.slane %v2453, 5
      %v2456 = vsel %vm341, %v2451, %v2455
      %v2458 = vshrl.u32 %v2169, 16
      %v2460 = vrot.slane %v2458, 4
      %v2461 = vshll.u32 %v2169, 16
      %v2463 = vrot.slane %v2461, 5
      %v2464 = vor.u32 %v2460, %v2463
      %v2465 = vrot.slane %v2464, 4
      %v2467 = vshll.u32 %v2170, 16
      %v2469 = vrot.slane %v2467, 5
      %v2470 = vsel %vm341, %v2465, %v2469
      %v2472 = vshrl.u32 %v2171, 16
      %v2474 = vrot.slane %v2472, 4
      %v2475 = vshll.u32 %v2171, 16
      %v2477 = vrot.slane %v2475, 5
      %v2478 = vor.u32 %v2474, %v2477
      %v2479 = vrot.slane %v2478, 4
      %v2481 = vshll.u32 %v2172, 16
      %v2483 = vrot.slane %v2481, 5
      %v2484 = vsel %vm341, %v2479, %v2483
      %v2486 = vshrl.u32 %v2173, 16
      %v2488 = vrot.slane %v2486, 4
      %v2489 = vshll.u32 %v2173, 16
      %v2491 = vrot.slane %v2489, 5
      %v2492 = vor.u32 %v2488, %v2491
      %v2493 = vrot.slane %v2492, 4
      %v2495 = vshll.u32 %v2174, 16
      %v2497 = vrot.slane %v2495, 5
      %v2498 = vsel %vm341, %v2493, %v2497
      %v2500 = vshrl.u32 %v2175, 16
      %v2502 = vrot.slane %v2500, 4
      %v2503 = vshll.u32 %v2175, 16
      %v2505 = vrot.slane %v2503, 5
      %v2506 = vor.u32 %v2502, %v2505
      %v2507 = vrot.slane %v2506, 4
      %v2509 = vshll.u32 %v2176, 16
      %v2511 = vrot.slane %v2509, 5
      %v2512 = vsel %vm341, %v2507, %v2511
      %2513 = vrot.lane.b32.xlu0 %v2190, 28
      %v2514 = vpop.permute.xlu0 %2513
      %2515 = vrot.lane.b32.xlu0 %v2204, 28
      %v2516 = vpop.permute.xlu0 %2515
      %2517 = vrot.lane.b32.xlu0 %v2218, 28
      %v2518 = vpop.permute.xlu0 %2517
      %2519 = vrot.lane.b32.xlu0 %v2232, 28
      %v2520 = vpop.permute.xlu0 %2519
      %2521 = vrot.lane.b32.xlu0 %v2246, 28
      %v2522 = vpop.permute.xlu0 %2521
      %2523 = vrot.lane.b32.xlu0 %v2260, 28
      %v2524 = vpop.permute.xlu0 %2523
      %2525 = vrot.lane.b32.xlu0 %v2274, 28
      %v2526 = vpop.permute.xlu0 %2525
      %2527 = vrot.lane.b32.xlu0 %v2288, 28
      %v2528 = vpop.permute.xlu0 %2527
      %2529 = vrot.lane.b32.xlu0 %v2302, 28
      %v2530 = vpop.permute.xlu0 %2529
      %2531 = vrot.lane.b32.xlu0 %v2316, 28
      %v2532 = vpop.permute.xlu0 %2531
      %2533 = vrot.lane.b32.xlu0 %v2330, 28
      %v2534 = vpop.permute.xlu0 %2533
      %2535 = vrot.lane.b32.xlu0 %v2344, 28
      %v2536 = vpop.permute.xlu0 %2535
      %2537 = vrot.lane.b32.xlu0 %v2358, 28
      %v2538 = vpop.permute.xlu0 %2537
      %2539 = vrot.lane.b32.xlu0 %v2372, 28
      %v2540 = vpop.permute.xlu0 %2539
      %2541 = vrot.lane.b32.xlu0 %v2386, 28
      %v2542 = vpop.permute.xlu0 %2541
      %2543 = vrot.lane.b32.xlu0 %v2400, 28
      %v2544 = vpop.permute.xlu0 %2543
      %2545 = vrot.lane.b32.xlu0 %v2414, 28
      %v2546 = vpop.permute.xlu0 %2545
      %2547 = vrot.lane.b32.xlu0 %v2428, 28
      %v2548 = vpop.permute.xlu0 %2547
      %2549 = vrot.lane.b32.xlu0 %v2442, 28
      %v2550 = vpop.permute.xlu0 %2549
      %2551 = vrot.lane.b32.xlu0 %v2456, 28
      %v2552 = vpop.permute.xlu0 %2551
      %2553 = vrot.lane.b32.xlu0 %v2470, 28
      %v2554 = vpop.permute.xlu0 %2553
      %2555 = vrot.lane.b32.xlu0 %v2484, 28
      %v2556 = vpop.permute.xlu0 %2555
      %2557 = vrot.lane.b32.xlu0 %v2498, 28
      %v2558 = vpop.permute.xlu0 %2557
      %2559 = vrot.lane.b32.xlu0 %v2512, 28
      %v2560 = vpop.permute.xlu0 %2559
      %vm2585 = vcmask 257248
      %2586 = vst.msk [vmem:[#allocation2] sm:$0xf] %vm2585, %v2514
      %2587 = vst.msk [vmem:[#allocation2 + $0x4] sm:$0xf] %vm2585, %v2516
      %2588 = vst.msk [vmem:[#allocation2 + $0x8] sm:$0xf] %vm2585, %v2518
      %2589 = vst.msk [vmem:[#allocation2 + $0xc] sm:$0xf] %vm2585, %v2520
      %2590 = vst.msk [vmem:[#allocation2 + $0x10] sm:$0xf] %vm2585, %v2522
      %2591 = vst.msk [vmem:[#allocation2 + $0x14] sm:$0xf] %vm2585, %v2524
      %2592 = vst.msk [vmem:[#allocation2 + $0x18] sm:$0xf] %vm2585, %v2526
      %2593 = vst.msk [vmem:[#allocation2 + $0x1c] sm:$0xf] %vm2585, %v2528
      %2594 = vst.msk [vmem:[#allocation2 + $0x20] sm:$0xf] %vm2585, %v2530
      %2595 = vst.msk [vmem:[#allocation2 + $0x24] sm:$0xf] %vm2585, %v2532
      %2596 = vst.msk [vmem:[#allocation2 + $0x28] sm:$0xf] %vm2585, %v2534
      %2597 = vst.msk [vmem:[#allocation2 + $0x2c] sm:$0xf] %vm2585, %v2536
      %2598 = vst.msk [vmem:[#allocation2 + $0x30] sm:$0xf] %vm2585, %v2538
      %2599 = vst.msk [vmem:[#allocation2 + $0x34] sm:$0xf] %vm2585, %v2540
      %2600 = vst.msk [vmem:[#allocation2 + $0x38] sm:$0xf] %vm2585, %v2542
      %2601 = vst.msk [vmem:[#allocation2 + $0x3c] sm:$0xf] %vm2585, %v2544
      %2602 = vst.msk [vmem:[#allocation2 + $0x40] sm:$0xf] %vm2585, %v2546
      %2603 = vst.msk [vmem:[#allocation2 + $0x44] sm:$0xf] %vm2585, %v2548
      %2604 = vst.msk [vmem:[#allocation2 + $0x48] sm:$0xf] %vm2585, %v2550
      %2605 = vst.msk [vmem:[#allocation2 + $0x4c] sm:$0xf] %vm2585, %v2552
      %2606 = vst.msk [vmem:[#allocation2 + $0x50] sm:$0xf] %vm2585, %v2554
      %2607 = vst.msk [vmem:[#allocation2 + $0x54] sm:$0xf] %vm2585, %v2556
      %2608 = vst.msk [vmem:[#allocation2 + $0x58] sm:$0xf] %vm2585, %v2558
      %2609 = vst.msk [vmem:[#allocation2 + $0x5c] sm:$0xf] %vm2585, %v2560
      %v2610 = vld [vmem:[%s1983] sm:$0xe]
      %v2611 = vld [vmem:[%s1983 + $0x4] sm:$0x1]
      %v2612 = vld [vmem:[%s1983 + $0x8] sm:$0xe]
      %v2613 = vld [vmem:[%s1983 + $0xc] sm:$0x1]
      %v2614 = vld [vmem:[%s1983 + $0x10] sm:$0xe]
      %v2615 = vld [vmem:[%s1983 + $0x14] sm:$0x1]
      %v2616 = vld [vmem:[%s1983 + $0x18] sm:$0xe]
      %v2617 = vld [vmem:[%s1983 + $0x1c] sm:$0x1]
      %v2618 = vld [vmem:[%s1983 + $0x20] sm:$0xe]
      %v2619 = vld [vmem:[%s1983 + $0x24] sm:$0x1]
      %v2620 = vld [vmem:[%s1983 + $0x28] sm:$0xe]
      %v2621 = vld [vmem:[%s1983 + $0x2c] sm:$0x1]
      %v2622 = vld [vmem:[%s1983 + $0x30] sm:$0xe]
      %v2623 = vld [vmem:[%s1983 + $0x34] sm:$0x1]
      %v2624 = vld [vmem:[%s1983 + $0x38] sm:$0xe]
      %v2625 = vld [vmem:[%s1983 + $0x3c] sm:$0x1]
      %v2626 = vld [vmem:[%s1983 + $0x50] sm:$0xe]
      %v2627 = vld [vmem:[%s1983 + $0x54] sm:$0x1]
      %v2628 = vld [vmem:[%s1983 + $0x58] sm:$0xe]
      %v2629 = vld [vmem:[%s1983 + $0x5c] sm:$0x1]
      %v2630 = vld [vmem:[%s1983 + $0x60] sm:$0xe]
      %v2631 = vld [vmem:[%s1983 + $0x64] sm:$0x1]
      %v2632 = vld [vmem:[%s1983 + $0x68] sm:$0xe]
      %v2633 = vld [vmem:[%s1983 + $0x6c] sm:$0x1]
      %v2634 = vld [vmem:[%s1983 + $0x70] sm:$0xe]
      %v2635 = vld [vmem:[%s1983 + $0x74] sm:$0x1]
      %v2636 = vld [vmem:[%s1983 + $0x78] sm:$0xe]
      %v2637 = vld [vmem:[%s1983 + $0x7c] sm:$0x1]
      %v2638 = vld [vmem:[%s1983 + $0x80] sm:$0xe]
      %v2639 = vld [vmem:[%s1983 + $0x84] sm:$0x1]
      %v2640 = vld [vmem:[%s1983 + $0x88] sm:$0xe]
      %v2641 = vld [vmem:[%s1983 + $0x8c] sm:$0x1]
      %v2642 = vld [vmem:[%s1983 + $0xa0] sm:$0xe]
      %v2643 = vld [vmem:[%s1983 + $0xa4] sm:$0x1]
      %v2644 = vld [vmem:[%s1983 + $0xa8] sm:$0xe]
      %v2645 = vld [vmem:[%s1983 + $0xac] sm:$0x1]
      %v2646 = vld [vmem:[%s1983 + $0xb0] sm:$0xe]
      %v2647 = vld [vmem:[%s1983 + $0xb4] sm:$0x1]
      %v2648 = vld [vmem:[%s1983 + $0xb8] sm:$0xe]
      %v2649 = vld [vmem:[%s1983 + $0xbc] sm:$0x1]
      %v2650 = vld [vmem:[%s1983 + $0xc0] sm:$0xe]
      %v2651 = vld [vmem:[%s1983 + $0xc4] sm:$0x1]
      %v2652 = vld [vmem:[%s1983 + $0xc8] sm:$0xe]
      %v2653 = vld [vmem:[%s1983 + $0xcc] sm:$0x1]
      %v2654 = vld [vmem:[%s1983 + $0xd0] sm:$0xe]
      %v2655 = vld [vmem:[%s1983 + $0xd4] sm:$0x1]
      %v2656 = vld [vmem:[%s1983 + $0xd8] sm:$0xe]
      %v2657 = vld [vmem:[%s1983 + $0xdc] sm:$0x1]
      %v2706 = vrot.slane %v2610, 5
      %v2707 = vrot.slane %v2706, 4
      %v2708 = vrot.slane %v2611, 5
      %v2709 = vsel %vm873, %v2707, %v2708
      %v2710 = vrot.slane %v2612, 5
      %v2711 = vrot.slane %v2710, 4
      %v2712 = vrot.slane %v2613, 5
      %v2713 = vsel %vm873, %v2711, %v2712
      %v2714 = vrot.slane %v2614, 5
      %v2715 = vrot.slane %v2714, 4
      %v2716 = vrot.slane %v2615, 5
      %v2717 = vsel %vm873, %v2715, %v2716
      %v2718 = vrot.slane %v2616, 5
      %v2719 = vrot.slane %v2718, 4
      %v2720 = vrot.slane %v2617, 5
      %v2721 = vsel %vm873, %v2719, %v2720
      %v2722 = vrot.slane %v2618, 5
      %v2723 = vrot.slane %v2722, 4
      %v2724 = vrot.slane %v2619, 5
      %v2725 = vsel %vm873, %v2723, %v2724
      %v2726 = vrot.slane %v2620, 5
      %v2727 = vrot.slane %v2726, 4
      %v2728 = vrot.slane %v2621, 5
      %v2729 = vsel %vm873, %v2727, %v2728
      %v2730 = vrot.slane %v2622, 5
      %v2731 = vrot.slane %v2730, 4
      %v2732 = vrot.slane %v2623, 5
      %v2733 = vsel %vm873, %v2731, %v2732
      %v2734 = vrot.slane %v2624, 5
      %v2735 = vrot.slane %v2734, 4
      %v2736 = vrot.slane %v2625, 5
      %v2737 = vsel %vm873, %v2735, %v2736
      %v2738 = vrot.slane %v2626, 5
      %v2739 = vrot.slane %v2738, 4
      %v2740 = vrot.slane %v2627, 5
      %v2741 = vsel %vm873, %v2739, %v2740
      %v2742 = vrot.slane %v2628, 5
      %v2743 = vrot.slane %v2742, 4
      %v2744 = vrot.slane %v2629, 5
      %v2745 = vsel %vm873, %v2743, %v2744
      %v2746 = vrot.slane %v2630, 5
      %v2747 = vrot.slane %v2746, 4
      %v2748 = vrot.slane %v2631, 5
      %v2749 = vsel %vm873, %v2747, %v2748
      %v2750 = vrot.slane %v2632, 5
      %v2751 = vrot.slane %v2750, 4
      %v2752 = vrot.slane %v2633, 5
      %v2753 = vsel %vm873, %v2751, %v2752
      %v2754 = vrot.slane %v2634, 5
      %v2755 = vrot.slane %v2754, 4
      %v2756 = vrot.slane %v2635, 5
      %v2757 = vsel %vm873, %v2755, %v2756
      %v2758 = vrot.slane %v2636, 5
      %v2759 = vrot.slane %v2758, 4
      %v2760 = vrot.slane %v2637, 5
      %v2761 = vsel %vm873, %v2759, %v2760
      %v2762 = vrot.slane %v2638, 5
      %v2763 = vrot.slane %v2762, 4
      %v2764 = vrot.slane %v2639, 5
      %v2765 = vsel %vm873, %v2763, %v2764
      %v2766 = vrot.slane %v2640, 5
      %v2767 = vrot.slane %v2766, 4
      %v2768 = vrot.slane %v2641, 5
      %v2769 = vsel %vm873, %v2767, %v2768
      %v2770 = vrot.slane %v2642, 5
      %v2771 = vrot.slane %v2770, 4
      %v2772 = vrot.slane %v2643, 5
      %v2773 = vsel %vm873, %v2771, %v2772
      %v2774 = vrot.slane %v2644, 5
      %v2775 = vrot.slane %v2774, 4
      %v2776 = vrot.slane %v2645, 5
      %v2777 = vsel %vm873, %v2775, %v2776
      %v2778 = vrot.slane %v2646, 5
      %v2779 = vrot.slane %v2778, 4
      %v2780 = vrot.slane %v2647, 5
      %v2781 = vsel %vm873, %v2779, %v2780
      %v2782 = vrot.slane %v2648, 5
      %v2783 = vrot.slane %v2782, 4
      %v2784 = vrot.slane %v2649, 5
      %v2785 = vsel %vm873, %v2783, %v2784
      %v2786 = vrot.slane %v2650, 5
      %v2787 = vrot.slane %v2786, 4
      %v2788 = vrot.slane %v2651, 5
      %v2789 = vsel %vm873, %v2787, %v2788
      %v2790 = vrot.slane %v2652, 5
      %v2791 = vrot.slane %v2790, 4
      %v2792 = vrot.slane %v2653, 5
      %v2793 = vsel %vm873, %v2791, %v2792
      %v2794 = vrot.slane %v2654, 5
      %v2795 = vrot.slane %v2794, 4
      %v2796 = vrot.slane %v2655, 5
      %v2797 = vsel %vm873, %v2795, %v2796
      %v2798 = vrot.slane %v2656, 5
      %v2799 = vrot.slane %v2798, 4
      %v2800 = vrot.slane %v2657, 5
      %v2801 = vsel %vm873, %v2799, %v2800
      %2802 = vrot.lane.b32.xlu0 %v2709, 32
      %v2803 = vpop.permute.xlu0 %2802
      %2804 = vrot.lane.b32.xlu0 %v2713, 32
      %v2805 = vpop.permute.xlu0 %2804
      %2806 = vrot.lane.b32.xlu0 %v2717, 32
      %v2807 = vpop.permute.xlu0 %2806
      %2808 = vrot.lane.b32.xlu0 %v2721, 32
      %v2809 = vpop.permute.xlu0 %2808
      %2810 = vrot.lane.b32.xlu0 %v2725, 32
      %v2811 = vpop.permute.xlu0 %2810
      %2812 = vrot.lane.b32.xlu0 %v2729, 32
      %v2813 = vpop.permute.xlu0 %2812
      %2814 = vrot.lane.b32.xlu0 %v2733, 32
      %v2815 = vpop.permute.xlu0 %2814
      %2816 = vrot.lane.b32.xlu0 %v2737, 32
      %v2817 = vpop.permute.xlu0 %2816
      %2818 = vrot.lane.b32.xlu0 %v2741, 32
      %v2819 = vpop.permute.xlu0 %2818
      %2820 = vrot.lane.b32.xlu0 %v2745, 32
      %v2821 = vpop.permute.xlu0 %2820
      %2822 = vrot.lane.b32.xlu0 %v2749, 32
      %v2823 = vpop.permute.xlu0 %2822
      %2824 = vrot.lane.b32.xlu0 %v2753, 32
      %v2825 = vpop.permute.xlu0 %2824
      %2826 = vrot.lane.b32.xlu0 %v2757, 32
      %v2827 = vpop.permute.xlu0 %2826
      %2828 = vrot.lane.b32.xlu0 %v2761, 32
      %v2829 = vpop.permute.xlu0 %2828
      %2830 = vrot.lane.b32.xlu0 %v2765, 32
      %v2831 = vpop.permute.xlu0 %2830
      %2832 = vrot.lane.b32.xlu0 %v2769, 32
      %v2833 = vpop.permute.xlu0 %2832
      %2834 = vrot.lane.b32.xlu0 %v2773, 32
      %v2835 = vpop.permute.xlu0 %2834
      %2836 = vrot.lane.b32.xlu0 %v2777, 32
      %v2837 = vpop.permute.xlu0 %2836
      %2838 = vrot.lane.b32.xlu0 %v2781, 32
      %v2839 = vpop.permute.xlu0 %2838
      %2840 = vrot.lane.b32.xlu0 %v2785, 32
      %v2841 = vpop.permute.xlu0 %2840
      %2842 = vrot.lane.b32.xlu0 %v2789, 32
      %v2843 = vpop.permute.xlu0 %2842
      %2844 = vrot.lane.b32.xlu0 %v2793, 32
      %v2845 = vpop.permute.xlu0 %2844
      %2846 = vrot.lane.b32.xlu0 %v2797, 32
      %v2847 = vpop.permute.xlu0 %2846
      %2848 = vrot.lane.b32.xlu0 %v2801, 32
      %v2849 = vpop.permute.xlu0 %2848
      %vm2874 = vcmask 290048
      %2875 = vst.msk [vmem:[#allocation2] sm:$0xf] %vm2874, %v2803
      %2876 = vst.msk [vmem:[#allocation2 + $0x4] sm:$0xf] %vm2874, %v2805
      %2877 = vst.msk [vmem:[#allocation2 + $0x8] sm:$0xf] %vm2874, %v2807
      %2878 = vst.msk [vmem:[#allocation2 + $0xc] sm:$0xf] %vm2874, %v2809
      %2879 = vst.msk [vmem:[#allocation2 + $0x10] sm:$0xf] %vm2874, %v2811
      %2880 = vst.msk [vmem:[#allocation2 + $0x14] sm:$0xf] %vm2874, %v2813
      %2881 = vst.msk [vmem:[#allocation2 + $0x18] sm:$0xf] %vm2874, %v2815
      %2882 = vst.msk [vmem:[#allocation2 + $0x1c] sm:$0xf] %vm2874, %v2817
      %2883 = vst.msk [vmem:[#allocation2 + $0x20] sm:$0xf] %vm2874, %v2819
      %2884 = vst.msk [vmem:[#allocation2 + $0x24] sm:$0xf] %vm2874, %v2821
      %2885 = vst.msk [vmem:[#allocation2 + $0x28] sm:$0xf] %vm2874, %v2823
      %2886 = vst.msk [vmem:[#allocation2 + $0x2c] sm:$0xf] %vm2874, %v2825
      %2887 = vst.msk [vmem:[#allocation2 + $0x30] sm:$0xf] %vm2874, %v2827
      %2888 = vst.msk [vmem:[#allocation2 + $0x34] sm:$0xf] %vm2874, %v2829
      %2889 = vst.msk [vmem:[#allocation2 + $0x38] sm:$0xf] %vm2874, %v2831
      %2890 = vst.msk [vmem:[#allocation2 + $0x3c] sm:$0xf] %vm2874, %v2833
      %2891 = vst.msk [vmem:[#allocation2 + $0x40] sm:$0xf] %vm2874, %v2835
      %2892 = vst.msk [vmem:[#allocation2 + $0x44] sm:$0xf] %vm2874, %v2837
      %2893 = vst.msk [vmem:[#allocation2 + $0x48] sm:$0xf] %vm2874, %v2839
      %2894 = vst.msk [vmem:[#allocation2 + $0x4c] sm:$0xf] %vm2874, %v2841
      %2895 = vst.msk [vmem:[#allocation2 + $0x50] sm:$0xf] %vm2874, %v2843
      %2896 = vst.msk [vmem:[#allocation2 + $0x54] sm:$0xf] %vm2874, %v2845
      %2897 = vst.msk [vmem:[#allocation2 + $0x58] sm:$0xf] %vm2874, %v2847
      %2898 = vst.msk [vmem:[#allocation2 + $0x5c] sm:$0xf] %vm2874, %v2849
      %s2899 = scalar_lea.vmem %s221, 80
      %v2900 = vld [vmem:[%s2899] sm:$0xf]
      %v2901 = vld [vmem:[%s2899 + $0x8] sm:$0xf]
      %v2902 = vld [vmem:[%s2899 + $0x10] sm:$0xf]
      %v2903 = vld [vmem:[%s2899 + $0x18] sm:$0xf]
      %v2904 = vld [vmem:[%s2899 + $0x20] sm:$0xf]
      %v2905 = vld [vmem:[%s2899 + $0x28] sm:$0xf]
      %v2906 = vld [vmem:[%s2899 + $0x30] sm:$0xf]
      %v2907 = vld [vmem:[%s2899 + $0x38] sm:$0xf]
      %v2908 = vld [vmem:[%s2899 + $0x50] sm:$0xf]
      %v2909 = vld [vmem:[%s2899 + $0x58] sm:$0xf]
      %v2910 = vld [vmem:[%s2899 + $0x60] sm:$0xf]
      %v2911 = vld [vmem:[%s2899 + $0x68] sm:$0xf]
      %v2912 = vld [vmem:[%s2899 + $0x70] sm:$0xf]
      %v2913 = vld [vmem:[%s2899 + $0x78] sm:$0xf]
      %v2914 = vld [vmem:[%s2899 + $0x80] sm:$0xf]
      %v2915 = vld [vmem:[%s2899 + $0x88] sm:$0xf]
      %v2916 = vld [vmem:[%s2899 + $0xa0] sm:$0xf]
      %v2917 = vld [vmem:[%s2899 + $0xa8] sm:$0xf]
      %v2918 = vld [vmem:[%s2899 + $0xb0] sm:$0xf]
      %v2919 = vld [vmem:[%s2899 + $0xb8] sm:$0xf]
      %v2920 = vld [vmem:[%s2899 + $0xc0] sm:$0xf]
      %v2921 = vld [vmem:[%s2899 + $0xc8] sm:$0xf]
      %v2922 = vld [vmem:[%s2899 + $0xd0] sm:$0xf]
      %v2923 = vld [vmem:[%s2899 + $0xd8] sm:$0xf]
      %2948 = vrot.lane.b32.xlu0 %v2900, 36
      %v2949 = vpop.permute.xlu0 %2948
      %2950 = vrot.lane.b32.xlu0 %v2901, 36
      %v2951 = vpop.permute.xlu0 %2950
      %2952 = vrot.lane.b32.xlu0 %v2902, 36
      %v2953 = vpop.permute.xlu0 %2952
      %2954 = vrot.lane.b32.xlu0 %v2903, 36
      %v2955 = vpop.permute.xlu0 %2954
      %2956 = vrot.lane.b32.xlu0 %v2904, 36
      %v2957 = vpop.permute.xlu0 %2956
      %2958 = vrot.lane.b32.xlu0 %v2905, 36
      %v2959 = vpop.permute.xlu0 %2958
      %2960 = vrot.lane.b32.xlu0 %v2906, 36
      %v2961 = vpop.permute.xlu0 %2960
      %2962 = vrot.lane.b32.xlu0 %v2907, 36
      %v2963 = vpop.permute.xlu0 %2962
      %2964 = vrot.lane.b32.xlu0 %v2908, 36
      %v2965 = vpop.permute.xlu0 %2964
      %2966 = vrot.lane.b32.xlu0 %v2909, 36
      %v2967 = vpop.permute.xlu0 %2966
      %2968 = vrot.lane.b32.xlu0 %v2910, 36
      %v2969 = vpop.permute.xlu0 %2968
      %2970 = vrot.lane.b32.xlu0 %v2911, 36
      %v2971 = vpop.permute.xlu0 %2970
      %2972 = vrot.lane.b32.xlu0 %v2912, 36
      %v2973 = vpop.permute.xlu0 %2972
      %2974 = vrot.lane.b32.xlu0 %v2913, 36
      %v2975 = vpop.permute.xlu0 %2974
      %2976 = vrot.lane.b32.xlu0 %v2914, 36
      %v2977 = vpop.permute.xlu0 %2976
      %2978 = vrot.lane.b32.xlu0 %v2915, 36
      %v2979 = vpop.permute.xlu0 %2978
      %2980 = vrot.lane.b32.xlu0 %v2916, 36
      %v2981 = vpop.permute.xlu0 %2980
      %2982 = vrot.lane.b32.xlu0 %v2917, 36
      %v2983 = vpop.permute.xlu0 %2982
      %2984 = vrot.lane.b32.xlu0 %v2918, 36
      %v2985 = vpop.permute.xlu0 %2984
      %2986 = vrot.lane.b32.xlu0 %v2919, 36
      %v2987 = vpop.permute.xlu0 %2986
      %2988 = vrot.lane.b32.xlu0 %v2920, 36
      %v2989 = vpop.permute.xlu0 %2988
      %2990 = vrot.lane.b32.xlu0 %v2921, 36
      %v2991 = vpop.permute.xlu0 %2990
      %2992 = vrot.lane.b32.xlu0 %v2922, 36
      %v2993 = vpop.permute.xlu0 %2992
      %2994 = vrot.lane.b32.xlu0 %v2923, 36
      %v2995 = vpop.permute.xlu0 %2994
      %vm3020 = vcmask 322848
      %3021 = vst.msk [vmem:[#allocation2] sm:$0xf] %vm3020, %v2949
      %3022 = vst.msk [vmem:[#allocation2 + $0x4] sm:$0xf] %vm3020, %v2951
      %3023 = vst.msk [vmem:[#allocation2 + $0x8] sm:$0xf] %vm3020, %v2953
      %3024 = vst.msk [vmem:[#allocation2 + $0xc] sm:$0xf] %vm3020, %v2955
      %3025 = vst.msk [vmem:[#allocation2 + $0x10] sm:$0xf] %vm3020, %v2957
      %3026 = vst.msk [vmem:[#allocation2 + $0x14] sm:$0xf] %vm3020, %v2959
      %3027 = vst.msk [vmem:[#allocation2 + $0x18] sm:$0xf] %vm3020, %v2961
      %3028 = vst.msk [vmem:[#allocation2 + $0x1c] sm:$0xf] %vm3020, %v2963
      %3029 = vst.msk [vmem:[#allocation2 + $0x20] sm:$0xf] %vm3020, %v2965
      %3030 = vst.msk [vmem:[#allocation2 + $0x24] sm:$0xf] %vm3020, %v2967
      %3031 = vst.msk [vmem:[#allocation2 + $0x28] sm:$0xf] %vm3020, %v2969
      %3032 = vst.msk [vmem:[#allocation2 + $0x2c] sm:$0xf] %vm3020, %v2971
      %3033 = vst.msk [vmem:[#allocation2 + $0x30] sm:$0xf] %vm3020, %v2973
      %3034 = vst.msk [vmem:[#allocation2 + $0x34] sm:$0xf] %vm3020, %v2975
      %3035 = vst.msk [vmem:[#allocation2 + $0x38] sm:$0xf] %vm3020, %v2977
      %3036 = vst.msk [vmem:[#allocation2 + $0x3c] sm:$0xf] %vm3020, %v2979
      %3037 = vst.msk [vmem:[#allocation2 + $0x40] sm:$0xf] %vm3020, %v2981
      %3038 = vst.msk [vmem:[#allocation2 + $0x44] sm:$0xf] %vm3020, %v2983
      %3039 = vst.msk [vmem:[#allocation2 + $0x48] sm:$0xf] %vm3020, %v2985
      %3040 = vst.msk [vmem:[#allocation2 + $0x4c] sm:$0xf] %vm3020, %v2987
      %3041 = vst.msk [vmem:[#allocation2 + $0x50] sm:$0xf] %vm3020, %v2989
      %3042 = vst.msk [vmem:[#allocation2 + $0x54] sm:$0xf] %vm3020, %v2991
      %3043 = vst.msk [vmem:[#allocation2 + $0x58] sm:$0xf] %vm3020, %v2993
      %3044 = vst.msk [vmem:[#allocation2 + $0x5c] sm:$0xf] %vm3020, %v2995
      %v3045 = vld [vmem:[%s2899] sm:$0xf]
      %v3046 = vld [vmem:[%s2899 + $0x4] sm:$0x1]
      %v3047 = vld [vmem:[%s2899 + $0x8] sm:$0xf]
      %v3048 = vld [vmem:[%s2899 + $0xc] sm:$0x1]
      %v3049 = vld [vmem:[%s2899 + $0x10] sm:$0xf]
      %v3050 = vld [vmem:[%s2899 + $0x14] sm:$0x1]
      %v3051 = vld [vmem:[%s2899 + $0x18] sm:$0xf]
      %v3052 = vld [vmem:[%s2899 + $0x1c] sm:$0x1]
      %v3053 = vld [vmem:[%s2899 + $0x20] sm:$0xf]
      %v3054 = vld [vmem:[%s2899 + $0x24] sm:$0x1]
      %v3055 = vld [vmem:[%s2899 + $0x28] sm:$0xf]
      %v3056 = vld [vmem:[%s2899 + $0x2c] sm:$0x1]
      %v3057 = vld [vmem:[%s2899 + $0x30] sm:$0xf]
      %v3058 = vld [vmem:[%s2899 + $0x34] sm:$0x1]
      %v3059 = vld [vmem:[%s2899 + $0x38] sm:$0xf]
      %v3060 = vld [vmem:[%s2899 + $0x3c] sm:$0x1]
      %v3061 = vld [vmem:[%s2899 + $0x50] sm:$0xf]
      %v3062 = vld [vmem:[%s2899 + $0x54] sm:$0x1]
      %v3063 = vld [vmem:[%s2899 + $0x58] sm:$0xf]
      %v3064 = vld [vmem:[%s2899 + $0x5c] sm:$0x1]
      %v3065 = vld [vmem:[%s2899 + $0x60] sm:$0xf]
      %v3066 = vld [vmem:[%s2899 + $0x64] sm:$0x1]
      %v3067 = vld [vmem:[%s2899 + $0x68] sm:$0xf]
      %v3068 = vld [vmem:[%s2899 + $0x6c] sm:$0x1]
      %v3069 = vld [vmem:[%s2899 + $0x70] sm:$0xf]
      %v3070 = vld [vmem:[%s2899 + $0x74] sm:$0x1]
      %v3071 = vld [vmem:[%s2899 + $0x78] sm:$0xf]
      %v3072 = vld [vmem:[%s2899 + $0x7c] sm:$0x1]
      %v3073 = vld [vmem:[%s2899 + $0x80] sm:$0xf]
      %v3074 = vld [vmem:[%s2899 + $0x84] sm:$0x1]
      %v3075 = vld [vmem:[%s2899 + $0x88] sm:$0xf]
      %v3076 = vld [vmem:[%s2899 + $0x8c] sm:$0x1]
      %v3077 = vld [vmem:[%s2899 + $0xa0] sm:$0xf]
      %v3078 = vld [vmem:[%s2899 + $0xa4] sm:$0x1]
      %v3079 = vld [vmem:[%s2899 + $0xa8] sm:$0xf]
      %v3080 = vld [vmem:[%s2899 + $0xac] sm:$0x1]
      %v3081 = vld [vmem:[%s2899 + $0xb0] sm:$0xf]
      %v3082 = vld [vmem:[%s2899 + $0xb4] sm:$0x1]
      %v3083 = vld [vmem:[%s2899 + $0xb8] sm:$0xf]
      %v3084 = vld [vmem:[%s2899 + $0xbc] sm:$0x1]
      %v3085 = vld [vmem:[%s2899 + $0xc0] sm:$0xf]
      %v3086 = vld [vmem:[%s2899 + $0xc4] sm:$0x1]
      %v3087 = vld [vmem:[%s2899 + $0xc8] sm:$0xf]
      %v3088 = vld [vmem:[%s2899 + $0xcc] sm:$0x1]
      %v3089 = vld [vmem:[%s2899 + $0xd0] sm:$0xf]
      %v3090 = vld [vmem:[%s2899 + $0xd4] sm:$0x1]
      %v3091 = vld [vmem:[%s2899 + $0xd8] sm:$0xf]
      %v3092 = vld [vmem:[%s2899 + $0xdc] sm:$0x1]
      %v3094 = vshrl.u32 %v3045, 16
      %v3096 = vrot.slane %v3094, 4
      %v3097 = vshll.u32 %v3045, 16
      %v3099 = vrot.slane %v3097, 5
      %v3100 = vor.u32 %v3096, %v3099
      %v3101 = vrot.slane %v3100, 4
      %v3103 = vshll.u32 %v3046, 16
      %v3105 = vrot.slane %v3103, 5
      %v3106 = vsel %vm341, %v3101, %v3105
      %v3108 = vshrl.u32 %v3047, 16
      %v3110 = vrot.slane %v3108, 4
      %v3111 = vshll.u32 %v3047, 16
      %v3113 = vrot.slane %v3111, 5
      %v3114 = vor.u32 %v3110, %v3113
      %v3115 = vrot.slane %v3114, 4
      %v3117 = vshll.u32 %v3048, 16
      %v3119 = vrot.slane %v3117, 5
      %v3120 = vsel %vm341, %v3115, %v3119
      %v3122 = vshrl.u32 %v3049, 16
      %v3124 = vrot.slane %v3122, 4
      %v3125 = vshll.u32 %v3049, 16
      %v3127 = vrot.slane %v3125, 5
      %v3128 = vor.u32 %v3124, %v3127
      %v3129 = vrot.slane %v3128, 4
      %v3131 = vshll.u32 %v3050, 16
      %v3133 = vrot.slane %v3131, 5
      %v3134 = vsel %vm341, %v3129, %v3133
      %v3136 = vshrl.u32 %v3051, 16
      %v3138 = vrot.slane %v3136, 4
      %v3139 = vshll.u32 %v3051, 16
      %v3141 = vrot.slane %v3139, 5
      %v3142 = vor.u32 %v3138, %v3141
      %v3143 = vrot.slane %v3142, 4
      %v3145 = vshll.u32 %v3052, 16
      %v3147 = vrot.slane %v3145, 5
      %v3148 = vsel %vm341, %v3143, %v3147
      %v3150 = vshrl.u32 %v3053, 16
      %v3152 = vrot.slane %v3150, 4
      %v3153 = vshll.u32 %v3053, 16
      %v3155 = vrot.slane %v3153, 5
      %v3156 = vor.u32 %v3152, %v3155
      %v3157 = vrot.slane %v3156, 4
      %v3159 = vshll.u32 %v3054, 16
      %v3161 = vrot.slane %v3159, 5
      %v3162 = vsel %vm341, %v3157, %v3161
      %v3164 = vshrl.u32 %v3055, 16
      %v3166 = vrot.slane %v3164, 4
      %v3167 = vshll.u32 %v3055, 16
      %v3169 = vrot.slane %v3167, 5
      %v3170 = vor.u32 %v3166, %v3169
      %v3171 = vrot.slane %v3170, 4
      %v3173 = vshll.u32 %v3056, 16
      %v3175 = vrot.slane %v3173, 5
      %v3176 = vsel %vm341, %v3171, %v3175
      %v3178 = vshrl.u32 %v3057, 16
      %v3180 = vrot.slane %v3178, 4
      %v3181 = vshll.u32 %v3057, 16
      %v3183 = vrot.slane %v3181, 5
      %v3184 = vor.u32 %v3180, %v3183
      %v3185 = vrot.slane %v3184, 4
      %v3187 = vshll.u32 %v3058, 16
      %v3189 = vrot.slane %v3187, 5
      %v3190 = vsel %vm341, %v3185, %v3189
      %v3192 = vshrl.u32 %v3059, 16
      %v3194 = vrot.slane %v3192, 4
      %v3195 = vshll.u32 %v3059, 16
      %v3197 = vrot.slane %v3195, 5
      %v3198 = vor.u32 %v3194, %v3197
      %v3199 = vrot.slane %v3198, 4
      %v3201 = vshll.u32 %v3060, 16
      %v3203 = vrot.slane %v3201, 5
      %v3204 = vsel %vm341, %v3199, %v3203
      %v3206 = vshrl.u32 %v3061, 16
      %v3208 = vrot.slane %v3206, 4
      %v3209 = vshll.u32 %v3061, 16
      %v3211 = vrot.slane %v3209, 5
      %v3212 = vor.u32 %v3208, %v3211
      %v3213 = vrot.slane %v3212, 4
      %v3215 = vshll.u32 %v3062, 16
      %v3217 = vrot.slane %v3215, 5
      %v3218 = vsel %vm341, %v3213, %v3217
      %v3220 = vshrl.u32 %v3063, 16
      %v3222 = vrot.slane %v3220, 4
      %v3223 = vshll.u32 %v3063, 16
      %v3225 = vrot.slane %v3223, 5
      %v3226 = vor.u32 %v3222, %v3225
      %v3227 = vrot.slane %v3226, 4
      %v3229 = vshll.u32 %v3064, 16
      %v3231 = vrot.slane %v3229, 5
      %v3232 = vsel %vm341, %v3227, %v3231
      %v3234 = vshrl.u32 %v3065, 16
      %v3236 = vrot.slane %v3234, 4
      %v3237 = vshll.u32 %v3065, 16
      %v3239 = vrot.slane %v3237, 5
      %v3240 = vor.u32 %v3236, %v3239
      %v3241 = vrot.slane %v3240, 4
      %v3243 = vshll.u32 %v3066, 16
      %v3245 = vrot.slane %v3243, 5
      %v3246 = vsel %vm341, %v3241, %v3245
      %v3248 = vshrl.u32 %v3067, 16
      %v3250 = vrot.slane %v3248, 4
      %v3251 = vshll.u32 %v3067, 16
      %v3253 = vrot.slane %v3251, 5
      %v3254 = vor.u32 %v3250, %v3253
      %v3255 = vrot.slane %v3254, 4
      %v3257 = vshll.u32 %v3068, 16
      %v3259 = vrot.slane %v3257, 5
      %v3260 = vsel %vm341, %v3255, %v3259
      %v3262 = vshrl.u32 %v3069, 16
      %v3264 = vrot.slane %v3262, 4
      %v3265 = vshll.u32 %v3069, 16
      %v3267 = vrot.slane %v3265, 5
      %v3268 = vor.u32 %v3264, %v3267
      %v3269 = vrot.slane %v3268, 4
      %v3271 = vshll.u32 %v3070, 16
      %v3273 = vrot.slane %v3271, 5
      %v3274 = vsel %vm341, %v3269, %v3273
      %v3276 = vshrl.u32 %v3071, 16
      %v3278 = vrot.slane %v3276, 4
      %v3279 = vshll.u32 %v3071, 16
      %v3281 = vrot.slane %v3279, 5
      %v3282 = vor.u32 %v3278, %v3281
      %v3283 = vrot.slane %v3282, 4
      %v3285 = vshll.u32 %v3072, 16
      %v3287 = vrot.slane %v3285, 5
      %v3288 = vsel %vm341, %v3283, %v3287
      %v3290 = vshrl.u32 %v3073, 16
      %v3292 = vrot.slane %v3290, 4
      %v3293 = vshll.u32 %v3073, 16
      %v3295 = vrot.slane %v3293, 5
      %v3296 = vor.u32 %v3292, %v3295
      %v3297 = vrot.slane %v3296, 4
      %v3299 = vshll.u32 %v3074, 16
      %v3301 = vrot.slane %v3299, 5
      %v3302 = vsel %vm341, %v3297, %v3301
      %v3304 = vshrl.u32 %v3075, 16
      %v3306 = vrot.slane %v3304, 4
      %v3307 = vshll.u32 %v3075, 16
      %v3309 = vrot.slane %v3307, 5
      %v3310 = vor.u32 %v3306, %v3309
      %v3311 = vrot.slane %v3310, 4
      %v3313 = vshll.u32 %v3076, 16
      %v3315 = vrot.slane %v3313, 5
      %v3316 = vsel %vm341, %v3311, %v3315
      %v3318 = vshrl.u32 %v3077, 16
      %v3320 = vrot.slane %v3318, 4
      %v3321 = vshll.u32 %v3077, 16
      %v3323 = vrot.slane %v3321, 5
      %v3324 = vor.u32 %v3320, %v3323
      %v3325 = vrot.slane %v3324, 4
      %v3327 = vshll.u32 %v3078, 16
      %v3329 = vrot.slane %v3327, 5
      %v3330 = vsel %vm341, %v3325, %v3329
      %v3332 = vshrl.u32 %v3079, 16
      %v3334 = vrot.slane %v3332, 4
      %v3335 = vshll.u32 %v3079, 16
      %v3337 = vrot.slane %v3335, 5
      %v3338 = vor.u32 %v3334, %v3337
      %v3339 = vrot.slane %v3338, 4
      %v3341 = vshll.u32 %v3080, 16
      %v3343 = vrot.slane %v3341, 5
      %v3344 = vsel %vm341, %v3339, %v3343
      %v3346 = vshrl.u32 %v3081, 16
      %v3348 = vrot.slane %v3346, 4
      %v3349 = vshll.u32 %v3081, 16
      %v3351 = vrot.slane %v3349, 5
      %v3352 = vor.u32 %v3348, %v3351
      %v3353 = vrot.slane %v3352, 4
      %v3355 = vshll.u32 %v3082, 16
      %v3357 = vrot.slane %v3355, 5
      %v3358 = vsel %vm341, %v3353, %v3357
      %v3360 = vshrl.u32 %v3083, 16
      %v3362 = vrot.slane %v3360, 4
      %v3363 = vshll.u32 %v3083, 16
      %v3365 = vrot.slane %v3363, 5
      %v3366 = vor.u32 %v3362, %v3365
      %v3367 = vrot.slane %v3366, 4
      %v3369 = vshll.u32 %v3084, 16
      %v3371 = vrot.slane %v3369, 5
      %v3372 = vsel %vm341, %v3367, %v3371
      %v3374 = vshrl.u32 %v3085, 16
      %v3376 = vrot.slane %v3374, 4
      %v3377 = vshll.u32 %v3085, 16
      %v3379 = vrot.slane %v3377, 5
      %v3380 = vor.u32 %v3376, %v3379
      %v3381 = vrot.slane %v3380, 4
      %v3383 = vshll.u32 %v3086, 16
      %v3385 = vrot.slane %v3383, 5
      %v3386 = vsel %vm341, %v3381, %v3385
      %v3388 = vshrl.u32 %v3087, 16
      %v3390 = vrot.slane %v3388, 4
      %v3391 = vshll.u32 %v3087, 16
      %v3393 = vrot.slane %v3391, 5
      %v3394 = vor.u32 %v3390, %v3393
      %v3395 = vrot.slane %v3394, 4
      %v3397 = vshll.u32 %v3088, 16
      %v3399 = vrot.slane %v3397, 5
      %v3400 = vsel %vm341, %v3395, %v3399
      %v3402 = vshrl.u32 %v3089, 16
      %v3404 = vrot.slane %v3402, 4
      %v3405 = vshll.u32 %v3089, 16
      %v3407 = vrot.slane %v3405, 5
      %v3408 = vor.u32 %v3404, %v3407
      %v3409 = vrot.slane %v3408, 4
      %v3411 = vshll.u32 %v3090, 16
      %v3413 = vrot.slane %v3411, 5
      %v3414 = vsel %vm341, %v3409, %v3413
      %v3416 = vshrl.u32 %v3091, 16
      %v3418 = vrot.slane %v3416, 4
      %v3419 = vshll.u32 %v3091, 16
      %v3421 = vrot.slane %v3419, 5
      %v3422 = vor.u32 %v3418, %v3421
      %v3423 = vrot.slane %v3422, 4
      %v3425 = vshll.u32 %v3092, 16
      %v3427 = vrot.slane %v3425, 5
      %v3428 = vsel %vm341, %v3423, %v3427
      %3429 = vrot.lane.b32.xlu0 %v3106, 40
      %v3430 = vpop.permute.xlu0 %3429
      %3431 = vrot.lane.b32.xlu0 %v3120, 40
      %v3432 = vpop.permute.xlu0 %3431
      %3433 = vrot.lane.b32.xlu0 %v3134, 40
      %v3434 = vpop.permute.xlu0 %3433
      %3435 = vrot.lane.b32.xlu0 %v3148, 40
      %v3436 = vpop.permute.xlu0 %3435
      %3437 = vrot.lane.b32.xlu0 %v3162, 40
      %v3438 = vpop.permute.xlu0 %3437
      %3439 = vrot.lane.b32.xlu0 %v3176, 40
      %v3440 = vpop.permute.xlu0 %3439
      %3441 = vrot.lane.b32.xlu0 %v3190, 40
      %v3442 = vpop.permute.xlu0 %3441
      %3443 = vrot.lane.b32.xlu0 %v3204, 40
      %v3444 = vpop.permute.xlu0 %3443
      %3445 = vrot.lane.b32.xlu0 %v3218, 40
      %v3446 = vpop.permute.xlu0 %3445
      %3447 = vrot.lane.b32.xlu0 %v3232, 40
      %v3448 = vpop.permute.xlu0 %3447
      %3449 = vrot.lane.b32.xlu0 %v3246, 40
      %v3450 = vpop.permute.xlu0 %3449
      %3451 = vrot.lane.b32.xlu0 %v3260, 40
      %v3452 = vpop.permute.xlu0 %3451
      %3453 = vrot.lane.b32.xlu0 %v3274, 40
      %v3454 = vpop.permute.xlu0 %3453
      %3455 = vrot.lane.b32.xlu0 %v3288, 40
      %v3456 = vpop.permute.xlu0 %3455
      %3457 = vrot.lane.b32.xlu0 %v3302, 40
      %v3458 = vpop.permute.xlu0 %3457
      %3459 = vrot.lane.b32.xlu0 %v3316, 40
      %v3460 = vpop.permute.xlu0 %3459
      %3461 = vrot.lane.b32.xlu0 %v3330, 40
      %v3462 = vpop.permute.xlu0 %3461
      %3463 = vrot.lane.b32.xlu0 %v3344, 40
      %v3464 = vpop.permute.xlu0 %3463
      %3465 = vrot.lane.b32.xlu0 %v3358, 40
      %v3466 = vpop.permute.xlu0 %3465
      %3467 = vrot.lane.b32.xlu0 %v3372, 40
      %v3468 = vpop.permute.xlu0 %3467
      %3469 = vrot.lane.b32.xlu0 %v3386, 40
      %v3470 = vpop.permute.xlu0 %3469
      %3471 = vrot.lane.b32.xlu0 %v3400, 40
      %v3472 = vpop.permute.xlu0 %3471
      %3473 = vrot.lane.b32.xlu0 %v3414, 40
      %v3474 = vpop.permute.xlu0 %3473
      %3475 = vrot.lane.b32.xlu0 %v3428, 40
      %v3476 = vpop.permute.xlu0 %3475
      %vm3501 = vcmask 355648
      %3502 = vst.msk [vmem:[#allocation2] sm:$0xf] %vm3501, %v3430
      %3503 = vst.msk [vmem:[#allocation2 + $0x4] sm:$0xf] %vm3501, %v3432
      %3504 = vst.msk [vmem:[#allocation2 + $0x8] sm:$0xf] %vm3501, %v3434
      %3505 = vst.msk [vmem:[#allocation2 + $0xc] sm:$0xf] %vm3501, %v3436
      %3506 = vst.msk [vmem:[#allocation2 + $0x10] sm:$0xf] %vm3501, %v3438
      %3507 = vst.msk [vmem:[#allocation2 + $0x14] sm:$0xf] %vm3501, %v3440
      %3508 = vst.msk [vmem:[#allocation2 + $0x18] sm:$0xf] %vm3501, %v3442
      %3509 = vst.msk [vmem:[#allocation2 + $0x1c] sm:$0xf] %vm3501, %v3444
      %3510 = vst.msk [vmem:[#allocation2 + $0x20] sm:$0xf] %vm3501, %v3446
      %3511 = vst.msk [vmem:[#allocation2 + $0x24] sm:$0xf] %vm3501, %v3448
      %3512 = vst.msk [vmem:[#allocation2 + $0x28] sm:$0xf] %vm3501, %v3450
      %3513 = vst.msk [vmem:[#allocation2 + $0x2c] sm:$0xf] %vm3501, %v3452
      %3514 = vst.msk [vmem:[#allocation2 + $0x30] sm:$0xf] %vm3501, %v3454
      %3515 = vst.msk [vmem:[#allocation2 + $0x34] sm:$0xf] %vm3501, %v3456
      %3516 = vst.msk [vmem:[#allocation2 + $0x38] sm:$0xf] %vm3501, %v3458
      %3517 = vst.msk [vmem:[#allocation2 + $0x3c] sm:$0xf] %vm3501, %v3460
      %3518 = vst.msk [vmem:[#allocation2 + $0x40] sm:$0xf] %vm3501, %v3462
      %3519 = vst.msk [vmem:[#allocation2 + $0x44] sm:$0xf] %vm3501, %v3464
      %3520 = vst.msk [vmem:[#allocation2 + $0x48] sm:$0xf] %vm3501, %v3466
      %3521 = vst.msk [vmem:[#allocation2 + $0x4c] sm:$0xf] %vm3501, %v3468
      %3522 = vst.msk [vmem:[#allocation2 + $0x50] sm:$0xf] %vm3501, %v3470
      %3523 = vst.msk [vmem:[#allocation2 + $0x54] sm:$0xf] %vm3501, %v3472
      %3524 = vst.msk [vmem:[#allocation2 + $0x58] sm:$0xf] %vm3501, %v3474
      %3525 = vst.msk [vmem:[#allocation2 + $0x5c] sm:$0xf] %vm3501, %v3476
      %v3526 = vld [vmem:[%s2899] sm:$0xe]
      %v3527 = vld [vmem:[%s2899 + $0x4] sm:$0x1]
      %v3528 = vld [vmem:[%s2899 + $0x8] sm:$0xe]
      %v3529 = vld [vmem:[%s2899 + $0xc] sm:$0x1]
      %v3530 = vld [vmem:[%s2899 + $0x10] sm:$0xe]
      %v3531 = vld [vmem:[%s2899 + $0x14] sm:$0x1]
      %v3532 = vld [vmem:[%s2899 + $0x18] sm:$0xe]
      %v3533 = vld [vmem:[%s2899 + $0x1c] sm:$0x1]
      %v3534 = vld [vmem:[%s2899 + $0x20] sm:$0xe]
      %v3535 = vld [vmem:[%s2899 + $0x24] sm:$0x1]
      %v3536 = vld [vmem:[%s2899 + $0x28] sm:$0xe]
      %v3537 = vld [vmem:[%s2899 + $0x2c] sm:$0x1]
      %v3538 = vld [vmem:[%s2899 + $0x30] sm:$0xe]
      %v3539 = vld [vmem:[%s2899 + $0x34] sm:$0x1]
      %v3540 = vld [vmem:[%s2899 + $0x38] sm:$0xe]
      %v3541 = vld [vmem:[%s2899 + $0x3c] sm:$0x1]
      %v3542 = vld [vmem:[%s2899 + $0x50] sm:$0xe]
      %v3543 = vld [vmem:[%s2899 + $0x54] sm:$0x1]
      %v3544 = vld [vmem:[%s2899 + $0x58] sm:$0xe]
      %v3545 = vld [vmem:[%s2899 + $0x5c] sm:$0x1]
      %v3546 = vld [vmem:[%s2899 + $0x60] sm:$0xe]
      %v3547 = vld [vmem:[%s2899 + $0x64] sm:$0x1]
      %v3548 = vld [vmem:[%s2899 + $0x68] sm:$0xe]
      %v3549 = vld [vmem:[%s2899 + $0x6c] sm:$0x1]
      %v3550 = vld [vmem:[%s2899 + $0x70] sm:$0xe]
      %v3551 = vld [vmem:[%s2899 + $0x74] sm:$0x1]
      %v3552 = vld [vmem:[%s2899 + $0x78] sm:$0xe]
      %v3553 = vld [vmem:[%s2899 + $0x7c] sm:$0x1]
      %v3554 = vld [vmem:[%s2899 + $0x80] sm:$0xe]
      %v3555 = vld [vmem:[%s2899 + $0x84] sm:$0x1]
      %v3556 = vld [vmem:[%s2899 + $0x88] sm:$0xe]
      %v3557 = vld [vmem:[%s2899 + $0x8c] sm:$0x1]
      %v3558 = vld [vmem:[%s2899 + $0xa0] sm:$0xe]
      %v3559 = vld [vmem:[%s2899 + $0xa4] sm:$0x1]
      %v3560 = vld [vmem:[%s2899 + $0xa8] sm:$0xe]
      %v3561 = vld [vmem:[%s2899 + $0xac] sm:$0x1]
      %v3562 = vld [vmem:[%s2899 + $0xb0] sm:$0xe]
      %v3563 = vld [vmem:[%s2899 + $0xb4] sm:$0x1]
      %v3564 = vld [vmem:[%s2899 + $0xb8] sm:$0xe]
      %v3565 = vld [vmem:[%s2899 + $0xbc] sm:$0x1]
      %v3566 = vld [vmem:[%s2899 + $0xc0] sm:$0xe]
      %v3567 = vld [vmem:[%s2899 + $0xc4] sm:$0x1]
      %v3568 = vld [vmem:[%s2899 + $0xc8] sm:$0xe]
      %v3569 = vld [vmem:[%s2899 + $0xcc] sm:$0x1]
      %v3570 = vld [vmem:[%s2899 + $0xd0] sm:$0xe]
      %v3571 = vld [vmem:[%s2899 + $0xd4] sm:$0x1]
      %v3572 = vld [vmem:[%s2899 + $0xd8] sm:$0xe]
      %v3573 = vld [vmem:[%s2899 + $0xdc] sm:$0x1]
      %v3622 = vrot.slane %v3526, 5
      %v3623 = vrot.slane %v3622, 4
      %v3624 = vrot.slane %v3527, 5
      %v3625 = vsel %vm873, %v3623, %v3624
      %v3626 = vrot.slane %v3528, 5
      %v3627 = vrot.slane %v3626, 4
      %v3628 = vrot.slane %v3529, 5
      %v3629 = vsel %vm873, %v3627, %v3628
      %v3630 = vrot.slane %v3530, 5
      %v3631 = vrot.slane %v3630, 4
      %v3632 = vrot.slane %v3531, 5
      %v3633 = vsel %vm873, %v3631, %v3632
      %v3634 = vrot.slane %v3532, 5
      %v3635 = vrot.slane %v3634, 4
      %v3636 = vrot.slane %v3533, 5
      %v3637 = vsel %vm873, %v3635, %v3636
      %v3638 = vrot.slane %v3534, 5
      %v3639 = vrot.slane %v3638, 4
      %v3640 = vrot.slane %v3535, 5
      %v3641 = vsel %vm873, %v3639, %v3640
      %v3642 = vrot.slane %v3536, 5
      %v3643 = vrot.slane %v3642, 4
      %v3644 = vrot.slane %v3537, 5
      %v3645 = vsel %vm873, %v3643, %v3644
      %v3646 = vrot.slane %v3538, 5
      %v3647 = vrot.slane %v3646, 4
      %v3648 = vrot.slane %v3539, 5
      %v3649 = vsel %vm873, %v3647, %v3648
      %v3650 = vrot.slane %v3540, 5
      %v3651 = vrot.slane %v3650, 4
      %v3652 = vrot.slane %v3541, 5
      %v3653 = vsel %vm873, %v3651, %v3652
      %v3654 = vrot.slane %v3542, 5
      %v3655 = vrot.slane %v3654, 4
      %v3656 = vrot.slane %v3543, 5
      %v3657 = vsel %vm873, %v3655, %v3656
      %v3658 = vrot.slane %v3544, 5
      %v3659 = vrot.slane %v3658, 4
      %v3660 = vrot.slane %v3545, 5
      %v3661 = vsel %vm873, %v3659, %v3660
      %v3662 = vrot.slane %v3546, 5
      %v3663 = vrot.slane %v3662, 4
      %v3664 = vrot.slane %v3547, 5
      %v3665 = vsel %vm873, %v3663, %v3664
      %v3666 = vrot.slane %v3548, 5
      %v3667 = vrot.slane %v3666, 4
      %v3668 = vrot.slane %v3549, 5
      %v3669 = vsel %vm873, %v3667, %v3668
      %v3670 = vrot.slane %v3550, 5
      %v3671 = vrot.slane %v3670, 4
      %v3672 = vrot.slane %v3551, 5
      %v3673 = vsel %vm873, %v3671, %v3672
      %v3674 = vrot.slane %v3552, 5
      %v3675 = vrot.slane %v3674, 4
      %v3676 = vrot.slane %v3553, 5
      %v3677 = vsel %vm873, %v3675, %v3676
      %v3678 = vrot.slane %v3554, 5
      %v3679 = vrot.slane %v3678, 4
      %v3680 = vrot.slane %v3555, 5
      %v3681 = vsel %vm873, %v3679, %v3680
      %v3682 = vrot.slane %v3556, 5
      %v3683 = vrot.slane %v3682, 4
      %v3684 = vrot.slane %v3557, 5
      %v3685 = vsel %vm873, %v3683, %v3684
      %v3686 = vrot.slane %v3558, 5
      %v3687 = vrot.slane %v3686, 4
      %v3688 = vrot.slane %v3559, 5
      %v3689 = vsel %vm873, %v3687, %v3688
      %v3690 = vrot.slane %v3560, 5
      %v3691 = vrot.slane %v3690, 4
      %v3692 = vrot.slane %v3561, 5
      %v3693 = vsel %vm873, %v3691, %v3692
      %v3694 = vrot.slane %v3562, 5
      %v3695 = vrot.slane %v3694, 4
      %v3696 = vrot.slane %v3563, 5
      %v3697 = vsel %vm873, %v3695, %v3696
      %v3698 = vrot.slane %v3564, 5
      %v3699 = vrot.slane %v3698, 4
      %v3700 = vrot.slane %v3565, 5
      %v3701 = vsel %vm873, %v3699, %v3700
      %v3702 = vrot.slane %v3566, 5
      %v3703 = vrot.slane %v3702, 4
      %v3704 = vrot.slane %v3567, 5
      %v3705 = vsel %vm873, %v3703, %v3704
      %v3706 = vrot.slane %v3568, 5
      %v3707 = vrot.slane %v3706, 4
      %v3708 = vrot.slane %v3569, 5
      %v3709 = vsel %vm873, %v3707, %v3708
      %v3710 = vrot.slane %v3570, 5
      %v3711 = vrot.slane %v3710, 4
      %v3712 = vrot.slane %v3571, 5
      %v3713 = vsel %vm873, %v3711, %v3712
      %v3714 = vrot.slane %v3572, 5
      %v3715 = vrot.slane %v3714, 4
      %v3716 = vrot.slane %v3573, 5
      %v3717 = vsel %vm873, %v3715, %v3716
      %3718 = vrot.lane.b32.xlu0 %v3625, 44
      %v3719 = vpop.permute.xlu0 %3718
      %3720 = vrot.lane.b32.xlu0 %v3629, 44
      %v3721 = vpop.permute.xlu0 %3720
      %3722 = vrot.lane.b32.xlu0 %v3633, 44
      %v3723 = vpop.permute.xlu0 %3722
      %3724 = vrot.lane.b32.xlu0 %v3637, 44
      %v3725 = vpop.permute.xlu0 %3724
      %3726 = vrot.lane.b32.xlu0 %v3641, 44
      %v3727 = vpop.permute.xlu0 %3726
      %3728 = vrot.lane.b32.xlu0 %v3645, 44
      %v3729 = vpop.permute.xlu0 %3728
      %3730 = vrot.lane.b32.xlu0 %v3649, 44
      %v3731 = vpop.permute.xlu0 %3730
      %3732 = vrot.lane.b32.xlu0 %v3653, 44
      %v3733 = vpop.permute.xlu0 %3732
      %3734 = vrot.lane.b32.xlu0 %v3657, 44
      %v3735 = vpop.permute.xlu0 %3734
      %3736 = vrot.lane.b32.xlu0 %v3661, 44
      %v3737 = vpop.permute.xlu0 %3736
      %3738 = vrot.lane.b32.xlu0 %v3665, 44
      %v3739 = vpop.permute.xlu0 %3738
      %3740 = vrot.lane.b32.xlu0 %v3669, 44
      %v3741 = vpop.permute.xlu0 %3740
      %3742 = vrot.lane.b32.xlu0 %v3673, 44
      %v3743 = vpop.permute.xlu0 %3742
      %3744 = vrot.lane.b32.xlu0 %v3677, 44
      %v3745 = vpop.permute.xlu0 %3744
      %3746 = vrot.lane.b32.xlu0 %v3681, 44
      %v3747 = vpop.permute.xlu0 %3746
      %3748 = vrot.lane.b32.xlu0 %v3685, 44
      %v3749 = vpop.permute.xlu0 %3748
      %3750 = vrot.lane.b32.xlu0 %v3689, 44
      %v3751 = vpop.permute.xlu0 %3750
      %3752 = vrot.lane.b32.xlu0 %v3693, 44
      %v3753 = vpop.permute.xlu0 %3752
      %3754 = vrot.lane.b32.xlu0 %v3697, 44
      %v3755 = vpop.permute.xlu0 %3754
      %3756 = vrot.lane.b32.xlu0 %v3701, 44
      %v3757 = vpop.permute.xlu0 %3756
      %3758 = vrot.lane.b32.xlu0 %v3705, 44
      %v3759 = vpop.permute.xlu0 %3758
      %3760 = vrot.lane.b32.xlu0 %v3709, 44
      %v3761 = vpop.permute.xlu0 %3760
      %3762 = vrot.lane.b32.xlu0 %v3713, 44
      %v3763 = vpop.permute.xlu0 %3762
      %3764 = vrot.lane.b32.xlu0 %v3717, 44
      %v3765 = vpop.permute.xlu0 %3764
      %vm3790 = vcmask 388448
      %3791 = vst.msk [vmem:[#allocation2] sm:$0xf] %vm3790, %v3719
      %3792 = vst.msk [vmem:[#allocation2 + $0x4] sm:$0xf] %vm3790, %v3721
      %3793 = vst.msk [vmem:[#allocation2 + $0x8] sm:$0xf] %vm3790, %v3723
      %3794 = vst.msk [vmem:[#allocation2 + $0xc] sm:$0xf] %vm3790, %v3725
      %3795 = vst.msk [vmem:[#allocation2 + $0x10] sm:$0xf] %vm3790, %v3727
      %3796 = vst.msk [vmem:[#allocation2 + $0x14] sm:$0xf] %vm3790, %v3729
      %3797 = vst.msk [vmem:[#allocation2 + $0x18] sm:$0xf] %vm3790, %v3731
      %3798 = vst.msk [vmem:[#allocation2 + $0x1c] sm:$0xf] %vm3790, %v3733
      %3799 = vst.msk [vmem:[#allocation2 + $0x20] sm:$0xf] %vm3790, %v3735
      %3800 = vst.msk [vmem:[#allocation2 + $0x24] sm:$0xf] %vm3790, %v3737
      %3801 = vst.msk [vmem:[#allocation2 + $0x28] sm:$0xf] %vm3790, %v3739
      %3802 = vst.msk [vmem:[#allocation2 + $0x2c] sm:$0xf] %vm3790, %v3741
      %3803 = vst.msk [vmem:[#allocation2 + $0x30] sm:$0xf] %vm3790, %v3743
      %3804 = vst.msk [vmem:[#allocation2 + $0x34] sm:$0xf] %vm3790, %v3745
      %3805 = vst.msk [vmem:[#allocation2 + $0x38] sm:$0xf] %vm3790, %v3747
      %3806 = vst.msk [vmem:[#allocation2 + $0x3c] sm:$0xf] %vm3790, %v3749
      %3807 = vst.msk [vmem:[#allocation2 + $0x40] sm:$0xf] %vm3790, %v3751
      %3808 = vst.msk [vmem:[#allocation2 + $0x44] sm:$0xf] %vm3790, %v3753
      %3809 = vst.msk [vmem:[#allocation2 + $0x48] sm:$0xf] %vm3790, %v3755
      %3810 = vst.msk [vmem:[#allocation2 + $0x4c] sm:$0xf] %vm3790, %v3757
      %3811 = vst.msk [vmem:[#allocation2 + $0x50] sm:$0xf] %vm3790, %v3759
      %3812 = vst.msk [vmem:[#allocation2 + $0x54] sm:$0xf] %vm3790, %v3761
      %3813 = vst.msk [vmem:[#allocation2 + $0x58] sm:$0xf] %vm3790, %v3763
      %3814 = vst.msk [vmem:[#allocation2 + $0x5c] sm:$0xf] %vm3790, %v3765
      %s3815 = scalar_lea.vmem %s221, 88
      %v3816 = vld [vmem:[%s3815] sm:$0xf]
      %v3817 = vld [vmem:[%s3815 + $0x8] sm:$0xf]
      %v3818 = vld [vmem:[%s3815 + $0x10] sm:$0xf]
      %v3819 = vld [vmem:[%s3815 + $0x18] sm:$0xf]
      %v3820 = vld [vmem:[%s3815 + $0x20] sm:$0xf]
      %v3821 = vld [vmem:[%s3815 + $0x28] sm:$0xf]
      %v3822 = vld [vmem:[%s3815 + $0x30] sm:$0xf]
      %v3823 = vld [vmem:[%s3815 + $0x38] sm:$0xf]
      %v3824 = vld [vmem:[%s3815 + $0x50] sm:$0xf]
      %v3825 = vld [vmem:[%s3815 + $0x58] sm:$0xf]
      %v3826 = vld [vmem:[%s3815 + $0x60] sm:$0xf]
      %v3827 = vld [vmem:[%s3815 + $0x68] sm:$0xf]
      %v3828 = vld [vmem:[%s3815 + $0x70] sm:$0xf]
      %v3829 = vld [vmem:[%s3815 + $0x78] sm:$0xf]
      %v3830 = vld [vmem:[%s3815 + $0x80] sm:$0xf]
      %v3831 = vld [vmem:[%s3815 + $0x88] sm:$0xf]
      %v3832 = vld [vmem:[%s3815 + $0xa0] sm:$0xf]
      %v3833 = vld [vmem:[%s3815 + $0xa8] sm:$0xf]
      %v3834 = vld [vmem:[%s3815 + $0xb0] sm:$0xf]
      %v3835 = vld [vmem:[%s3815 + $0xb8] sm:$0xf]
      %v3836 = vld [vmem:[%s3815 + $0xc0] sm:$0xf]
      %v3837 = vld [vmem:[%s3815 + $0xc8] sm:$0xf]
      %v3838 = vld [vmem:[%s3815 + $0xd0] sm:$0xf]
      %v3839 = vld [vmem:[%s3815 + $0xd8] sm:$0xf]
      %3864 = vrot.lane.b32.xlu0 %v3816, 48
      %v3865 = vpop.permute.xlu0 %3864
      %3866 = vrot.lane.b32.xlu0 %v3817, 48
      %v3867 = vpop.permute.xlu0 %3866
      %3868 = vrot.lane.b32.xlu0 %v3818, 48
      %v3869 = vpop.permute.xlu0 %3868
      %3870 = vrot.lane.b32.xlu0 %v3819, 48
      %v3871 = vpop.permute.xlu0 %3870
      %3872 = vrot.lane.b32.xlu0 %v3820, 48
      %v3873 = vpop.permute.xlu0 %3872
      %3874 = vrot.lane.b32.xlu0 %v3821, 48
      %v3875 = vpop.permute.xlu0 %3874
      %3876 = vrot.lane.b32.xlu0 %v3822, 48
      %v3877 = vpop.permute.xlu0 %3876
      %3878 = vrot.lane.b32.xlu0 %v3823, 48
      %v3879 = vpop.permute.xlu0 %3878
      %3880 = vrot.lane.b32.xlu0 %v3824, 48
      %v3881 = vpop.permute.xlu0 %3880
      %3882 = vrot.lane.b32.xlu0 %v3825, 48
      %v3883 = vpop.permute.xlu0 %3882
      %3884 = vrot.lane.b32.xlu0 %v3826, 48
      %v3885 = vpop.permute.xlu0 %3884
      %3886 = vrot.lane.b32.xlu0 %v3827, 48
      %v3887 = vpop.permute.xlu0 %3886
      %3888 = vrot.lane.b32.xlu0 %v3828, 48
      %v3889 = vpop.permute.xlu0 %3888
      %3890 = vrot.lane.b32.xlu0 %v3829, 48
      %v3891 = vpop.permute.xlu0 %3890
      %3892 = vrot.lane.b32.xlu0 %v3830, 48
      %v3893 = vpop.permute.xlu0 %3892
      %3894 = vrot.lane.b32.xlu0 %v3831, 48
      %v3895 = vpop.permute.xlu0 %3894
      %3896 = vrot.lane.b32.xlu0 %v3832, 48
      %v3897 = vpop.permute.xlu0 %3896
      %3898 = vrot.lane.b32.xlu0 %v3833, 48
      %v3899 = vpop.permute.xlu0 %3898
      %3900 = vrot.lane.b32.xlu0 %v3834, 48
      %v3901 = vpop.permute.xlu0 %3900
      %3902 = vrot.lane.b32.xlu0 %v3835, 48
      %v3903 = vpop.permute.xlu0 %3902
      %3904 = vrot.lane.b32.xlu0 %v3836, 48
      %v3905 = vpop.permute.xlu0 %3904
      %3906 = vrot.lane.b32.xlu0 %v3837, 48
      %v3907 = vpop.permute.xlu0 %3906
      %3908 = vrot.lane.b32.xlu0 %v3838, 48
      %v3909 = vpop.permute.xlu0 %3908
      %3910 = vrot.lane.b32.xlu0 %v3839, 48
      %v3911 = vpop.permute.xlu0 %3910
      %vm3936 = vcmask 421248
      %3937 = vst.msk [vmem:[#allocation2] sm:$0xf] %vm3936, %v3865
      %3938 = vst.msk [vmem:[#allocation2 + $0x4] sm:$0xf] %vm3936, %v3867
      %3939 = vst.msk [vmem:[#allocation2 + $0x8] sm:$0xf] %vm3936, %v3869
      %3940 = vst.msk [vmem:[#allocation2 + $0xc] sm:$0xf] %vm3936, %v3871
      %3941 = vst.msk [vmem:[#allocation2 + $0x10] sm:$0xf] %vm3936, %v3873
      %3942 = vst.msk [vmem:[#allocation2 + $0x14] sm:$0xf] %vm3936, %v3875
      %3943 = vst.msk [vmem:[#allocation2 + $0x18] sm:$0xf] %vm3936, %v3877
      %3944 = vst.msk [vmem:[#allocation2 + $0x1c] sm:$0xf] %vm3936, %v3879
      %3945 = vst.msk [vmem:[#allocation2 + $0x20] sm:$0xf] %vm3936, %v3881
      %3946 = vst.msk [vmem:[#allocation2 + $0x24] sm:$0xf] %vm3936, %v3883
      %3947 = vst.msk [vmem:[#allocation2 + $0x28] sm:$0xf] %vm3936, %v3885
      %3948 = vst.msk [vmem:[#allocation2 + $0x2c] sm:$0xf] %vm3936, %v3887
      %3949 = vst.msk [vmem:[#allocation2 + $0x30] sm:$0xf] %vm3936, %v3889
      %3950 = vst.msk [vmem:[#allocation2 + $0x34] sm:$0xf] %vm3936, %v3891
      %3951 = vst.msk [vmem:[#allocation2 + $0x38] sm:$0xf] %vm3936, %v3893
      %3952 = vst.msk [vmem:[#allocation2 + $0x3c] sm:$0xf] %vm3936, %v3895
      %3953 = vst.msk [vmem:[#allocation2 + $0x40] sm:$0xf] %vm3936, %v3897
      %3954 = vst.msk [vmem:[#allocation2 + $0x44] sm:$0xf] %vm3936, %v3899
      %3955 = vst.msk [vmem:[#allocation2 + $0x48] sm:$0xf] %vm3936, %v3901
      %3956 = vst.msk [vmem:[#allocation2 + $0x4c] sm:$0xf] %vm3936, %v3903
      %3957 = vst.msk [vmem:[#allocation2 + $0x50] sm:$0xf] %vm3936, %v3905
      %3958 = vst.msk [vmem:[#allocation2 + $0x54] sm:$0xf] %vm3936, %v3907
      %3959 = vst.msk [vmem:[#allocation2 + $0x58] sm:$0xf] %vm3936, %v3909
      %3960 = vst.msk [vmem:[#allocation2 + $0x5c] sm:$0xf] %vm3936, %v3911
      %v3961 = vld [vmem:[%s3815] sm:$0xf]
      %v3962 = vld [vmem:[%s3815 + $0x4] sm:$0x1]
      %v3963 = vld [vmem:[%s3815 + $0x8] sm:$0xf]
      %v3964 = vld [vmem:[%s3815 + $0xc] sm:$0x1]
      %v3965 = vld [vmem:[%s3815 + $0x10] sm:$0xf]
      %v3966 = vld [vmem:[%s3815 + $0x14] sm:$0x1]
      %v3967 = vld [vmem:[%s3815 + $0x18] sm:$0xf]
      %v3968 = vld [vmem:[%s3815 + $0x1c] sm:$0x1]
      %v3969 = vld [vmem:[%s3815 + $0x20] sm:$0xf]
      %v3970 = vld [vmem:[%s3815 + $0x24] sm:$0x1]
      %v3971 = vld [vmem:[%s3815 + $0x28] sm:$0xf]
      %v3972 = vld [vmem:[%s3815 + $0x2c] sm:$0x1]
      %v3973 = vld [vmem:[%s3815 + $0x30] sm:$0xf]
      %v3974 = vld [vmem:[%s3815 + $0x34] sm:$0x1]
      %v3975 = vld [vmem:[%s3815 + $0x38] sm:$0xf]
      %v3976 = vld [vmem:[%s3815 + $0x3c] sm:$0x1]
      %v3977 = vld [vmem:[%s3815 + $0x50] sm:$0xf]
      %v3978 = vld [vmem:[%s3815 + $0x54] sm:$0x1]
      %v3979 = vld [vmem:[%s3815 + $0x58] sm:$0xf]
      %v3980 = vld [vmem:[%s3815 + $0x5c] sm:$0x1]
      %v3981 = vld [vmem:[%s3815 + $0x60] sm:$0xf]
      %v3982 = vld [vmem:[%s3815 + $0x64] sm:$0x1]
      %v3983 = vld [vmem:[%s3815 + $0x68] sm:$0xf]
      %v3984 = vld [vmem:[%s3815 + $0x6c] sm:$0x1]
      %v3985 = vld [vmem:[%s3815 + $0x70] sm:$0xf]
      %v3986 = vld [vmem:[%s3815 + $0x74] sm:$0x1]
      %v3987 = vld [vmem:[%s3815 + $0x78] sm:$0xf]
      %v3988 = vld [vmem:[%s3815 + $0x7c] sm:$0x1]
      %v3989 = vld [vmem:[%s3815 + $0x80] sm:$0xf]
      %v3990 = vld [vmem:[%s3815 + $0x84] sm:$0x1]
      %v3991 = vld [vmem:[%s3815 + $0x88] sm:$0xf]
      %v3992 = vld [vmem:[%s3815 + $0x8c] sm:$0x1]
      %v3993 = vld [vmem:[%s3815 + $0xa0] sm:$0xf]
      %v3994 = vld [vmem:[%s3815 + $0xa4] sm:$0x1]
      %v3995 = vld [vmem:[%s3815 + $0xa8] sm:$0xf]
      %v3996 = vld [vmem:[%s3815 + $0xac] sm:$0x1]
      %v3997 = vld [vmem:[%s3815 + $0xb0] sm:$0xf]
      %v3998 = vld [vmem:[%s3815 + $0xb4] sm:$0x1]
      %v3999 = vld [vmem:[%s3815 + $0xb8] sm:$0xf]
      %v4000 = vld [vmem:[%s3815 + $0xbc] sm:$0x1]
      %v4001 = vld [vmem:[%s3815 + $0xc0] sm:$0xf]
      %v4002 = vld [vmem:[%s3815 + $0xc4] sm:$0x1]
      %v4003 = vld [vmem:[%s3815 + $0xc8] sm:$0xf]
      %v4004 = vld [vmem:[%s3815 + $0xcc] sm:$0x1]
      %v4005 = vld [vmem:[%s3815 + $0xd0] sm:$0xf]
      %v4006 = vld [vmem:[%s3815 + $0xd4] sm:$0x1]
      %v4007 = vld [vmem:[%s3815 + $0xd8] sm:$0xf]
      %v4008 = vld [vmem:[%s3815 + $0xdc] sm:$0x1]
      %v4010 = vshrl.u32 %v3961, 16
      %v4012 = vrot.slane %v4010, 4
      %v4013 = vshll.u32 %v3961, 16
      %v4015 = vrot.slane %v4013, 5
      %v4016 = vor.u32 %v4012, %v4015
      %v4017 = vrot.slane %v4016, 4
      %v4019 = vshll.u32 %v3962, 16
      %v4021 = vrot.slane %v4019, 5
      %v4022 = vsel %vm341, %v4017, %v4021
      %v4024 = vshrl.u32 %v3963, 16
      %v4026 = vrot.slane %v4024, 4
      %v4027 = vshll.u32 %v3963, 16
      %v4029 = vrot.slane %v4027, 5
      %v4030 = vor.u32 %v4026, %v4029
      %v4031 = vrot.slane %v4030, 4
      %v4033 = vshll.u32 %v3964, 16
      %v4035 = vrot.slane %v4033, 5
      %v4036 = vsel %vm341, %v4031, %v4035
      %v4038 = vshrl.u32 %v3965, 16
      %v4040 = vrot.slane %v4038, 4
      %v4041 = vshll.u32 %v3965, 16
      %v4043 = vrot.slane %v4041, 5
      %v4044 = vor.u32 %v4040, %v4043
      %v4045 = vrot.slane %v4044, 4
      %v4047 = vshll.u32 %v3966, 16
      %v4049 = vrot.slane %v4047, 5
      %v4050 = vsel %vm341, %v4045, %v4049
      %v4052 = vshrl.u32 %v3967, 16
      %v4054 = vrot.slane %v4052, 4
      %v4055 = vshll.u32 %v3967, 16
      %v4057 = vrot.slane %v4055, 5
      %v4058 = vor.u32 %v4054, %v4057
      %v4059 = vrot.slane %v4058, 4
      %v4061 = vshll.u32 %v3968, 16
      %v4063 = vrot.slane %v4061, 5
      %v4064 = vsel %vm341, %v4059, %v4063
      %v4066 = vshrl.u32 %v3969, 16
      %v4068 = vrot.slane %v4066, 4
      %v4069 = vshll.u32 %v3969, 16
      %v4071 = vrot.slane %v4069, 5
      %v4072 = vor.u32 %v4068, %v4071
      %v4073 = vrot.slane %v4072, 4
      %v4075 = vshll.u32 %v3970, 16
      %v4077 = vrot.slane %v4075, 5
      %v4078 = vsel %vm341, %v4073, %v4077
      %v4080 = vshrl.u32 %v3971, 16
      %v4082 = vrot.slane %v4080, 4
      %v4083 = vshll.u32 %v3971, 16
      %v4085 = vrot.slane %v4083, 5
      %v4086 = vor.u32 %v4082, %v4085
      %v4087 = vrot.slane %v4086, 4
      %v4089 = vshll.u32 %v3972, 16
      %v4091 = vrot.slane %v4089, 5
      %v4092 = vsel %vm341, %v4087, %v4091
      %v4094 = vshrl.u32 %v3973, 16
      %v4096 = vrot.slane %v4094, 4
      %v4097 = vshll.u32 %v3973, 16
      %v4099 = vrot.slane %v4097, 5
      %v4100 = vor.u32 %v4096, %v4099
      %v4101 = vrot.slane %v4100, 4
      %v4103 = vshll.u32 %v3974, 16
      %v4105 = vrot.slane %v4103, 5
      %v4106 = vsel %vm341, %v4101, %v4105
      %v4108 = vshrl.u32 %v3975, 16
      %v4110 = vrot.slane %v4108, 4
      %v4111 = vshll.u32 %v3975, 16
      %v4113 = vrot.slane %v4111, 5
      %v4114 = vor.u32 %v4110, %v4113
      %v4115 = vrot.slane %v4114, 4
      %v4117 = vshll.u32 %v3976, 16
      %v4119 = vrot.slane %v4117, 5
      %v4120 = vsel %vm341, %v4115, %v4119
      %v4122 = vshrl.u32 %v3977, 16
      %v4124 = vrot.slane %v4122, 4
      %v4125 = vshll.u32 %v3977, 16
      %v4127 = vrot.slane %v4125, 5
      %v4128 = vor.u32 %v4124, %v4127
      %v4129 = vrot.slane %v4128, 4
      %v4131 = vshll.u32 %v3978, 16
      %v4133 = vrot.slane %v4131, 5
      %v4134 = vsel %vm341, %v4129, %v4133
      %v4136 = vshrl.u32 %v3979, 16
      %v4138 = vrot.slane %v4136, 4
      %v4139 = vshll.u32 %v3979, 16
      %v4141 = vrot.slane %v4139, 5
      %v4142 = vor.u32 %v4138, %v4141
      %v4143 = vrot.slane %v4142, 4
      %v4145 = vshll.u32 %v3980, 16
      %v4147 = vrot.slane %v4145, 5
      %v4148 = vsel %vm341, %v4143, %v4147
      %v4150 = vshrl.u32 %v3981, 16
      %v4152 = vrot.slane %v4150, 4
      %v4153 = vshll.u32 %v3981, 16
      %v4155 = vrot.slane %v4153, 5
      %v4156 = vor.u32 %v4152, %v4155
      %v4157 = vrot.slane %v4156, 4
      %v4159 = vshll.u32 %v3982, 16
      %v4161 = vrot.slane %v4159, 5
      %v4162 = vsel %vm341, %v4157, %v4161
      %v4164 = vshrl.u32 %v3983, 16
      %v4166 = vrot.slane %v4164, 4
      %v4167 = vshll.u32 %v3983, 16
      %v4169 = vrot.slane %v4167, 5
      %v4170 = vor.u32 %v4166, %v4169
      %v4171 = vrot.slane %v4170, 4
      %v4173 = vshll.u32 %v3984, 16
      %v4175 = vrot.slane %v4173, 5
      %v4176 = vsel %vm341, %v4171, %v4175
      %v4178 = vshrl.u32 %v3985, 16
      %v4180 = vrot.slane %v4178, 4
      %v4181 = vshll.u32 %v3985, 16
      %v4183 = vrot.slane %v4181, 5
      %v4184 = vor.u32 %v4180, %v4183
      %v4185 = vrot.slane %v4184, 4
      %v4187 = vshll.u32 %v3986, 16
      %v4189 = vrot.slane %v4187, 5
      %v4190 = vsel %vm341, %v4185, %v4189
      %v4192 = vshrl.u32 %v3987, 16
      %v4194 = vrot.slane %v4192, 4
      %v4195 = vshll.u32 %v3987, 16
      %v4197 = vrot.slane %v4195, 5
      %v4198 = vor.u32 %v4194, %v4197
      %v4199 = vrot.slane %v4198, 4
      %v4201 = vshll.u32 %v3988, 16
      %v4203 = vrot.slane %v4201, 5
      %v4204 = vsel %vm341, %v4199, %v4203
      %v4206 = vshrl.u32 %v3989, 16
      %v4208 = vrot.slane %v4206, 4
      %v4209 = vshll.u32 %v3989, 16
      %v4211 = vrot.slane %v4209, 5
      %v4212 = vor.u32 %v4208, %v4211
      %v4213 = vrot.slane %v4212, 4
      %v4215 = vshll.u32 %v3990, 16
      %v4217 = vrot.slane %v4215, 5
      %v4218 = vsel %vm341, %v4213, %v4217
      %v4220 = vshrl.u32 %v3991, 16
      %v4222 = vrot.slane %v4220, 4
      %v4223 = vshll.u32 %v3991, 16
      %v4225 = vrot.slane %v4223, 5
      %v4226 = vor.u32 %v4222, %v4225
      %v4227 = vrot.slane %v4226, 4
      %v4229 = vshll.u32 %v3992, 16
      %v4231 = vrot.slane %v4229, 5
      %v4232 = vsel %vm341, %v4227, %v4231
      %v4234 = vshrl.u32 %v3993, 16
      %v4236 = vrot.slane %v4234, 4
      %v4237 = vshll.u32 %v3993, 16
      %v4239 = vrot.slane %v4237, 5
      %v4240 = vor.u32 %v4236, %v4239
      %v4241 = vrot.slane %v4240, 4
      %v4243 = vshll.u32 %v3994, 16
      %v4245 = vrot.slane %v4243, 5
      %v4246 = vsel %vm341, %v4241, %v4245
      %v4248 = vshrl.u32 %v3995, 16
      %v4250 = vrot.slane %v4248, 4
      %v4251 = vshll.u32 %v3995, 16
      %v4253 = vrot.slane %v4251, 5
      %v4254 = vor.u32 %v4250, %v4253
      %v4255 = vrot.slane %v4254, 4
      %v4257 = vshll.u32 %v3996, 16
      %v4259 = vrot.slane %v4257, 5
      %v4260 = vsel %vm341, %v4255, %v4259
      %v4262 = vshrl.u32 %v3997, 16
      %v4264 = vrot.slane %v4262, 4
      %v4265 = vshll.u32 %v3997, 16
      %v4267 = vrot.slane %v4265, 5
      %v4268 = vor.u32 %v4264, %v4267
      %v4269 = vrot.slane %v4268, 4
      %v4271 = vshll.u32 %v3998, 16
      %v4273 = vrot.slane %v4271, 5
      %v4274 = vsel %vm341, %v4269, %v4273
      %v4276 = vshrl.u32 %v3999, 16
      %v4278 = vrot.slane %v4276, 4
      %v4279 = vshll.u32 %v3999, 16
      %v4281 = vrot.slane %v4279, 5
      %v4282 = vor.u32 %v4278, %v4281
      %v4283 = vrot.slane %v4282, 4
      %v4285 = vshll.u32 %v4000, 16
      %v4287 = vrot.slane %v4285, 5
      %v4288 = vsel %vm341, %v4283, %v4287
      %v4290 = vshrl.u32 %v4001, 16
      %v4292 = vrot.slane %v4290, 4
      %v4293 = vshll.u32 %v4001, 16
      %v4295 = vrot.slane %v4293, 5
      %v4296 = vor.u32 %v4292, %v4295
      %v4297 = vrot.slane %v4296, 4
      %v4299 = vshll.u32 %v4002, 16
      %v4301 = vrot.slane %v4299, 5
      %v4302 = vsel %vm341, %v4297, %v4301
      %v4304 = vshrl.u32 %v4003, 16
      %v4306 = vrot.slane %v4304, 4
      %v4307 = vshll.u32 %v4003, 16
      %v4309 = vrot.slane %v4307, 5
      %v4310 = vor.u32 %v4306, %v4309
      %v4311 = vrot.slane %v4310, 4
      %v4313 = vshll.u32 %v4004, 16
      %v4315 = vrot.slane %v4313, 5
      %v4316 = vsel %vm341, %v4311, %v4315
      %v4318 = vshrl.u32 %v4005, 16
      %v4320 = vrot.slane %v4318, 4
      %v4321 = vshll.u32 %v4005, 16
      %v4323 = vrot.slane %v4321, 5
      %v4324 = vor.u32 %v4320, %v4323
      %v4325 = vrot.slane %v4324, 4
      %v4327 = vshll.u32 %v4006, 16
      %v4329 = vrot.slane %v4327, 5
      %v4330 = vsel %vm341, %v4325, %v4329
      %v4332 = vshrl.u32 %v4007, 16
      %v4334 = vrot.slane %v4332, 4
      %v4335 = vshll.u32 %v4007, 16
      %v4337 = vrot.slane %v4335, 5
      %v4338 = vor.u32 %v4334, %v4337
      %v4339 = vrot.slane %v4338, 4
      %v4341 = vshll.u32 %v4008, 16
      %v4343 = vrot.slane %v4341, 5
      %v4344 = vsel %vm341, %v4339, %v4343
      %4345 = vrot.lane.b32.xlu0 %v4022, 52
      %v4346 = vpop.permute.xlu0 %4345
      %4347 = vrot.lane.b32.xlu0 %v4036, 52
      %v4348 = vpop.permute.xlu0 %4347
      %4349 = vrot.lane.b32.xlu0 %v4050, 52
      %v4350 = vpop.permute.xlu0 %4349
      %4351 = vrot.lane.b32.xlu0 %v4064, 52
      %v4352 = vpop.permute.xlu0 %4351
      %4353 = vrot.lane.b32.xlu0 %v4078, 52
      %v4354 = vpop.permute.xlu0 %4353
      %4355 = vrot.lane.b32.xlu0 %v4092, 52
      %v4356 = vpop.permute.xlu0 %4355
      %4357 = vrot.lane.b32.xlu0 %v4106, 52
      %v4358 = vpop.permute.xlu0 %4357
      %4359 = vrot.lane.b32.xlu0 %v4120, 52
      %v4360 = vpop.permute.xlu0 %4359
      %4361 = vrot.lane.b32.xlu0 %v4134, 52
      %v4362 = vpop.permute.xlu0 %4361
      %4363 = vrot.lane.b32.xlu0 %v4148, 52
      %v4364 = vpop.permute.xlu0 %4363
      %4365 = vrot.lane.b32.xlu0 %v4162, 52
      %v4366 = vpop.permute.xlu0 %4365
      %4367 = vrot.lane.b32.xlu0 %v4176, 52
      %v4368 = vpop.permute.xlu0 %4367
      %4369 = vrot.lane.b32.xlu0 %v4190, 52
      %v4370 = vpop.permute.xlu0 %4369
      %4371 = vrot.lane.b32.xlu0 %v4204, 52
      %v4372 = vpop.permute.xlu0 %4371
      %4373 = vrot.lane.b32.xlu0 %v4218, 52
      %v4374 = vpop.permute.xlu0 %4373
      %4375 = vrot.lane.b32.xlu0 %v4232, 52
      %v4376 = vpop.permute.xlu0 %4375
      %4377 = vrot.lane.b32.xlu0 %v4246, 52
      %v4378 = vpop.permute.xlu0 %4377
      %4379 = vrot.lane.b32.xlu0 %v4260, 52
      %v4380 = vpop.permute.xlu0 %4379
      %4381 = vrot.lane.b32.xlu0 %v4274, 52
      %v4382 = vpop.permute.xlu0 %4381
      %4383 = vrot.lane.b32.xlu0 %v4288, 52
      %v4384 = vpop.permute.xlu0 %4383
      %4385 = vrot.lane.b32.xlu0 %v4302, 52
      %v4386 = vpop.permute.xlu0 %4385
      %4387 = vrot.lane.b32.xlu0 %v4316, 52
      %v4388 = vpop.permute.xlu0 %4387
      %4389 = vrot.lane.b32.xlu0 %v4330, 52
      %v4390 = vpop.permute.xlu0 %4389
      %4391 = vrot.lane.b32.xlu0 %v4344, 52
      %v4392 = vpop.permute.xlu0 %4391
      %vm4417 = vcmask 454048
      %4418 = vst.msk [vmem:[#allocation2] sm:$0xf] %vm4417, %v4346
      %4419 = vst.msk [vmem:[#allocation2 + $0x4] sm:$0xf] %vm4417, %v4348
      %4420 = vst.msk [vmem:[#allocation2 + $0x8] sm:$0xf] %vm4417, %v4350
      %4421 = vst.msk [vmem:[#allocation2 + $0xc] sm:$0xf] %vm4417, %v4352
      %4422 = vst.msk [vmem:[#allocation2 + $0x10] sm:$0xf] %vm4417, %v4354
      %4423 = vst.msk [vmem:[#allocation2 + $0x14] sm:$0xf] %vm4417, %v4356
      %4424 = vst.msk [vmem:[#allocation2 + $0x18] sm:$0xf] %vm4417, %v4358
      %4425 = vst.msk [vmem:[#allocation2 + $0x1c] sm:$0xf] %vm4417, %v4360
      %4426 = vst.msk [vmem:[#allocation2 + $0x20] sm:$0xf] %vm4417, %v4362
      %4427 = vst.msk [vmem:[#allocation2 + $0x24] sm:$0xf] %vm4417, %v4364
      %4428 = vst.msk [vmem:[#allocation2 + $0x28] sm:$0xf] %vm4417, %v4366
      %4429 = vst.msk [vmem:[#allocation2 + $0x2c] sm:$0xf] %vm4417, %v4368
      %4430 = vst.msk [vmem:[#allocation2 + $0x30] sm:$0xf] %vm4417, %v4370
      %4431 = vst.msk [vmem:[#allocation2 + $0x34] sm:$0xf] %vm4417, %v4372
      %4432 = vst.msk [vmem:[#allocation2 + $0x38] sm:$0xf] %vm4417, %v4374
      %4433 = vst.msk [vmem:[#allocation2 + $0x3c] sm:$0xf] %vm4417, %v4376
      %4434 = vst.msk [vmem:[#allocation2 + $0x40] sm:$0xf] %vm4417, %v4378
      %4435 = vst.msk [vmem:[#allocation2 + $0x44] sm:$0xf] %vm4417, %v4380
      %4436 = vst.msk [vmem:[#allocation2 + $0x48] sm:$0xf] %vm4417, %v4382
      %4437 = vst.msk [vmem:[#allocation2 + $0x4c] sm:$0xf] %vm4417, %v4384
      %4438 = vst.msk [vmem:[#allocation2 + $0x50] sm:$0xf] %vm4417, %v4386
      %4439 = vst.msk [vmem:[#allocation2 + $0x54] sm:$0xf] %vm4417, %v4388
      %4440 = vst.msk [vmem:[#allocation2 + $0x58] sm:$0xf] %vm4417, %v4390
      %4441 = vst.msk [vmem:[#allocation2 + $0x5c] sm:$0xf] %vm4417, %v4392
      %v4442 = vld [vmem:[%s3815] sm:$0xe]
      %v4443 = vld [vmem:[%s3815 + $0x4] sm:$0x1]
      %v4444 = vld [vmem:[%s3815 + $0x8] sm:$0xe]
      %v4445 = vld [vmem:[%s3815 + $0xc] sm:$0x1]
      %v4446 = vld [vmem:[%s3815 + $0x10] sm:$0xe]
      %v4447 = vld [vmem:[%s3815 + $0x14] sm:$0x1]
      %v4448 = vld [vmem:[%s3815 + $0x18] sm:$0xe]
      %v4449 = vld [vmem:[%s3815 + $0x1c] sm:$0x1]
      %v4450 = vld [vmem:[%s3815 + $0x20] sm:$0xe]
      %v4451 = vld [vmem:[%s3815 + $0x24] sm:$0x1]
      %v4452 = vld [vmem:[%s3815 + $0x28] sm:$0xe]
      %v4453 = vld [vmem:[%s3815 + $0x2c] sm:$0x1]
      %v4454 = vld [vmem:[%s3815 + $0x30] sm:$0xe]
      %v4455 = vld [vmem:[%s3815 + $0x34] sm:$0x1]
      %v4456 = vld [vmem:[%s3815 + $0x38] sm:$0xe]
      %v4457 = vld [vmem:[%s3815 + $0x3c] sm:$0x1]
      %v4458 = vld [vmem:[%s3815 + $0x50] sm:$0xe]
      %v4459 = vld [vmem:[%s3815 + $0x54] sm:$0x1]
      %v4460 = vld [vmem:[%s3815 + $0x58] sm:$0xe]
      %v4461 = vld [vmem:[%s3815 + $0x5c] sm:$0x1]
      %v4462 = vld [vmem:[%s3815 + $0x60] sm:$0xe]
      %v4463 = vld [vmem:[%s3815 + $0x64] sm:$0x1]
      %v4464 = vld [vmem:[%s3815 + $0x68] sm:$0xe]
      %v4465 = vld [vmem:[%s3815 + $0x6c] sm:$0x1]
      %v4466 = vld [vmem:[%s3815 + $0x70] sm:$0xe]
      %v4467 = vld [vmem:[%s3815 + $0x74] sm:$0x1]
      %v4468 = vld [vmem:[%s3815 + $0x78] sm:$0xe]
      %v4469 = vld [vmem:[%s3815 + $0x7c] sm:$0x1]
      %v4470 = vld [vmem:[%s3815 + $0x80] sm:$0xe]
      %v4471 = vld [vmem:[%s3815 + $0x84] sm:$0x1]
      %v4472 = vld [vmem:[%s3815 + $0x88] sm:$0xe]
      %v4473 = vld [vmem:[%s3815 + $0x8c] sm:$0x1]
      %v4474 = vld [vmem:[%s3815 + $0xa0] sm:$0xe]
      %v4475 = vld [vmem:[%s3815 + $0xa4] sm:$0x1]
      %v4476 = vld [vmem:[%s3815 + $0xa8] sm:$0xe]
      %v4477 = vld [vmem:[%s3815 + $0xac] sm:$0x1]
      %v4478 = vld [vmem:[%s3815 + $0xb0] sm:$0xe]
      %v4479 = vld [vmem:[%s3815 + $0xb4] sm:$0x1]
      %v4480 = vld [vmem:[%s3815 + $0xb8] sm:$0xe]
      %v4481 = vld [vmem:[%s3815 + $0xbc] sm:$0x1]
      %v4482 = vld [vmem:[%s3815 + $0xc0] sm:$0xe]
      %v4483 = vld [vmem:[%s3815 + $0xc4] sm:$0x1]
      %v4484 = vld [vmem:[%s3815 + $0xc8] sm:$0xe]
      %v4485 = vld [vmem:[%s3815 + $0xcc] sm:$0x1]
      %v4486 = vld [vmem:[%s3815 + $0xd0] sm:$0xe]
      %v4487 = vld [vmem:[%s3815 + $0xd4] sm:$0x1]
      %v4488 = vld [vmem:[%s3815 + $0xd8] sm:$0xe]
      %v4489 = vld [vmem:[%s3815 + $0xdc] sm:$0x1]
      %v4538 = vrot.slane %v4442, 5
      %v4539 = vrot.slane %v4538, 4
      %v4540 = vrot.slane %v4443, 5
      %v4541 = vsel %vm873, %v4539, %v4540
      %v4542 = vrot.slane %v4444, 5
      %v4543 = vrot.slane %v4542, 4
      %v4544 = vrot.slane %v4445, 5
      %v4545 = vsel %vm873, %v4543, %v4544
      %v4546 = vrot.slane %v4446, 5
      %v4547 = vrot.slane %v4546, 4
      %v4548 = vrot.slane %v4447, 5
      %v4549 = vsel %vm873, %v4547, %v4548
      %v4550 = vrot.slane %v4448, 5
      %v4551 = vrot.slane %v4550, 4
      %v4552 = vrot.slane %v4449, 5
      %v4553 = vsel %vm873, %v4551, %v4552
      %v4554 = vrot.slane %v4450, 5
      %v4555 = vrot.slane %v4554, 4
      %v4556 = vrot.slane %v4451, 5
      %v4557 = vsel %vm873, %v4555, %v4556
      %v4558 = vrot.slane %v4452, 5
      %v4559 = vrot.slane %v4558, 4
      %v4560 = vrot.slane %v4453, 5
      %v4561 = vsel %vm873, %v4559, %v4560
      %v4562 = vrot.slane %v4454, 5
      %v4563 = vrot.slane %v4562, 4
      %v4564 = vrot.slane %v4455, 5
      %v4565 = vsel %vm873, %v4563, %v4564
      %v4566 = vrot.slane %v4456, 5
      %v4567 = vrot.slane %v4566, 4
      %v4568 = vrot.slane %v4457, 5
      %v4569 = vsel %vm873, %v4567, %v4568
      %v4570 = vrot.slane %v4458, 5
      %v4571 = vrot.slane %v4570, 4
      %v4572 = vrot.slane %v4459, 5
      %v4573 = vsel %vm873, %v4571, %v4572
      %v4574 = vrot.slane %v4460, 5
      %v4575 = vrot.slane %v4574, 4
      %v4576 = vrot.slane %v4461, 5
      %v4577 = vsel %vm873, %v4575, %v4576
      %v4578 = vrot.slane %v4462, 5
      %v4579 = vrot.slane %v4578, 4
      %v4580 = vrot.slane %v4463, 5
      %v4581 = vsel %vm873, %v4579, %v4580
      %v4582 = vrot.slane %v4464, 5
      %v4583 = vrot.slane %v4582, 4
      %v4584 = vrot.slane %v4465, 5
      %v4585 = vsel %vm873, %v4583, %v4584
      %v4586 = vrot.slane %v4466, 5
      %v4587 = vrot.slane %v4586, 4
      %v4588 = vrot.slane %v4467, 5
      %v4589 = vsel %vm873, %v4587, %v4588
      %v4590 = vrot.slane %v4468, 5
      %v4591 = vrot.slane %v4590, 4
      %v4592 = vrot.slane %v4469, 5
      %v4593 = vsel %vm873, %v4591, %v4592
      %v4594 = vrot.slane %v4470, 5
      %v4595 = vrot.slane %v4594, 4
      %v4596 = vrot.slane %v4471, 5
      %v4597 = vsel %vm873, %v4595, %v4596
      %v4598 = vrot.slane %v4472, 5
      %v4599 = vrot.slane %v4598, 4
      %v4600 = vrot.slane %v4473, 5
      %v4601 = vsel %vm873, %v4599, %v4600
      %v4602 = vrot.slane %v4474, 5
      %v4603 = vrot.slane %v4602, 4
      %v4604 = vrot.slane %v4475, 5
      %v4605 = vsel %vm873, %v4603, %v4604
      %v4606 = vrot.slane %v4476, 5
      %v4607 = vrot.slane %v4606, 4
      %v4608 = vrot.slane %v4477, 5
      %v4609 = vsel %vm873, %v4607, %v4608
      %v4610 = vrot.slane %v4478, 5
      %v4611 = vrot.slane %v4610, 4
      %v4612 = vrot.slane %v4479, 5
      %v4613 = vsel %vm873, %v4611, %v4612
      %v4614 = vrot.slane %v4480, 5
      %v4615 = vrot.slane %v4614, 4
      %v4616 = vrot.slane %v4481, 5
      %v4617 = vsel %vm873, %v4615, %v4616
      %v4618 = vrot.slane %v4482, 5
      %v4619 = vrot.slane %v4618, 4
      %v4620 = vrot.slane %v4483, 5
      %v4621 = vsel %vm873, %v4619, %v4620
      %v4622 = vrot.slane %v4484, 5
      %v4623 = vrot.slane %v4622, 4
      %v4624 = vrot.slane %v4485, 5
      %v4625 = vsel %vm873, %v4623, %v4624
      %v4626 = vrot.slane %v4486, 5
      %v4627 = vrot.slane %v4626, 4
      %v4628 = vrot.slane %v4487, 5
      %v4629 = vsel %vm873, %v4627, %v4628
      %v4630 = vrot.slane %v4488, 5
      %v4631 = vrot.slane %v4630, 4
      %v4632 = vrot.slane %v4489, 5
      %v4633 = vsel %vm873, %v4631, %v4632
      %4634 = vrot.lane.b32.xlu0 %v4541, 56
      %v4635 = vpop.permute.xlu0 %4634
      %4636 = vrot.lane.b32.xlu0 %v4545, 56
      %v4637 = vpop.permute.xlu0 %4636
      %4638 = vrot.lane.b32.xlu0 %v4549, 56
      %v4639 = vpop.permute.xlu0 %4638
      %4640 = vrot.lane.b32.xlu0 %v4553, 56
      %v4641 = vpop.permute.xlu0 %4640
      %4642 = vrot.lane.b32.xlu0 %v4557, 56
      %v4643 = vpop.permute.xlu0 %4642
      %4644 = vrot.lane.b32.xlu0 %v4561, 56
      %v4645 = vpop.permute.xlu0 %4644
      %4646 = vrot.lane.b32.xlu0 %v4565, 56
      %v4647 = vpop.permute.xlu0 %4646
      %4648 = vrot.lane.b32.xlu0 %v4569, 56
      %v4649 = vpop.permute.xlu0 %4648
      %4650 = vrot.lane.b32.xlu0 %v4573, 56
      %v4651 = vpop.permute.xlu0 %4650
      %4652 = vrot.lane.b32.xlu0 %v4577, 56
      %v4653 = vpop.permute.xlu0 %4652
      %4654 = vrot.lane.b32.xlu0 %v4581, 56
      %v4655 = vpop.permute.xlu0 %4654
      %4656 = vrot.lane.b32.xlu0 %v4585, 56
      %v4657 = vpop.permute.xlu0 %4656
      %4658 = vrot.lane.b32.xlu0 %v4589, 56
      %v4659 = vpop.permute.xlu0 %4658
      %4660 = vrot.lane.b32.xlu0 %v4593, 56
      %v4661 = vpop.permute.xlu0 %4660
      %4662 = vrot.lane.b32.xlu0 %v4597, 56
      %v4663 = vpop.permute.xlu0 %4662
      %4664 = vrot.lane.b32.xlu0 %v4601, 56
      %v4665 = vpop.permute.xlu0 %4664
      %4666 = vrot.lane.b32.xlu0 %v4605, 56
      %v4667 = vpop.permute.xlu0 %4666
      %4668 = vrot.lane.b32.xlu0 %v4609, 56
      %v4669 = vpop.permute.xlu0 %4668
      %4670 = vrot.lane.b32.xlu0 %v4613, 56
      %v4671 = vpop.permute.xlu0 %4670
      %4672 = vrot.lane.b32.xlu0 %v4617, 56
      %v4673 = vpop.permute.xlu0 %4672
      %4674 = vrot.lane.b32.xlu0 %v4621, 56
      %v4675 = vpop.permute.xlu0 %4674
      %4676 = vrot.lane.b32.xlu0 %v4625, 56
      %v4677 = vpop.permute.xlu0 %4676
      %4678 = vrot.lane.b32.xlu0 %v4629, 56
      %v4679 = vpop.permute.xlu0 %4678
      %4680 = vrot.lane.b32.xlu0 %v4633, 56
      %v4681 = vpop.permute.xlu0 %4680
      %vm4706 = vcmask 486848
      %4707 = vst.msk [vmem:[#allocation2] sm:$0xf] %vm4706, %v4635
      %4708 = vst.msk [vmem:[#allocation2 + $0x4] sm:$0xf] %vm4706, %v4637
      %4709 = vst.msk [vmem:[#allocation2 + $0x8] sm:$0xf] %vm4706, %v4639
      %4710 = vst.msk [vmem:[#allocation2 + $0xc] sm:$0xf] %vm4706, %v4641
      %4711 = vst.msk [vmem:[#allocation2 + $0x10] sm:$0xf] %vm4706, %v4643
      %4712 = vst.msk [vmem:[#allocation2 + $0x14] sm:$0xf] %vm4706, %v4645
      %4713 = vst.msk [vmem:[#allocation2 + $0x18] sm:$0xf] %vm4706, %v4647
      %4714 = vst.msk [vmem:[#allocation2 + $0x1c] sm:$0xf] %vm4706, %v4649
      %4715 = vst.msk [vmem:[#allocation2 + $0x20] sm:$0xf] %vm4706, %v4651
      %4716 = vst.msk [vmem:[#allocation2 + $0x24] sm:$0xf] %vm4706, %v4653
      %4717 = vst.msk [vmem:[#allocation2 + $0x28] sm:$0xf] %vm4706, %v4655
      %4718 = vst.msk [vmem:[#allocation2 + $0x2c] sm:$0xf] %vm4706, %v4657
      %4719 = vst.msk [vmem:[#allocation2 + $0x30] sm:$0xf] %vm4706, %v4659
      %4720 = vst.msk [vmem:[#allocation2 + $0x34] sm:$0xf] %vm4706, %v4661
      %4721 = vst.msk [vmem:[#allocation2 + $0x38] sm:$0xf] %vm4706, %v4663
      %4722 = vst.msk [vmem:[#allocation2 + $0x3c] sm:$0xf] %vm4706, %v4665
      %4723 = vst.msk [vmem:[#allocation2 + $0x40] sm:$0xf] %vm4706, %v4667
      %4724 = vst.msk [vmem:[#allocation2 + $0x44] sm:$0xf] %vm4706, %v4669
      %4725 = vst.msk [vmem:[#allocation2 + $0x48] sm:$0xf] %vm4706, %v4671
      %4726 = vst.msk [vmem:[#allocation2 + $0x4c] sm:$0xf] %vm4706, %v4673
      %4727 = vst.msk [vmem:[#allocation2 + $0x50] sm:$0xf] %vm4706, %v4675
      %4728 = vst.msk [vmem:[#allocation2 + $0x54] sm:$0xf] %vm4706, %v4677
      %4729 = vst.msk [vmem:[#allocation2 + $0x58] sm:$0xf] %vm4706, %v4679
      %4730 = vst.msk [vmem:[#allocation2 + $0x5c] sm:$0xf] %vm4706, %v4681
      %s4731 = scalar_lea.vmem %s221, 96
      %v4732 = vld [vmem:[%s4731] sm:$0xf]
      %v4733 = vld [vmem:[%s4731 + $0x8] sm:$0xf]
      %v4734 = vld [vmem:[%s4731 + $0x10] sm:$0xf]
      %v4735 = vld [vmem:[%s4731 + $0x18] sm:$0xf]
      %v4736 = vld [vmem:[%s4731 + $0x20] sm:$0xf]
      %v4737 = vld [vmem:[%s4731 + $0x28] sm:$0xf]
      %v4738 = vld [vmem:[%s4731 + $0x30] sm:$0xf]
      %v4739 = vld [vmem:[%s4731 + $0x38] sm:$0xf]
      %v4740 = vld [vmem:[%s4731 + $0x50] sm:$0xf]
      %v4741 = vld [vmem:[%s4731 + $0x58] sm:$0xf]
      %v4742 = vld [vmem:[%s4731 + $0x60] sm:$0xf]
      %v4743 = vld [vmem:[%s4731 + $0x68] sm:$0xf]
      %v4744 = vld [vmem:[%s4731 + $0x70] sm:$0xf]
      %v4745 = vld [vmem:[%s4731 + $0x78] sm:$0xf]
      %v4746 = vld [vmem:[%s4731 + $0x80] sm:$0xf]
      %v4747 = vld [vmem:[%s4731 + $0x88] sm:$0xf]
      %v4748 = vld [vmem:[%s4731 + $0xa0] sm:$0xf]
      %v4749 = vld [vmem:[%s4731 + $0xa8] sm:$0xf]
      %v4750 = vld [vmem:[%s4731 + $0xb0] sm:$0xf]
      %v4751 = vld [vmem:[%s4731 + $0xb8] sm:$0xf]
      %v4752 = vld [vmem:[%s4731 + $0xc0] sm:$0xf]
      %v4753 = vld [vmem:[%s4731 + $0xc8] sm:$0xf]
      %v4754 = vld [vmem:[%s4731 + $0xd0] sm:$0xf]
      %v4755 = vld [vmem:[%s4731 + $0xd8] sm:$0xf]
      %4780 = vrot.lane.b32.xlu0 %v4732, 60
      %v4781 = vpop.permute.xlu0 %4780
      %4782 = vrot.lane.b32.xlu0 %v4733, 60
      %v4783 = vpop.permute.xlu0 %4782
      %4784 = vrot.lane.b32.xlu0 %v4734, 60
      %v4785 = vpop.permute.xlu0 %4784
      %4786 = vrot.lane.b32.xlu0 %v4735, 60
      %v4787 = vpop.permute.xlu0 %4786
      %4788 = vrot.lane.b32.xlu0 %v4736, 60
      %v4789 = vpop.permute.xlu0 %4788
      %4790 = vrot.lane.b32.xlu0 %v4737, 60
      %v4791 = vpop.permute.xlu0 %4790
      %4792 = vrot.lane.b32.xlu0 %v4738, 60
      %v4793 = vpop.permute.xlu0 %4792
      %4794 = vrot.lane.b32.xlu0 %v4739, 60
      %v4795 = vpop.permute.xlu0 %4794
      %4796 = vrot.lane.b32.xlu0 %v4740, 60
      %v4797 = vpop.permute.xlu0 %4796
      %4798 = vrot.lane.b32.xlu0 %v4741, 60
      %v4799 = vpop.permute.xlu0 %4798
      %4800 = vrot.lane.b32.xlu0 %v4742, 60
      %v4801 = vpop.permute.xlu0 %4800
      %4802 = vrot.lane.b32.xlu0 %v4743, 60
      %v4803 = vpop.permute.xlu0 %4802
      %4804 = vrot.lane.b32.xlu0 %v4744, 60
      %v4805 = vpop.permute.xlu0 %4804
      %4806 = vrot.lane.b32.xlu0 %v4745, 60
      %v4807 = vpop.permute.xlu0 %4806
      %4808 = vrot.lane.b32.xlu0 %v4746, 60
      %v4809 = vpop.permute.xlu0 %4808
      %4810 = vrot.lane.b32.xlu0 %v4747, 60
      %v4811 = vpop.permute.xlu0 %4810
      %4812 = vrot.lane.b32.xlu0 %v4748, 60
      %v4813 = vpop.permute.xlu0 %4812
      %4814 = vrot.lane.b32.xlu0 %v4749, 60
      %v4815 = vpop.permute.xlu0 %4814
      %4816 = vrot.lane.b32.xlu0 %v4750, 60
      %v4817 = vpop.permute.xlu0 %4816
      %4818 = vrot.lane.b32.xlu0 %v4751, 60
      %v4819 = vpop.permute.xlu0 %4818
      %4820 = vrot.lane.b32.xlu0 %v4752, 60
      %v4821 = vpop.permute.xlu0 %4820
      %4822 = vrot.lane.b32.xlu0 %v4753, 60
      %v4823 = vpop.permute.xlu0 %4822
      %4824 = vrot.lane.b32.xlu0 %v4754, 60
      %v4825 = vpop.permute.xlu0 %4824
      %4826 = vrot.lane.b32.xlu0 %v4755, 60
      %v4827 = vpop.permute.xlu0 %4826
      %vm4852 = vcmask 519648
      %4853 = vst.msk [vmem:[#allocation2] sm:$0xf] %vm4852, %v4781
      %4854 = vst.msk [vmem:[#allocation2 + $0x4] sm:$0xf] %vm4852, %v4783
      %4855 = vst.msk [vmem:[#allocation2 + $0x8] sm:$0xf] %vm4852, %v4785
      %4856 = vst.msk [vmem:[#allocation2 + $0xc] sm:$0xf] %vm4852, %v4787
      %4857 = vst.msk [vmem:[#allocation2 + $0x10] sm:$0xf] %vm4852, %v4789
      %4858 = vst.msk [vmem:[#allocation2 + $0x14] sm:$0xf] %vm4852, %v4791
      %4859 = vst.msk [vmem:[#allocation2 + $0x18] sm:$0xf] %vm4852, %v4793
      %4860 = vst.msk [vmem:[#allocation2 + $0x1c] sm:$0xf] %vm4852, %v4795
      %4861 = vst.msk [vmem:[#allocation2 + $0x20] sm:$0xf] %vm4852, %v4797
      %4862 = vst.msk [vmem:[#allocation2 + $0x24] sm:$0xf] %vm4852, %v4799
      %4863 = vst.msk [vmem:[#allocation2 + $0x28] sm:$0xf] %vm4852, %v4801
      %4864 = vst.msk [vmem:[#allocation2 + $0x2c] sm:$0xf] %vm4852, %v4803
      %4865 = vst.msk [vmem:[#allocation2 + $0x30] sm:$0xf] %vm4852, %v4805
      %4866 = vst.msk [vmem:[#allocation2 + $0x34] sm:$0xf] %vm4852, %v4807
      %4867 = vst.msk [vmem:[#allocation2 + $0x38] sm:$0xf] %vm4852, %v4809
      %4868 = vst.msk [vmem:[#allocation2 + $0x3c] sm:$0xf] %vm4852, %v4811
      %4869 = vst.msk [vmem:[#allocation2 + $0x40] sm:$0xf] %vm4852, %v4813
      %4870 = vst.msk [vmem:[#allocation2 + $0x44] sm:$0xf] %vm4852, %v4815
      %4871 = vst.msk [vmem:[#allocation2 + $0x48] sm:$0xf] %vm4852, %v4817
      %4872 = vst.msk [vmem:[#allocation2 + $0x4c] sm:$0xf] %vm4852, %v4819
      %4873 = vst.msk [vmem:[#allocation2 + $0x50] sm:$0xf] %vm4852, %v4821
      %4874 = vst.msk [vmem:[#allocation2 + $0x54] sm:$0xf] %vm4852, %v4823
      %4875 = vst.msk [vmem:[#allocation2 + $0x58] sm:$0xf] %vm4852, %v4825
      %4876 = vst.msk [vmem:[#allocation2 + $0x5c] sm:$0xf] %vm4852, %v4827
      %v4877 = vld [vmem:[%s4731] sm:$0xf]
      %v4878 = vld [vmem:[%s4731 + $0x4] sm:$0x1]
      %v4879 = vld [vmem:[%s4731 + $0x8] sm:$0xf]
      %v4880 = vld [vmem:[%s4731 + $0xc] sm:$0x1]
      %v4881 = vld [vmem:[%s4731 + $0x10] sm:$0xf]
      %v4882 = vld [vmem:[%s4731 + $0x14] sm:$0x1]
      %v4883 = vld [vmem:[%s4731 + $0x18] sm:$0xf]
      %v4884 = vld [vmem:[%s4731 + $0x1c] sm:$0x1]
      %v4885 = vld [vmem:[%s4731 + $0x20] sm:$0xf]
      %v4886 = vld [vmem:[%s4731 + $0x24] sm:$0x1]
      %v4887 = vld [vmem:[%s4731 + $0x28] sm:$0xf]
      %v4888 = vld [vmem:[%s4731 + $0x2c] sm:$0x1]
      %v4889 = vld [vmem:[%s4731 + $0x30] sm:$0xf]
      %v4890 = vld [vmem:[%s4731 + $0x34] sm:$0x1]
      %v4891 = vld [vmem:[%s4731 + $0x38] sm:$0xf]
      %v4892 = vld [vmem:[%s4731 + $0x3c] sm:$0x1]
      %v4893 = vld [vmem:[%s4731 + $0x50] sm:$0xf]
      %v4894 = vld [vmem:[%s4731 + $0x54] sm:$0x1]
      %v4895 = vld [vmem:[%s4731 + $0x58] sm:$0xf]
      %v4896 = vld [vmem:[%s4731 + $0x5c] sm:$0x1]
      %v4897 = vld [vmem:[%s4731 + $0x60] sm:$0xf]
      %v4898 = vld [vmem:[%s4731 + $0x64] sm:$0x1]
      %v4899 = vld [vmem:[%s4731 + $0x68] sm:$0xf]
      %v4900 = vld [vmem:[%s4731 + $0x6c] sm:$0x1]
      %v4901 = vld [vmem:[%s4731 + $0x70] sm:$0xf]
      %v4902 = vld [vmem:[%s4731 + $0x74] sm:$0x1]
      %v4903 = vld [vmem:[%s4731 + $0x78] sm:$0xf]
      %v4904 = vld [vmem:[%s4731 + $0x7c] sm:$0x1]
      %v4905 = vld [vmem:[%s4731 + $0x80] sm:$0xf]
      %v4906 = vld [vmem:[%s4731 + $0x84] sm:$0x1]
      %v4907 = vld [vmem:[%s4731 + $0x88] sm:$0xf]
      %v4908 = vld [vmem:[%s4731 + $0x8c] sm:$0x1]
      %v4909 = vld [vmem:[%s4731 + $0xa0] sm:$0xf]
      %v4910 = vld [vmem:[%s4731 + $0xa4] sm:$0x1]
      %v4911 = vld [vmem:[%s4731 + $0xa8] sm:$0xf]
      %v4912 = vld [vmem:[%s4731 + $0xac] sm:$0x1]
      %v4913 = vld [vmem:[%s4731 + $0xb0] sm:$0xf]
      %v4914 = vld [vmem:[%s4731 + $0xb4] sm:$0x1]
      %v4915 = vld [vmem:[%s4731 + $0xb8] sm:$0xf]
      %v4916 = vld [vmem:[%s4731 + $0xbc] sm:$0x1]
      %v4917 = vld [vmem:[%s4731 + $0xc0] sm:$0xf]
      %v4918 = vld [vmem:[%s4731 + $0xc4] sm:$0x1]
      %v4919 = vld [vmem:[%s4731 + $0xc8] sm:$0xf]
      %v4920 = vld [vmem:[%s4731 + $0xcc] sm:$0x1]
      %v4921 = vld [vmem:[%s4731 + $0xd0] sm:$0xf]
      %v4922 = vld [vmem:[%s4731 + $0xd4] sm:$0x1]
      %v4923 = vld [vmem:[%s4731 + $0xd8] sm:$0xf]
      %v4924 = vld [vmem:[%s4731 + $0xdc] sm:$0x1]
      %v4926 = vshrl.u32 %v4877, 16
      %v4928 = vrot.slane %v4926, 4
      %v4929 = vshll.u32 %v4877, 16
      %v4931 = vrot.slane %v4929, 5
      %v4932 = vor.u32 %v4928, %v4931
      %v4933 = vrot.slane %v4932, 4
      %v4935 = vshll.u32 %v4878, 16
      %v4937 = vrot.slane %v4935, 5
      %v4938 = vsel %vm341, %v4933, %v4937
      %v4940 = vshrl.u32 %v4879, 16
      %v4942 = vrot.slane %v4940, 4
      %v4943 = vshll.u32 %v4879, 16
      %v4945 = vrot.slane %v4943, 5
      %v4946 = vor.u32 %v4942, %v4945
      %v4947 = vrot.slane %v4946, 4
      %v4949 = vshll.u32 %v4880, 16
      %v4951 = vrot.slane %v4949, 5
      %v4952 = vsel %vm341, %v4947, %v4951
      %v4954 = vshrl.u32 %v4881, 16
      %v4956 = vrot.slane %v4954, 4
      %v4957 = vshll.u32 %v4881, 16
      %v4959 = vrot.slane %v4957, 5
      %v4960 = vor.u32 %v4956, %v4959
      %v4961 = vrot.slane %v4960, 4
      %v4963 = vshll.u32 %v4882, 16
      %v4965 = vrot.slane %v4963, 5
      %v4966 = vsel %vm341, %v4961, %v4965
      %v4968 = vshrl.u32 %v4883, 16
      %v4970 = vrot.slane %v4968, 4
      %v4971 = vshll.u32 %v4883, 16
      %v4973 = vrot.slane %v4971, 5
      %v4974 = vor.u32 %v4970, %v4973
      %v4975 = vrot.slane %v4974, 4
      %v4977 = vshll.u32 %v4884, 16
      %v4979 = vrot.slane %v4977, 5
      %v4980 = vsel %vm341, %v4975, %v4979
      %v4982 = vshrl.u32 %v4885, 16
      %v4984 = vrot.slane %v4982, 4
      %v4985 = vshll.u32 %v4885, 16
      %v4987 = vrot.slane %v4985, 5
      %v4988 = vor.u32 %v4984, %v4987
      %v4989 = vrot.slane %v4988, 4
      %v4991 = vshll.u32 %v4886, 16
      %v4993 = vrot.slane %v4991, 5
      %v4994 = vsel %vm341, %v4989, %v4993
      %v4996 = vshrl.u32 %v4887, 16
      %v4998 = vrot.slane %v4996, 4
      %v4999 = vshll.u32 %v4887, 16
      %v5001 = vrot.slane %v4999, 5
      %v5002 = vor.u32 %v4998, %v5001
      %v5003 = vrot.slane %v5002, 4
      %v5005 = vshll.u32 %v4888, 16
      %v5007 = vrot.slane %v5005, 5
      %v5008 = vsel %vm341, %v5003, %v5007
      %v5010 = vshrl.u32 %v4889, 16
      %v5012 = vrot.slane %v5010, 4
      %v5013 = vshll.u32 %v4889, 16
      %v5015 = vrot.slane %v5013, 5
      %v5016 = vor.u32 %v5012, %v5015
      %v5017 = vrot.slane %v5016, 4
      %v5019 = vshll.u32 %v4890, 16
      %v5021 = vrot.slane %v5019, 5
      %v5022 = vsel %vm341, %v5017, %v5021
      %v5024 = vshrl.u32 %v4891, 16
      %v5026 = vrot.slane %v5024, 4
      %v5027 = vshll.u32 %v4891, 16
      %v5029 = vrot.slane %v5027, 5
      %v5030 = vor.u32 %v5026, %v5029
      %v5031 = vrot.slane %v5030, 4
      %v5033 = vshll.u32 %v4892, 16
      %v5035 = vrot.slane %v5033, 5
      %v5036 = vsel %vm341, %v5031, %v5035
      %v5038 = vshrl.u32 %v4893, 16
      %v5040 = vrot.slane %v5038, 4
      %v5041 = vshll.u32 %v4893, 16
      %v5043 = vrot.slane %v5041, 5
      %v5044 = vor.u32 %v5040, %v5043
      %v5045 = vrot.slane %v5044, 4
      %v5047 = vshll.u32 %v4894, 16
      %v5049 = vrot.slane %v5047, 5
      %v5050 = vsel %vm341, %v5045, %v5049
      %v5052 = vshrl.u32 %v4895, 16
      %v5054 = vrot.slane %v5052, 4
      %v5055 = vshll.u32 %v4895, 16
      %v5057 = vrot.slane %v5055, 5
      %v5058 = vor.u32 %v5054, %v5057
      %v5059 = vrot.slane %v5058, 4
      %v5061 = vshll.u32 %v4896, 16
      %v5063 = vrot.slane %v5061, 5
      %v5064 = vsel %vm341, %v5059, %v5063
      %v5066 = vshrl.u32 %v4897, 16
      %v5068 = vrot.slane %v5066, 4
      %v5069 = vshll.u32 %v4897, 16
      %v5071 = vrot.slane %v5069, 5
      %v5072 = vor.u32 %v5068, %v5071
      %v5073 = vrot.slane %v5072, 4
      %v5075 = vshll.u32 %v4898, 16
      %v5077 = vrot.slane %v5075, 5
      %v5078 = vsel %vm341, %v5073, %v5077
      %v5080 = vshrl.u32 %v4899, 16
      %v5082 = vrot.slane %v5080, 4
      %v5083 = vshll.u32 %v4899, 16
      %v5085 = vrot.slane %v5083, 5
      %v5086 = vor.u32 %v5082, %v5085
      %v5087 = vrot.slane %v5086, 4
      %v5089 = vshll.u32 %v4900, 16
      %v5091 = vrot.slane %v5089, 5
      %v5092 = vsel %vm341, %v5087, %v5091
      %v5094 = vshrl.u32 %v4901, 16
      %v5096 = vrot.slane %v5094, 4
      %v5097 = vshll.u32 %v4901, 16
      %v5099 = vrot.slane %v5097, 5
      %v5100 = vor.u32 %v5096, %v5099
      %v5101 = vrot.slane %v5100, 4
      %v5103 = vshll.u32 %v4902, 16
      %v5105 = vrot.slane %v5103, 5
      %v5106 = vsel %vm341, %v5101, %v5105
      %v5108 = vshrl.u32 %v4903, 16
      %v5110 = vrot.slane %v5108, 4
      %v5111 = vshll.u32 %v4903, 16
      %v5113 = vrot.slane %v5111, 5
      %v5114 = vor.u32 %v5110, %v5113
      %v5115 = vrot.slane %v5114, 4
      %v5117 = vshll.u32 %v4904, 16
      %v5119 = vrot.slane %v5117, 5
      %v5120 = vsel %vm341, %v5115, %v5119
      %v5122 = vshrl.u32 %v4905, 16
      %v5124 = vrot.slane %v5122, 4
      %v5125 = vshll.u32 %v4905, 16
      %v5127 = vrot.slane %v5125, 5
      %v5128 = vor.u32 %v5124, %v5127
      %v5129 = vrot.slane %v5128, 4
      %v5131 = vshll.u32 %v4906, 16
      %v5133 = vrot.slane %v5131, 5
      %v5134 = vsel %vm341, %v5129, %v5133
      %v5136 = vshrl.u32 %v4907, 16
      %v5138 = vrot.slane %v5136, 4
      %v5139 = vshll.u32 %v4907, 16
      %v5141 = vrot.slane %v5139, 5
      %v5142 = vor.u32 %v5138, %v5141
      %v5143 = vrot.slane %v5142, 4
      %v5145 = vshll.u32 %v4908, 16
      %v5147 = vrot.slane %v5145, 5
      %v5148 = vsel %vm341, %v5143, %v5147
      %v5150 = vshrl.u32 %v4909, 16
      %v5152 = vrot.slane %v5150, 4
      %v5153 = vshll.u32 %v4909, 16
      %v5155 = vrot.slane %v5153, 5
      %v5156 = vor.u32 %v5152, %v5155
      %v5157 = vrot.slane %v5156, 4
      %v5159 = vshll.u32 %v4910, 16
      %v5161 = vrot.slane %v5159, 5
      %v5162 = vsel %vm341, %v5157, %v5161
      %v5164 = vshrl.u32 %v4911, 16
      %v5166 = vrot.slane %v5164, 4
      %v5167 = vshll.u32 %v4911, 16
      %v5169 = vrot.slane %v5167, 5
      %v5170 = vor.u32 %v5166, %v5169
      %v5171 = vrot.slane %v5170, 4
      %v5173 = vshll.u32 %v4912, 16
      %v5175 = vrot.slane %v5173, 5
      %v5176 = vsel %vm341, %v5171, %v5175
      %v5178 = vshrl.u32 %v4913, 16
      %v5180 = vrot.slane %v5178, 4
      %v5181 = vshll.u32 %v4913, 16
      %v5183 = vrot.slane %v5181, 5
      %v5184 = vor.u32 %v5180, %v5183
      %v5185 = vrot.slane %v5184, 4
      %v5187 = vshll.u32 %v4914, 16
      %v5189 = vrot.slane %v5187, 5
      %v5190 = vsel %vm341, %v5185, %v5189
      %v5192 = vshrl.u32 %v4915, 16
      %v5194 = vrot.slane %v5192, 4
      %v5195 = vshll.u32 %v4915, 16
      %v5197 = vrot.slane %v5195, 5
      %v5198 = vor.u32 %v5194, %v5197
      %v5199 = vrot.slane %v5198, 4
      %v5201 = vshll.u32 %v4916, 16
      %v5203 = vrot.slane %v5201, 5
      %v5204 = vsel %vm341, %v5199, %v5203
      %v5206 = vshrl.u32 %v4917, 16
      %v5208 = vrot.slane %v5206, 4
      %v5209 = vshll.u32 %v4917, 16
      %v5211 = vrot.slane %v5209, 5
      %v5212 = vor.u32 %v5208, %v5211
      %v5213 = vrot.slane %v5212, 4
      %v5215 = vshll.u32 %v4918, 16
      %v5217 = vrot.slane %v5215, 5
      %v5218 = vsel %vm341, %v5213, %v5217
      %v5220 = vshrl.u32 %v4919, 16
      %v5222 = vrot.slane %v5220, 4
      %v5223 = vshll.u32 %v4919, 16
      %v5225 = vrot.slane %v5223, 5
      %v5226 = vor.u32 %v5222, %v5225
      %v5227 = vrot.slane %v5226, 4
      %v5229 = vshll.u32 %v4920, 16
      %v5231 = vrot.slane %v5229, 5
      %v5232 = vsel %vm341, %v5227, %v5231
      %v5234 = vshrl.u32 %v4921, 16
      %v5236 = vrot.slane %v5234, 4
      %v5237 = vshll.u32 %v4921, 16
      %v5239 = vrot.slane %v5237, 5
      %v5240 = vor.u32 %v5236, %v5239
      %v5241 = vrot.slane %v5240, 4
      %v5243 = vshll.u32 %v4922, 16
      %v5245 = vrot.slane %v5243, 5
      %v5246 = vsel %vm341, %v5241, %v5245
      %v5248 = vshrl.u32 %v4923, 16
      %v5250 = vrot.slane %v5248, 4
      %v5251 = vshll.u32 %v4923, 16
      %v5253 = vrot.slane %v5251, 5
      %v5254 = vor.u32 %v5250, %v5253
      %v5255 = vrot.slane %v5254, 4
      %v5257 = vshll.u32 %v4924, 16
      %v5259 = vrot.slane %v5257, 5
      %v5260 = vsel %vm341, %v5255, %v5259
      %5261 = vrot.lane.b32.xlu0 %v4938, 64
      %v5262 = vpop.permute.xlu0 %5261
      %5263 = vrot.lane.b32.xlu0 %v4952, 64
      %v5264 = vpop.permute.xlu0 %5263
      %5265 = vrot.lane.b32.xlu0 %v4966, 64
      %v5266 = vpop.permute.xlu0 %5265
      %5267 = vrot.lane.b32.xlu0 %v4980, 64
      %v5268 = vpop.permute.xlu0 %5267
      %5269 = vrot.lane.b32.xlu0 %v4994, 64
      %v5270 = vpop.permute.xlu0 %5269
      %5271 = vrot.lane.b32.xlu0 %v5008, 64
      %v5272 = vpop.permute.xlu0 %5271
      %5273 = vrot.lane.b32.xlu0 %v5022, 64
      %v5274 = vpop.permute.xlu0 %5273
      %5275 = vrot.lane.b32.xlu0 %v5036, 64
      %v5276 = vpop.permute.xlu0 %5275
      %5277 = vrot.lane.b32.xlu0 %v5050, 64
      %v5278 = vpop.permute.xlu0 %5277
      %5279 = vrot.lane.b32.xlu0 %v5064, 64
      %v5280 = vpop.permute.xlu0 %5279
      %5281 = vrot.lane.b32.xlu0 %v5078, 64
      %v5282 = vpop.permute.xlu0 %5281
      %5283 = vrot.lane.b32.xlu0 %v5092, 64
      %v5284 = vpop.permute.xlu0 %5283
      %5285 = vrot.lane.b32.xlu0 %v5106, 64
      %v5286 = vpop.permute.xlu0 %5285
      %5287 = vrot.lane.b32.xlu0 %v5120, 64
      %v5288 = vpop.permute.xlu0 %5287
      %5289 = vrot.lane.b32.xlu0 %v5134, 64
      %v5290 = vpop.permute.xlu0 %5289
      %5291 = vrot.lane.b32.xlu0 %v5148, 64
      %v5292 = vpop.permute.xlu0 %5291
      %5293 = vrot.lane.b32.xlu0 %v5162, 64
      %v5294 = vpop.permute.xlu0 %5293
      %5295 = vrot.lane.b32.xlu0 %v5176, 64
      %v5296 = vpop.permute.xlu0 %5295
      %5297 = vrot.lane.b32.xlu0 %v5190, 64
      %v5298 = vpop.permute.xlu0 %5297
      %5299 = vrot.lane.b32.xlu0 %v5204, 64
      %v5300 = vpop.permute.xlu0 %5299
      %5301 = vrot.lane.b32.xlu0 %v5218, 64
      %v5302 = vpop.permute.xlu0 %5301
      %5303 = vrot.lane.b32.xlu0 %v5232, 64
      %v5304 = vpop.permute.xlu0 %5303
      %5305 = vrot.lane.b32.xlu0 %v5246, 64
      %v5306 = vpop.permute.xlu0 %5305
      %5307 = vrot.lane.b32.xlu0 %v5260, 64
      %v5308 = vpop.permute.xlu0 %5307
      %vm5333 = vcmask 552448
      %5334 = vst.msk [vmem:[#allocation2] sm:$0xf] %vm5333, %v5262
      %5335 = vst.msk [vmem:[#allocation2 + $0x4] sm:$0xf] %vm5333, %v5264
      %5336 = vst.msk [vmem:[#allocation2 + $0x8] sm:$0xf] %vm5333, %v5266
      %5337 = vst.msk [vmem:[#allocation2 + $0xc] sm:$0xf] %vm5333, %v5268
      %5338 = vst.msk [vmem:[#allocation2 + $0x10] sm:$0xf] %vm5333, %v5270
      %5339 = vst.msk [vmem:[#allocation2 + $0x14] sm:$0xf] %vm5333, %v5272
      %5340 = vst.msk [vmem:[#allocation2 + $0x18] sm:$0xf] %vm5333, %v5274
      %5341 = vst.msk [vmem:[#allocation2 + $0x1c] sm:$0xf] %vm5333, %v5276
      %5342 = vst.msk [vmem:[#allocation2 + $0x20] sm:$0xf] %vm5333, %v5278
      %5343 = vst.msk [vmem:[#allocation2 + $0x24] sm:$0xf] %vm5333, %v5280
      %5344 = vst.msk [vmem:[#allocation2 + $0x28] sm:$0xf] %vm5333, %v5282
      %5345 = vst.msk [vmem:[#allocation2 + $0x2c] sm:$0xf] %vm5333, %v5284
      %5346 = vst.msk [vmem:[#allocation2 + $0x30] sm:$0xf] %vm5333, %v5286
      %5347 = vst.msk [vmem:[#allocation2 + $0x34] sm:$0xf] %vm5333, %v5288
      %5348 = vst.msk [vmem:[#allocation2 + $0x38] sm:$0xf] %vm5333, %v5290
      %5349 = vst.msk [vmem:[#allocation2 + $0x3c] sm:$0xf] %vm5333, %v5292
      %5350 = vst.msk [vmem:[#allocation2 + $0x40] sm:$0xf] %vm5333, %v5294
      %5351 = vst.msk [vmem:[#allocation2 + $0x44] sm:$0xf] %vm5333, %v5296
      %5352 = vst.msk [vmem:[#allocation2 + $0x48] sm:$0xf] %vm5333, %v5298
      %5353 = vst.msk [vmem:[#allocation2 + $0x4c] sm:$0xf] %vm5333, %v5300
      %5354 = vst.msk [vmem:[#allocation2 + $0x50] sm:$0xf] %vm5333, %v5302
      %5355 = vst.msk [vmem:[#allocation2 + $0x54] sm:$0xf] %vm5333, %v5304
      %5356 = vst.msk [vmem:[#allocation2 + $0x58] sm:$0xf] %vm5333, %v5306
      %5357 = vst.msk [vmem:[#allocation2 + $0x5c] sm:$0xf] %vm5333, %v5308
      %v5358 = vld [vmem:[%s4731] sm:$0xe]
      %v5359 = vld [vmem:[%s4731 + $0x4] sm:$0x1]
      %v5360 = vld [vmem:[%s4731 + $0x8] sm:$0xe]
      %v5361 = vld [vmem:[%s4731 + $0xc] sm:$0x1]
      %v5362 = vld [vmem:[%s4731 + $0x10] sm:$0xe]
      %v5363 = vld [vmem:[%s4731 + $0x14] sm:$0x1]
      %v5364 = vld [vmem:[%s4731 + $0x18] sm:$0xe]
      %v5365 = vld [vmem:[%s4731 + $0x1c] sm:$0x1]
      %v5366 = vld [vmem:[%s4731 + $0x20] sm:$0xe]
      %v5367 = vld [vmem:[%s4731 + $0x24] sm:$0x1]
      %v5368 = vld [vmem:[%s4731 + $0x28] sm:$0xe]
      %v5369 = vld [vmem:[%s4731 + $0x2c] sm:$0x1]
      %v5370 = vld [vmem:[%s4731 + $0x30] sm:$0xe]
      %v5371 = vld [vmem:[%s4731 + $0x34] sm:$0x1]
      %v5372 = vld [vmem:[%s4731 + $0x38] sm:$0xe]
      %v5373 = vld [vmem:[%s4731 + $0x3c] sm:$0x1]
      %v5374 = vld [vmem:[%s4731 + $0x50] sm:$0xe]
      %v5375 = vld [vmem:[%s4731 + $0x54] sm:$0x1]
      %v5376 = vld [vmem:[%s4731 + $0x58] sm:$0xe]
      %v5377 = vld [vmem:[%s4731 + $0x5c] sm:$0x1]
      %v5378 = vld [vmem:[%s4731 + $0x60] sm:$0xe]
      %v5379 = vld [vmem:[%s4731 + $0x64] sm:$0x1]
      %v5380 = vld [vmem:[%s4731 + $0x68] sm:$0xe]
      %v5381 = vld [vmem:[%s4731 + $0x6c] sm:$0x1]
      %v5382 = vld [vmem:[%s4731 + $0x70] sm:$0xe]
      %v5383 = vld [vmem:[%s4731 + $0x74] sm:$0x1]
      %v5384 = vld [vmem:[%s4731 + $0x78] sm:$0xe]
      %v5385 = vld [vmem:[%s4731 + $0x7c] sm:$0x1]
      %v5386 = vld [vmem:[%s4731 + $0x80] sm:$0xe]
      %v5387 = vld [vmem:[%s4731 + $0x84] sm:$0x1]
      %v5388 = vld [vmem:[%s4731 + $0x88] sm:$0xe]
      %v5389 = vld [vmem:[%s4731 + $0x8c] sm:$0x1]
      %v5390 = vld [vmem:[%s4731 + $0xa0] sm:$0xe]
      %v5391 = vld [vmem:[%s4731 + $0xa4] sm:$0x1]
      %v5392 = vld [vmem:[%s4731 + $0xa8] sm:$0xe]
      %v5393 = vld [vmem:[%s4731 + $0xac] sm:$0x1]
      %v5394 = vld [vmem:[%s4731 + $0xb0] sm:$0xe]
      %v5395 = vld [vmem:[%s4731 + $0xb4] sm:$0x1]
      %v5396 = vld [vmem:[%s4731 + $0xb8] sm:$0xe]
      %v5397 = vld [vmem:[%s4731 + $0xbc] sm:$0x1]
      %v5398 = vld [vmem:[%s4731 + $0xc0] sm:$0xe]
      %v5399 = vld [vmem:[%s4731 + $0xc4] sm:$0x1]
      %v5400 = vld [vmem:[%s4731 + $0xc8] sm:$0xe]
      %v5401 = vld [vmem:[%s4731 + $0xcc] sm:$0x1]
      %v5402 = vld [vmem:[%s4731 + $0xd0] sm:$0xe]
      %v5403 = vld [vmem:[%s4731 + $0xd4] sm:$0x1]
      %v5404 = vld [vmem:[%s4731 + $0xd8] sm:$0xe]
      %v5405 = vld [vmem:[%s4731 + $0xdc] sm:$0x1]
      %v5454 = vrot.slane %v5358, 5
      %v5455 = vrot.slane %v5454, 4
      %v5456 = vrot.slane %v5359, 5
      %v5457 = vsel %vm873, %v5455, %v5456
      %v5458 = vrot.slane %v5360, 5
      %v5459 = vrot.slane %v5458, 4
      %v5460 = vrot.slane %v5361, 5
      %v5461 = vsel %vm873, %v5459, %v5460
      %v5462 = vrot.slane %v5362, 5
      %v5463 = vrot.slane %v5462, 4
      %v5464 = vrot.slane %v5363, 5
      %v5465 = vsel %vm873, %v5463, %v5464
      %v5466 = vrot.slane %v5364, 5
      %v5467 = vrot.slane %v5466, 4
      %v5468 = vrot.slane %v5365, 5
      %v5469 = vsel %vm873, %v5467, %v5468
      %v5470 = vrot.slane %v5366, 5
      %v5471 = vrot.slane %v5470, 4
      %v5472 = vrot.slane %v5367, 5
      %v5473 = vsel %vm873, %v5471, %v5472
      %v5474 = vrot.slane %v5368, 5
      %v5475 = vrot.slane %v5474, 4
      %v5476 = vrot.slane %v5369, 5
      %v5477 = vsel %vm873, %v5475, %v5476
      %v5478 = vrot.slane %v5370, 5
      %v5479 = vrot.slane %v5478, 4
      %v5480 = vrot.slane %v5371, 5
      %v5481 = vsel %vm873, %v5479, %v5480
      %v5482 = vrot.slane %v5372, 5
      %v5483 = vrot.slane %v5482, 4
      %v5484 = vrot.slane %v5373, 5
      %v5485 = vsel %vm873, %v5483, %v5484
      %v5486 = vrot.slane %v5374, 5
      %v5487 = vrot.slane %v5486, 4
      %v5488 = vrot.slane %v5375, 5
      %v5489 = vsel %vm873, %v5487, %v5488
      %v5490 = vrot.slane %v5376, 5
      %v5491 = vrot.slane %v5490, 4
      %v5492 = vrot.slane %v5377, 5
      %v5493 = vsel %vm873, %v5491, %v5492
      %v5494 = vrot.slane %v5378, 5
      %v5495 = vrot.slane %v5494, 4
      %v5496 = vrot.slane %v5379, 5
      %v5497 = vsel %vm873, %v5495, %v5496
      %v5498 = vrot.slane %v5380, 5
      %v5499 = vrot.slane %v5498, 4
      %v5500 = vrot.slane %v5381, 5
      %v5501 = vsel %vm873, %v5499, %v5500
      %v5502 = vrot.slane %v5382, 5
      %v5503 = vrot.slane %v5502, 4
      %v5504 = vrot.slane %v5383, 5
      %v5505 = vsel %vm873, %v5503, %v5504
      %v5506 = vrot.slane %v5384, 5
      %v5507 = vrot.slane %v5506, 4
      %v5508 = vrot.slane %v5385, 5
      %v5509 = vsel %vm873, %v5507, %v5508
      %v5510 = vrot.slane %v5386, 5
      %v5511 = vrot.slane %v5510, 4
      %v5512 = vrot.slane %v5387, 5
      %v5513 = vsel %vm873, %v5511, %v5512
      %v5514 = vrot.slane %v5388, 5
      %v5515 = vrot.slane %v5514, 4
      %v5516 = vrot.slane %v5389, 5
      %v5517 = vsel %vm873, %v5515, %v5516
      %v5518 = vrot.slane %v5390, 5
      %v5519 = vrot.slane %v5518, 4
      %v5520 = vrot.slane %v5391, 5
      %v5521 = vsel %vm873, %v5519, %v5520
      %v5522 = vrot.slane %v5392, 5
      %v5523 = vrot.slane %v5522, 4
      %v5524 = vrot.slane %v5393, 5
      %v5525 = vsel %vm873, %v5523, %v5524
      %v5526 = vrot.slane %v5394, 5
      %v5527 = vrot.slane %v5526, 4
      %v5528 = vrot.slane %v5395, 5
      %v5529 = vsel %vm873, %v5527, %v5528
      %v5530 = vrot.slane %v5396, 5
      %v5531 = vrot.slane %v5530, 4
      %v5532 = vrot.slane %v5397, 5
      %v5533 = vsel %vm873, %v5531, %v5532
      %v5534 = vrot.slane %v5398, 5
      %v5535 = vrot.slane %v5534, 4
      %v5536 = vrot.slane %v5399, 5
      %v5537 = vsel %vm873, %v5535, %v5536
      %v5538 = vrot.slane %v5400, 5
      %v5539 = vrot.slane %v5538, 4
      %v5540 = vrot.slane %v5401, 5
      %v5541 = vsel %vm873, %v5539, %v5540
      %v5542 = vrot.slane %v5402, 5
      %v5543 = vrot.slane %v5542, 4
      %v5544 = vrot.slane %v5403, 5
      %v5545 = vsel %vm873, %v5543, %v5544
      %v5546 = vrot.slane %v5404, 5
      %v5547 = vrot.slane %v5546, 4
      %v5548 = vrot.slane %v5405, 5
      %v5549 = vsel %vm873, %v5547, %v5548
      %5550 = vrot.lane.b32.xlu0 %v5457, 68
      %v5551 = vpop.permute.xlu0 %5550
      %5552 = vrot.lane.b32.xlu0 %v5461, 68
      %v5553 = vpop.permute.xlu0 %5552
      %5554 = vrot.lane.b32.xlu0 %v5465, 68
      %v5555 = vpop.permute.xlu0 %5554
      %5556 = vrot.lane.b32.xlu0 %v5469, 68
      %v5557 = vpop.permute.xlu0 %5556
      %5558 = vrot.lane.b32.xlu0 %v5473, 68
      %v5559 = vpop.permute.xlu0 %5558
      %5560 = vrot.lane.b32.xlu0 %v5477, 68
      %v5561 = vpop.permute.xlu0 %5560
      %5562 = vrot.lane.b32.xlu0 %v5481, 68
      %v5563 = vpop.permute.xlu0 %5562
      %5564 = vrot.lane.b32.xlu0 %v5485, 68
      %v5565 = vpop.permute.xlu0 %5564
      %5566 = vrot.lane.b32.xlu0 %v5489, 68
      %v5567 = vpop.permute.xlu0 %5566
      %5568 = vrot.lane.b32.xlu0 %v5493, 68
      %v5569 = vpop.permute.xlu0 %5568
      %5570 = vrot.lane.b32.xlu0 %v5497, 68
      %v5571 = vpop.permute.xlu0 %5570
      %5572 = vrot.lane.b32.xlu0 %v5501, 68
      %v5573 = vpop.permute.xlu0 %5572
      %5574 = vrot.lane.b32.xlu0 %v5505, 68
      %v5575 = vpop.permute.xlu0 %5574
      %5576 = vrot.lane.b32.xlu0 %v5509, 68
      %v5577 = vpop.permute.xlu0 %5576
      %5578 = vrot.lane.b32.xlu0 %v5513, 68
      %v5579 = vpop.permute.xlu0 %5578
      %5580 = vrot.lane.b32.xlu0 %v5517, 68
      %v5581 = vpop.permute.xlu0 %5580
      %5582 = vrot.lane.b32.xlu0 %v5521, 68
      %v5583 = vpop.permute.xlu0 %5582
      %5584 = vrot.lane.b32.xlu0 %v5525, 68
      %v5585 = vpop.permute.xlu0 %5584
      %5586 = vrot.lane.b32.xlu0 %v5529, 68
      %v5587 = vpop.permute.xlu0 %5586
      %5588 = vrot.lane.b32.xlu0 %v5533, 68
      %v5589 = vpop.permute.xlu0 %5588
      %5590 = vrot.lane.b32.xlu0 %v5537, 68
      %v5591 = vpop.permute.xlu0 %5590
      %5592 = vrot.lane.b32.xlu0 %v5541, 68
      %v5593 = vpop.permute.xlu0 %5592
      %5594 = vrot.lane.b32.xlu0 %v5545, 68
      %v5595 = vpop.permute.xlu0 %5594
      %5596 = vrot.lane.b32.xlu0 %v5549, 68
      %v5597 = vpop.permute.xlu0 %5596
      %vm5622 = vcmask 585248
      %5623 = vst.msk [vmem:[#allocation2] sm:$0xf] %vm5622, %v5551
      %5624 = vst.msk [vmem:[#allocation2 + $0x4] sm:$0xf] %vm5622, %v5553
      %5625 = vst.msk [vmem:[#allocation2 + $0x8] sm:$0xf] %vm5622, %v5555
      %5626 = vst.msk [vmem:[#allocation2 + $0xc] sm:$0xf] %vm5622, %v5557
      %5627 = vst.msk [vmem:[#allocation2 + $0x10] sm:$0xf] %vm5622, %v5559
      %5628 = vst.msk [vmem:[#allocation2 + $0x14] sm:$0xf] %vm5622, %v5561
      %5629 = vst.msk [vmem:[#allocation2 + $0x18] sm:$0xf] %vm5622, %v5563
      %5630 = vst.msk [vmem:[#allocation2 + $0x1c] sm:$0xf] %vm5622, %v5565
      %5631 = vst.msk [vmem:[#allocation2 + $0x20] sm:$0xf] %vm5622, %v5567
      %5632 = vst.msk [vmem:[#allocation2 + $0x24] sm:$0xf] %vm5622, %v5569
      %5633 = vst.msk [vmem:[#allocation2 + $0x28] sm:$0xf] %vm5622, %v5571
      %5634 = vst.msk [vmem:[#allocation2 + $0x2c] sm:$0xf] %vm5622, %v5573
      %5635 = vst.msk [vmem:[#allocation2 + $0x30] sm:$0xf] %vm5622, %v5575
      %5636 = vst.msk [vmem:[#allocation2 + $0x34] sm:$0xf] %vm5622, %v5577
      %5637 = vst.msk [vmem:[#allocation2 + $0x38] sm:$0xf] %vm5622, %v5579
      %5638 = vst.msk [vmem:[#allocation2 + $0x3c] sm:$0xf] %vm5622, %v5581
      %5639 = vst.msk [vmem:[#allocation2 + $0x40] sm:$0xf] %vm5622, %v5583
      %5640 = vst.msk [vmem:[#allocation2 + $0x44] sm:$0xf] %vm5622, %v5585
      %5641 = vst.msk [vmem:[#allocation2 + $0x48] sm:$0xf] %vm5622, %v5587
      %5642 = vst.msk [vmem:[#allocation2 + $0x4c] sm:$0xf] %vm5622, %v5589
      %5643 = vst.msk [vmem:[#allocation2 + $0x50] sm:$0xf] %vm5622, %v5591
      %5644 = vst.msk [vmem:[#allocation2 + $0x54] sm:$0xf] %vm5622, %v5593
      %5645 = vst.msk [vmem:[#allocation2 + $0x58] sm:$0xf] %vm5622, %v5595
      %5646 = vst.msk [vmem:[#allocation2 + $0x5c] sm:$0xf] %vm5622, %v5597
      %s5647 = scalar_lea.vmem %s221, 160
      %v5648 = vld [vmem:[%s5647] sm:$0xf]
      %v5649 = vld [vmem:[%s5647 + $0x8] sm:$0xf]
      %v5650 = vld [vmem:[%s5647 + $0x10] sm:$0xf]
      %v5651 = vld [vmem:[%s5647 + $0x18] sm:$0xf]
      %v5652 = vld [vmem:[%s5647 + $0x20] sm:$0xf]
      %v5653 = vld [vmem:[%s5647 + $0x28] sm:$0xf]
      %v5654 = vld [vmem:[%s5647 + $0x30] sm:$0xf]
      %v5655 = vld [vmem:[%s5647 + $0x38] sm:$0xf]
      %v5656 = vld [vmem:[%s5647 + $0x50] sm:$0xf]
      %v5657 = vld [vmem:[%s5647 + $0x58] sm:$0xf]
      %v5658 = vld [vmem:[%s5647 + $0x60] sm:$0xf]
      %v5659 = vld [vmem:[%s5647 + $0x68] sm:$0xf]
      %v5660 = vld [vmem:[%s5647 + $0x70] sm:$0xf]
      %v5661 = vld [vmem:[%s5647 + $0x78] sm:$0xf]
      %v5662 = vld [vmem:[%s5647 + $0x80] sm:$0xf]
      %v5663 = vld [vmem:[%s5647 + $0x88] sm:$0xf]
      %v5664 = vld [vmem:[%s5647 + $0xa0] sm:$0xf]
      %v5665 = vld [vmem:[%s5647 + $0xa8] sm:$0xf]
      %v5666 = vld [vmem:[%s5647 + $0xb0] sm:$0xf]
      %v5667 = vld [vmem:[%s5647 + $0xb8] sm:$0xf]
      %v5668 = vld [vmem:[%s5647 + $0xc0] sm:$0xf]
      %v5669 = vld [vmem:[%s5647 + $0xc8] sm:$0xf]
      %v5670 = vld [vmem:[%s5647 + $0xd0] sm:$0xf]
      %v5671 = vld [vmem:[%s5647 + $0xd8] sm:$0xf]
      %5696 = vrot.lane.b32.xlu0 %v5648, 72
      %v5697 = vpop.permute.xlu0 %5696
      %5698 = vrot.lane.b32.xlu0 %v5649, 72
      %v5699 = vpop.permute.xlu0 %5698
      %5700 = vrot.lane.b32.xlu0 %v5650, 72
      %v5701 = vpop.permute.xlu0 %5700
      %5702 = vrot.lane.b32.xlu0 %v5651, 72
      %v5703 = vpop.permute.xlu0 %5702
      %5704 = vrot.lane.b32.xlu0 %v5652, 72
      %v5705 = vpop.permute.xlu0 %5704
      %5706 = vrot.lane.b32.xlu0 %v5653, 72
      %v5707 = vpop.permute.xlu0 %5706
      %5708 = vrot.lane.b32.xlu0 %v5654, 72
      %v5709 = vpop.permute.xlu0 %5708
      %5710 = vrot.lane.b32.xlu0 %v5655, 72
      %v5711 = vpop.permute.xlu0 %5710
      %5712 = vrot.lane.b32.xlu0 %v5656, 72
      %v5713 = vpop.permute.xlu0 %5712
      %5714 = vrot.lane.b32.xlu0 %v5657, 72
      %v5715 = vpop.permute.xlu0 %5714
      %5716 = vrot.lane.b32.xlu0 %v5658, 72
      %v5717 = vpop.permute.xlu0 %5716
      %5718 = vrot.lane.b32.xlu0 %v5659, 72
      %v5719 = vpop.permute.xlu0 %5718
      %5720 = vrot.lane.b32.xlu0 %v5660, 72
      %v5721 = vpop.permute.xlu0 %5720
      %5722 = vrot.lane.b32.xlu0 %v5661, 72
      %v5723 = vpop.permute.xlu0 %5722
      %5724 = vrot.lane.b32.xlu0 %v5662, 72
      %v5725 = vpop.permute.xlu0 %5724
      %5726 = vrot.lane.b32.xlu0 %v5663, 72
      %v5727 = vpop.permute.xlu0 %5726
      %5728 = vrot.lane.b32.xlu0 %v5664, 72
      %v5729 = vpop.permute.xlu0 %5728
      %5730 = vrot.lane.b32.xlu0 %v5665, 72
      %v5731 = vpop.permute.xlu0 %5730
      %5732 = vrot.lane.b32.xlu0 %v5666, 72
      %v5733 = vpop.permute.xlu0 %5732
      %5734 = vrot.lane.b32.xlu0 %v5667, 72
      %v5735 = vpop.permute.xlu0 %5734
      %5736 = vrot.lane.b32.xlu0 %v5668, 72
      %v5737 = vpop.permute.xlu0 %5736
      %5738 = vrot.lane.b32.xlu0 %v5669, 72
      %v5739 = vpop.permute.xlu0 %5738
      %5740 = vrot.lane.b32.xlu0 %v5670, 72
      %v5741 = vpop.permute.xlu0 %5740
      %5742 = vrot.lane.b32.xlu0 %v5671, 72
      %v5743 = vpop.permute.xlu0 %5742
      %vm5768 = vcmask 618048
      %5769 = vst.msk [vmem:[#allocation2] sm:$0xf] %vm5768, %v5697
      %5770 = vst.msk [vmem:[#allocation2 + $0x4] sm:$0xf] %vm5768, %v5699
      %5771 = vst.msk [vmem:[#allocation2 + $0x8] sm:$0xf] %vm5768, %v5701
      %5772 = vst.msk [vmem:[#allocation2 + $0xc] sm:$0xf] %vm5768, %v5703
      %5773 = vst.msk [vmem:[#allocation2 + $0x10] sm:$0xf] %vm5768, %v5705
      %5774 = vst.msk [vmem:[#allocation2 + $0x14] sm:$0xf] %vm5768, %v5707
      %5775 = vst.msk [vmem:[#allocation2 + $0x18] sm:$0xf] %vm5768, %v5709
      %5776 = vst.msk [vmem:[#allocation2 + $0x1c] sm:$0xf] %vm5768, %v5711
      %5777 = vst.msk [vmem:[#allocation2 + $0x20] sm:$0xf] %vm5768, %v5713
      %5778 = vst.msk [vmem:[#allocation2 + $0x24] sm:$0xf] %vm5768, %v5715
      %5779 = vst.msk [vmem:[#allocation2 + $0x28] sm:$0xf] %vm5768, %v5717
      %5780 = vst.msk [vmem:[#allocation2 + $0x2c] sm:$0xf] %vm5768, %v5719
      %5781 = vst.msk [vmem:[#allocation2 + $0x30] sm:$0xf] %vm5768, %v5721
      %5782 = vst.msk [vmem:[#allocation2 + $0x34] sm:$0xf] %vm5768, %v5723
      %5783 = vst.msk [vmem:[#allocation2 + $0x38] sm:$0xf] %vm5768, %v5725
      %5784 = vst.msk [vmem:[#allocation2 + $0x3c] sm:$0xf] %vm5768, %v5727
      %5785 = vst.msk [vmem:[#allocation2 + $0x40] sm:$0xf] %vm5768, %v5729
      %5786 = vst.msk [vmem:[#allocation2 + $0x44] sm:$0xf] %vm5768, %v5731
      %5787 = vst.msk [vmem:[#allocation2 + $0x48] sm:$0xf] %vm5768, %v5733
      %5788 = vst.msk [vmem:[#allocation2 + $0x4c] sm:$0xf] %vm5768, %v5735
      %5789 = vst.msk [vmem:[#allocation2 + $0x50] sm:$0xf] %vm5768, %v5737
      %5790 = vst.msk [vmem:[#allocation2 + $0x54] sm:$0xf] %vm5768, %v5739
      %5791 = vst.msk [vmem:[#allocation2 + $0x58] sm:$0xf] %vm5768, %v5741
      %5792 = vst.msk [vmem:[#allocation2 + $0x5c] sm:$0xf] %vm5768, %v5743
      %v5793 = vld [vmem:[%s5647] sm:$0xf]
      %v5794 = vld [vmem:[%s5647 + $0x4] sm:$0x1]
      %v5795 = vld [vmem:[%s5647 + $0x8] sm:$0xf]
      %v5796 = vld [vmem:[%s5647 + $0xc] sm:$0x1]
      %v5797 = vld [vmem:[%s5647 + $0x10] sm:$0xf]
      %v5798 = vld [vmem:[%s5647 + $0x14] sm:$0x1]
      %v5799 = vld [vmem:[%s5647 + $0x18] sm:$0xf]
      %v5800 = vld [vmem:[%s5647 + $0x1c] sm:$0x1]
      %v5801 = vld [vmem:[%s5647 + $0x20] sm:$0xf]
      %v5802 = vld [vmem:[%s5647 + $0x24] sm:$0x1]
      %v5803 = vld [vmem:[%s5647 + $0x28] sm:$0xf]
      %v5804 = vld [vmem:[%s5647 + $0x2c] sm:$0x1]
      %v5805 = vld [vmem:[%s5647 + $0x30] sm:$0xf]
      %v5806 = vld [vmem:[%s5647 + $0x34] sm:$0x1]
      %v5807 = vld [vmem:[%s5647 + $0x38] sm:$0xf]
      %v5808 = vld [vmem:[%s5647 + $0x3c] sm:$0x1]
      %v5809 = vld [vmem:[%s5647 + $0x50] sm:$0xf]
      %v5810 = vld [vmem:[%s5647 + $0x54] sm:$0x1]
      %v5811 = vld [vmem:[%s5647 + $0x58] sm:$0xf]
      %v5812 = vld [vmem:[%s5647 + $0x5c] sm:$0x1]
      %v5813 = vld [vmem:[%s5647 + $0x60] sm:$0xf]
      %v5814 = vld [vmem:[%s5647 + $0x64] sm:$0x1]
      %v5815 = vld [vmem:[%s5647 + $0x68] sm:$0xf]
      %v5816 = vld [vmem:[%s5647 + $0x6c] sm:$0x1]
      %v5817 = vld [vmem:[%s5647 + $0x70] sm:$0xf]
      %v5818 = vld [vmem:[%s5647 + $0x74] sm:$0x1]
      %v5819 = vld [vmem:[%s5647 + $0x78] sm:$0xf]
      %v5820 = vld [vmem:[%s5647 + $0x7c] sm:$0x1]
      %v5821 = vld [vmem:[%s5647 + $0x80] sm:$0xf]
      %v5822 = vld [vmem:[%s5647 + $0x84] sm:$0x1]
      %v5823 = vld [vmem:[%s5647 + $0x88] sm:$0xf]
      %v5824 = vld [vmem:[%s5647 + $0x8c] sm:$0x1]
      %v5825 = vld [vmem:[%s5647 + $0xa0] sm:$0xf]
      %v5826 = vld [vmem:[%s5647 + $0xa4] sm:$0x1]
      %v5827 = vld [vmem:[%s5647 + $0xa8] sm:$0xf]
      %v5828 = vld [vmem:[%s5647 + $0xac] sm:$0x1]
      %v5829 = vld [vmem:[%s5647 + $0xb0] sm:$0xf]
      %v5830 = vld [vmem:[%s5647 + $0xb4] sm:$0x1]
      %v5831 = vld [vmem:[%s5647 + $0xb8] sm:$0xf]
      %v5832 = vld [vmem:[%s5647 + $0xbc] sm:$0x1]
      %v5833 = vld [vmem:[%s5647 + $0xc0] sm:$0xf]
      %v5834 = vld [vmem:[%s5647 + $0xc4] sm:$0x1]
      %v5835 = vld [vmem:[%s5647 + $0xc8] sm:$0xf]
      %v5836 = vld [vmem:[%s5647 + $0xcc] sm:$0x1]
      %v5837 = vld [vmem:[%s5647 + $0xd0] sm:$0xf]
      %v5838 = vld [vmem:[%s5647 + $0xd4] sm:$0x1]
      %v5839 = vld [vmem:[%s5647 + $0xd8] sm:$0xf]
      %v5840 = vld [vmem:[%s5647 + $0xdc] sm:$0x1]
      %v5842 = vshrl.u32 %v5793, 16
      %v5844 = vrot.slane %v5842, 4
      %v5845 = vshll.u32 %v5793, 16
      %v5847 = vrot.slane %v5845, 5
      %v5848 = vor.u32 %v5844, %v5847
      %v5849 = vrot.slane %v5848, 4
      %v5851 = vshll.u32 %v5794, 16
      %v5853 = vrot.slane %v5851, 5
      %v5854 = vsel %vm341, %v5849, %v5853
      %v5856 = vshrl.u32 %v5795, 16
      %v5858 = vrot.slane %v5856, 4
      %v5859 = vshll.u32 %v5795, 16
      %v5861 = vrot.slane %v5859, 5
      %v5862 = vor.u32 %v5858, %v5861
      %v5863 = vrot.slane %v5862, 4
      %v5865 = vshll.u32 %v5796, 16
      %v5867 = vrot.slane %v5865, 5
      %v5868 = vsel %vm341, %v5863, %v5867
      %v5870 = vshrl.u32 %v5797, 16
      %v5872 = vrot.slane %v5870, 4
      %v5873 = vshll.u32 %v5797, 16
      %v5875 = vrot.slane %v5873, 5
      %v5876 = vor.u32 %v5872, %v5875
      %v5877 = vrot.slane %v5876, 4
      %v5879 = vshll.u32 %v5798, 16
      %v5881 = vrot.slane %v5879, 5
      %v5882 = vsel %vm341, %v5877, %v5881
      %v5884 = vshrl.u32 %v5799, 16
      %v5886 = vrot.slane %v5884, 4
      %v5887 = vshll.u32 %v5799, 16
      %v5889 = vrot.slane %v5887, 5
      %v5890 = vor.u32 %v5886, %v5889
      %v5891 = vrot.slane %v5890, 4
      %v5893 = vshll.u32 %v5800, 16
      %v5895 = vrot.slane %v5893, 5
      %v5896 = vsel %vm341, %v5891, %v5895
      %v5898 = vshrl.u32 %v5801, 16
      %v5900 = vrot.slane %v5898, 4
      %v5901 = vshll.u32 %v5801, 16
      %v5903 = vrot.slane %v5901, 5
      %v5904 = vor.u32 %v5900, %v5903
      %v5905 = vrot.slane %v5904, 4
      %v5907 = vshll.u32 %v5802, 16
      %v5909 = vrot.slane %v5907, 5
      %v5910 = vsel %vm341, %v5905, %v5909
      %v5912 = vshrl.u32 %v5803, 16
      %v5914 = vrot.slane %v5912, 4
      %v5915 = vshll.u32 %v5803, 16
      %v5917 = vrot.slane %v5915, 5
      %v5918 = vor.u32 %v5914, %v5917
      %v5919 = vrot.slane %v5918, 4
      %v5921 = vshll.u32 %v5804, 16
      %v5923 = vrot.slane %v5921, 5
      %v5924 = vsel %vm341, %v5919, %v5923
      %v5926 = vshrl.u32 %v5805, 16
      %v5928 = vrot.slane %v5926, 4
      %v5929 = vshll.u32 %v5805, 16
      %v5931 = vrot.slane %v5929, 5
      %v5932 = vor.u32 %v5928, %v5931
      %v5933 = vrot.slane %v5932, 4
      %v5935 = vshll.u32 %v5806, 16
      %v5937 = vrot.slane %v5935, 5
      %v5938 = vsel %vm341, %v5933, %v5937
      %v5940 = vshrl.u32 %v5807, 16
      %v5942 = vrot.slane %v5940, 4
      %v5943 = vshll.u32 %v5807, 16
      %v5945 = vrot.slane %v5943, 5
      %v5946 = vor.u32 %v5942, %v5945
      %v5947 = vrot.slane %v5946, 4
      %v5949 = vshll.u32 %v5808, 16
      %v5951 = vrot.slane %v5949, 5
      %v5952 = vsel %vm341, %v5947, %v5951
      %v5954 = vshrl.u32 %v5809, 16
      %v5956 = vrot.slane %v5954, 4
      %v5957 = vshll.u32 %v5809, 16
      %v5959 = vrot.slane %v5957, 5
      %v5960 = vor.u32 %v5956, %v5959
      %v5961 = vrot.slane %v5960, 4
      %v5963 = vshll.u32 %v5810, 16
      %v5965 = vrot.slane %v5963, 5
      %v5966 = vsel %vm341, %v5961, %v5965
      %v5968 = vshrl.u32 %v5811, 16
      %v5970 = vrot.slane %v5968, 4
      %v5971 = vshll.u32 %v5811, 16
      %v5973 = vrot.slane %v5971, 5
      %v5974 = vor.u32 %v5970, %v5973
      %v5975 = vrot.slane %v5974, 4
      %v5977 = vshll.u32 %v5812, 16
      %v5979 = vrot.slane %v5977, 5
      %v5980 = vsel %vm341, %v5975, %v5979
      %v5982 = vshrl.u32 %v5813, 16
      %v5984 = vrot.slane %v5982, 4
      %v5985 = vshll.u32 %v5813, 16
      %v5987 = vrot.slane %v5985, 5
      %v5988 = vor.u32 %v5984, %v5987
      %v5989 = vrot.slane %v5988, 4
      %v5991 = vshll.u32 %v5814, 16
      %v5993 = vrot.slane %v5991, 5
      %v5994 = vsel %vm341, %v5989, %v5993
      %v5996 = vshrl.u32 %v5815, 16
      %v5998 = vrot.slane %v5996, 4
      %v5999 = vshll.u32 %v5815, 16
      %v6001 = vrot.slane %v5999, 5
      %v6002 = vor.u32 %v5998, %v6001
      %v6003 = vrot.slane %v6002, 4
      %v6005 = vshll.u32 %v5816, 16
      %v6007 = vrot.slane %v6005, 5
      %v6008 = vsel %vm341, %v6003, %v6007
      %v6010 = vshrl.u32 %v5817, 16
      %v6012 = vrot.slane %v6010, 4
      %v6013 = vshll.u32 %v5817, 16
      %v6015 = vrot.slane %v6013, 5
      %v6016 = vor.u32 %v6012, %v6015
      %v6017 = vrot.slane %v6016, 4
      %v6019 = vshll.u32 %v5818, 16
      %v6021 = vrot.slane %v6019, 5
      %v6022 = vsel %vm341, %v6017, %v6021
      %v6024 = vshrl.u32 %v5819, 16
      %v6026 = vrot.slane %v6024, 4
      %v6027 = vshll.u32 %v5819, 16
      %v6029 = vrot.slane %v6027, 5
      %v6030 = vor.u32 %v6026, %v6029
      %v6031 = vrot.slane %v6030, 4
      %v6033 = vshll.u32 %v5820, 16
      %v6035 = vrot.slane %v6033, 5
      %v6036 = vsel %vm341, %v6031, %v6035
      %v6038 = vshrl.u32 %v5821, 16
      %v6040 = vrot.slane %v6038, 4
      %v6041 = vshll.u32 %v5821, 16
      %v6043 = vrot.slane %v6041, 5
      %v6044 = vor.u32 %v6040, %v6043
      %v6045 = vrot.slane %v6044, 4
      %v6047 = vshll.u32 %v5822, 16
      %v6049 = vrot.slane %v6047, 5
      %v6050 = vsel %vm341, %v6045, %v6049
      %v6052 = vshrl.u32 %v5823, 16
      %v6054 = vrot.slane %v6052, 4
      %v6055 = vshll.u32 %v5823, 16
      %v6057 = vrot.slane %v6055, 5
      %v6058 = vor.u32 %v6054, %v6057
      %v6059 = vrot.slane %v6058, 4
      %v6061 = vshll.u32 %v5824, 16
      %v6063 = vrot.slane %v6061, 5
      %v6064 = vsel %vm341, %v6059, %v6063
      %v6066 = vshrl.u32 %v5825, 16
      %v6068 = vrot.slane %v6066, 4
      %v6069 = vshll.u32 %v5825, 16
      %v6071 = vrot.slane %v6069, 5
      %v6072 = vor.u32 %v6068, %v6071
      %v6073 = vrot.slane %v6072, 4
      %v6075 = vshll.u32 %v5826, 16
      %v6077 = vrot.slane %v6075, 5
      %v6078 = vsel %vm341, %v6073, %v6077
      %v6080 = vshrl.u32 %v5827, 16
      %v6082 = vrot.slane %v6080, 4
      %v6083 = vshll.u32 %v5827, 16
      %v6085 = vrot.slane %v6083, 5
      %v6086 = vor.u32 %v6082, %v6085
      %v6087 = vrot.slane %v6086, 4
      %v6089 = vshll.u32 %v5828, 16
      %v6091 = vrot.slane %v6089, 5
      %v6092 = vsel %vm341, %v6087, %v6091
      %v6094 = vshrl.u32 %v5829, 16
      %v6096 = vrot.slane %v6094, 4
      %v6097 = vshll.u32 %v5829, 16
      %v6099 = vrot.slane %v6097, 5
      %v6100 = vor.u32 %v6096, %v6099
      %v6101 = vrot.slane %v6100, 4
      %v6103 = vshll.u32 %v5830, 16
      %v6105 = vrot.slane %v6103, 5
      %v6106 = vsel %vm341, %v6101, %v6105
      %v6108 = vshrl.u32 %v5831, 16
      %v6110 = vrot.slane %v6108, 4
      %v6111 = vshll.u32 %v5831, 16
      %v6113 = vrot.slane %v6111, 5
      %v6114 = vor.u32 %v6110, %v6113
      %v6115 = vrot.slane %v6114, 4
      %v6117 = vshll.u32 %v5832, 16
      %v6119 = vrot.slane %v6117, 5
      %v6120 = vsel %vm341, %v6115, %v6119
      %v6122 = vshrl.u32 %v5833, 16
      %v6124 = vrot.slane %v6122, 4
      %v6125 = vshll.u32 %v5833, 16
      %v6127 = vrot.slane %v6125, 5
      %v6128 = vor.u32 %v6124, %v6127
      %v6129 = vrot.slane %v6128, 4
      %v6131 = vshll.u32 %v5834, 16
      %v6133 = vrot.slane %v6131, 5
      %v6134 = vsel %vm341, %v6129, %v6133
      %v6136 = vshrl.u32 %v5835, 16
      %v6138 = vrot.slane %v6136, 4
      %v6139 = vshll.u32 %v5835, 16
      %v6141 = vrot.slane %v6139, 5
      %v6142 = vor.u32 %v6138, %v6141
      %v6143 = vrot.slane %v6142, 4
      %v6145 = vshll.u32 %v5836, 16
      %v6147 = vrot.slane %v6145, 5
      %v6148 = vsel %vm341, %v6143, %v6147
      %v6150 = vshrl.u32 %v5837, 16
      %v6152 = vrot.slane %v6150, 4
      %v6153 = vshll.u32 %v5837, 16
      %v6155 = vrot.slane %v6153, 5
      %v6156 = vor.u32 %v6152, %v6155
      %v6157 = vrot.slane %v6156, 4
      %v6159 = vshll.u32 %v5838, 16
      %v6161 = vrot.slane %v6159, 5
      %v6162 = vsel %vm341, %v6157, %v6161
      %v6164 = vshrl.u32 %v5839, 16
      %v6166 = vrot.slane %v6164, 4
      %v6167 = vshll.u32 %v5839, 16
      %v6169 = vrot.slane %v6167, 5
      %v6170 = vor.u32 %v6166, %v6169
      %v6171 = vrot.slane %v6170, 4
      %v6173 = vshll.u32 %v5840, 16
      %v6175 = vrot.slane %v6173, 5
      %v6176 = vsel %vm341, %v6171, %v6175
      %6177 = vrot.lane.b32.xlu0 %v5854, 76
      %v6178 = vpop.permute.xlu0 %6177
      %6179 = vrot.lane.b32.xlu0 %v5868, 76
      %v6180 = vpop.permute.xlu0 %6179
      %6181 = vrot.lane.b32.xlu0 %v5882, 76
      %v6182 = vpop.permute.xlu0 %6181
      %6183 = vrot.lane.b32.xlu0 %v5896, 76
      %v6184 = vpop.permute.xlu0 %6183
      %6185 = vrot.lane.b32.xlu0 %v5910, 76
      %v6186 = vpop.permute.xlu0 %6185
      %6187 = vrot.lane.b32.xlu0 %v5924, 76
      %v6188 = vpop.permute.xlu0 %6187
      %6189 = vrot.lane.b32.xlu0 %v5938, 76
      %v6190 = vpop.permute.xlu0 %6189
      %6191 = vrot.lane.b32.xlu0 %v5952, 76
      %v6192 = vpop.permute.xlu0 %6191
      %6193 = vrot.lane.b32.xlu0 %v5966, 76
      %v6194 = vpop.permute.xlu0 %6193
      %6195 = vrot.lane.b32.xlu0 %v5980, 76
      %v6196 = vpop.permute.xlu0 %6195
      %6197 = vrot.lane.b32.xlu0 %v5994, 76
      %v6198 = vpop.permute.xlu0 %6197
      %6199 = vrot.lane.b32.xlu0 %v6008, 76
      %v6200 = vpop.permute.xlu0 %6199
      %6201 = vrot.lane.b32.xlu0 %v6022, 76
      %v6202 = vpop.permute.xlu0 %6201
      %6203 = vrot.lane.b32.xlu0 %v6036, 76
      %v6204 = vpop.permute.xlu0 %6203
      %6205 = vrot.lane.b32.xlu0 %v6050, 76
      %v6206 = vpop.permute.xlu0 %6205
      %6207 = vrot.lane.b32.xlu0 %v6064, 76
      %v6208 = vpop.permute.xlu0 %6207
      %6209 = vrot.lane.b32.xlu0 %v6078, 76
      %v6210 = vpop.permute.xlu0 %6209
      %6211 = vrot.lane.b32.xlu0 %v6092, 76
      %v6212 = vpop.permute.xlu0 %6211
      %6213 = vrot.lane.b32.xlu0 %v6106, 76
      %v6214 = vpop.permute.xlu0 %6213
      %6215 = vrot.lane.b32.xlu0 %v6120, 76
      %v6216 = vpop.permute.xlu0 %6215
      %6217 = vrot.lane.b32.xlu0 %v6134, 76
      %v6218 = vpop.permute.xlu0 %6217
      %6219 = vrot.lane.b32.xlu0 %v6148, 76
      %v6220 = vpop.permute.xlu0 %6219
      %6221 = vrot.lane.b32.xlu0 %v6162, 76
      %v6222 = vpop.permute.xlu0 %6221
      %6223 = vrot.lane.b32.xlu0 %v6176, 76
      %v6224 = vpop.permute.xlu0 %6223
      %vm6249 = vcmask 650848
      %6250 = vst.msk [vmem:[#allocation2] sm:$0xf] %vm6249, %v6178
      %6251 = vst.msk [vmem:[#allocation2 + $0x4] sm:$0xf] %vm6249, %v6180
      %6252 = vst.msk [vmem:[#allocation2 + $0x8] sm:$0xf] %vm6249, %v6182
      %6253 = vst.msk [vmem:[#allocation2 + $0xc] sm:$0xf] %vm6249, %v6184
      %6254 = vst.msk [vmem:[#allocation2 + $0x10] sm:$0xf] %vm6249, %v6186
      %6255 = vst.msk [vmem:[#allocation2 + $0x14] sm:$0xf] %vm6249, %v6188
      %6256 = vst.msk [vmem:[#allocation2 + $0x18] sm:$0xf] %vm6249, %v6190
      %6257 = vst.msk [vmem:[#allocation2 + $0x1c] sm:$0xf] %vm6249, %v6192
      %6258 = vst.msk [vmem:[#allocation2 + $0x20] sm:$0xf] %vm6249, %v6194
      %6259 = vst.msk [vmem:[#allocation2 + $0x24] sm:$0xf] %vm6249, %v6196
      %6260 = vst.msk [vmem:[#allocation2 + $0x28] sm:$0xf] %vm6249, %v6198
      %6261 = vst.msk [vmem:[#allocation2 + $0x2c] sm:$0xf] %vm6249, %v6200
      %6262 = vst.msk [vmem:[#allocation2 + $0x30] sm:$0xf] %vm6249, %v6202
      %6263 = vst.msk [vmem:[#allocation2 + $0x34] sm:$0xf] %vm6249, %v6204
      %6264 = vst.msk [vmem:[#allocation2 + $0x38] sm:$0xf] %vm6249, %v6206
      %6265 = vst.msk [vmem:[#allocation2 + $0x3c] sm:$0xf] %vm6249, %v6208
      %6266 = vst.msk [vmem:[#allocation2 + $0x40] sm:$0xf] %vm6249, %v6210
      %6267 = vst.msk [vmem:[#allocation2 + $0x44] sm:$0xf] %vm6249, %v6212
      %6268 = vst.msk [vmem:[#allocation2 + $0x48] sm:$0xf] %vm6249, %v6214
      %6269 = vst.msk [vmem:[#allocation2 + $0x4c] sm:$0xf] %vm6249, %v6216
      %6270 = vst.msk [vmem:[#allocation2 + $0x50] sm:$0xf] %vm6249, %v6218
      %6271 = vst.msk [vmem:[#allocation2 + $0x54] sm:$0xf] %vm6249, %v6220
      %6272 = vst.msk [vmem:[#allocation2 + $0x58] sm:$0xf] %vm6249, %v6222
      %6273 = vst.msk [vmem:[#allocation2 + $0x5c] sm:$0xf] %vm6249, %v6224
      %v6274 = vld [vmem:[%s5647] sm:$0xe]
      %v6275 = vld [vmem:[%s5647 + $0x4] sm:$0x1]
      %v6276 = vld [vmem:[%s5647 + $0x8] sm:$0xe]
      %v6277 = vld [vmem:[%s5647 + $0xc] sm:$0x1]
      %v6278 = vld [vmem:[%s5647 + $0x10] sm:$0xe]
      %v6279 = vld [vmem:[%s5647 + $0x14] sm:$0x1]
      %v6280 = vld [vmem:[%s5647 + $0x18] sm:$0xe]
      %v6281 = vld [vmem:[%s5647 + $0x1c] sm:$0x1]
      %v6282 = vld [vmem:[%s5647 + $0x20] sm:$0xe]
      %v6283 = vld [vmem:[%s5647 + $0x24] sm:$0x1]
      %v6284 = vld [vmem:[%s5647 + $0x28] sm:$0xe]
      %v6285 = vld [vmem:[%s5647 + $0x2c] sm:$0x1]
      %v6286 = vld [vmem:[%s5647 + $0x30] sm:$0xe]
      %v6287 = vld [vmem:[%s5647 + $0x34] sm:$0x1]
      %v6288 = vld [vmem:[%s5647 + $0x38] sm:$0xe]
      %v6289 = vld [vmem:[%s5647 + $0x3c] sm:$0x1]
      %v6290 = vld [vmem:[%s5647 + $0x50] sm:$0xe]
      %v6291 = vld [vmem:[%s5647 + $0x54] sm:$0x1]
      %v6292 = vld [vmem:[%s5647 + $0x58] sm:$0xe]
      %v6293 = vld [vmem:[%s5647 + $0x5c] sm:$0x1]
      %v6294 = vld [vmem:[%s5647 + $0x60] sm:$0xe]
      %v6295 = vld [vmem:[%s5647 + $0x64] sm:$0x1]
      %v6296 = vld [vmem:[%s5647 + $0x68] sm:$0xe]
      %v6297 = vld [vmem:[%s5647 + $0x6c] sm:$0x1]
      %v6298 = vld [vmem:[%s5647 + $0x70] sm:$0xe]
      %v6299 = vld [vmem:[%s5647 + $0x74] sm:$0x1]
      %v6300 = vld [vmem:[%s5647 + $0x78] sm:$0xe]
      %v6301 = vld [vmem:[%s5647 + $0x7c] sm:$0x1]
      %v6302 = vld [vmem:[%s5647 + $0x80] sm:$0xe]
      %v6303 = vld [vmem:[%s5647 + $0x84] sm:$0x1]
      %v6304 = vld [vmem:[%s5647 + $0x88] sm:$0xe]
      %v6305 = vld [vmem:[%s5647 + $0x8c] sm:$0x1]
      %v6306 = vld [vmem:[%s5647 + $0xa0] sm:$0xe]
      %v6307 = vld [vmem:[%s5647 + $0xa4] sm:$0x1]
      %v6308 = vld [vmem:[%s5647 + $0xa8] sm:$0xe]
      %v6309 = vld [vmem:[%s5647 + $0xac] sm:$0x1]
      %v6310 = vld [vmem:[%s5647 + $0xb0] sm:$0xe]
      %v6311 = vld [vmem:[%s5647 + $0xb4] sm:$0x1]
      %v6312 = vld [vmem:[%s5647 + $0xb8] sm:$0xe]
      %v6313 = vld [vmem:[%s5647 + $0xbc] sm:$0x1]
      %v6314 = vld [vmem:[%s5647 + $0xc0] sm:$0xe]
      %v6315 = vld [vmem:[%s5647 + $0xc4] sm:$0x1]
      %v6316 = vld [vmem:[%s5647 + $0xc8] sm:$0xe]
      %v6317 = vld [vmem:[%s5647 + $0xcc] sm:$0x1]
      %v6318 = vld [vmem:[%s5647 + $0xd0] sm:$0xe]
      %v6319 = vld [vmem:[%s5647 + $0xd4] sm:$0x1]
      %v6320 = vld [vmem:[%s5647 + $0xd8] sm:$0xe]
      %v6321 = vld [vmem:[%s5647 + $0xdc] sm:$0x1]
      %v6370 = vrot.slane %v6274, 5
      %v6371 = vrot.slane %v6370, 4
      %v6372 = vrot.slane %v6275, 5
      %v6373 = vsel %vm873, %v6371, %v6372
      %v6374 = vrot.slane %v6276, 5
      %v6375 = vrot.slane %v6374, 4
      %v6376 = vrot.slane %v6277, 5
      %v6377 = vsel %vm873, %v6375, %v6376
      %v6378 = vrot.slane %v6278, 5
      %v6379 = vrot.slane %v6378, 4
      %v6380 = vrot.slane %v6279, 5
      %v6381 = vsel %vm873, %v6379, %v6380
      %v6382 = vrot.slane %v6280, 5
      %v6383 = vrot.slane %v6382, 4
      %v6384 = vrot.slane %v6281, 5
      %v6385 = vsel %vm873, %v6383, %v6384
      %v6386 = vrot.slane %v6282, 5
      %v6387 = vrot.slane %v6386, 4
      %v6388 = vrot.slane %v6283, 5
      %v6389 = vsel %vm873, %v6387, %v6388
      %v6390 = vrot.slane %v6284, 5
      %v6391 = vrot.slane %v6390, 4
      %v6392 = vrot.slane %v6285, 5
      %v6393 = vsel %vm873, %v6391, %v6392
      %v6394 = vrot.slane %v6286, 5
      %v6395 = vrot.slane %v6394, 4
      %v6396 = vrot.slane %v6287, 5
      %v6397 = vsel %vm873, %v6395, %v6396
      %v6398 = vrot.slane %v6288, 5
      %v6399 = vrot.slane %v6398, 4
      %v6400 = vrot.slane %v6289, 5
      %v6401 = vsel %vm873, %v6399, %v6400
      %v6402 = vrot.slane %v6290, 5
      %v6403 = vrot.slane %v6402, 4
      %v6404 = vrot.slane %v6291, 5
      %v6405 = vsel %vm873, %v6403, %v6404
      %v6406 = vrot.slane %v6292, 5
      %v6407 = vrot.slane %v6406, 4
      %v6408 = vrot.slane %v6293, 5
      %v6409 = vsel %vm873, %v6407, %v6408
      %v6410 = vrot.slane %v6294, 5
      %v6411 = vrot.slane %v6410, 4
      %v6412 = vrot.slane %v6295, 5
      %v6413 = vsel %vm873, %v6411, %v6412
      %v6414 = vrot.slane %v6296, 5
      %v6415 = vrot.slane %v6414, 4
      %v6416 = vrot.slane %v6297, 5
      %v6417 = vsel %vm873, %v6415, %v6416
      %v6418 = vrot.slane %v6298, 5
      %v6419 = vrot.slane %v6418, 4
      %v6420 = vrot.slane %v6299, 5
      %v6421 = vsel %vm873, %v6419, %v6420
      %v6422 = vrot.slane %v6300, 5
      %v6423 = vrot.slane %v6422, 4
      %v6424 = vrot.slane %v6301, 5
      %v6425 = vsel %vm873, %v6423, %v6424
      %v6426 = vrot.slane %v6302, 5
      %v6427 = vrot.slane %v6426, 4
      %v6428 = vrot.slane %v6303, 5
      %v6429 = vsel %vm873, %v6427, %v6428
      %v6430 = vrot.slane %v6304, 5
      %v6431 = vrot.slane %v6430, 4
      %v6432 = vrot.slane %v6305, 5
      %v6433 = vsel %vm873, %v6431, %v6432
      %v6434 = vrot.slane %v6306, 5
      %v6435 = vrot.slane %v6434, 4
      %v6436 = vrot.slane %v6307, 5
      %v6437 = vsel %vm873, %v6435, %v6436
      %v6438 = vrot.slane %v6308, 5
      %v6439 = vrot.slane %v6438, 4
      %v6440 = vrot.slane %v6309, 5
      %v6441 = vsel %vm873, %v6439, %v6440
      %v6442 = vrot.slane %v6310, 5
      %v6443 = vrot.slane %v6442, 4
      %v6444 = vrot.slane %v6311, 5
      %v6445 = vsel %vm873, %v6443, %v6444
      %v6446 = vrot.slane %v6312, 5
      %v6447 = vrot.slane %v6446, 4
      %v6448 = vrot.slane %v6313, 5
      %v6449 = vsel %vm873, %v6447, %v6448
      %v6450 = vrot.slane %v6314, 5
      %v6451 = vrot.slane %v6450, 4
      %v6452 = vrot.slane %v6315, 5
      %v6453 = vsel %vm873, %v6451, %v6452
      %v6454 = vrot.slane %v6316, 5
      %v6455 = vrot.slane %v6454, 4
      %v6456 = vrot.slane %v6317, 5
      %v6457 = vsel %vm873, %v6455, %v6456
      %v6458 = vrot.slane %v6318, 5
      %v6459 = vrot.slane %v6458, 4
      %v6460 = vrot.slane %v6319, 5
      %v6461 = vsel %vm873, %v6459, %v6460
      %v6462 = vrot.slane %v6320, 5
      %v6463 = vrot.slane %v6462, 4
      %v6464 = vrot.slane %v6321, 5
      %v6465 = vsel %vm873, %v6463, %v6464
      %6466 = vrot.lane.b32.xlu0 %v6373, 80
      %v6467 = vpop.permute.xlu0 %6466
      %6468 = vrot.lane.b32.xlu0 %v6377, 80
      %v6469 = vpop.permute.xlu0 %6468
      %6470 = vrot.lane.b32.xlu0 %v6381, 80
      %v6471 = vpop.permute.xlu0 %6470
      %6472 = vrot.lane.b32.xlu0 %v6385, 80
      %v6473 = vpop.permute.xlu0 %6472
      %6474 = vrot.lane.b32.xlu0 %v6389, 80
      %v6475 = vpop.permute.xlu0 %6474
      %6476 = vrot.lane.b32.xlu0 %v6393, 80
      %v6477 = vpop.permute.xlu0 %6476
      %6478 = vrot.lane.b32.xlu0 %v6397, 80
      %v6479 = vpop.permute.xlu0 %6478
      %6480 = vrot.lane.b32.xlu0 %v6401, 80
      %v6481 = vpop.permute.xlu0 %6480
      %6482 = vrot.lane.b32.xlu0 %v6405, 80
      %v6483 = vpop.permute.xlu0 %6482
      %6484 = vrot.lane.b32.xlu0 %v6409, 80
      %v6485 = vpop.permute.xlu0 %6484
      %6486 = vrot.lane.b32.xlu0 %v6413, 80
      %v6487 = vpop.permute.xlu0 %6486
      %6488 = vrot.lane.b32.xlu0 %v6417, 80
      %v6489 = vpop.permute.xlu0 %6488
      %6490 = vrot.lane.b32.xlu0 %v6421, 80
      %v6491 = vpop.permute.xlu0 %6490
      %6492 = vrot.lane.b32.xlu0 %v6425, 80
      %v6493 = vpop.permute.xlu0 %6492
      %6494 = vrot.lane.b32.xlu0 %v6429, 80
      %v6495 = vpop.permute.xlu0 %6494
      %6496 = vrot.lane.b32.xlu0 %v6433, 80
      %v6497 = vpop.permute.xlu0 %6496
      %6498 = vrot.lane.b32.xlu0 %v6437, 80
      %v6499 = vpop.permute.xlu0 %6498
      %6500 = vrot.lane.b32.xlu0 %v6441, 80
      %v6501 = vpop.permute.xlu0 %6500
      %6502 = vrot.lane.b32.xlu0 %v6445, 80
      %v6503 = vpop.permute.xlu0 %6502
      %6504 = vrot.lane.b32.xlu0 %v6449, 80
      %v6505 = vpop.permute.xlu0 %6504
      %6506 = vrot.lane.b32.xlu0 %v6453, 80
      %v6507 = vpop.permute.xlu0 %6506
      %6508 = vrot.lane.b32.xlu0 %v6457, 80
      %v6509 = vpop.permute.xlu0 %6508
      %6510 = vrot.lane.b32.xlu0 %v6461, 80
      %v6511 = vpop.permute.xlu0 %6510
      %6512 = vrot.lane.b32.xlu0 %v6465, 80
      %v6513 = vpop.permute.xlu0 %6512
      %vm6538 = vcmask 683648
      %6539 = vst.msk [vmem:[#allocation2] sm:$0xf] %vm6538, %v6467
      %6540 = vst.msk [vmem:[#allocation2 + $0x4] sm:$0xf] %vm6538, %v6469
      %6541 = vst.msk [vmem:[#allocation2 + $0x8] sm:$0xf] %vm6538, %v6471
      %6542 = vst.msk [vmem:[#allocation2 + $0xc] sm:$0xf] %vm6538, %v6473
      %6543 = vst.msk [vmem:[#allocation2 + $0x10] sm:$0xf] %vm6538, %v6475
      %6544 = vst.msk [vmem:[#allocation2 + $0x14] sm:$0xf] %vm6538, %v6477
      %6545 = vst.msk [vmem:[#allocation2 + $0x18] sm:$0xf] %vm6538, %v6479
      %6546 = vst.msk [vmem:[#allocation2 + $0x1c] sm:$0xf] %vm6538, %v6481
      %6547 = vst.msk [vmem:[#allocation2 + $0x20] sm:$0xf] %vm6538, %v6483
      %6548 = vst.msk [vmem:[#allocation2 + $0x24] sm:$0xf] %vm6538, %v6485
      %6549 = vst.msk [vmem:[#allocation2 + $0x28] sm:$0xf] %vm6538, %v6487
      %6550 = vst.msk [vmem:[#allocation2 + $0x2c] sm:$0xf] %vm6538, %v6489
      %6551 = vst.msk [vmem:[#allocation2 + $0x30] sm:$0xf] %vm6538, %v6491
      %6552 = vst.msk [vmem:[#allocation2 + $0x34] sm:$0xf] %vm6538, %v6493
      %6553 = vst.msk [vmem:[#allocation2 + $0x38] sm:$0xf] %vm6538, %v6495
      %6554 = vst.msk [vmem:[#allocation2 + $0x3c] sm:$0xf] %vm6538, %v6497
      %6555 = vst.msk [vmem:[#allocation2 + $0x40] sm:$0xf] %vm6538, %v6499
      %6556 = vst.msk [vmem:[#allocation2 + $0x44] sm:$0xf] %vm6538, %v6501
      %6557 = vst.msk [vmem:[#allocation2 + $0x48] sm:$0xf] %vm6538, %v6503
      %6558 = vst.msk [vmem:[#allocation2 + $0x4c] sm:$0xf] %vm6538, %v6505
      %6559 = vst.msk [vmem:[#allocation2 + $0x50] sm:$0xf] %vm6538, %v6507
      %6560 = vst.msk [vmem:[#allocation2 + $0x54] sm:$0xf] %vm6538, %v6509
      %6561 = vst.msk [vmem:[#allocation2 + $0x58] sm:$0xf] %vm6538, %v6511
      %6562 = vst.msk [vmem:[#allocation2 + $0x5c] sm:$0xf] %vm6538, %v6513
      %s6563 = scalar_lea.vmem %s221, 168
      %v6564 = vld [vmem:[%s6563] sm:$0xf]
      %v6565 = vld [vmem:[%s6563 + $0x8] sm:$0xf]
      %v6566 = vld [vmem:[%s6563 + $0x10] sm:$0xf]
      %v6567 = vld [vmem:[%s6563 + $0x18] sm:$0xf]
      %v6568 = vld [vmem:[%s6563 + $0x20] sm:$0xf]
      %v6569 = vld [vmem:[%s6563 + $0x28] sm:$0xf]
      %v6570 = vld [vmem:[%s6563 + $0x30] sm:$0xf]
      %v6571 = vld [vmem:[%s6563 + $0x38] sm:$0xf]
      %v6572 = vld [vmem:[%s6563 + $0x50] sm:$0xf]
      %v6573 = vld [vmem:[%s6563 + $0x58] sm:$0xf]
      %v6574 = vld [vmem:[%s6563 + $0x60] sm:$0xf]
      %v6575 = vld [vmem:[%s6563 + $0x68] sm:$0xf]
      %v6576 = vld [vmem:[%s6563 + $0x70] sm:$0xf]
      %v6577 = vld [vmem:[%s6563 + $0x78] sm:$0xf]
      %v6578 = vld [vmem:[%s6563 + $0x80] sm:$0xf]
      %v6579 = vld [vmem:[%s6563 + $0x88] sm:$0xf]
      %v6580 = vld [vmem:[%s6563 + $0xa0] sm:$0xf]
      %v6581 = vld [vmem:[%s6563 + $0xa8] sm:$0xf]
      %v6582 = vld [vmem:[%s6563 + $0xb0] sm:$0xf]
      %v6583 = vld [vmem:[%s6563 + $0xb8] sm:$0xf]
      %v6584 = vld [vmem:[%s6563 + $0xc0] sm:$0xf]
      %v6585 = vld [vmem:[%s6563 + $0xc8] sm:$0xf]
      %v6586 = vld [vmem:[%s6563 + $0xd0] sm:$0xf]
      %v6587 = vld [vmem:[%s6563 + $0xd8] sm:$0xf]
      %6612 = vrot.lane.b32.xlu0 %v6564, 84
      %v6613 = vpop.permute.xlu0 %6612
      %6614 = vrot.lane.b32.xlu0 %v6565, 84
      %v6615 = vpop.permute.xlu0 %6614
      %6616 = vrot.lane.b32.xlu0 %v6566, 84
      %v6617 = vpop.permute.xlu0 %6616
      %6618 = vrot.lane.b32.xlu0 %v6567, 84
      %v6619 = vpop.permute.xlu0 %6618
      %6620 = vrot.lane.b32.xlu0 %v6568, 84
      %v6621 = vpop.permute.xlu0 %6620
      %6622 = vrot.lane.b32.xlu0 %v6569, 84
      %v6623 = vpop.permute.xlu0 %6622
      %6624 = vrot.lane.b32.xlu0 %v6570, 84
      %v6625 = vpop.permute.xlu0 %6624
      %6626 = vrot.lane.b32.xlu0 %v6571, 84
      %v6627 = vpop.permute.xlu0 %6626
      %6628 = vrot.lane.b32.xlu0 %v6572, 84
      %v6629 = vpop.permute.xlu0 %6628
      %6630 = vrot.lane.b32.xlu0 %v6573, 84
      %v6631 = vpop.permute.xlu0 %6630
      %6632 = vrot.lane.b32.xlu0 %v6574, 84
      %v6633 = vpop.permute.xlu0 %6632
      %6634 = vrot.lane.b32.xlu0 %v6575, 84
      %v6635 = vpop.permute.xlu0 %6634
      %6636 = vrot.lane.b32.xlu0 %v6576, 84
      %v6637 = vpop.permute.xlu0 %6636
      %6638 = vrot.lane.b32.xlu0 %v6577, 84
      %v6639 = vpop.permute.xlu0 %6638
      %6640 = vrot.lane.b32.xlu0 %v6578, 84
      %v6641 = vpop.permute.xlu0 %6640
      %6642 = vrot.lane.b32.xlu0 %v6579, 84
      %v6643 = vpop.permute.xlu0 %6642
      %6644 = vrot.lane.b32.xlu0 %v6580, 84
      %v6645 = vpop.permute.xlu0 %6644
      %6646 = vrot.lane.b32.xlu0 %v6581, 84
      %v6647 = vpop.permute.xlu0 %6646
      %6648 = vrot.lane.b32.xlu0 %v6582, 84
      %v6649 = vpop.permute.xlu0 %6648
      %6650 = vrot.lane.b32.xlu0 %v6583, 84
      %v6651 = vpop.permute.xlu0 %6650
      %6652 = vrot.lane.b32.xlu0 %v6584, 84
      %v6653 = vpop.permute.xlu0 %6652
      %6654 = vrot.lane.b32.xlu0 %v6585, 84
      %v6655 = vpop.permute.xlu0 %6654
      %6656 = vrot.lane.b32.xlu0 %v6586, 84
      %v6657 = vpop.permute.xlu0 %6656
      %6658 = vrot.lane.b32.xlu0 %v6587, 84
      %v6659 = vpop.permute.xlu0 %6658
      %vm6684 = vcmask 716448
      %6685 = vst.msk [vmem:[#allocation2] sm:$0xf] %vm6684, %v6613
      %6686 = vst.msk [vmem:[#allocation2 + $0x4] sm:$0xf] %vm6684, %v6615
      %6687 = vst.msk [vmem:[#allocation2 + $0x8] sm:$0xf] %vm6684, %v6617
      %6688 = vst.msk [vmem:[#allocation2 + $0xc] sm:$0xf] %vm6684, %v6619
      %6689 = vst.msk [vmem:[#allocation2 + $0x10] sm:$0xf] %vm6684, %v6621
      %6690 = vst.msk [vmem:[#allocation2 + $0x14] sm:$0xf] %vm6684, %v6623
      %6691 = vst.msk [vmem:[#allocation2 + $0x18] sm:$0xf] %vm6684, %v6625
      %6692 = vst.msk [vmem:[#allocation2 + $0x1c] sm:$0xf] %vm6684, %v6627
      %6693 = vst.msk [vmem:[#allocation2 + $0x20] sm:$0xf] %vm6684, %v6629
      %6694 = vst.msk [vmem:[#allocation2 + $0x24] sm:$0xf] %vm6684, %v6631
      %6695 = vst.msk [vmem:[#allocation2 + $0x28] sm:$0xf] %vm6684, %v6633
      %6696 = vst.msk [vmem:[#allocation2 + $0x2c] sm:$0xf] %vm6684, %v6635
      %6697 = vst.msk [vmem:[#allocation2 + $0x30] sm:$0xf] %vm6684, %v6637
      %6698 = vst.msk [vmem:[#allocation2 + $0x34] sm:$0xf] %vm6684, %v6639
      %6699 = vst.msk [vmem:[#allocation2 + $0x38] sm:$0xf] %vm6684, %v6641
      %6700 = vst.msk [vmem:[#allocation2 + $0x3c] sm:$0xf] %vm6684, %v6643
      %6701 = vst.msk [vmem:[#allocation2 + $0x40] sm:$0xf] %vm6684, %v6645
      %6702 = vst.msk [vmem:[#allocation2 + $0x44] sm:$0xf] %vm6684, %v6647
      %6703 = vst.msk [vmem:[#allocation2 + $0x48] sm:$0xf] %vm6684, %v6649
      %6704 = vst.msk [vmem:[#allocation2 + $0x4c] sm:$0xf] %vm6684, %v6651
      %6705 = vst.msk [vmem:[#allocation2 + $0x50] sm:$0xf] %vm6684, %v6653
      %6706 = vst.msk [vmem:[#allocation2 + $0x54] sm:$0xf] %vm6684, %v6655
      %6707 = vst.msk [vmem:[#allocation2 + $0x58] sm:$0xf] %vm6684, %v6657
      %6708 = vst.msk [vmem:[#allocation2 + $0x5c] sm:$0xf] %vm6684, %v6659
      %v6709 = vld [vmem:[%s6563] sm:$0xf]
      %v6710 = vld [vmem:[%s6563 + $0x4] sm:$0x1]
      %v6711 = vld [vmem:[%s6563 + $0x8] sm:$0xf]
      %v6712 = vld [vmem:[%s6563 + $0xc] sm:$0x1]
      %v6713 = vld [vmem:[%s6563 + $0x10] sm:$0xf]
      %v6714 = vld [vmem:[%s6563 + $0x14] sm:$0x1]
      %v6715 = vld [vmem:[%s6563 + $0x18] sm:$0xf]
      %v6716 = vld [vmem:[%s6563 + $0x1c] sm:$0x1]
      %v6717 = vld [vmem:[%s6563 + $0x20] sm:$0xf]
      %v6718 = vld [vmem:[%s6563 + $0x24] sm:$0x1]
      %v6719 = vld [vmem:[%s6563 + $0x28] sm:$0xf]
      %v6720 = vld [vmem:[%s6563 + $0x2c] sm:$0x1]
      %v6721 = vld [vmem:[%s6563 + $0x30] sm:$0xf]
      %v6722 = vld [vmem:[%s6563 + $0x34] sm:$0x1]
      %v6723 = vld [vmem:[%s6563 + $0x38] sm:$0xf]
      %v6724 = vld [vmem:[%s6563 + $0x3c] sm:$0x1]
      %v6725 = vld [vmem:[%s6563 + $0x50] sm:$0xf]
      %v6726 = vld [vmem:[%s6563 + $0x54] sm:$0x1]
      %v6727 = vld [vmem:[%s6563 + $0x58] sm:$0xf]
      %v6728 = vld [vmem:[%s6563 + $0x5c] sm:$0x1]
      %v6729 = vld [vmem:[%s6563 + $0x60] sm:$0xf]
      %v6730 = vld [vmem:[%s6563 + $0x64] sm:$0x1]
      %v6731 = vld [vmem:[%s6563 + $0x68] sm:$0xf]
      %v6732 = vld [vmem:[%s6563 + $0x6c] sm:$0x1]
      %v6733 = vld [vmem:[%s6563 + $0x70] sm:$0xf]
      %v6734 = vld [vmem:[%s6563 + $0x74] sm:$0x1]
      %v6735 = vld [vmem:[%s6563 + $0x78] sm:$0xf]
      %v6736 = vld [vmem:[%s6563 + $0x7c] sm:$0x1]
      %v6737 = vld [vmem:[%s6563 + $0x80] sm:$0xf]
      %v6738 = vld [vmem:[%s6563 + $0x84] sm:$0x1]
      %v6739 = vld [vmem:[%s6563 + $0x88] sm:$0xf]
      %v6740 = vld [vmem:[%s6563 + $0x8c] sm:$0x1]
      %v6741 = vld [vmem:[%s6563 + $0xa0] sm:$0xf]
      %v6742 = vld [vmem:[%s6563 + $0xa4] sm:$0x1]
      %v6743 = vld [vmem:[%s6563 + $0xa8] sm:$0xf]
      %v6744 = vld [vmem:[%s6563 + $0xac] sm:$0x1]
      %v6745 = vld [vmem:[%s6563 + $0xb0] sm:$0xf]
      %v6746 = vld [vmem:[%s6563 + $0xb4] sm:$0x1]
      %v6747 = vld [vmem:[%s6563 + $0xb8] sm:$0xf]
      %v6748 = vld [vmem:[%s6563 + $0xbc] sm:$0x1]
      %v6749 = vld [vmem:[%s6563 + $0xc0] sm:$0xf]
      %v6750 = vld [vmem:[%s6563 + $0xc4] sm:$0x1]
      %v6751 = vld [vmem:[%s6563 + $0xc8] sm:$0xf]
      %v6752 = vld [vmem:[%s6563 + $0xcc] sm:$0x1]
      %v6753 = vld [vmem:[%s6563 + $0xd0] sm:$0xf]
      %v6754 = vld [vmem:[%s6563 + $0xd4] sm:$0x1]
      %v6755 = vld [vmem:[%s6563 + $0xd8] sm:$0xf]
      %v6756 = vld [vmem:[%s6563 + $0xdc] sm:$0x1]
      %v6758 = vshrl.u32 %v6709, 16
      %v6760 = vrot.slane %v6758, 4
      %v6761 = vshll.u32 %v6709, 16
      %v6763 = vrot.slane %v6761, 5
      %v6764 = vor.u32 %v6760, %v6763
      %v6765 = vrot.slane %v6764, 4
      %v6767 = vshll.u32 %v6710, 16
      %v6769 = vrot.slane %v6767, 5
      %v6770 = vsel %vm341, %v6765, %v6769
      %v6772 = vshrl.u32 %v6711, 16
      %v6774 = vrot.slane %v6772, 4
      %v6775 = vshll.u32 %v6711, 16
      %v6777 = vrot.slane %v6775, 5
      %v6778 = vor.u32 %v6774, %v6777
      %v6779 = vrot.slane %v6778, 4
      %v6781 = vshll.u32 %v6712, 16
      %v6783 = vrot.slane %v6781, 5
      %v6784 = vsel %vm341, %v6779, %v6783
      %v6786 = vshrl.u32 %v6713, 16
      %v6788 = vrot.slane %v6786, 4
      %v6789 = vshll.u32 %v6713, 16
      %v6791 = vrot.slane %v6789, 5
      %v6792 = vor.u32 %v6788, %v6791
      %v6793 = vrot.slane %v6792, 4
      %v6795 = vshll.u32 %v6714, 16
      %v6797 = vrot.slane %v6795, 5
      %v6798 = vsel %vm341, %v6793, %v6797
      %v6800 = vshrl.u32 %v6715, 16
      %v6802 = vrot.slane %v6800, 4
      %v6803 = vshll.u32 %v6715, 16
      %v6805 = vrot.slane %v6803, 5
      %v6806 = vor.u32 %v6802, %v6805
      %v6807 = vrot.slane %v6806, 4
      %v6809 = vshll.u32 %v6716, 16
      %v6811 = vrot.slane %v6809, 5
      %v6812 = vsel %vm341, %v6807, %v6811
      %v6814 = vshrl.u32 %v6717, 16
      %v6816 = vrot.slane %v6814, 4
      %v6817 = vshll.u32 %v6717, 16
      %v6819 = vrot.slane %v6817, 5
      %v6820 = vor.u32 %v6816, %v6819
      %v6821 = vrot.slane %v6820, 4
      %v6823 = vshll.u32 %v6718, 16
      %v6825 = vrot.slane %v6823, 5
      %v6826 = vsel %vm341, %v6821, %v6825
      %v6828 = vshrl.u32 %v6719, 16
      %v6830 = vrot.slane %v6828, 4
      %v6831 = vshll.u32 %v6719, 16
      %v6833 = vrot.slane %v6831, 5
      %v6834 = vor.u32 %v6830, %v6833
      %v6835 = vrot.slane %v6834, 4
      %v6837 = vshll.u32 %v6720, 16
      %v6839 = vrot.slane %v6837, 5
      %v6840 = vsel %vm341, %v6835, %v6839
      %v6842 = vshrl.u32 %v6721, 16
      %v6844 = vrot.slane %v6842, 4
      %v6845 = vshll.u32 %v6721, 16
      %v6847 = vrot.slane %v6845, 5
      %v6848 = vor.u32 %v6844, %v6847
      %v6849 = vrot.slane %v6848, 4
      %v6851 = vshll.u32 %v6722, 16
      %v6853 = vrot.slane %v6851, 5
      %v6854 = vsel %vm341, %v6849, %v6853
      %v6856 = vshrl.u32 %v6723, 16
      %v6858 = vrot.slane %v6856, 4
      %v6859 = vshll.u32 %v6723, 16
      %v6861 = vrot.slane %v6859, 5
      %v6862 = vor.u32 %v6858, %v6861
      %v6863 = vrot.slane %v6862, 4
      %v6865 = vshll.u32 %v6724, 16
      %v6867 = vrot.slane %v6865, 5
      %v6868 = vsel %vm341, %v6863, %v6867
      %v6870 = vshrl.u32 %v6725, 16
      %v6872 = vrot.slane %v6870, 4
      %v6873 = vshll.u32 %v6725, 16
      %v6875 = vrot.slane %v6873, 5
      %v6876 = vor.u32 %v6872, %v6875
      %v6877 = vrot.slane %v6876, 4
      %v6879 = vshll.u32 %v6726, 16
      %v6881 = vrot.slane %v6879, 5
      %v6882 = vsel %vm341, %v6877, %v6881
      %v6884 = vshrl.u32 %v6727, 16
      %v6886 = vrot.slane %v6884, 4
      %v6887 = vshll.u32 %v6727, 16
      %v6889 = vrot.slane %v6887, 5
      %v6890 = vor.u32 %v6886, %v6889
      %v6891 = vrot.slane %v6890, 4
      %v6893 = vshll.u32 %v6728, 16
      %v6895 = vrot.slane %v6893, 5
      %v6896 = vsel %vm341, %v6891, %v6895
      %v6898 = vshrl.u32 %v6729, 16
      %v6900 = vrot.slane %v6898, 4
      %v6901 = vshll.u32 %v6729, 16
      %v6903 = vrot.slane %v6901, 5
      %v6904 = vor.u32 %v6900, %v6903
      %v6905 = vrot.slane %v6904, 4
      %v6907 = vshll.u32 %v6730, 16
      %v6909 = vrot.slane %v6907, 5
      %v6910 = vsel %vm341, %v6905, %v6909
      %v6912 = vshrl.u32 %v6731, 16
      %v6914 = vrot.slane %v6912, 4
      %v6915 = vshll.u32 %v6731, 16
      %v6917 = vrot.slane %v6915, 5
      %v6918 = vor.u32 %v6914, %v6917
      %v6919 = vrot.slane %v6918, 4
      %v6921 = vshll.u32 %v6732, 16
      %v6923 = vrot.slane %v6921, 5
      %v6924 = vsel %vm341, %v6919, %v6923
      %v6926 = vshrl.u32 %v6733, 16
      %v6928 = vrot.slane %v6926, 4
      %v6929 = vshll.u32 %v6733, 16
      %v6931 = vrot.slane %v6929, 5
      %v6932 = vor.u32 %v6928, %v6931
      %v6933 = vrot.slane %v6932, 4
      %v6935 = vshll.u32 %v6734, 16
      %v6937 = vrot.slane %v6935, 5
      %v6938 = vsel %vm341, %v6933, %v6937
      %v6940 = vshrl.u32 %v6735, 16
      %v6942 = vrot.slane %v6940, 4
      %v6943 = vshll.u32 %v6735, 16
      %v6945 = vrot.slane %v6943, 5
      %v6946 = vor.u32 %v6942, %v6945
      %v6947 = vrot.slane %v6946, 4
      %v6949 = vshll.u32 %v6736, 16
      %v6951 = vrot.slane %v6949, 5
      %v6952 = vsel %vm341, %v6947, %v6951
      %v6954 = vshrl.u32 %v6737, 16
      %v6956 = vrot.slane %v6954, 4
      %v6957 = vshll.u32 %v6737, 16
      %v6959 = vrot.slane %v6957, 5
      %v6960 = vor.u32 %v6956, %v6959
      %v6961 = vrot.slane %v6960, 4
      %v6963 = vshll.u32 %v6738, 16
      %v6965 = vrot.slane %v6963, 5
      %v6966 = vsel %vm341, %v6961, %v6965
      %v6968 = vshrl.u32 %v6739, 16
      %v6970 = vrot.slane %v6968, 4
      %v6971 = vshll.u32 %v6739, 16
      %v6973 = vrot.slane %v6971, 5
      %v6974 = vor.u32 %v6970, %v6973
      %v6975 = vrot.slane %v6974, 4
      %v6977 = vshll.u32 %v6740, 16
      %v6979 = vrot.slane %v6977, 5
      %v6980 = vsel %vm341, %v6975, %v6979
      %v6982 = vshrl.u32 %v6741, 16
      %v6984 = vrot.slane %v6982, 4
      %v6985 = vshll.u32 %v6741, 16
      %v6987 = vrot.slane %v6985, 5
      %v6988 = vor.u32 %v6984, %v6987
      %v6989 = vrot.slane %v6988, 4
      %v6991 = vshll.u32 %v6742, 16
      %v6993 = vrot.slane %v6991, 5
      %v6994 = vsel %vm341, %v6989, %v6993
      %v6996 = vshrl.u32 %v6743, 16
      %v6998 = vrot.slane %v6996, 4
      %v6999 = vshll.u32 %v6743, 16
      %v7001 = vrot.slane %v6999, 5
      %v7002 = vor.u32 %v6998, %v7001
      %v7003 = vrot.slane %v7002, 4
      %v7005 = vshll.u32 %v6744, 16
      %v7007 = vrot.slane %v7005, 5
      %v7008 = vsel %vm341, %v7003, %v7007
      %v7010 = vshrl.u32 %v6745, 16
      %v7012 = vrot.slane %v7010, 4
      %v7013 = vshll.u32 %v6745, 16
      %v7015 = vrot.slane %v7013, 5
      %v7016 = vor.u32 %v7012, %v7015
      %v7017 = vrot.slane %v7016, 4
      %v7019 = vshll.u32 %v6746, 16
      %v7021 = vrot.slane %v7019, 5
      %v7022 = vsel %vm341, %v7017, %v7021
      %v7024 = vshrl.u32 %v6747, 16
      %v7026 = vrot.slane %v7024, 4
      %v7027 = vshll.u32 %v6747, 16
      %v7029 = vrot.slane %v7027, 5
      %v7030 = vor.u32 %v7026, %v7029
      %v7031 = vrot.slane %v7030, 4
      %v7033 = vshll.u32 %v6748, 16
      %v7035 = vrot.slane %v7033, 5
      %v7036 = vsel %vm341, %v7031, %v7035
      %v7038 = vshrl.u32 %v6749, 16
      %v7040 = vrot.slane %v7038, 4
      %v7041 = vshll.u32 %v6749, 16
      %v7043 = vrot.slane %v7041, 5
      %v7044 = vor.u32 %v7040, %v7043
      %v7045 = vrot.slane %v7044, 4
      %v7047 = vshll.u32 %v6750, 16
      %v7049 = vrot.slane %v7047, 5
      %v7050 = vsel %vm341, %v7045, %v7049
      %v7052 = vshrl.u32 %v6751, 16
      %v7054 = vrot.slane %v7052, 4
      %v7055 = vshll.u32 %v6751, 16
      %v7057 = vrot.slane %v7055, 5
      %v7058 = vor.u32 %v7054, %v7057
      %v7059 = vrot.slane %v7058, 4
      %v7061 = vshll.u32 %v6752, 16
      %v7063 = vrot.slane %v7061, 5
      %v7064 = vsel %vm341, %v7059, %v7063
      %v7066 = vshrl.u32 %v6753, 16
      %v7068 = vrot.slane %v7066, 4
      %v7069 = vshll.u32 %v6753, 16
      %v7071 = vrot.slane %v7069, 5
      %v7072 = vor.u32 %v7068, %v7071
      %v7073 = vrot.slane %v7072, 4
      %v7075 = vshll.u32 %v6754, 16
      %v7077 = vrot.slane %v7075, 5
      %v7078 = vsel %vm341, %v7073, %v7077
      %v7080 = vshrl.u32 %v6755, 16
      %v7082 = vrot.slane %v7080, 4
      %v7083 = vshll.u32 %v6755, 16
      %v7085 = vrot.slane %v7083, 5
      %v7086 = vor.u32 %v7082, %v7085
      %v7087 = vrot.slane %v7086, 4
      %v7089 = vshll.u32 %v6756, 16
      %v7091 = vrot.slane %v7089, 5
      %v7092 = vsel %vm341, %v7087, %v7091
      %7093 = vrot.lane.b32.xlu0 %v6770, 88
      %v7094 = vpop.permute.xlu0 %7093
      %7095 = vrot.lane.b32.xlu0 %v6784, 88
      %v7096 = vpop.permute.xlu0 %7095
      %7097 = vrot.lane.b32.xlu0 %v6798, 88
      %v7098 = vpop.permute.xlu0 %7097
      %7099 = vrot.lane.b32.xlu0 %v6812, 88
      %v7100 = vpop.permute.xlu0 %7099
      %7101 = vrot.lane.b32.xlu0 %v6826, 88
      %v7102 = vpop.permute.xlu0 %7101
      %7103 = vrot.lane.b32.xlu0 %v6840, 88
      %v7104 = vpop.permute.xlu0 %7103
      %7105 = vrot.lane.b32.xlu0 %v6854, 88
      %v7106 = vpop.permute.xlu0 %7105
      %7107 = vrot.lane.b32.xlu0 %v6868, 88
      %v7108 = vpop.permute.xlu0 %7107
      %7109 = vrot.lane.b32.xlu0 %v6882, 88
      %v7110 = vpop.permute.xlu0 %7109
      %7111 = vrot.lane.b32.xlu0 %v6896, 88
      %v7112 = vpop.permute.xlu0 %7111
      %7113 = vrot.lane.b32.xlu0 %v6910, 88
      %v7114 = vpop.permute.xlu0 %7113
      %7115 = vrot.lane.b32.xlu0 %v6924, 88
      %v7116 = vpop.permute.xlu0 %7115
      %7117 = vrot.lane.b32.xlu0 %v6938, 88
      %v7118 = vpop.permute.xlu0 %7117
      %7119 = vrot.lane.b32.xlu0 %v6952, 88
      %v7120 = vpop.permute.xlu0 %7119
      %7121 = vrot.lane.b32.xlu0 %v6966, 88
      %v7122 = vpop.permute.xlu0 %7121
      %7123 = vrot.lane.b32.xlu0 %v6980, 88
      %v7124 = vpop.permute.xlu0 %7123
      %7125 = vrot.lane.b32.xlu0 %v6994, 88
      %v7126 = vpop.permute.xlu0 %7125
      %7127 = vrot.lane.b32.xlu0 %v7008, 88
      %v7128 = vpop.permute.xlu0 %7127
      %7129 = vrot.lane.b32.xlu0 %v7022, 88
      %v7130 = vpop.permute.xlu0 %7129
      %7131 = vrot.lane.b32.xlu0 %v7036, 88
      %v7132 = vpop.permute.xlu0 %7131
      %7133 = vrot.lane.b32.xlu0 %v7050, 88
      %v7134 = vpop.permute.xlu0 %7133
      %7135 = vrot.lane.b32.xlu0 %v7064, 88
      %v7136 = vpop.permute.xlu0 %7135
      %7137 = vrot.lane.b32.xlu0 %v7078, 88
      %v7138 = vpop.permute.xlu0 %7137
      %7139 = vrot.lane.b32.xlu0 %v7092, 88
      %v7140 = vpop.permute.xlu0 %7139
      %vm7165 = vcmask 749248
      %7166 = vst.msk [vmem:[#allocation2] sm:$0xf] %vm7165, %v7094
      %7167 = vst.msk [vmem:[#allocation2 + $0x4] sm:$0xf] %vm7165, %v7096
      %7168 = vst.msk [vmem:[#allocation2 + $0x8] sm:$0xf] %vm7165, %v7098
      %7169 = vst.msk [vmem:[#allocation2 + $0xc] sm:$0xf] %vm7165, %v7100
      %7170 = vst.msk [vmem:[#allocation2 + $0x10] sm:$0xf] %vm7165, %v7102
      %7171 = vst.msk [vmem:[#allocation2 + $0x14] sm:$0xf] %vm7165, %v7104
      %7172 = vst.msk [vmem:[#allocation2 + $0x18] sm:$0xf] %vm7165, %v7106
      %7173 = vst.msk [vmem:[#allocation2 + $0x1c] sm:$0xf] %vm7165, %v7108
      %7174 = vst.msk [vmem:[#allocation2 + $0x20] sm:$0xf] %vm7165, %v7110
      %7175 = vst.msk [vmem:[#allocation2 + $0x24] sm:$0xf] %vm7165, %v7112
      %7176 = vst.msk [vmem:[#allocation2 + $0x28] sm:$0xf] %vm7165, %v7114
      %7177 = vst.msk [vmem:[#allocation2 + $0x2c] sm:$0xf] %vm7165, %v7116
      %7178 = vst.msk [vmem:[#allocation2 + $0x30] sm:$0xf] %vm7165, %v7118
      %7179 = vst.msk [vmem:[#allocation2 + $0x34] sm:$0xf] %vm7165, %v7120
      %7180 = vst.msk [vmem:[#allocation2 + $0x38] sm:$0xf] %vm7165, %v7122
      %7181 = vst.msk [vmem:[#allocation2 + $0x3c] sm:$0xf] %vm7165, %v7124
      %7182 = vst.msk [vmem:[#allocation2 + $0x40] sm:$0xf] %vm7165, %v7126
      %7183 = vst.msk [vmem:[#allocation2 + $0x44] sm:$0xf] %vm7165, %v7128
      %7184 = vst.msk [vmem:[#allocation2 + $0x48] sm:$0xf] %vm7165, %v7130
      %7185 = vst.msk [vmem:[#allocation2 + $0x4c] sm:$0xf] %vm7165, %v7132
      %7186 = vst.msk [vmem:[#allocation2 + $0x50] sm:$0xf] %vm7165, %v7134
      %7187 = vst.msk [vmem:[#allocation2 + $0x54] sm:$0xf] %vm7165, %v7136
      %7188 = vst.msk [vmem:[#allocation2 + $0x58] sm:$0xf] %vm7165, %v7138
      %7189 = vst.msk [vmem:[#allocation2 + $0x5c] sm:$0xf] %vm7165, %v7140
      %v7190 = vld [vmem:[%s6563] sm:$0xe]
      %v7191 = vld [vmem:[%s6563 + $0x4] sm:$0x1]
      %v7192 = vld [vmem:[%s6563 + $0x8] sm:$0xe]
      %v7193 = vld [vmem:[%s6563 + $0xc] sm:$0x1]
      %v7194 = vld [vmem:[%s6563 + $0x10] sm:$0xe]
      %v7195 = vld [vmem:[%s6563 + $0x14] sm:$0x1]
      %v7196 = vld [vmem:[%s6563 + $0x18] sm:$0xe]
      %v7197 = vld [vmem:[%s6563 + $0x1c] sm:$0x1]
      %v7198 = vld [vmem:[%s6563 + $0x20] sm:$0xe]
      %v7199 = vld [vmem:[%s6563 + $0x24] sm:$0x1]
      %v7200 = vld [vmem:[%s6563 + $0x28] sm:$0xe]
      %v7201 = vld [vmem:[%s6563 + $0x2c] sm:$0x1]
      %v7202 = vld [vmem:[%s6563 + $0x30] sm:$0xe]
      %v7203 = vld [vmem:[%s6563 + $0x34] sm:$0x1]
      %v7204 = vld [vmem:[%s6563 + $0x38] sm:$0xe]
      %v7205 = vld [vmem:[%s6563 + $0x3c] sm:$0x1]
      %v7206 = vld [vmem:[%s6563 + $0x50] sm:$0xe]
      %v7207 = vld [vmem:[%s6563 + $0x54] sm:$0x1]
      %v7208 = vld [vmem:[%s6563 + $0x58] sm:$0xe]
      %v7209 = vld [vmem:[%s6563 + $0x5c] sm:$0x1]
      %v7210 = vld [vmem:[%s6563 + $0x60] sm:$0xe]
      %v7211 = vld [vmem:[%s6563 + $0x64] sm:$0x1]
      %v7212 = vld [vmem:[%s6563 + $0x68] sm:$0xe]
      %v7213 = vld [vmem:[%s6563 + $0x6c] sm:$0x1]
      %v7214 = vld [vmem:[%s6563 + $0x70] sm:$0xe]
      %v7215 = vld [vmem:[%s6563 + $0x74] sm:$0x1]
      %v7216 = vld [vmem:[%s6563 + $0x78] sm:$0xe]
      %v7217 = vld [vmem:[%s6563 + $0x7c] sm:$0x1]
      %v7218 = vld [vmem:[%s6563 + $0x80] sm:$0xe]
      %v7219 = vld [vmem:[%s6563 + $0x84] sm:$0x1]
      %v7220 = vld [vmem:[%s6563 + $0x88] sm:$0xe]
      %v7221 = vld [vmem:[%s6563 + $0x8c] sm:$0x1]
      %v7222 = vld [vmem:[%s6563 + $0xa0] sm:$0xe]
      %v7223 = vld [vmem:[%s6563 + $0xa4] sm:$0x1]
      %v7224 = vld [vmem:[%s6563 + $0xa8] sm:$0xe]
      %v7225 = vld [vmem:[%s6563 + $0xac] sm:$0x1]
      %v7226 = vld [vmem:[%s6563 + $0xb0] sm:$0xe]
      %v7227 = vld [vmem:[%s6563 + $0xb4] sm:$0x1]
      %v7228 = vld [vmem:[%s6563 + $0xb8] sm:$0xe]
      %v7229 = vld [vmem:[%s6563 + $0xbc] sm:$0x1]
      %v7230 = vld [vmem:[%s6563 + $0xc0] sm:$0xe]
      %v7231 = vld [vmem:[%s6563 + $0xc4] sm:$0x1]
      %v7232 = vld [vmem:[%s6563 + $0xc8] sm:$0xe]
      %v7233 = vld [vmem:[%s6563 + $0xcc] sm:$0x1]
      %v7234 = vld [vmem:[%s6563 + $0xd0] sm:$0xe]
      %v7235 = vld [vmem:[%s6563 + $0xd4] sm:$0x1]
      %v7236 = vld [vmem:[%s6563 + $0xd8] sm:$0xe]
      %v7237 = vld [vmem:[%s6563 + $0xdc] sm:$0x1]
      %v7286 = vrot.slane %v7190, 5
      %v7287 = vrot.slane %v7286, 4
      %v7288 = vrot.slane %v7191, 5
      %v7289 = vsel %vm873, %v7287, %v7288
      %v7290 = vrot.slane %v7192, 5
      %v7291 = vrot.slane %v7290, 4
      %v7292 = vrot.slane %v7193, 5
      %v7293 = vsel %vm873, %v7291, %v7292
      %v7294 = vrot.slane %v7194, 5
      %v7295 = vrot.slane %v7294, 4
      %v7296 = vrot.slane %v7195, 5
      %v7297 = vsel %vm873, %v7295, %v7296
      %v7298 = vrot.slane %v7196, 5
      %v7299 = vrot.slane %v7298, 4
      %v7300 = vrot.slane %v7197, 5
      %v7301 = vsel %vm873, %v7299, %v7300
      %v7302 = vrot.slane %v7198, 5
      %v7303 = vrot.slane %v7302, 4
      %v7304 = vrot.slane %v7199, 5
      %v7305 = vsel %vm873, %v7303, %v7304
      %v7306 = vrot.slane %v7200, 5
      %v7307 = vrot.slane %v7306, 4
      %v7308 = vrot.slane %v7201, 5
      %v7309 = vsel %vm873, %v7307, %v7308
      %v7310 = vrot.slane %v7202, 5
      %v7311 = vrot.slane %v7310, 4
      %v7312 = vrot.slane %v7203, 5
      %v7313 = vsel %vm873, %v7311, %v7312
      %v7314 = vrot.slane %v7204, 5
      %v7315 = vrot.slane %v7314, 4
      %v7316 = vrot.slane %v7205, 5
      %v7317 = vsel %vm873, %v7315, %v7316
      %v7318 = vrot.slane %v7206, 5
      %v7319 = vrot.slane %v7318, 4
      %v7320 = vrot.slane %v7207, 5
      %v7321 = vsel %vm873, %v7319, %v7320
      %v7322 = vrot.slane %v7208, 5
      %v7323 = vrot.slane %v7322, 4
      %v7324 = vrot.slane %v7209, 5
      %v7325 = vsel %vm873, %v7323, %v7324
      %v7326 = vrot.slane %v7210, 5
      %v7327 = vrot.slane %v7326, 4
      %v7328 = vrot.slane %v7211, 5
      %v7329 = vsel %vm873, %v7327, %v7328
      %v7330 = vrot.slane %v7212, 5
      %v7331 = vrot.slane %v7330, 4
      %v7332 = vrot.slane %v7213, 5
      %v7333 = vsel %vm873, %v7331, %v7332
      %v7334 = vrot.slane %v7214, 5
      %v7335 = vrot.slane %v7334, 4
      %v7336 = vrot.slane %v7215, 5
      %v7337 = vsel %vm873, %v7335, %v7336
      %v7338 = vrot.slane %v7216, 5
      %v7339 = vrot.slane %v7338, 4
      %v7340 = vrot.slane %v7217, 5
      %v7341 = vsel %vm873, %v7339, %v7340
      %v7342 = vrot.slane %v7218, 5
      %v7343 = vrot.slane %v7342, 4
      %v7344 = vrot.slane %v7219, 5
      %v7345 = vsel %vm873, %v7343, %v7344
      %v7346 = vrot.slane %v7220, 5
      %v7347 = vrot.slane %v7346, 4
      %v7348 = vrot.slane %v7221, 5
      %v7349 = vsel %vm873, %v7347, %v7348
      %v7350 = vrot.slane %v7222, 5
      %v7351 = vrot.slane %v7350, 4
      %v7352 = vrot.slane %v7223, 5
      %v7353 = vsel %vm873, %v7351, %v7352
      %v7354 = vrot.slane %v7224, 5
      %v7355 = vrot.slane %v7354, 4
      %v7356 = vrot.slane %v7225, 5
      %v7357 = vsel %vm873, %v7355, %v7356
      %v7358 = vrot.slane %v7226, 5
      %v7359 = vrot.slane %v7358, 4
      %v7360 = vrot.slane %v7227, 5
      %v7361 = vsel %vm873, %v7359, %v7360
      %v7362 = vrot.slane %v7228, 5
      %v7363 = vrot.slane %v7362, 4
      %v7364 = vrot.slane %v7229, 5
      %v7365 = vsel %vm873, %v7363, %v7364
      %v7366 = vrot.slane %v7230, 5
      %v7367 = vrot.slane %v7366, 4
      %v7368 = vrot.slane %v7231, 5
      %v7369 = vsel %vm873, %v7367, %v7368
      %v7370 = vrot.slane %v7232, 5
      %v7371 = vrot.slane %v7370, 4
      %v7372 = vrot.slane %v7233, 5
      %v7373 = vsel %vm873, %v7371, %v7372
      %v7374 = vrot.slane %v7234, 5
      %v7375 = vrot.slane %v7374, 4
      %v7376 = vrot.slane %v7235, 5
      %v7377 = vsel %vm873, %v7375, %v7376
      %v7378 = vrot.slane %v7236, 5
      %v7379 = vrot.slane %v7378, 4
      %v7380 = vrot.slane %v7237, 5
      %v7381 = vsel %vm873, %v7379, %v7380
      %7382 = vrot.lane.b32.xlu0 %v7289, 92
      %v7383 = vpop.permute.xlu0 %7382
      %7384 = vrot.lane.b32.xlu0 %v7293, 92
      %v7385 = vpop.permute.xlu0 %7384
      %7386 = vrot.lane.b32.xlu0 %v7297, 92
      %v7387 = vpop.permute.xlu0 %7386
      %7388 = vrot.lane.b32.xlu0 %v7301, 92
      %v7389 = vpop.permute.xlu0 %7388
      %7390 = vrot.lane.b32.xlu0 %v7305, 92
      %v7391 = vpop.permute.xlu0 %7390
      %7392 = vrot.lane.b32.xlu0 %v7309, 92
      %v7393 = vpop.permute.xlu0 %7392
      %7394 = vrot.lane.b32.xlu0 %v7313, 92
      %v7395 = vpop.permute.xlu0 %7394
      %7396 = vrot.lane.b32.xlu0 %v7317, 92
      %v7397 = vpop.permute.xlu0 %7396
      %7398 = vrot.lane.b32.xlu0 %v7321, 92
      %v7399 = vpop.permute.xlu0 %7398
      %7400 = vrot.lane.b32.xlu0 %v7325, 92
      %v7401 = vpop.permute.xlu0 %7400
      %7402 = vrot.lane.b32.xlu0 %v7329, 92
      %v7403 = vpop.permute.xlu0 %7402
      %7404 = vrot.lane.b32.xlu0 %v7333, 92
      %v7405 = vpop.permute.xlu0 %7404
      %7406 = vrot.lane.b32.xlu0 %v7337, 92
      %v7407 = vpop.permute.xlu0 %7406
      %7408 = vrot.lane.b32.xlu0 %v7341, 92
      %v7409 = vpop.permute.xlu0 %7408
      %7410 = vrot.lane.b32.xlu0 %v7345, 92
      %v7411 = vpop.permute.xlu0 %7410
      %7412 = vrot.lane.b32.xlu0 %v7349, 92
      %v7413 = vpop.permute.xlu0 %7412
      %7414 = vrot.lane.b32.xlu0 %v7353, 92
      %v7415 = vpop.permute.xlu0 %7414
      %7416 = vrot.lane.b32.xlu0 %v7357, 92
      %v7417 = vpop.permute.xlu0 %7416
      %7418 = vrot.lane.b32.xlu0 %v7361, 92
      %v7419 = vpop.permute.xlu0 %7418
      %7420 = vrot.lane.b32.xlu0 %v7365, 92
      %v7421 = vpop.permute.xlu0 %7420
      %7422 = vrot.lane.b32.xlu0 %v7369, 92
      %v7423 = vpop.permute.xlu0 %7422
      %7424 = vrot.lane.b32.xlu0 %v7373, 92
      %v7425 = vpop.permute.xlu0 %7424
      %7426 = vrot.lane.b32.xlu0 %v7377, 92
      %v7427 = vpop.permute.xlu0 %7426
      %7428 = vrot.lane.b32.xlu0 %v7381, 92
      %v7429 = vpop.permute.xlu0 %7428
      %vm7454 = vcmask 782048
      %7455 = vst.msk [vmem:[#allocation2] sm:$0xf] %vm7454, %v7383
      %7456 = vst.msk [vmem:[#allocation2 + $0x4] sm:$0xf] %vm7454, %v7385
      %7457 = vst.msk [vmem:[#allocation2 + $0x8] sm:$0xf] %vm7454, %v7387
      %7458 = vst.msk [vmem:[#allocation2 + $0xc] sm:$0xf] %vm7454, %v7389
      %7459 = vst.msk [vmem:[#allocation2 + $0x10] sm:$0xf] %vm7454, %v7391
      %7460 = vst.msk [vmem:[#allocation2 + $0x14] sm:$0xf] %vm7454, %v7393
      %7461 = vst.msk [vmem:[#allocation2 + $0x18] sm:$0xf] %vm7454, %v7395
      %7462 = vst.msk [vmem:[#allocation2 + $0x1c] sm:$0xf] %vm7454, %v7397
      %7463 = vst.msk [vmem:[#allocation2 + $0x20] sm:$0xf] %vm7454, %v7399
      %7464 = vst.msk [vmem:[#allocation2 + $0x24] sm:$0xf] %vm7454, %v7401
      %7465 = vst.msk [vmem:[#allocation2 + $0x28] sm:$0xf] %vm7454, %v7403
      %7466 = vst.msk [vmem:[#allocation2 + $0x2c] sm:$0xf] %vm7454, %v7405
      %7467 = vst.msk [vmem:[#allocation2 + $0x30] sm:$0xf] %vm7454, %v7407
      %7468 = vst.msk [vmem:[#allocation2 + $0x34] sm:$0xf] %vm7454, %v7409
      %7469 = vst.msk [vmem:[#allocation2 + $0x38] sm:$0xf] %vm7454, %v7411
      %7470 = vst.msk [vmem:[#allocation2 + $0x3c] sm:$0xf] %vm7454, %v7413
      %7471 = vst.msk [vmem:[#allocation2 + $0x40] sm:$0xf] %vm7454, %v7415
      %7472 = vst.msk [vmem:[#allocation2 + $0x44] sm:$0xf] %vm7454, %v7417
      %7473 = vst.msk [vmem:[#allocation2 + $0x48] sm:$0xf] %vm7454, %v7419
      %7474 = vst.msk [vmem:[#allocation2 + $0x4c] sm:$0xf] %vm7454, %v7421
      %7475 = vst.msk [vmem:[#allocation2 + $0x50] sm:$0xf] %vm7454, %v7423
      %7476 = vst.msk [vmem:[#allocation2 + $0x54] sm:$0xf] %vm7454, %v7425
      %7477 = vst.msk [vmem:[#allocation2 + $0x58] sm:$0xf] %vm7454, %v7427
      %7478 = vst.msk [vmem:[#allocation2 + $0x5c] sm:$0xf] %vm7454, %v7429
      %s7479 = scalar_lea.vmem %s221, 176
      %v7480 = vld [vmem:[%s7479] sm:$0xf]
      %v7481 = vld [vmem:[%s7479 + $0x8] sm:$0xf]
      %v7482 = vld [vmem:[%s7479 + $0x10] sm:$0xf]
      %v7483 = vld [vmem:[%s7479 + $0x18] sm:$0xf]
      %v7484 = vld [vmem:[%s7479 + $0x20] sm:$0xf]
      %v7485 = vld [vmem:[%s7479 + $0x28] sm:$0xf]
      %v7486 = vld [vmem:[%s7479 + $0x30] sm:$0xf]
      %v7487 = vld [vmem:[%s7479 + $0x38] sm:$0xf]
      %v7488 = vld [vmem:[%s7479 + $0x50] sm:$0xf]
      %v7489 = vld [vmem:[%s7479 + $0x58] sm:$0xf]
      %v7490 = vld [vmem:[%s7479 + $0x60] sm:$0xf]
      %v7491 = vld [vmem:[%s7479 + $0x68] sm:$0xf]
      %v7492 = vld [vmem:[%s7479 + $0x70] sm:$0xf]
      %v7493 = vld [vmem:[%s7479 + $0x78] sm:$0xf]
      %v7494 = vld [vmem:[%s7479 + $0x80] sm:$0xf]
      %v7495 = vld [vmem:[%s7479 + $0x88] sm:$0xf]
      %v7496 = vld [vmem:[%s7479 + $0xa0] sm:$0xf]
      %v7497 = vld [vmem:[%s7479 + $0xa8] sm:$0xf]
      %v7498 = vld [vmem:[%s7479 + $0xb0] sm:$0xf]
      %v7499 = vld [vmem:[%s7479 + $0xb8] sm:$0xf]
      %v7500 = vld [vmem:[%s7479 + $0xc0] sm:$0xf]
      %v7501 = vld [vmem:[%s7479 + $0xc8] sm:$0xf]
      %v7502 = vld [vmem:[%s7479 + $0xd0] sm:$0xf]
      %v7503 = vld [vmem:[%s7479 + $0xd8] sm:$0xf]
      %7528 = vrot.lane.b32.xlu0 %v7480, 96
      %v7529 = vpop.permute.xlu0 %7528
      %7530 = vrot.lane.b32.xlu0 %v7481, 96
      %v7531 = vpop.permute.xlu0 %7530
      %7532 = vrot.lane.b32.xlu0 %v7482, 96
      %v7533 = vpop.permute.xlu0 %7532
      %7534 = vrot.lane.b32.xlu0 %v7483, 96
      %v7535 = vpop.permute.xlu0 %7534
      %7536 = vrot.lane.b32.xlu0 %v7484, 96
      %v7537 = vpop.permute.xlu0 %7536
      %7538 = vrot.lane.b32.xlu0 %v7485, 96
      %v7539 = vpop.permute.xlu0 %7538
      %7540 = vrot.lane.b32.xlu0 %v7486, 96
      %v7541 = vpop.permute.xlu0 %7540
      %7542 = vrot.lane.b32.xlu0 %v7487, 96
      %v7543 = vpop.permute.xlu0 %7542
      %7544 = vrot.lane.b32.xlu0 %v7488, 96
      %v7545 = vpop.permute.xlu0 %7544
      %7546 = vrot.lane.b32.xlu0 %v7489, 96
      %v7547 = vpop.permute.xlu0 %7546
      %7548 = vrot.lane.b32.xlu0 %v7490, 96
      %v7549 = vpop.permute.xlu0 %7548
      %7550 = vrot.lane.b32.xlu0 %v7491, 96
      %v7551 = vpop.permute.xlu0 %7550
      %7552 = vrot.lane.b32.xlu0 %v7492, 96
      %v7553 = vpop.permute.xlu0 %7552
      %7554 = vrot.lane.b32.xlu0 %v7493, 96
      %v7555 = vpop.permute.xlu0 %7554
      %7556 = vrot.lane.b32.xlu0 %v7494, 96
      %v7557 = vpop.permute.xlu0 %7556
      %7558 = vrot.lane.b32.xlu0 %v7495, 96
      %v7559 = vpop.permute.xlu0 %7558
      %7560 = vrot.lane.b32.xlu0 %v7496, 96
      %v7561 = vpop.permute.xlu0 %7560
      %7562 = vrot.lane.b32.xlu0 %v7497, 96
      %v7563 = vpop.permute.xlu0 %7562
      %7564 = vrot.lane.b32.xlu0 %v7498, 96
      %v7565 = vpop.permute.xlu0 %7564
      %7566 = vrot.lane.b32.xlu0 %v7499, 96
      %v7567 = vpop.permute.xlu0 %7566
      %7568 = vrot.lane.b32.xlu0 %v7500, 96
      %v7569 = vpop.permute.xlu0 %7568
      %7570 = vrot.lane.b32.xlu0 %v7501, 96
      %v7571 = vpop.permute.xlu0 %7570
      %7572 = vrot.lane.b32.xlu0 %v7502, 96
      %v7573 = vpop.permute.xlu0 %7572
      %7574 = vrot.lane.b32.xlu0 %v7503, 96
      %v7575 = vpop.permute.xlu0 %7574
      %vm7600 = vcmask 814848
      %7601 = vst.msk [vmem:[#allocation2] sm:$0xf] %vm7600, %v7529
      %7602 = vst.msk [vmem:[#allocation2 + $0x4] sm:$0xf] %vm7600, %v7531
      %7603 = vst.msk [vmem:[#allocation2 + $0x8] sm:$0xf] %vm7600, %v7533
      %7604 = vst.msk [vmem:[#allocation2 + $0xc] sm:$0xf] %vm7600, %v7535
      %7605 = vst.msk [vmem:[#allocation2 + $0x10] sm:$0xf] %vm7600, %v7537
      %7606 = vst.msk [vmem:[#allocation2 + $0x14] sm:$0xf] %vm7600, %v7539
      %7607 = vst.msk [vmem:[#allocation2 + $0x18] sm:$0xf] %vm7600, %v7541
      %7608 = vst.msk [vmem:[#allocation2 + $0x1c] sm:$0xf] %vm7600, %v7543
      %7609 = vst.msk [vmem:[#allocation2 + $0x20] sm:$0xf] %vm7600, %v7545
      %7610 = vst.msk [vmem:[#allocation2 + $0x24] sm:$0xf] %vm7600, %v7547
      %7611 = vst.msk [vmem:[#allocation2 + $0x28] sm:$0xf] %vm7600, %v7549
      %7612 = vst.msk [vmem:[#allocation2 + $0x2c] sm:$0xf] %vm7600, %v7551
      %7613 = vst.msk [vmem:[#allocation2 + $0x30] sm:$0xf] %vm7600, %v7553
      %7614 = vst.msk [vmem:[#allocation2 + $0x34] sm:$0xf] %vm7600, %v7555
      %7615 = vst.msk [vmem:[#allocation2 + $0x38] sm:$0xf] %vm7600, %v7557
      %7616 = vst.msk [vmem:[#allocation2 + $0x3c] sm:$0xf] %vm7600, %v7559
      %7617 = vst.msk [vmem:[#allocation2 + $0x40] sm:$0xf] %vm7600, %v7561
      %7618 = vst.msk [vmem:[#allocation2 + $0x44] sm:$0xf] %vm7600, %v7563
      %7619 = vst.msk [vmem:[#allocation2 + $0x48] sm:$0xf] %vm7600, %v7565
      %7620 = vst.msk [vmem:[#allocation2 + $0x4c] sm:$0xf] %vm7600, %v7567
      %7621 = vst.msk [vmem:[#allocation2 + $0x50] sm:$0xf] %vm7600, %v7569
      %7622 = vst.msk [vmem:[#allocation2 + $0x54] sm:$0xf] %vm7600, %v7571
      %7623 = vst.msk [vmem:[#allocation2 + $0x58] sm:$0xf] %vm7600, %v7573
      %7624 = vst.msk [vmem:[#allocation2 + $0x5c] sm:$0xf] %vm7600, %v7575
      %v7625 = vld [vmem:[%s7479] sm:$0xf]
      %v7626 = vld [vmem:[%s7479 + $0x4] sm:$0x1]
      %v7627 = vld [vmem:[%s7479 + $0x8] sm:$0xf]
      %v7628 = vld [vmem:[%s7479 + $0xc] sm:$0x1]
      %v7629 = vld [vmem:[%s7479 + $0x10] sm:$0xf]
      %v7630 = vld [vmem:[%s7479 + $0x14] sm:$0x1]
      %v7631 = vld [vmem:[%s7479 + $0x18] sm:$0xf]
      %v7632 = vld [vmem:[%s7479 + $0x1c] sm:$0x1]
      %v7633 = vld [vmem:[%s7479 + $0x20] sm:$0xf]
      %v7634 = vld [vmem:[%s7479 + $0x24] sm:$0x1]
      %v7635 = vld [vmem:[%s7479 + $0x28] sm:$0xf]
      %v7636 = vld [vmem:[%s7479 + $0x2c] sm:$0x1]
      %v7637 = vld [vmem:[%s7479 + $0x30] sm:$0xf]
      %v7638 = vld [vmem:[%s7479 + $0x34] sm:$0x1]
      %v7639 = vld [vmem:[%s7479 + $0x38] sm:$0xf]
      %v7640 = vld [vmem:[%s7479 + $0x3c] sm:$0x1]
      %v7641 = vld [vmem:[%s7479 + $0x50] sm:$0xf]
      %v7642 = vld [vmem:[%s7479 + $0x54] sm:$0x1]
      %v7643 = vld [vmem:[%s7479 + $0x58] sm:$0xf]
      %v7644 = vld [vmem:[%s7479 + $0x5c] sm:$0x1]
      %v7645 = vld [vmem:[%s7479 + $0x60] sm:$0xf]
      %v7646 = vld [vmem:[%s7479 + $0x64] sm:$0x1]
      %v7647 = vld [vmem:[%s7479 + $0x68] sm:$0xf]
      %v7648 = vld [vmem:[%s7479 + $0x6c] sm:$0x1]
      %v7649 = vld [vmem:[%s7479 + $0x70] sm:$0xf]
      %v7650 = vld [vmem:[%s7479 + $0x74] sm:$0x1]
      %v7651 = vld [vmem:[%s7479 + $0x78] sm:$0xf]
      %v7652 = vld [vmem:[%s7479 + $0x7c] sm:$0x1]
      %v7653 = vld [vmem:[%s7479 + $0x80] sm:$0xf]
      %v7654 = vld [vmem:[%s7479 + $0x84] sm:$0x1]
      %v7655 = vld [vmem:[%s7479 + $0x88] sm:$0xf]
      %v7656 = vld [vmem:[%s7479 + $0x8c] sm:$0x1]
      %v7657 = vld [vmem:[%s7479 + $0xa0] sm:$0xf]
      %v7658 = vld [vmem:[%s7479 + $0xa4] sm:$0x1]
      %v7659 = vld [vmem:[%s7479 + $0xa8] sm:$0xf]
      %v7660 = vld [vmem:[%s7479 + $0xac] sm:$0x1]
      %v7661 = vld [vmem:[%s7479 + $0xb0] sm:$0xf]
      %v7662 = vld [vmem:[%s7479 + $0xb4] sm:$0x1]
      %v7663 = vld [vmem:[%s7479 + $0xb8] sm:$0xf]
      %v7664 = vld [vmem:[%s7479 + $0xbc] sm:$0x1]
      %v7665 = vld [vmem:[%s7479 + $0xc0] sm:$0xf]
      %v7666 = vld [vmem:[%s7479 + $0xc4] sm:$0x1]
      %v7667 = vld [vmem:[%s7479 + $0xc8] sm:$0xf]
      %v7668 = vld [vmem:[%s7479 + $0xcc] sm:$0x1]
      %v7669 = vld [vmem:[%s7479 + $0xd0] sm:$0xf]
      %v7670 = vld [vmem:[%s7479 + $0xd4] sm:$0x1]
      %v7671 = vld [vmem:[%s7479 + $0xd8] sm:$0xf]
      %v7672 = vld [vmem:[%s7479 + $0xdc] sm:$0x1]
      %v7674 = vshrl.u32 %v7625, 16
      %v7676 = vrot.slane %v7674, 4
      %v7677 = vshll.u32 %v7625, 16
      %v7679 = vrot.slane %v7677, 5
      %v7680 = vor.u32 %v7676, %v7679
      %v7681 = vrot.slane %v7680, 4
      %v7683 = vshll.u32 %v7626, 16
      %v7685 = vrot.slane %v7683, 5
      %v7686 = vsel %vm341, %v7681, %v7685
      %v7688 = vshrl.u32 %v7627, 16
      %v7690 = vrot.slane %v7688, 4
      %v7691 = vshll.u32 %v7627, 16
      %v7693 = vrot.slane %v7691, 5
      %v7694 = vor.u32 %v7690, %v7693
      %v7695 = vrot.slane %v7694, 4
      %v7697 = vshll.u32 %v7628, 16
      %v7699 = vrot.slane %v7697, 5
      %v7700 = vsel %vm341, %v7695, %v7699
      %v7702 = vshrl.u32 %v7629, 16
      %v7704 = vrot.slane %v7702, 4
      %v7705 = vshll.u32 %v7629, 16
      %v7707 = vrot.slane %v7705, 5
      %v7708 = vor.u32 %v7704, %v7707
      %v7709 = vrot.slane %v7708, 4
      %v7711 = vshll.u32 %v7630, 16
      %v7713 = vrot.slane %v7711, 5
      %v7714 = vsel %vm341, %v7709, %v7713
      %v7716 = vshrl.u32 %v7631, 16
      %v7718 = vrot.slane %v7716, 4
      %v7719 = vshll.u32 %v7631, 16
      %v7721 = vrot.slane %v7719, 5
      %v7722 = vor.u32 %v7718, %v7721
      %v7723 = vrot.slane %v7722, 4
      %v7725 = vshll.u32 %v7632, 16
      %v7727 = vrot.slane %v7725, 5
      %v7728 = vsel %vm341, %v7723, %v7727
      %v7730 = vshrl.u32 %v7633, 16
      %v7732 = vrot.slane %v7730, 4
      %v7733 = vshll.u32 %v7633, 16
      %v7735 = vrot.slane %v7733, 5
      %v7736 = vor.u32 %v7732, %v7735
      %v7737 = vrot.slane %v7736, 4
      %v7739 = vshll.u32 %v7634, 16
      %v7741 = vrot.slane %v7739, 5
      %v7742 = vsel %vm341, %v7737, %v7741
      %v7744 = vshrl.u32 %v7635, 16
      %v7746 = vrot.slane %v7744, 4
      %v7747 = vshll.u32 %v7635, 16
      %v7749 = vrot.slane %v7747, 5
      %v7750 = vor.u32 %v7746, %v7749
      %v7751 = vrot.slane %v7750, 4
      %v7753 = vshll.u32 %v7636, 16
      %v7755 = vrot.slane %v7753, 5
      %v7756 = vsel %vm341, %v7751, %v7755
      %v7758 = vshrl.u32 %v7637, 16
      %v7760 = vrot.slane %v7758, 4
      %v7761 = vshll.u32 %v7637, 16
      %v7763 = vrot.slane %v7761, 5
      %v7764 = vor.u32 %v7760, %v7763
      %v7765 = vrot.slane %v7764, 4
      %v7767 = vshll.u32 %v7638, 16
      %v7769 = vrot.slane %v7767, 5
      %v7770 = vsel %vm341, %v7765, %v7769
      %v7772 = vshrl.u32 %v7639, 16
      %v7774 = vrot.slane %v7772, 4
      %v7775 = vshll.u32 %v7639, 16
      %v7777 = vrot.slane %v7775, 5
      %v7778 = vor.u32 %v7774, %v7777
      %v7779 = vrot.slane %v7778, 4
      %v7781 = vshll.u32 %v7640, 16
      %v7783 = vrot.slane %v7781, 5
      %v7784 = vsel %vm341, %v7779, %v7783
      %v7786 = vshrl.u32 %v7641, 16
      %v7788 = vrot.slane %v7786, 4
      %v7789 = vshll.u32 %v7641, 16
      %v7791 = vrot.slane %v7789, 5
      %v7792 = vor.u32 %v7788, %v7791
      %v7793 = vrot.slane %v7792, 4
      %v7795 = vshll.u32 %v7642, 16
      %v7797 = vrot.slane %v7795, 5
      %v7798 = vsel %vm341, %v7793, %v7797
      %v7800 = vshrl.u32 %v7643, 16
      %v7802 = vrot.slane %v7800, 4
      %v7803 = vshll.u32 %v7643, 16
      %v7805 = vrot.slane %v7803, 5
      %v7806 = vor.u32 %v7802, %v7805
      %v7807 = vrot.slane %v7806, 4
      %v7809 = vshll.u32 %v7644, 16
      %v7811 = vrot.slane %v7809, 5
      %v7812 = vsel %vm341, %v7807, %v7811
      %v7814 = vshrl.u32 %v7645, 16
      %v7816 = vrot.slane %v7814, 4
      %v7817 = vshll.u32 %v7645, 16
      %v7819 = vrot.slane %v7817, 5
      %v7820 = vor.u32 %v7816, %v7819
      %v7821 = vrot.slane %v7820, 4
      %v7823 = vshll.u32 %v7646, 16
      %v7825 = vrot.slane %v7823, 5
      %v7826 = vsel %vm341, %v7821, %v7825
      %v7828 = vshrl.u32 %v7647, 16
      %v7830 = vrot.slane %v7828, 4
      %v7831 = vshll.u32 %v7647, 16
      %v7833 = vrot.slane %v7831, 5
      %v7834 = vor.u32 %v7830, %v7833
      %v7835 = vrot.slane %v7834, 4
      %v7837 = vshll.u32 %v7648, 16
      %v7839 = vrot.slane %v7837, 5
      %v7840 = vsel %vm341, %v7835, %v7839
      %v7842 = vshrl.u32 %v7649, 16
      %v7844 = vrot.slane %v7842, 4
      %v7845 = vshll.u32 %v7649, 16
      %v7847 = vrot.slane %v7845, 5
      %v7848 = vor.u32 %v7844, %v7847
      %v7849 = vrot.slane %v7848, 4
      %v7851 = vshll.u32 %v7650, 16
      %v7853 = vrot.slane %v7851, 5
      %v7854 = vsel %vm341, %v7849, %v7853
      %v7856 = vshrl.u32 %v7651, 16
      %v7858 = vrot.slane %v7856, 4
      %v7859 = vshll.u32 %v7651, 16
      %v7861 = vrot.slane %v7859, 5
      %v7862 = vor.u32 %v7858, %v7861
      %v7863 = vrot.slane %v7862, 4
      %v7865 = vshll.u32 %v7652, 16
      %v7867 = vrot.slane %v7865, 5
      %v7868 = vsel %vm341, %v7863, %v7867
      %v7870 = vshrl.u32 %v7653, 16
      %v7872 = vrot.slane %v7870, 4
      %v7873 = vshll.u32 %v7653, 16
      %v7875 = vrot.slane %v7873, 5
      %v7876 = vor.u32 %v7872, %v7875
      %v7877 = vrot.slane %v7876, 4
      %v7879 = vshll.u32 %v7654, 16
      %v7881 = vrot.slane %v7879, 5
      %v7882 = vsel %vm341, %v7877, %v7881
      %v7884 = vshrl.u32 %v7655, 16
      %v7886 = vrot.slane %v7884, 4
      %v7887 = vshll.u32 %v7655, 16
      %v7889 = vrot.slane %v7887, 5
      %v7890 = vor.u32 %v7886, %v7889
      %v7891 = vrot.slane %v7890, 4
      %v7893 = vshll.u32 %v7656, 16
      %v7895 = vrot.slane %v7893, 5
      %v7896 = vsel %vm341, %v7891, %v7895
      %v7898 = vshrl.u32 %v7657, 16
      %v7900 = vrot.slane %v7898, 4
      %v7901 = vshll.u32 %v7657, 16
      %v7903 = vrot.slane %v7901, 5
      %v7904 = vor.u32 %v7900, %v7903
      %v7905 = vrot.slane %v7904, 4
      %v7907 = vshll.u32 %v7658, 16
      %v7909 = vrot.slane %v7907, 5
      %v7910 = vsel %vm341, %v7905, %v7909
      %v7912 = vshrl.u32 %v7659, 16
      %v7914 = vrot.slane %v7912, 4
      %v7915 = vshll.u32 %v7659, 16
      %v7917 = vrot.slane %v7915, 5
      %v7918 = vor.u32 %v7914, %v7917
      %v7919 = vrot.slane %v7918, 4
      %v7921 = vshll.u32 %v7660, 16
      %v7923 = vrot.slane %v7921, 5
      %v7924 = vsel %vm341, %v7919, %v7923
      %v7926 = vshrl.u32 %v7661, 16
      %v7928 = vrot.slane %v7926, 4
      %v7929 = vshll.u32 %v7661, 16
      %v7931 = vrot.slane %v7929, 5
      %v7932 = vor.u32 %v7928, %v7931
      %v7933 = vrot.slane %v7932, 4
      %v7935 = vshll.u32 %v7662, 16
      %v7937 = vrot.slane %v7935, 5
      %v7938 = vsel %vm341, %v7933, %v7937
      %v7940 = vshrl.u32 %v7663, 16
      %v7942 = vrot.slane %v7940, 4
      %v7943 = vshll.u32 %v7663, 16
      %v7945 = vrot.slane %v7943, 5
      %v7946 = vor.u32 %v7942, %v7945
      %v7947 = vrot.slane %v7946, 4
      %v7949 = vshll.u32 %v7664, 16
      %v7951 = vrot.slane %v7949, 5
      %v7952 = vsel %vm341, %v7947, %v7951
      %v7954 = vshrl.u32 %v7665, 16
      %v7956 = vrot.slane %v7954, 4
      %v7957 = vshll.u32 %v7665, 16
      %v7959 = vrot.slane %v7957, 5
      %v7960 = vor.u32 %v7956, %v7959
      %v7961 = vrot.slane %v7960, 4
      %v7963 = vshll.u32 %v7666, 16
      %v7965 = vrot.slane %v7963, 5
      %v7966 = vsel %vm341, %v7961, %v7965
      %v7968 = vshrl.u32 %v7667, 16
      %v7970 = vrot.slane %v7968, 4
      %v7971 = vshll.u32 %v7667, 16
      %v7973 = vrot.slane %v7971, 5
      %v7974 = vor.u32 %v7970, %v7973
      %v7975 = vrot.slane %v7974, 4
      %v7977 = vshll.u32 %v7668, 16
      %v7979 = vrot.slane %v7977, 5
      %v7980 = vsel %vm341, %v7975, %v7979
      %v7982 = vshrl.u32 %v7669, 16
      %v7984 = vrot.slane %v7982, 4
      %v7985 = vshll.u32 %v7669, 16
      %v7987 = vrot.slane %v7985, 5
      %v7988 = vor.u32 %v7984, %v7987
      %v7989 = vrot.slane %v7988, 4
      %v7991 = vshll.u32 %v7670, 16
      %v7993 = vrot.slane %v7991, 5
      %v7994 = vsel %vm341, %v7989, %v7993
      %v7996 = vshrl.u32 %v7671, 16
      %v7998 = vrot.slane %v7996, 4
      %v7999 = vshll.u32 %v7671, 16
      %v8001 = vrot.slane %v7999, 5
      %v8002 = vor.u32 %v7998, %v8001
      %v8003 = vrot.slane %v8002, 4
      %v8005 = vshll.u32 %v7672, 16
      %v8007 = vrot.slane %v8005, 5
      %v8008 = vsel %vm341, %v8003, %v8007
      %8009 = vrot.lane.b32.xlu0 %v7686, 100
      %v8010 = vpop.permute.xlu0 %8009
      %8011 = vrot.lane.b32.xlu0 %v7700, 100
      %v8012 = vpop.permute.xlu0 %8011
      %8013 = vrot.lane.b32.xlu0 %v7714, 100
      %v8014 = vpop.permute.xlu0 %8013
      %8015 = vrot.lane.b32.xlu0 %v7728, 100
      %v8016 = vpop.permute.xlu0 %8015
      %8017 = vrot.lane.b32.xlu0 %v7742, 100
      %v8018 = vpop.permute.xlu0 %8017
      %8019 = vrot.lane.b32.xlu0 %v7756, 100
      %v8020 = vpop.permute.xlu0 %8019
      %8021 = vrot.lane.b32.xlu0 %v7770, 100
      %v8022 = vpop.permute.xlu0 %8021
      %8023 = vrot.lane.b32.xlu0 %v7784, 100
      %v8024 = vpop.permute.xlu0 %8023
      %8025 = vrot.lane.b32.xlu0 %v7798, 100
      %v8026 = vpop.permute.xlu0 %8025
      %8027 = vrot.lane.b32.xlu0 %v7812, 100
      %v8028 = vpop.permute.xlu0 %8027
      %8029 = vrot.lane.b32.xlu0 %v7826, 100
      %v8030 = vpop.permute.xlu0 %8029
      %8031 = vrot.lane.b32.xlu0 %v7840, 100
      %v8032 = vpop.permute.xlu0 %8031
      %8033 = vrot.lane.b32.xlu0 %v7854, 100
      %v8034 = vpop.permute.xlu0 %8033
      %8035 = vrot.lane.b32.xlu0 %v7868, 100
      %v8036 = vpop.permute.xlu0 %8035
      %8037 = vrot.lane.b32.xlu0 %v7882, 100
      %v8038 = vpop.permute.xlu0 %8037
      %8039 = vrot.lane.b32.xlu0 %v7896, 100
      %v8040 = vpop.permute.xlu0 %8039
      %8041 = vrot.lane.b32.xlu0 %v7910, 100
      %v8042 = vpop.permute.xlu0 %8041
      %8043 = vrot.lane.b32.xlu0 %v7924, 100
      %v8044 = vpop.permute.xlu0 %8043
      %8045 = vrot.lane.b32.xlu0 %v7938, 100
      %v8046 = vpop.permute.xlu0 %8045
      %8047 = vrot.lane.b32.xlu0 %v7952, 100
      %v8048 = vpop.permute.xlu0 %8047
      %8049 = vrot.lane.b32.xlu0 %v7966, 100
      %v8050 = vpop.permute.xlu0 %8049
      %8051 = vrot.lane.b32.xlu0 %v7980, 100
      %v8052 = vpop.permute.xlu0 %8051
      %8053 = vrot.lane.b32.xlu0 %v7994, 100
      %v8054 = vpop.permute.xlu0 %8053
      %8055 = vrot.lane.b32.xlu0 %v8008, 100
      %v8056 = vpop.permute.xlu0 %8055
      %vm8081 = vcmask 847648
      %8082 = vst.msk [vmem:[#allocation2] sm:$0xf] %vm8081, %v8010
      %8083 = vst.msk [vmem:[#allocation2 + $0x4] sm:$0xf] %vm8081, %v8012
      %8084 = vst.msk [vmem:[#allocation2 + $0x8] sm:$0xf] %vm8081, %v8014
      %8085 = vst.msk [vmem:[#allocation2 + $0xc] sm:$0xf] %vm8081, %v8016
      %8086 = vst.msk [vmem:[#allocation2 + $0x10] sm:$0xf] %vm8081, %v8018
      %8087 = vst.msk [vmem:[#allocation2 + $0x14] sm:$0xf] %vm8081, %v8020
      %8088 = vst.msk [vmem:[#allocation2 + $0x18] sm:$0xf] %vm8081, %v8022
      %8089 = vst.msk [vmem:[#allocation2 + $0x1c] sm:$0xf] %vm8081, %v8024
      %8090 = vst.msk [vmem:[#allocation2 + $0x20] sm:$0xf] %vm8081, %v8026
      %8091 = vst.msk [vmem:[#allocation2 + $0x24] sm:$0xf] %vm8081, %v8028
      %8092 = vst.msk [vmem:[#allocation2 + $0x28] sm:$0xf] %vm8081, %v8030
      %8093 = vst.msk [vmem:[#allocation2 + $0x2c] sm:$0xf] %vm8081, %v8032
      %8094 = vst.msk [vmem:[#allocation2 + $0x30] sm:$0xf] %vm8081, %v8034
      %8095 = vst.msk [vmem:[#allocation2 + $0x34] sm:$0xf] %vm8081, %v8036
      %8096 = vst.msk [vmem:[#allocation2 + $0x38] sm:$0xf] %vm8081, %v8038
      %8097 = vst.msk [vmem:[#allocation2 + $0x3c] sm:$0xf] %vm8081, %v8040
      %8098 = vst.msk [vmem:[#allocation2 + $0x40] sm:$0xf] %vm8081, %v8042
      %8099 = vst.msk [vmem:[#allocation2 + $0x44] sm:$0xf] %vm8081, %v8044
      %8100 = vst.msk [vmem:[#allocation2 + $0x48] sm:$0xf] %vm8081, %v8046
      %8101 = vst.msk [vmem:[#allocation2 + $0x4c] sm:$0xf] %vm8081, %v8048
      %8102 = vst.msk [vmem:[#allocation2 + $0x50] sm:$0xf] %vm8081, %v8050
      %8103 = vst.msk [vmem:[#allocation2 + $0x54] sm:$0xf] %vm8081, %v8052
      %8104 = vst.msk [vmem:[#allocation2 + $0x58] sm:$0xf] %vm8081, %v8054
      %8105 = vst.msk [vmem:[#allocation2 + $0x5c] sm:$0xf] %vm8081, %v8056
      %v8106 = vld [vmem:[%s7479] sm:$0xe]
      %v8107 = vld [vmem:[%s7479 + $0x4] sm:$0x1]
      %v8108 = vld [vmem:[%s7479 + $0x8] sm:$0xe]
      %v8109 = vld [vmem:[%s7479 + $0xc] sm:$0x1]
      %v8110 = vld [vmem:[%s7479 + $0x10] sm:$0xe]
      %v8111 = vld [vmem:[%s7479 + $0x14] sm:$0x1]
      %v8112 = vld [vmem:[%s7479 + $0x18] sm:$0xe]
      %v8113 = vld [vmem:[%s7479 + $0x1c] sm:$0x1]
      %v8114 = vld [vmem:[%s7479 + $0x20] sm:$0xe]
      %v8115 = vld [vmem:[%s7479 + $0x24] sm:$0x1]
      %v8116 = vld [vmem:[%s7479 + $0x28] sm:$0xe]
      %v8117 = vld [vmem:[%s7479 + $0x2c] sm:$0x1]
      %v8118 = vld [vmem:[%s7479 + $0x30] sm:$0xe]
      %v8119 = vld [vmem:[%s7479 + $0x34] sm:$0x1]
      %v8120 = vld [vmem:[%s7479 + $0x38] sm:$0xe]
      %v8121 = vld [vmem:[%s7479 + $0x3c] sm:$0x1]
      %v8122 = vld [vmem:[%s7479 + $0x50] sm:$0xe]
      %v8123 = vld [vmem:[%s7479 + $0x54] sm:$0x1]
      %v8124 = vld [vmem:[%s7479 + $0x58] sm:$0xe]
      %v8125 = vld [vmem:[%s7479 + $0x5c] sm:$0x1]
      %v8126 = vld [vmem:[%s7479 + $0x60] sm:$0xe]
      %v8127 = vld [vmem:[%s7479 + $0x64] sm:$0x1]
      %v8128 = vld [vmem:[%s7479 + $0x68] sm:$0xe]
      %v8129 = vld [vmem:[%s7479 + $0x6c] sm:$0x1]
      %v8130 = vld [vmem:[%s7479 + $0x70] sm:$0xe]
      %v8131 = vld [vmem:[%s7479 + $0x74] sm:$0x1]
      %v8132 = vld [vmem:[%s7479 + $0x78] sm:$0xe]
      %v8133 = vld [vmem:[%s7479 + $0x7c] sm:$0x1]
      %v8134 = vld [vmem:[%s7479 + $0x80] sm:$0xe]
      %v8135 = vld [vmem:[%s7479 + $0x84] sm:$0x1]
      %v8136 = vld [vmem:[%s7479 + $0x88] sm:$0xe]
      %v8137 = vld [vmem:[%s7479 + $0x8c] sm:$0x1]
      %v8138 = vld [vmem:[%s7479 + $0xa0] sm:$0xe]
      %v8139 = vld [vmem:[%s7479 + $0xa4] sm:$0x1]
      %v8140 = vld [vmem:[%s7479 + $0xa8] sm:$0xe]
      %v8141 = vld [vmem:[%s7479 + $0xac] sm:$0x1]
      %v8142 = vld [vmem:[%s7479 + $0xb0] sm:$0xe]
      %v8143 = vld [vmem:[%s7479 + $0xb4] sm:$0x1]
      %v8144 = vld [vmem:[%s7479 + $0xb8] sm:$0xe]
      %v8145 = vld [vmem:[%s7479 + $0xbc] sm:$0x1]
      %v8146 = vld [vmem:[%s7479 + $0xc0] sm:$0xe]
      %v8147 = vld [vmem:[%s7479 + $0xc4] sm:$0x1]
      %v8148 = vld [vmem:[%s7479 + $0xc8] sm:$0xe]
      %v8149 = vld [vmem:[%s7479 + $0xcc] sm:$0x1]
      %v8150 = vld [vmem:[%s7479 + $0xd0] sm:$0xe]
      %v8151 = vld [vmem:[%s7479 + $0xd4] sm:$0x1]
      %v8152 = vld [vmem:[%s7479 + $0xd8] sm:$0xe]
      %v8153 = vld [vmem:[%s7479 + $0xdc] sm:$0x1]
      %v8202 = vrot.slane %v8106, 5
      %v8203 = vrot.slane %v8202, 4
      %v8204 = vrot.slane %v8107, 5
      %v8205 = vsel %vm873, %v8203, %v8204
      %v8206 = vrot.slane %v8108, 5
      %v8207 = vrot.slane %v8206, 4
      %v8208 = vrot.slane %v8109, 5
      %v8209 = vsel %vm873, %v8207, %v8208
      %v8210 = vrot.slane %v8110, 5
      %v8211 = vrot.slane %v8210, 4
      %v8212 = vrot.slane %v8111, 5
      %v8213 = vsel %vm873, %v8211, %v8212
      %v8214 = vrot.slane %v8112, 5
      %v8215 = vrot.slane %v8214, 4
      %v8216 = vrot.slane %v8113, 5
      %v8217 = vsel %vm873, %v8215, %v8216
      %v8218 = vrot.slane %v8114, 5
      %v8219 = vrot.slane %v8218, 4
      %v8220 = vrot.slane %v8115, 5
      %v8221 = vsel %vm873, %v8219, %v8220
      %v8222 = vrot.slane %v8116, 5
      %v8223 = vrot.slane %v8222, 4
      %v8224 = vrot.slane %v8117, 5
      %v8225 = vsel %vm873, %v8223, %v8224
      %v8226 = vrot.slane %v8118, 5
      %v8227 = vrot.slane %v8226, 4
      %v8228 = vrot.slane %v8119, 5
      %v8229 = vsel %vm873, %v8227, %v8228
      %v8230 = vrot.slane %v8120, 5
      %v8231 = vrot.slane %v8230, 4
      %v8232 = vrot.slane %v8121, 5
      %v8233 = vsel %vm873, %v8231, %v8232
      %v8234 = vrot.slane %v8122, 5
      %v8235 = vrot.slane %v8234, 4
      %v8236 = vrot.slane %v8123, 5
      %v8237 = vsel %vm873, %v8235, %v8236
      %v8238 = vrot.slane %v8124, 5
      %v8239 = vrot.slane %v8238, 4
      %v8240 = vrot.slane %v8125, 5
      %v8241 = vsel %vm873, %v8239, %v8240
      %v8242 = vrot.slane %v8126, 5
      %v8243 = vrot.slane %v8242, 4
      %v8244 = vrot.slane %v8127, 5
      %v8245 = vsel %vm873, %v8243, %v8244
      %v8246 = vrot.slane %v8128, 5
      %v8247 = vrot.slane %v8246, 4
      %v8248 = vrot.slane %v8129, 5
      %v8249 = vsel %vm873, %v8247, %v8248
      %v8250 = vrot.slane %v8130, 5
      %v8251 = vrot.slane %v8250, 4
      %v8252 = vrot.slane %v8131, 5
      %v8253 = vsel %vm873, %v8251, %v8252
      %v8254 = vrot.slane %v8132, 5
      %v8255 = vrot.slane %v8254, 4
      %v8256 = vrot.slane %v8133, 5
      %v8257 = vsel %vm873, %v8255, %v8256
      %v8258 = vrot.slane %v8134, 5
      %v8259 = vrot.slane %v8258, 4
      %v8260 = vrot.slane %v8135, 5
      %v8261 = vsel %vm873, %v8259, %v8260
      %v8262 = vrot.slane %v8136, 5
      %v8263 = vrot.slane %v8262, 4
      %v8264 = vrot.slane %v8137, 5
      %v8265 = vsel %vm873, %v8263, %v8264
      %v8266 = vrot.slane %v8138, 5
      %v8267 = vrot.slane %v8266, 4
      %v8268 = vrot.slane %v8139, 5
      %v8269 = vsel %vm873, %v8267, %v8268
      %v8270 = vrot.slane %v8140, 5
      %v8271 = vrot.slane %v8270, 4
      %v8272 = vrot.slane %v8141, 5
      %v8273 = vsel %vm873, %v8271, %v8272
      %v8274 = vrot.slane %v8142, 5
      %v8275 = vrot.slane %v8274, 4
      %v8276 = vrot.slane %v8143, 5
      %v8277 = vsel %vm873, %v8275, %v8276
      %v8278 = vrot.slane %v8144, 5
      %v8279 = vrot.slane %v8278, 4
      %v8280 = vrot.slane %v8145, 5
      %v8281 = vsel %vm873, %v8279, %v8280
      %v8282 = vrot.slane %v8146, 5
      %v8283 = vrot.slane %v8282, 4
      %v8284 = vrot.slane %v8147, 5
      %v8285 = vsel %vm873, %v8283, %v8284
      %v8286 = vrot.slane %v8148, 5
      %v8287 = vrot.slane %v8286, 4
      %v8288 = vrot.slane %v8149, 5
      %v8289 = vsel %vm873, %v8287, %v8288
      %v8290 = vrot.slane %v8150, 5
      %v8291 = vrot.slane %v8290, 4
      %v8292 = vrot.slane %v8151, 5
      %v8293 = vsel %vm873, %v8291, %v8292
      %v8294 = vrot.slane %v8152, 5
      %v8295 = vrot.slane %v8294, 4
      %v8296 = vrot.slane %v8153, 5
      %v8297 = vsel %vm873, %v8295, %v8296
      %8298 = vrot.lane.b32.xlu0 %v8205, 104
      %v8299 = vpop.permute.xlu0 %8298
      %8300 = vrot.lane.b32.xlu0 %v8209, 104
      %v8301 = vpop.permute.xlu0 %8300
      %8302 = vrot.lane.b32.xlu0 %v8213, 104
      %v8303 = vpop.permute.xlu0 %8302
      %8304 = vrot.lane.b32.xlu0 %v8217, 104
      %v8305 = vpop.permute.xlu0 %8304
      %8306 = vrot.lane.b32.xlu0 %v8221, 104
      %v8307 = vpop.permute.xlu0 %8306
      %8308 = vrot.lane.b32.xlu0 %v8225, 104
      %v8309 = vpop.permute.xlu0 %8308
      %8310 = vrot.lane.b32.xlu0 %v8229, 104
      %v8311 = vpop.permute.xlu0 %8310
      %8312 = vrot.lane.b32.xlu0 %v8233, 104
      %v8313 = vpop.permute.xlu0 %8312
      %8314 = vrot.lane.b32.xlu0 %v8237, 104
      %v8315 = vpop.permute.xlu0 %8314
      %8316 = vrot.lane.b32.xlu0 %v8241, 104
      %v8317 = vpop.permute.xlu0 %8316
      %8318 = vrot.lane.b32.xlu0 %v8245, 104
      %v8319 = vpop.permute.xlu0 %8318
      %8320 = vrot.lane.b32.xlu0 %v8249, 104
      %v8321 = vpop.permute.xlu0 %8320
      %8322 = vrot.lane.b32.xlu0 %v8253, 104
      %v8323 = vpop.permute.xlu0 %8322
      %8324 = vrot.lane.b32.xlu0 %v8257, 104
      %v8325 = vpop.permute.xlu0 %8324
      %8326 = vrot.lane.b32.xlu0 %v8261, 104
      %v8327 = vpop.permute.xlu0 %8326
      %8328 = vrot.lane.b32.xlu0 %v8265, 104
      %v8329 = vpop.permute.xlu0 %8328
      %8330 = vrot.lane.b32.xlu0 %v8269, 104
      %v8331 = vpop.permute.xlu0 %8330
      %8332 = vrot.lane.b32.xlu0 %v8273, 104
      %v8333 = vpop.permute.xlu0 %8332
      %8334 = vrot.lane.b32.xlu0 %v8277, 104
      %v8335 = vpop.permute.xlu0 %8334
      %8336 = vrot.lane.b32.xlu0 %v8281, 104
      %v8337 = vpop.permute.xlu0 %8336
      %8338 = vrot.lane.b32.xlu0 %v8285, 104
      %v8339 = vpop.permute.xlu0 %8338
      %8340 = vrot.lane.b32.xlu0 %v8289, 104
      %v8341 = vpop.permute.xlu0 %8340
      %8342 = vrot.lane.b32.xlu0 %v8293, 104
      %v8343 = vpop.permute.xlu0 %8342
      %8344 = vrot.lane.b32.xlu0 %v8297, 104
      %v8345 = vpop.permute.xlu0 %8344
      %vm8370 = vcmask 880448
      %8371 = vst.msk [vmem:[#allocation2] sm:$0xf] %vm8370, %v8299
      %8372 = vst.msk [vmem:[#allocation2 + $0x4] sm:$0xf] %vm8370, %v8301
      %8373 = vst.msk [vmem:[#allocation2 + $0x8] sm:$0xf] %vm8370, %v8303
      %8374 = vst.msk [vmem:[#allocation2 + $0xc] sm:$0xf] %vm8370, %v8305
      %8375 = vst.msk [vmem:[#allocation2 + $0x10] sm:$0xf] %vm8370, %v8307
      %8376 = vst.msk [vmem:[#allocation2 + $0x14] sm:$0xf] %vm8370, %v8309
      %8377 = vst.msk [vmem:[#allocation2 + $0x18] sm:$0xf] %vm8370, %v8311
      %8378 = vst.msk [vmem:[#allocation2 + $0x1c] sm:$0xf] %vm8370, %v8313
      %8379 = vst.msk [vmem:[#allocation2 + $0x20] sm:$0xf] %vm8370, %v8315
      %8380 = vst.msk [vmem:[#allocation2 + $0x24] sm:$0xf] %vm8370, %v8317
      %8381 = vst.msk [vmem:[#allocation2 + $0x28] sm:$0xf] %vm8370, %v8319
      %8382 = vst.msk [vmem:[#allocation2 + $0x2c] sm:$0xf] %vm8370, %v8321
      %8383 = vst.msk [vmem:[#allocation2 + $0x30] sm:$0xf] %vm8370, %v8323
      %8384 = vst.msk [vmem:[#allocation2 + $0x34] sm:$0xf] %vm8370, %v8325
      %8385 = vst.msk [vmem:[#allocation2 + $0x38] sm:$0xf] %vm8370, %v8327
      %8386 = vst.msk [vmem:[#allocation2 + $0x3c] sm:$0xf] %vm8370, %v8329
      %8387 = vst.msk [vmem:[#allocation2 + $0x40] sm:$0xf] %vm8370, %v8331
      %8388 = vst.msk [vmem:[#allocation2 + $0x44] sm:$0xf] %vm8370, %v8333
      %8389 = vst.msk [vmem:[#allocation2 + $0x48] sm:$0xf] %vm8370, %v8335
      %8390 = vst.msk [vmem:[#allocation2 + $0x4c] sm:$0xf] %vm8370, %v8337
      %8391 = vst.msk [vmem:[#allocation2 + $0x50] sm:$0xf] %vm8370, %v8339
      %8392 = vst.msk [vmem:[#allocation2 + $0x54] sm:$0xf] %vm8370, %v8341
      %8393 = vst.msk [vmem:[#allocation2 + $0x58] sm:$0xf] %vm8370, %v8343
      %8394 = vst.msk [vmem:[#allocation2 + $0x5c] sm:$0xf] %vm8370, %v8345
      %v8395 = vld [vmem:[#allocation2] sm:$0xf]
      %v8396 = vld [vmem:[#allocation2 + $0x4] sm:$0xf]
      %v8397 = vld [vmem:[#allocation2 + $0x8] sm:$0xf]
      %v8398 = vld [vmem:[#allocation2 + $0xc] sm:$0xf]
      %v8399 = vld [vmem:[#allocation2 + $0x10] sm:$0xf]
      %v8400 = vld [vmem:[#allocation2 + $0x14] sm:$0xf]
      %v8401 = vld [vmem:[#allocation2 + $0x18] sm:$0xf]
      %v8402 = vld [vmem:[#allocation2 + $0x1c] sm:$0xf]
      %v8403 = vld [vmem:[#allocation2 + $0x20] sm:$0xf]
      %v8404 = vld [vmem:[#allocation2 + $0x24] sm:$0xf]
      %v8405 = vld [vmem:[#allocation2 + $0x28] sm:$0xf]
      %v8406 = vld [vmem:[#allocation2 + $0x2c] sm:$0xf]
      %v8407 = vld [vmem:[#allocation2 + $0x30] sm:$0xf]
      %v8408 = vld [vmem:[#allocation2 + $0x34] sm:$0xf]
      %v8409 = vld [vmem:[#allocation2 + $0x38] sm:$0xf]
      %v8410 = vld [vmem:[#allocation2 + $0x3c] sm:$0xf]
      %v8411 = vld [vmem:[#allocation2 + $0x40] sm:$0xf]
      %v8412 = vld [vmem:[#allocation2 + $0x44] sm:$0xf]
      %v8413 = vld [vmem:[#allocation2 + $0x48] sm:$0xf]
      %v8414 = vld [vmem:[#allocation2 + $0x4c] sm:$0xf]
      %v8415 = vld [vmem:[#allocation2 + $0x50] sm:$0xf]
      %v8416 = vld [vmem:[#allocation2 + $0x54] sm:$0xf]
      %v8417 = vld [vmem:[#allocation2 + $0x58] sm:$0xf]
      %v8418 = vld [vmem:[#allocation2 + $0x5c] sm:$0xf]
      %v8419 = vld [vmem:[%s228] sm:$0xf]
      %v8420 = vld [vmem:[%s228 + $0x4] sm:$0xf]
      %v8421 = vld [vmem:[%s228 + $0x8] sm:$0xf]
      %v8422 = vld [vmem:[%s228 + $0xc] sm:$0xf]
      %v8423 = vld [vmem:[%s228 + $0x10] sm:$0xf]
      %v8424 = vld [vmem:[%s228 + $0x14] sm:$0xf]
      %v8425 = vld [vmem:[%s228 + $0x18] sm:$0xf]
      %v8426 = vld [vmem:[%s228 + $0x1c] sm:$0xf]
      %v8427 = vld [vmem:[%s228 + $0x20] sm:$0xf]
      %v8428 = vld [vmem:[%s228 + $0x24] sm:$0xf]
      %v8429 = vld [vmem:[%s228 + $0x28] sm:$0xf]
      %v8430 = vld [vmem:[%s228 + $0x2c] sm:$0xf]
      %v8431 = vld [vmem:[%s228 + $0x30] sm:$0xf]
      %v8432 = vld [vmem:[%s228 + $0x34] sm:$0x3]
      %v8433 = vld [vmem:[%s231] sm:$0x1]
      %v8435 = vlaneseq
      %v8436 = vshrl.u32 %v8435, 7
      %v8437 = vsub.s32 0, %v8436
      %v8438 = vrot.slane %v8433, %v8437
      %v8464 = vunpack.c.l.b16 %v8395
      %v8465 = vunpack.c.l.b16 %v8396
      %v8466 = vunpack.c.l.b16 %v8397
      %v8467 = vunpack.c.l.b16 %v8398
      %v8468 = vunpack.c.l.b16 %v8399
      %v8469 = vunpack.c.l.b16 %v8400
      %v8470 = vunpack.c.l.b16 %v8401
      %v8471 = vunpack.c.l.b16 %v8402
      %v8472 = vunpack.c.l.b16 %v8403
      %v8473 = vunpack.c.l.b16 %v8404
      %v8474 = vunpack.c.l.b16 %v8405
      %v8475 = vunpack.c.l.b16 %v8406
      %v8476 = vunpack.c.l.b16 %v8407
      %v8477 = vunpack.c.l.b16 %v8408
      %v8478 = vunpack.c.l.b16 %v8409
      %v8479 = vunpack.c.l.b16 %v8410
      %v8480 = vunpack.c.l.b16 %v8411
      %v8481 = vunpack.c.l.b16 %v8412
      %v8482 = vunpack.c.l.b16 %v8413
      %v8483 = vunpack.c.l.b16 %v8414
      %v8484 = vunpack.c.l.b16 %v8415
      %v8485 = vunpack.c.l.b16 %v8416
      %v8486 = vunpack.c.l.b16 %v8417
      %v8487 = vunpack.c.l.b16 %v8418
      %v8488 = vpack.c.b16 %v8465, %v8464
      %v8489 = vpack.c.b16 %v8467, %v8466
      %v8490 = vpack.c.b16 %v8469, %v8468
      %v8491 = vpack.c.b16 %v8471, %v8470
      %v8492 = vpack.c.b16 %v8473, %v8472
      %v8493 = vpack.c.b16 %v8475, %v8474
      %v8494 = vpack.c.b16 %v8477, %v8476
      %v8495 = vpack.c.b16 %v8479, %v8478
      %v8496 = vpack.c.b16 %v8481, %v8480
      %v8497 = vpack.c.b16 %v8483, %v8482
      %v8498 = vpack.c.b16 %v8485, %v8484
      %v8499 = vpack.c.b16 %v8487, %v8486
      %v8514 = vunpack.c.l.b16 %v8419
      %v8515 = vunpack.c.l.b16 %v8420
      %v8516 = vunpack.c.l.b16 %v8421
      %v8517 = vunpack.c.l.b16 %v8422
      %v8518 = vunpack.c.l.b16 %v8423
      %v8519 = vunpack.c.l.b16 %v8424
      %v8520 = vunpack.c.l.b16 %v8425
      %v8521 = vunpack.c.l.b16 %v8426
      %v8522 = vunpack.c.l.b16 %v8427
      %v8523 = vunpack.c.l.b16 %v8428
      %v8524 = vunpack.c.l.b16 %v8429
      %v8525 = vunpack.c.l.b16 %v8430
      %v8526 = vunpack.c.l.b16 %v8431
      %v8527 = vunpack.c.l.b16 %v8432
      %v8528 = vpack.c.b16 %v8515, %v8514
      %v8529 = vpack.c.b16 %v8517, %v8516
      %v8530 = vpack.c.b16 %v8519, %v8518
      %v8531 = vpack.c.b16 %v8521, %v8520
      %v8532 = vpack.c.b16 %v8523, %v8522
      %v8533 = vpack.c.b16 %v8525, %v8524
      %v8534 = vpack.c.b16 %v8527, %v8526
      %vm8541 = vcmask 883712
      %v8543 = vsel %vm8541, %v8488, 0
      %v8546 = vsel %vm8541, %v8489, 0
      %v8549 = vsel %vm8541, %v8490, 0
      %v8552 = vsel %vm8541, %v8491, 0
      %v8555 = vsel %vm8541, %v8492, 0
      %v8558 = vsel %vm8541, %v8493, 0
      %v8561 = vsel %vm8541, %v8494, 0
      %v8564 = vsel %vm8541, %v8495, 0
      %v8567 = vsel %vm8541, %v8496, 0
      %v8570 = vsel %vm8541, %v8497, 0
      %v8573 = vsel %vm8541, %v8498, 0
      %v8576 = vsel %vm8541, %v8499, 0
      %vm8578 = vcmask 1045504
      %v8580 = vsel %vm8578, %v8534, 0
      %8582 = vmatprep.subr.bf16.mxu0 0
      %8583 = vmatpush1.bf16.msra.mxu0 0
      %8584 = vmatprep.subr.bf16.mxu0 0
      %8585 = vmatpush1.bf16.msra.mxu0 %v8580
      %8586 = vmatprep.subr.bf16.mxu0 0
      %8587 = vmatpush1.bf16.msra.mxu0 %v8533
      %8588 = vmatprep.subr.bf16.mxu0 0
      %8589 = vmatpush1.bf16.msra.mxu0 %v8532
      %8590 = vmatprep.subr.bf16.mxu0 0
      %8591 = vmatpush1.bf16.msra.mxu0 %v8531
      %8592 = vmatprep.subr.bf16.mxu0 0
      %8593 = vmatpush1.bf16.msra.mxu0 %v8530
      %8594 = vmatprep.subr.bf16.mxu0 0
      %8595 = vmatpush1.bf16.msra.mxu0 %v8529
      %8596 = vmatprep.subr.bf16.mxu0 0
      %8597 = vmatpush1.bf16.msra.mxu0 %v8528
      %8598 = vmatprep.subr.bf16.mxu0 0
      %8599 = vmatpush2.bf16.msra.mxu0 0
      %8600 = vmatprep.subr.bf16.mxu0 0
      %8601 = vmatpush2.bf16.msra.mxu0 0
      %8602 = vmatprep.subr.bf16.mxu0 0
      %8603 = vmatpush2.bf16.msra.mxu0 0
      %8604 = vmatprep.subr.bf16.mxu0 0
      %8605 = vmatpush2.bf16.msra.mxu0 0
      %8606 = vmatprep.subr.bf16.mxu0 0
      %8607 = vmatpush2.bf16.msra.mxu0 0
      %8608 = vmatprep.subr.bf16.mxu0 0
      %8609 = vmatpush2.bf16.msra.mxu0 0
      %8610 = vmatprep.subr.bf16.mxu0 0
      %8611 = vmatpush2.bf16.msra.mxu0 0
      %8612 = vmatprep.subr.bf16.mxu0 0
      %8613 = vmatpush2.bf16.msra.mxu0 0
      %8614 = vmatprep.mubr.bf16.mxu0 0
      %8615 = vmatmul.mubr.bf16.gmra.mxu0 %v8543
      %v8616 = vpop.f32.mrf.mxu0
      %v8617 = vadd.f32 %v8438, %v8616
      %v8618 = vpop.f32.mrf.mxu0
      %v8619 = vpop.f32.mrf.mxu0
      %v8620 = vadd.f32 %v8438, %v8619
      %v8621 = vpop.f32.mrf.mxu0
      %8622 = vmatprep.mubr.bf16.mxu0 0
      %8623 = vmatmul.mubr.bf16.gmra.mxu0 %v8546
      %v8624 = vpop.f32.mrf.mxu0
      %v8625 = vadd.f32 %v8438, %v8624
      %v8626 = vpop.f32.mrf.mxu0
      %v8627 = vpop.f32.mrf.mxu0
      %v8628 = vadd.f32 %v8438, %v8627
      %v8629 = vpop.f32.mrf.mxu0
      %8630 = vmatprep.mubr.bf16.mxu0 0
      %8631 = vmatmul.mubr.bf16.gmra.mxu0 %v8549
      %v8632 = vpop.f32.mrf.mxu0
      %v8633 = vadd.f32 %v8438, %v8632
      %v8634 = vpop.f32.mrf.mxu0
      %v8635 = vpop.f32.mrf.mxu0
      %v8636 = vadd.f32 %v8438, %v8635
      %v8637 = vpop.f32.mrf.mxu0
      %8638 = vmatprep.mubr.bf16.mxu0 0
      %8639 = vmatmul.mubr.bf16.gmra.mxu0 %v8552
      %v8640 = vpop.f32.mrf.mxu0
      %v8641 = vadd.f32 %v8438, %v8640
      %v8642 = vpop.f32.mrf.mxu0
      %v8643 = vpop.f32.mrf.mxu0
      %v8644 = vadd.f32 %v8438, %v8643
      %v8645 = vpop.f32.mrf.mxu0
      %8646 = vmatprep.mubr.bf16.mxu0 0
      %8647 = vmatmul.mubr.bf16.gmra.mxu0 %v8555
      %v8648 = vpop.f32.mrf.mxu0
      %v8649 = vadd.f32 %v8438, %v8648
      %v8650 = vpop.f32.mrf.mxu0
      %v8651 = vpop.f32.mrf.mxu0
      %v8652 = vadd.f32 %v8438, %v8651
      %v8653 = vpop.f32.mrf.mxu0
      %8654 = vmatprep.mubr.bf16.mxu0 0
      %8655 = vmatmul.mubr.bf16.gmra.mxu0 %v8558
      %v8656 = vpop.f32.mrf.mxu0
      %v8657 = vadd.f32 %v8438, %v8656
      %v8658 = vpop.f32.mrf.mxu0
      %v8659 = vpop.f32.mrf.mxu0
      %v8660 = vadd.f32 %v8438, %v8659
      %v8661 = vpop.f32.mrf.mxu0
      %8662 = vmatprep.mubr.bf16.mxu0 0
      %8663 = vmatmul.mubr.bf16.gmra.mxu0 %v8561
      %v8664 = vpop.f32.mrf.mxu0
      %v8665 = vadd.f32 %v8438, %v8664
      %v8666 = vpop.f32.mrf.mxu0
      %v8667 = vpop.f32.mrf.mxu0
      %v8668 = vadd.f32 %v8438, %v8667
      %v8669 = vpop.f32.mrf.mxu0
      %8670 = vmatprep.mubr.bf16.mxu0 0
      %8671 = vmatmul.mubr.bf16.gmra.mxu0 %v8564
      %v8672 = vpop.f32.mrf.mxu0
      %v8673 = vadd.f32 %v8438, %v8672
      %v8674 = vpop.f32.mrf.mxu0
      %v8675 = vpop.f32.mrf.mxu0
      %v8676 = vadd.f32 %v8438, %v8675
      %v8677 = vpop.f32.mrf.mxu0
      %8678 = vmatprep.mubr.bf16.mxu0 0
      %8679 = vmatmul.mubr.bf16.gmra.mxu0 %v8567
      %v8680 = vpop.f32.mrf.mxu0
      %v8681 = vadd.f32 %v8438, %v8680
      %v8682 = vpop.f32.mrf.mxu0
      %v8683 = vpop.f32.mrf.mxu0
      %v8684 = vadd.f32 %v8438, %v8683
      %v8685 = vpop.f32.mrf.mxu0
      %8686 = vmatprep.mubr.bf16.mxu0 0
      %8687 = vmatmul.mubr.bf16.gmra.mxu0 %v8570
      %v8688 = vpop.f32.mrf.mxu0
      %v8689 = vadd.f32 %v8438, %v8688
      %v8690 = vpop.f32.mrf.mxu0
      %v8691 = vpop.f32.mrf.mxu0
      %v8692 = vadd.f32 %v8438, %v8691
      %v8693 = vpop.f32.mrf.mxu0
      %8694 = vmatprep.mubr.bf16.mxu0 0
      %8695 = vmatmul.mubr.bf16.gmra.mxu0 %v8573
      %v8696 = vpop.f32.mrf.mxu0
      %v8697 = vadd.f32 %v8438, %v8696
      %v8698 = vpop.f32.mrf.mxu0
      %v8699 = vpop.f32.mrf.mxu0
      %v8700 = vadd.f32 %v8438, %v8699
      %v8701 = vpop.f32.mrf.mxu0
      %8702 = vmatprep.mubr.bf16.mxu0 0
      %8703 = vmatmul.mubr.bf16.gmra.mxu0 %v8576
      %v8704 = vpop.f32.mrf.mxu0
      %v8705 = vadd.f32 %v8438, %v8704
      %v8706 = vpop.f32.mrf.mxu0
      %v8707 = vpop.f32.mrf.mxu0
      %v8708 = vadd.f32 %v8438, %v8707
      %v8709 = vpop.f32.mrf.mxu0
      %8710 = vdwg.mxu0
      %vm8711 = vcmask 64512
      %8712 = vst.msk [vmem:[%s240] sm:$0xff] %vm8711, %v8617
      %8713 = vst.msk [vmem:[%s240 + $0x8] sm:$0xff] %vm8711, %v8620
      %8714 = vst.msk [vmem:[%s240 + $0x10] sm:$0xff] %vm8711, %v8625
      %8715 = vst.msk [vmem:[%s240 + $0x18] sm:$0xff] %vm8711, %v8628
      %8716 = vst.msk [vmem:[%s240 + $0x20] sm:$0xff] %vm8711, %v8633
      %8717 = vst.msk [vmem:[%s240 + $0x28] sm:$0xff] %vm8711, %v8636
      %8718 = vst.msk [vmem:[%s240 + $0x30] sm:$0xff] %vm8711, %v8641
      %8719 = vst.msk [vmem:[%s240 + $0x38] sm:$0xff] %vm8711, %v8644
      %8720 = vst.msk [vmem:[%s240 + $0x40] sm:$0xff] %vm8711, %v8649
      %8721 = vst.msk [vmem:[%s240 + $0x48] sm:$0xff] %vm8711, %v8652
      %8722 = vst.msk [vmem:[%s240 + $0x50] sm:$0xff] %vm8711, %v8657
      %8723 = vst.msk [vmem:[%s240 + $0x58] sm:$0xff] %vm8711, %v8660
      %8724 = vst.msk [vmem:[%s240 + $0x60] sm:$0xff] %vm8711, %v8665
      %8725 = vst.msk [vmem:[%s240 + $0x68] sm:$0xff] %vm8711, %v8668
      %8726 = vst.msk [vmem:[%s240 + $0x70] sm:$0xff] %vm8711, %v8673
      %8727 = vst.msk [vmem:[%s240 + $0x78] sm:$0xff] %vm8711, %v8676
      %8728 = vst.msk [vmem:[%s240 + $0x80] sm:$0xff] %vm8711, %v8681
      %8729 = vst.msk [vmem:[%s240 + $0x88] sm:$0xff] %vm8711, %v8684
      %8730 = vst.msk [vmem:[%s240 + $0x90] sm:$0xff] %vm8711, %v8689
      %8731 = vst.msk [vmem:[%s240 + $0x98] sm:$0xff] %vm8711, %v8692
      %8732 = vst.msk [vmem:[%s240 + $0xa0] sm:$0xff] %vm8711, %v8697
      %8733 = vst.msk [vmem:[%s240 + $0xa8] sm:$0xff] %vm8711, %v8700
      %8734 = vst.msk [vmem:[%s240 + $0xb0] sm:$0xff] %vm8711, %v8705
      %8735 = vst.msk [vmem:[%s240 + $0xb8] sm:$0xff] %vm8711, %v8708
      %p8736 = scmp.lt.s32.totalorder %s18, 1
      %s8737 = scalar_select %p8736, %s18, 1
      %p8738 = scmp.lt.s32.totalorder %s19, 2
      %s8739 = scalar_select %p8738, %s19, 2
      %s8740 = smul.addr %s8739, 24
      %s8741 = smul.addr %s8737, 72
      %s8742 = sadd.s32 %s8740, %s8741
      %s8743 = smul.addr %s8742, 8
      %s8744 = scalar_lea.vmem %s3, %s8743
      // Predicated region
      $region33: #{tpu_custom_call.1} parent=31 // pred_check
        %p8745 = pneg %p128
      $region34: #{tpu_custom_call.1} parent=31 // pred_check_branch
        %8747 = sbr.rel (%p8745) target = $region36
      $region35: #{tpu_custom_call.1} parent=31 // pred_region
        _
      $region36: #{tpu_custom_call.1} parent=31 // pred_fallthru
        _
    $region32: #{tpu_custom_call.1} parent=5 // pred_fallthru
      _
    %p8748 = scmp.le.s32.totalorder 2, %s9
    // Predicated region
    $region37: #{tpu_custom_call.1} parent=5 // pred_check
      %p8749 = pneg %p8748
    $region38: #{tpu_custom_call.1} parent=5 // pred_check_branch
      %8751 = sbr.rel (%p8749) target = $region40
    $region39: #{tpu_custom_call.1} parent=5 // pred_region
      %s8752 = ssub.s32 %s9, 2
      // Predicated region
      $region41: #{tpu_custom_call.1} parent=39 // pred_check
        %p8753 = pneg %p134
      $region42: #{tpu_custom_call.1} parent=39 // pred_check_branch
        %8755 = sbr.rel (%p8753) target = $region44
      $region43: #{tpu_custom_call.1} parent=39 // pred_region
        %p8756 = scmp.lt.s32.totalorder %s20, 1
        %s8757 = scalar_select %p8756, %s20, 1
        %p8758 = scmp.lt.s32.totalorder %s21, 2
        %s8759 = scalar_select %p8758, %s21, 2
        %s8760 = smul.addr %s8759, 24
        %s8761 = smul.addr %s8757, 72
        %s8762 = sadd.s32 %s8760, %s8761
        %s8763 = smul.addr %s8762, 8
        %s8764 = scalar_lea.vmem %s3, %s8763
      $region44: #{tpu_custom_call.1} parent=39 // pred_fallthru
        _
    $region40: #{tpu_custom_call.1} parent=5 // pred_fallthru
      _
  $region6: #{tpu_custom_call.1} parent=0 // loop_footer
    %s13 = sadd.s32 1, %s9
  $region7: #{tpu_custom_call.1} parent=0 // loop_footer_branch
    %8 = sbr.rel target = $region3
  $region8: #{tpu_custom_call.1} parent=0 // loop_exit
    _

</llo_original>
